<compile_context>
chip_gen: v7x
topology: tpu7x:2x2x1
jax: 0.10.0
libtpu: 0.0.40
codegen_flags: <defaults>
</compile_context>

<pallas_src>
import functools
import math

import jax
import jax.numpy as jnp
from jax import lax
from jax.experimental import pallas as pl
from jax.experimental.pallas import tpu as pltpu

QUANTILE = 0.25
USE_VERTICAL = True


# ---------------------------------------------------------------------------
# In-kernel quantile (torch 'linear' interpolation) via stable rank selection.
# Single broadcasted pairwise compare -> one rank reduction (axis+1) -> one
# selection reduction per needed order statistic.  All reductions are along
# the minor / second-minor dims (lane / sublane reduces).
# ---------------------------------------------------------------------------
def _quantile_along_axis(v, q, axis):
    """q-quantile of f32 `v` along `axis` (keepdims=True). Assumes no NaNs."""
    n = v.shape[axis]
    pos = q * (n - 1)
    k_lo = int(math.floor(pos))
    k_hi = int(math.ceil(pos))
    frac = pos - k_lo

    vi = jnp.expand_dims(v, axis + 1)          # value at index i (runs along `axis`)
    vj = jnp.expand_dims(v, axis)              # value at index j (runs along `axis`+1)
    pair_shape = tuple(jnp.broadcast_shapes(vi.shape, vj.shape))
    ii = lax.broadcasted_iota(jnp.int32, pair_shape, axis)
    jj = lax.broadcasted_iota(jnp.int32, pair_shape, axis + 1)
    # stable-sort rank of element i: #{j : v_j < v_i, or v_j == v_i and j < i}
    sel = (vj < vi) | ((vj == vi) & (jj < ii))
    rank = jnp.sum(sel.astype(jnp.int32), axis=axis + 1)          # shape == v.shape

    lo = jnp.sum(jnp.where(rank == k_lo, v, 0.0), axis=axis, keepdims=True)
    if k_hi == k_lo:
        return lo
    hi = jnp.sum(jnp.where(rank == k_hi, v, 0.0), axis=axis, keepdims=True)
    return lo * (1.0 - frac) + hi * frac


# ---------------------------------------------------------------------------
# Fused kernel: batch-0 quantile norms + normalize + 1x1 conv (one MXU matmul).
#   x0_ref : (1, C, H, W)      batch-0 block (norm source, torch [0] quirk)
#   x2_ref : (B*C, HW)         lane-dense / sublane-full view of the full input
#   wb_ref : (B*Cout, B*C+1)   kron(I_B, W) with bias folded in as last column
#   o_ref  : (B*Cout, HW)      lane-dense output (unmasked 256-lane stores)
# ---------------------------------------------------------------------------
def _fused_kernel(x0_ref, x2_ref, wb_ref, o_ref, *, B, C, H, W,
                  use_vertical, quantile):
    HW = H * W

    # ---- batch-0 quantile norms ------------------------------------------
    x0 = x0_ref[0].astype(jnp.float32)                           # (C, H, W)
    norm_h = _quantile_along_axis(x0, quantile, axis=1)          # (C, 1, W)  dim=2
    if use_vertical:
        norm_w = _quantile_along_axis(x0 - norm_h, quantile, axis=2)  # (C, H, 1)

    # ---- assemble the combined norm directly in lane-dense (C, HW) layout.
    # Built by concatenating H width-W slabs along the lane axis -> no
    # in-kernel reshape/relayout of the minor dims is needed.
    nh = norm_h[:, 0, :]                                         # (C, W)
    cols = []
    for h in range(H):
        col = nh
        if use_vertical:
            col = col + jnp.broadcast_to(norm_w[:, h, :], (C, W))
        cols.append(col)
    norm_flat = jnp.concatenate(cols, axis=1)                    # (C, HW)

    # ---- normalize every batch (same batch-0 norm) + single MXU matmul ----
    norm_rows = jnp.concatenate([norm_flat] * B, axis=0)         # (B*C, HW)
    xn = x2_ref[...].astype(jnp.float32) - norm_rows             # (B*C, HW)
    ones_row = jnp.ones((1, HW), jnp.float32)                    # drives the bias column
    xn_aug = jnp.concatenate([xn, ones_row], axis=0)             # (B*C+1, HW)

    y = jnp.dot(wb_ref[...].astype(jnp.float32), xn_aug,
                preferred_element_type=jnp.float32)              # (B*Cout, HW)
    o_ref[...] = y.astype(o_ref.dtype)


# ---------------------------------------------------------------------------
# Full MedNormModel forward.  All wrapper-side reshapes are contiguous
# last/leading-dim merges (bitcast-level); no transposes anywhere.
# TODO(synk): the wrapped inner `model` is an arbitrary nn.Module in the spec;
# it is represented here by a synthetic 1x1 Conv2d fused into the kernel.
# ---------------------------------------------------------------------------
@jax.jit
def mednorm_model_forward(x, w, b):
    B, C, H, W = x.shape
    Cout = w.shape[0]
    HW = H * W

    # Block-diagonal weight (the same 1x1 conv applied independently per batch)
    # with the bias folded in as an extra input column -> one MXU matmul.
    w_blk = jnp.kron(jnp.eye(B, dtype=jnp.float32), w.astype(jnp.float32))  # (B*Cout, B*C)
    b_col = jnp.tile(b.astype(jnp.float32), B).reshape(B * Cout, 1)         # (B*Cout, 1)
    wb = jnp.concatenate([w_blk, b_col], axis=1)                            # (B*Cout, B*C+1)

    # Two views of the same input: 4-D for the quantile (batch 0 only via the
    # BlockSpec), lane-dense 2-D for the normalize+matmul.
    x2d = x.reshape(B * C, HW)

    kernel = functools.partial(_fused_kernel, B=B, C=C, H=H, W=W,
                               use_vertical=USE_VERTICAL, quantile=QUANTILE)
    y = pl.pallas_call(
        kernel,
        out_shape=jax.ShapeDtypeStruct((B * Cout, HW), x.dtype),
        grid=(1,),
        in_specs=[
            pl.BlockSpec((1, C, H, W), lambda i: (0, 0, 0, 0)),     # batch-0 slice only
            pl.BlockSpec((B * C, HW), lambda i: (0, 0)),            # full lane-dense input
            pl.BlockSpec((B * Cout, B * C + 1), lambda i: (0, 0)),  # weight (+bias column)
        ],
        out_specs=pl.BlockSpec((B * Cout, HW), lambda i: (0, 0)),
        compiler_params=pltpu.CompilerParams(dimension_semantics=("arbitrary",)),
    )(x, x2d, wb)

    return y.reshape(B, Cout, H, W)


# Pure-JAX reference (mirrors the PyTorch forward, including the [0] indexing).
def reference(x, w, b):
    norm = jnp.quantile(x, QUANTILE, axis=2, keepdims=True)[0]      # (C, 1, W)
    x = x - norm
    if USE_VERTICAL:
        norm = jnp.quantile(x, QUANTILE, axis=3, keepdims=True)[0]  # (C, H, 1)
        x = x - norm
    y = jnp.einsum("bchw,oc->bohw", x, w) + b.reshape(1, -1, 1, 1)
    return y


if __name__ == "__main__":
    B, C, H, W, COUT = 2, 4, 16, 16, 8
    key = jax.random.PRNGKey(0)
    kx, kw, kb = jax.random.split(key, 3)
    x = jax.random.normal(kx, (B, C, H, W), dtype=jnp.float32)
    # deterministic synthetic parameters for the wrapped 1x1 conv
    w = jax.random.normal(kw, (COUT, C), dtype=jnp.float32) * 0.1   # (Cout, Cin)
    b = jax.random.normal(kb, (COUT,), dtype=jnp.float32) * 0.1     # bias

    out = jax.block_until_ready(mednorm_model_forward(x, w, b))

    ref = reference(x, w, b)
    assert out.shape == (B, COUT, H, W)
    max_err = float(jnp.max(jnp.abs(out - ref)))
    assert max_err < 1e-4, f"mismatch vs reference: {max_err}"
    print("KERNEL_OK")
</pallas_src>

<mosaic_0001>
module attributes {stable_mosaic.version = 11 : i64} {
  func.func @_fused_kernel(%arg0: i32, %arg1: memref<1x4x16x16xf32, #tpu.memory_space<vmem>>, %arg2: memref<8x256xf32, #tpu.memory_space<vmem>>, %arg3: memref<16x9xf32, #tpu.memory_space<vmem>>, %arg4: memref<16x256xf32, #tpu.memory_space<vmem>>) attributes {dimension_semantics = [#tpu.dimension_semantics<arbitrary>], iteration_bounds = array<i64: 1>, scalar_prefetch = 0 : i64, scratch_operands = 0 : i64, tpu.core_type = #tpu.core_type<tc>, window_params = [{transform_indices = @transform_0, window_bounds = array<i64: 1, 4, 16, 16>}, {pipeline_mode = #tpu.pipeline_mode<synchronous>, transform_indices = @transform_1, window_bounds = array<i64: 8, 256>}, {pipeline_mode = #tpu.pipeline_mode<synchronous>, transform_indices = @transform_2, window_bounds = array<i64: 16, 9>}, {pipeline_mode = #tpu.pipeline_mode<synchronous>, transform_indices = @transform_3, window_bounds = array<i64: 16, 256>}]} {
    %c0 = arith.constant 0 : index
    %c0_0 = arith.constant 0 : index
    %c0_1 = arith.constant 0 : index
    %c0_2 = arith.constant 0 : index
    %0 = vector.load %arg1[%c0, %c0_0, %c0_1, %c0_2] : memref<1x4x16x16xf32, #tpu.memory_space<vmem>>, vector<1x4x16x16xf32>
    %1 = vector.shape_cast %0 : vector<1x4x16x16xf32> to vector<4x16x16xf32>
    %2 = vector.shape_cast %1 : vector<4x16x16xf32> to vector<4x16x1x16xf32>
    %3 = vector.shape_cast %1 : vector<4x16x16xf32> to vector<4x1x16x16xf32>
    %4 = tpu.iota {dimensions = array<i32: 1>} : vector<4x16x16x16xi32>
    %5 = tpu.iota {dimensions = array<i32: 2>} : vector<4x16x16x16xi32>
    %6 = vector.broadcast %3 : vector<4x1x16x16xf32> to vector<4x16x16x16xf32>
    %7 = vector.broadcast %2 : vector<4x16x1x16xf32> to vector<4x16x16x16xf32>
    %8 = arith.cmpf olt, %6, %7 : vector<4x16x16x16xf32>
    %9 = vector.broadcast %3 : vector<4x1x16x16xf32> to vector<4x16x16x16xf32>
    %10 = vector.broadcast %2 : vector<4x16x1x16xf32> to vector<4x16x16x16xf32>
    %11 = arith.cmpf oeq, %9, %10 : vector<4x16x16x16xf32>
    %12 = arith.cmpi slt, %5, %4 : vector<4x16x16x16xi32>
    %13 = arith.andi %11, %12 : vector<4x16x16x16xi1>
    %14 = arith.ori %8, %13 : vector<4x16x16x16xi1>
    %15 = arith.extui %14 : vector<4x16x16x16xi1> to vector<4x16x16x16xi32>
    %cst = arith.constant dense<0> : vector<4x16x16xi32>
    %16 = vector.multi_reduction <add>, %15, %cst [2] : vector<4x16x16x16xi32> to vector<4x16x16xi32>
    %c3_i32 = arith.constant 3 : i32
    %17 = vector.broadcast %c3_i32 : i32 to vector<4x16x16xi32>
    %18 = arith.cmpi eq, %16, %17 : vector<4x16x16xi32>
    %cst_3 = arith.constant 0.000000e+00 : f32
    %19 = vector.broadcast %cst_3 : f32 to vector<4x16x16xf32>
    %20 = arith.select %18, %1, %19 : vector<4x16x16xi1>, vector<4x16x16xf32>
    %cst_4 = arith.constant dense<0.000000e+00> : vector<4x16xf32>
    %21 = vector.multi_reduction <add>, %20, %cst_4 [1] : vector<4x16x16xf32> to vector<4x16xf32>
    %22 = vector.shape_cast %21 : vector<4x16xf32> to vector<4x1x16xf32>
    %c4_i32 = arith.constant 4 : i32
    %23 = vector.broadcast %c4_i32 : i32 to vector<4x16x16xi32>
    %24 = arith.cmpi eq, %16, %23 : vector<4x16x16xi32>
    %cst_5 = arith.constant 0.000000e+00 : f32
    %25 = vector.broadcast %cst_5 : f32 to vector<4x16x16xf32>
    %26 = arith.select %24, %1, %25 : vector<4x16x16xi1>, vector<4x16x16xf32>
    %cst_6 = arith.constant dense<0.000000e+00> : vector<4x16xf32>
    %27 = vector.multi_reduction <add>, %26, %cst_6 [1] : vector<4x16x16xf32> to vector<4x16xf32>
    %28 = vector.shape_cast %27 : vector<4x16xf32> to vector<4x1x16xf32>
    %cst_7 = arith.constant 2.500000e-01 : f32
    %29 = vector.broadcast %cst_7 : f32 to vector<4x1x16xf32>
    %30 = arith.mulf %22, %29 : vector<4x1x16xf32>
    %cst_8 = arith.constant 7.500000e-01 : f32
    %31 = vector.broadcast %cst_8 : f32 to vector<4x1x16xf32>
    %32 = arith.mulf %28, %31 : vector<4x1x16xf32>
    %33 = arith.addf %30, %32 : vector<4x1x16xf32>
    %34 = vector.broadcast %33 : vector<4x1x16xf32> to vector<4x16x16xf32>
    %35 = arith.subf %1, %34 : vector<4x16x16xf32>
    %36 = vector.shape_cast %35 : vector<4x16x16xf32> to vector<4x16x16x1xf32>
    %37 = vector.shape_cast %35 : vector<4x16x16xf32> to vector<4x16x1x16xf32>
    %38 = tpu.iota {dimensions = array<i32: 2>} : vector<4x16x16x16xi32>
    %39 = tpu.iota {dimensions = array<i32: 3>} : vector<4x16x16x16xi32>
    %40 = vector.broadcast %37 : vector<4x16x1x16xf32> to vector<4x16x16x16xf32>
    %41 = vector.broadcast %36 : vector<4x16x16x1xf32> to vector<4x16x16x16xf32>
    %42 = arith.cmpf olt, %40, %41 : vector<4x16x16x16xf32>
    %43 = vector.broadcast %37 : vector<4x16x1x16xf32> to vector<4x16x16x16xf32>
    %44 = vector.broadcast %36 : vector<4x16x16x1xf32> to vector<4x16x16x16xf32>
    %45 = arith.cmpf oeq, %43, %44 : vector<4x16x16x16xf32>
    %46 = arith.cmpi slt, %39, %38 : vector<4x16x16x16xi32>
    %47 = arith.andi %45, %46 : vector<4x16x16x16xi1>
    %48 = arith.ori %42, %47 : vector<4x16x16x16xi1>
    %49 = arith.extui %48 : vector<4x16x16x16xi1> to vector<4x16x16x16xi32>
    %cst_9 = arith.constant dense<0> : vector<4x16x16xi32>
    %50 = vector.multi_reduction <add>, %49, %cst_9 [3] : vector<4x16x16x16xi32> to vector<4x16x16xi32>
    %c3_i32_10 = arith.constant 3 : i32
    %51 = vector.broadcast %c3_i32_10 : i32 to vector<4x16x16xi32>
    %52 = arith.cmpi eq, %50, %51 : vector<4x16x16xi32>
    %cst_11 = arith.constant 0.000000e+00 : f32
    %53 = vector.broadcast %cst_11 : f32 to vector<4x16x16xf32>
    %54 = arith.select %52, %35, %53 : vector<4x16x16xi1>, vector<4x16x16xf32>
    %cst_12 = arith.constant dense<0.000000e+00> : vector<4x16xf32>
    %55 = vector.multi_reduction <add>, %54, %cst_12 [2] : vector<4x16x16xf32> to vector<4x16xf32>
    %56 = vector.shape_cast %55 : vector<4x16xf32> to vector<4x16x1xf32>
    %c4_i32_13 = arith.constant 4 : i32
    %57 = vector.broadcast %c4_i32_13 : i32 to vector<4x16x16xi32>
    %58 = arith.cmpi eq, %50, %57 : vector<4x16x16xi32>
    %cst_14 = arith.constant 0.000000e+00 : f32
    %59 = vector.broadcast %cst_14 : f32 to vector<4x16x16xf32>
    %60 = arith.select %58, %35, %59 : vector<4x16x16xi1>, vector<4x16x16xf32>
    %cst_15 = arith.constant dense<0.000000e+00> : vector<4x16xf32>
    %61 = vector.multi_reduction <add>, %60, %cst_15 [2] : vector<4x16x16xf32> to vector<4x16xf32>
    %62 = vector.shape_cast %61 : vector<4x16xf32> to vector<4x16x1xf32>
    %cst_16 = arith.constant 2.500000e-01 : f32
    %63 = vector.broadcast %cst_16 : f32 to vector<4x16x1xf32>
    %64 = arith.mulf %56, %63 : vector<4x16x1xf32>
    %cst_17 = arith.constant 7.500000e-01 : f32
    %65 = vector.broadcast %cst_17 : f32 to vector<4x16x1xf32>
    %66 = arith.mulf %62, %65 : vector<4x16x1xf32>
    %67 = arith.addf %64, %66 : vector<4x16x1xf32>
    %68 = vector.shape_cast %33 : vector<4x1x16xf32> to vector<4x16xf32>
    %69 = vector.extract_strided_slice %67 {offsets = [0, 0, 0], sizes = [4, 1, 1], strides = [1, 1, 1]} : vector<4x16x1xf32> to vector<4x1x1xf32>
    %70 = vector.shape_cast %69 : vector<4x1x1xf32> to vector<4x1xf32>
    %71 = vector.shape_cast %70 : vector<4x1xf32> to vector<4x1xf32>
    %72 = vector.broadcast %71 : vector<4x1xf32> to vector<4x16xf32>
    %73 = arith.addf %68, %72 : vector<4x16xf32>
    %74 = vector.extract_strided_slice %67 {offsets = [0, 1, 0], sizes = [4, 1, 1], strides = [1, 1, 1]} : vector<4x16x1xf32> to vector<4x1x1xf32>
    %75 = vector.shape_cast %74 : vector<4x1x1xf32> to vector<4x1xf32>
    %76 = vector.shape_cast %75 : vector<4x1xf32> to vector<4x1xf32>
    %77 = vector.broadcast %76 : vector<4x1xf32> to vector<4x16xf32>
    %78 = arith.addf %68, %77 : vector<4x16xf32>
    %79 = vector.extract_strided_slice %67 {offsets = [0, 2, 0], sizes = [4, 1, 1], strides = [1, 1, 1]} : vector<4x16x1xf32> to vector<4x1x1xf32>
    %80 = vector.shape_cast %79 : vector<4x1x1xf32> to vector<4x1xf32>
    %81 = vector.shape_cast %80 : vector<4x1xf32> to vector<4x1xf32>
    %82 = vector.broadcast %81 : vector<4x1xf32> to vector<4x16xf32>
    %83 = arith.addf %68, %82 : vector<4x16xf32>
    %84 = vector.extract_strided_slice %67 {offsets = [0, 3, 0], sizes = [4, 1, 1], strides = [1, 1, 1]} : vector<4x16x1xf32> to vector<4x1x1xf32>
    %85 = vector.shape_cast %84 : vector<4x1x1xf32> to vector<4x1xf32>
    %86 = vector.shape_cast %85 : vector<4x1xf32> to vector<4x1xf32>
    %87 = vector.broadcast %86 : vector<4x1xf32> to vector<4x16xf32>
    %88 = arith.addf %68, %87 : vector<4x16xf32>
    %89 = vector.extract_strided_slice %67 {offsets = [0, 4, 0], sizes = [4, 1, 1], strides = [1, 1, 1]} : vector<4x16x1xf32> to vector<4x1x1xf32>
    %90 = vector.shape_cast %89 : vector<4x1x1xf32> to vector<4x1xf32>
    %91 = vector.shape_cast %90 : vector<4x1xf32> to vector<4x1xf32>
    %92 = vector.broadcast %91 : vector<4x1xf32> to vector<4x16xf32>
    %93 = arith.addf %68, %92 : vector<4x16xf32>
    %94 = vector.extract_strided_slice %67 {offsets = [0, 5, 0], sizes = [4, 1, 1], strides = [1, 1, 1]} : vector<4x16x1xf32> to vector<4x1x1xf32>
    %95 = vector.shape_cast %94 : vector<4x1x1xf32> to vector<4x1xf32>
    %96 = vector.shape_cast %95 : vector<4x1xf32> to vector<4x1xf32>
    %97 = vector.broadcast %96 : vector<4x1xf32> to vector<4x16xf32>
    %98 = arith.addf %68, %97 : vector<4x16xf32>
    %99 = vector.extract_strided_slice %67 {offsets = [0, 6, 0], sizes = [4, 1, 1], strides = [1, 1, 1]} : vector<4x16x1xf32> to vector<4x1x1xf32>
    %100 = vector.shape_cast %99 : vector<4x1x1xf32> to vector<4x1xf32>
    %101 = vector.shape_cast %100 : vector<4x1xf32> to vector<4x1xf32>
    %102 = vector.broadcast %101 : vector<4x1xf32> to vector<4x16xf32>
    %103 = arith.addf %68, %102 : vector<4x16xf32>
    %104 = vector.extract_strided_slice %67 {offsets = [0, 7, 0], sizes = [4, 1, 1], strides = [1, 1, 1]} : vector<4x16x1xf32> to vector<4x1x1xf32>
    %105 = vector.shape_cast %104 : vector<4x1x1xf32> to vector<4x1xf32>
    %106 = vector.shape_cast %105 : vector<4x1xf32> to vector<4x1xf32>
    %107 = vector.broadcast %106 : vector<4x1xf32> to vector<4x16xf32>
    %108 = arith.addf %68, %107 : vector<4x16xf32>
    %109 = vector.extract_strided_slice %67 {offsets = [0, 8, 0], sizes = [4, 1, 1], strides = [1, 1, 1]} : vector<4x16x1xf32> to vector<4x1x1xf32>
    %110 = vector.shape_cast %109 : vector<4x1x1xf32> to vector<4x1xf32>
    %111 = vector.shape_cast %110 : vector<4x1xf32> to vector<4x1xf32>
    %112 = vector.broadcast %111 : vector<4x1xf32> to vector<4x16xf32>
    %113 = arith.addf %68, %112 : vector<4x16xf32>
    %114 = vector.extract_strided_slice %67 {offsets = [0, 9, 0], sizes = [4, 1, 1], strides = [1, 1, 1]} : vector<4x16x1xf32> to vector<4x1x1xf32>
    %115 = vector.shape_cast %114 : vector<4x1x1xf32> to vector<4x1xf32>
    %116 = vector.shape_cast %115 : vector<4x1xf32> to vector<4x1xf32>
    %117 = vector.broadcast %116 : vector<4x1xf32> to vector<4x16xf32>
    %118 = arith.addf %68, %117 : vector<4x16xf32>
    %119 = vector.extract_strided_slice %67 {offsets = [0, 10, 0], sizes = [4, 1, 1], strides = [1, 1, 1]} : vector<4x16x1xf32> to vector<4x1x1xf32>
    %120 = vector.shape_cast %119 : vector<4x1x1xf32> to vector<4x1xf32>
    %121 = vector.shape_cast %120 : vector<4x1xf32> to vector<4x1xf32>
    %122 = vector.broadcast %121 : vector<4x1xf32> to vector<4x16xf32>
    %123 = arith.addf %68, %122 : vector<4x16xf32>
    %124 = vector.extract_strided_slice %67 {offsets = [0, 11, 0], sizes = [4, 1, 1], strides = [1, 1, 1]} : vector<4x16x1xf32> to vector<4x1x1xf32>
    %125 = vector.shape_cast %124 : vector<4x1x1xf32> to vector<4x1xf32>
    %126 = vector.shape_cast %125 : vector<4x1xf32> to vector<4x1xf32>
    %127 = vector.broadcast %126 : vector<4x1xf32> to vector<4x16xf32>
    %128 = arith.addf %68, %127 : vector<4x16xf32>
    %129 = vector.extract_strided_slice %67 {offsets = [0, 12, 0], sizes = [4, 1, 1], strides = [1, 1, 1]} : vector<4x16x1xf32> to vector<4x1x1xf32>
    %130 = vector.shape_cast %129 : vector<4x1x1xf32> to vector<4x1xf32>
    %131 = vector.shape_cast %130 : vector<4x1xf32> to vector<4x1xf32>
    %132 = vector.broadcast %131 : vector<4x1xf32> to vector<4x16xf32>
    %133 = arith.addf %68, %132 : vector<4x16xf32>
    %134 = vector.extract_strided_slice %67 {offsets = [0, 13, 0], sizes = [4, 1, 1], strides = [1, 1, 1]} : vector<4x16x1xf32> to vector<4x1x1xf32>
    %135 = vector.shape_cast %134 : vector<4x1x1xf32> to vector<4x1xf32>
    %136 = vector.shape_cast %135 : vector<4x1xf32> to vector<4x1xf32>
    %137 = vector.broadcast %136 : vector<4x1xf32> to vector<4x16xf32>
    %138 = arith.addf %68, %137 : vector<4x16xf32>
    %139 = vector.extract_strided_slice %67 {offsets = [0, 14, 0], sizes = [4, 1, 1], strides = [1, 1, 1]} : vector<4x16x1xf32> to vector<4x1x1xf32>
    %140 = vector.shape_cast %139 : vector<4x1x1xf32> to vector<4x1xf32>
    %141 = vector.shape_cast %140 : vector<4x1xf32> to vector<4x1xf32>
    %142 = vector.broadcast %141 : vector<4x1xf32> to vector<4x16xf32>
    %143 = arith.addf %68, %142 : vector<4x16xf32>
    %144 = vector.extract_strided_slice %67 {offsets = [0, 15, 0], sizes = [4, 1, 1], strides = [1, 1, 1]} : vector<4x16x1xf32> to vector<4x1x1xf32>
    %145 = vector.shape_cast %144 : vector<4x1x1xf32> to vector<4x1xf32>
    %146 = vector.shape_cast %145 : vector<4x1xf32> to vector<4x1xf32>
    %147 = vector.broadcast %146 : vector<4x1xf32> to vector<4x16xf32>
    %148 = arith.addf %68, %147 : vector<4x16xf32>
    %149 = tpu.concatenate %73, %78, %83, %88, %93, %98, %103, %108, %113, %118, %123, %128, %133, %138, %143, %148 in 1 : vector<4x16xf32>, vector<4x16xf32>, vector<4x16xf32>, vector<4x16xf32>, vector<4x16xf32>, vector<4x16xf32>, vector<4x16xf32>, vector<4x16xf32>, vector<4x16xf32>, vector<4x16xf32>, vector<4x16xf32>, vector<4x16xf32>, vector<4x16xf32>, vector<4x16xf32>, vector<4x16xf32>, vector<4x16xf32> -> vector<4x256xf32>
    %150 = tpu.concatenate %149, %149 in 0 : vector<4x256xf32>, vector<4x256xf32> -> vector<8x256xf32>
    %c0_18 = arith.constant 0 : index
    %c0_19 = arith.constant 0 : index
    %151 = vector.load %arg2[%c0_18, %c0_19] : memref<8x256xf32, #tpu.memory_space<vmem>>, vector<8x256xf32>
    %152 = arith.subf %151, %150 : vector<8x256xf32>
    %cst_20 = arith.constant 1.000000e+00 : f32
    %153 = vector.broadcast %cst_20 : f32 to vector<1x256xf32>
    %154 = tpu.concatenate %152, %153 in 0 : vector<8x256xf32>, vector<1x256xf32> -> vector<9x256xf32>
    %c0_21 = arith.constant 0 : index
    %c0_22 = arith.constant 0 : index
    %155 = vector.load %arg3[%c0_21, %c0_22] : memref<16x9xf32, #tpu.memory_space<vmem>>, vector<16x9xf32>
    %cst_23 = arith.constant dense<0.000000e+00> : vector<16x256xf32>
    %156 = tpu.matmul %155, %154, %cst_23 {dimension_numbers = #tpu.dot_dimension_numbers<[1], [0], [0], [1], [0, 0, 1, 1], [], []>} : vector<16x9xf32>, vector<9x256xf32>, vector<16x256xf32> -> vector<16x256xf32>
    %c0_24 = arith.constant 0 : index
    %c0_25 = arith.constant 0 : index
    %157 = vector.load %arg4[%c0_24, %c0_25] : memref<16x256xf32, #tpu.memory_space<vmem>>, vector<16x256xf32>
    tpu.vector_store %arg4[%c0_24, %c0_25], %156 {strides = array<i32>} : memref<16x256xf32, #tpu.memory_space<vmem>>, vector<16x256xf32>,
    return
  }
  func.func @transform_0(%arg0: i32) -> (i32, i32, i32, i32) {
    %c0_i32 = arith.constant 0 : i32
    %c0_i32_0 = arith.constant 0 : i32
    %c0_i32_1 = arith.constant 0 : i32
    %c0_i32_2 = arith.constant 0 : i32
    %c0_i32_3 = arith.constant 0 : i32
    return %c0_i32, %c0_i32_0, %c0_i32_1, %c0_i32_2 : i32, i32, i32, i32
  }
  func.func @transform_1(%arg0: i32) -> (i32, i32) {
    %c0_i32 = arith.constant 0 : i32
    %c0_i32_0 = arith.constant 0 : i32
    %c0_i32_1 = arith.constant 0 : i32
    return %c0_i32, %c0_i32_0 : i32, i32
  }
  func.func @transform_2(%arg0: i32) -> (i32, i32) {
    %c0_i32 = arith.constant 0 : i32
    %c0_i32_0 = arith.constant 0 : i32
    %c0_i32_1 = arith.constant 0 : i32
    return %c0_i32, %c0_i32_0 : i32, i32
  }
  func.func @transform_3(%arg0: i32) -> (i32, i32) {
    %c0_i32 = arith.constant 0 : i32
    %c0_i32_0 = arith.constant 0 : i32
    %c0_i32_1 = arith.constant 0 : i32
    return %c0_i32, %c0_i32_0 : i32, i32
  }
}

</mosaic_0001>

<llo_original>
// kernel: tile.8
$region0: #{tile.8}
  #allocation2 [shape = 's32[1]{0}', space=sflag, size = 0x4, scoped, tag = 'scoped memory for tile.8']
  %s0 = inlined_call_operand.hbm [shape: f32[8], index: 0, kind: input, shape index: {}]
  %s1 = inlined_call_operand.vmem [shape: f32[2,8], index: 1, kind: output, shape index: {}]
  $region1: #{tile.8} parent=0
    #allocation0 [shape = 'u8[512]{0}', space=vmem, size = 0x400, scoped, tag = 'operand span for operand 0']
    #allocation1 [shape = 's32[1]{0}', space=sflag, size = 0x4, scoped, tag = 'scoped memory for tile.8']
    %2 = vsyncpa [#allocation1], 0
    // Predicated region
    $region2: #{tile.8} parent=1 // pred_check
      _
    $region3: #{tile.8} parent=1 // pred_check_branch
      %4 = sbr.rel (0) target = $region5
    $region4: #{tile.8} parent=1 // pred_region
      %s6 = ssub.s32 16, 16
      %7 = vsyncadd [#allocation1], %s6
      %s9 = sshll.u32 [#allocation0], 4
      %s10 = int_to_ptr.vmem [resolvable:$true] %s9
      %12 = dma.hbm_to_vmem [thread:$0]  %s0, 16, %s10, [#allocation1]
    $region5: #{tile.8} parent=1 // pred_fallthru
      _
    // Predicated region
    $region6: #{tile.8} parent=1 // pred_check
      _
    $region7: #{tile.8} parent=1 // pred_check_branch
      %14 = sbr.rel (0) target = $region9
    $region8: #{tile.8} parent=1 // pred_region
      %15 = dma.done [#allocation1], 16
    $region9: #{tile.8} parent=1 // pred_fallthru
      _
    %v16 = vld [vmem:[#allocation0] ss:$0 sm:$0xff]
    %17 = vst [vmem:[%s1] sm:$0x3] %v16
    %18 = vsyncpa [#allocation1], 1

// kernel: tile.0
$region0: #{tile.0}
  %s0 = inlined_call_operand.vmem [shape: f32[2,8], index: 0, kind: input, shape index: {}]
  %s1 = inlined_call_operand.vmem [shape: f32[16,1], index: 1, kind: output, shape index: {}]
  $region1: #{tile.0} parent=0
    #allocation0 [shape = 'u8[4096]{0}', space=vmem, size = 0x1000, scoped, tag = 'scoped mem for input reshape']
    %s3 = sshllo.u32 0, 2
    %v4 = vld [vmem:[%s0] sm:%s3]
    %5 = vst [vmem:[#allocation0] sm:%s3] %v4
    %v6 = vld [vmem:[#allocation0] sm:$0x3]
    %vm7 = vcmask 7168
    %8 = vst.msk [vmem:[%s1] ss:$8 sm:$0x3] %vm7, %v6
    %v9 = vld [vmem:[#allocation0] sm:$0x3]
    %10 = vrot.lane.b32.xlu0 %v9, 127
    %v11 = vpop.permute.xlu0 %10
    %vm12 = vcmask 7168
    %s13 = scalar_lea.vmem %s1, 1
    %14 = vst.msk [vmem:[%s13] ss:$8 sm:$0x3] %vm12, %v11
    %v15 = vld [vmem:[#allocation0] sm:$0x3]
    %16 = vrot.lane.b32.xlu0 %v15, 126
    %v17 = vpop.permute.xlu0 %16
    %vm18 = vcmask 7168
    %s19 = scalar_lea.vmem %s1, 2
    %20 = vst.msk [vmem:[%s19] ss:$8 sm:$0x3] %vm18, %v17
    %v21 = vld [vmem:[#allocation0] sm:$0x3]
    %22 = vrot.lane.b32.xlu0 %v21, 125
    %v23 = vpop.permute.xlu0 %22
    %vm24 = vcmask 7168
    %s25 = scalar_lea.vmem %s1, 3
    %26 = vst.msk [vmem:[%s25] ss:$8 sm:$0x3] %vm24, %v23
    %v27 = vld [vmem:[#allocation0] sm:$0x3]
    %28 = vrot.lane.b32.xlu0 %v27, 124
    %v29 = vpop.permute.xlu0 %28
    %vm30 = vcmask 7168
    %s31 = scalar_lea.vmem %s1, 4
    %32 = vst.msk [vmem:[%s31] ss:$8 sm:$0x3] %vm30, %v29
    %v33 = vld [vmem:[#allocation0] sm:$0x3]
    %34 = vrot.lane.b32.xlu0 %v33, 123
    %v35 = vpop.permute.xlu0 %34
    %vm36 = vcmask 7168
    %s37 = scalar_lea.vmem %s1, 5
    %38 = vst.msk [vmem:[%s37] ss:$8 sm:$0x3] %vm36, %v35
    %v39 = vld [vmem:[#allocation0] sm:$0x3]
    %40 = vrot.lane.b32.xlu0 %v39, 122
    %v41 = vpop.permute.xlu0 %40
    %vm42 = vcmask 7168
    %s43 = scalar_lea.vmem %s1, 6
    %44 = vst.msk [vmem:[%s43] ss:$8 sm:$0x3] %vm42, %v41
    %v45 = vld [vmem:[#allocation0] sm:$0x3]
    %46 = vrot.lane.b32.xlu0 %v45, 121
    %v47 = vpop.permute.xlu0 %46
    %vm48 = vcmask 7168
    %s49 = scalar_lea.vmem %s1, 7
    %50 = vst.msk [vmem:[%s49] ss:$8 sm:$0x3] %vm48, %v47

// kernel: mednorm_model_forward.1
$region0: #{mednorm_model_forward.1}
  #allocation0 [shape = 'u32[]', space=smem, size = 0x4, offset = 0x4, fixed_abs, tag = 'smem constant byte address 0x4 - core index']
  #allocation1 [shape = 'u32[144,128]{1,0:T(1,128)}', space=vmem, size = 0x12000, scoped, tag = 'internal scratch']
  %s0 = inlined_call_operand.vmem [shape: f32[2,4,16,16], index: 0, kind: input, shape index: {}]
  %s1 = inlined_call_operand.vmem [shape: f32[8,256], index: 1, kind: input, shape index: {}]
  %s2 = inlined_call_operand.vmem [shape: f32[16,9], index: 2, kind: input, shape index: {}]
  %s3 = inlined_call_operand.vmem [shape: f32[16,256], index: 3, kind: output, shape index: {}]
  %s4 = sld [smem:[#allocation0]]
  $region22: #{mednorm_model_forward.1} parent=0
    _
  %s6 = ssub.s32 1, %s4
  %s7 = scalar_select 0, %s6, %s4
  // Predicated region
  $region2: #{mednorm_model_forward.1} parent=0 // pred_check
    _
  $region3: #{mednorm_model_forward.1} parent=0 // pred_check_branch
    %9 = sbr.rel (0) target = $region5
  $region4: #{mednorm_model_forward.1} parent=0 // pred_region
    _
  $region5: #{mednorm_model_forward.1} parent=0 // pred_fallthru
    _
  // Predicated region
  $region6: #{mednorm_model_forward.1} parent=0 // pred_check
    _
  $region7: #{mednorm_model_forward.1} parent=0 // pred_check_branch
    %11 = sbr.rel (0) target = $region9
  $region8: #{mednorm_model_forward.1} parent=0 // pred_region
    _
  $region9: #{mednorm_model_forward.1} parent=0 // pred_fallthru
    _
  // Predicated region
  $region10: #{mednorm_model_forward.1} parent=0 // pred_check
    _
  $region11: #{mednorm_model_forward.1} parent=0 // pred_check_branch
    %13 = sbr.rel (0) target = $region13
  $region12: #{mednorm_model_forward.1} parent=0 // pred_region
    _
  $region13: #{mednorm_model_forward.1} parent=0 // pred_fallthru
    _
  %v14 = vld [vmem:[%s0] sm:$0xff]
  %v15 = vld [vmem:[%s0 + $0x8] sm:$0xff]
  %v16 = vld [vmem:[%s0 + $0x10] sm:$0xff]
  %v17 = vld [vmem:[%s0 + $0x18] sm:$0xff]
  %v18 = vld [vmem:[%s0 + $0x20] sm:$0xff]
  %v19 = vld [vmem:[%s0 + $0x28] sm:$0xff]
  %v20 = vld [vmem:[%s0 + $0x30] sm:$0xff]
  %v21 = vld [vmem:[%s0 + $0x38] sm:$0xff]
  %v30 = vcombine.high %v14, %v14
  %v32 = vunpack.c.l.s4 1966171168
  %v33 = vunpack.c.0.s8 %v32
  %v34 = vlaneseq
  %v35 = vshrl.u32 %v34, 7
  %v36 = vsub.s32 %v33, %v35
  %v37 = vrot.slane %v14, %v36
  %v39 = vunpack.c.l.s4 1966171168
  %v40 = vunpack.c.0.s8 %v39
  %v41 = vlaneseq
  %v42 = vshrl.u32 %v41, 7
  %v43 = vsub.s32 %v40, %v42
  %v44 = vrot.slane %v30, %v43
  %v45 = vcombine.high %v37, %v37
  %v46 = vcombine.high %v44, %v44
  %v48 = vunpack.c.l.s4 1966171168
  %v49 = vunpack.c.0.s8 %v48
  %v50 = vlaneseq
  %v51 = vshrl.u32 %v50, 7
  %v52 = vsub.s32 %v49, %v51
  %v53 = vrot.slane %v37, %v52
  %v55 = vunpack.c.l.s4 1966171168
  %v56 = vunpack.c.0.s8 %v55
  %v57 = vlaneseq
  %v58 = vshrl.u32 %v57, 7
  %v59 = vsub.s32 %v56, %v58
  %v60 = vrot.slane %v44, %v59
  %v62 = vunpack.c.l.s4 1966171168
  %v63 = vunpack.c.0.s8 %v62
  %v64 = vlaneseq
  %v65 = vshrl.u32 %v64, 7
  %v66 = vsub.s32 %v63, %v65
  %v67 = vrot.slane %v45, %v66
  %v69 = vunpack.c.l.s4 1966171168
  %v70 = vunpack.c.0.s8 %v69
  %v71 = vlaneseq
  %v72 = vshrl.u32 %v71, 7
  %v73 = vsub.s32 %v70, %v72
  %v74 = vrot.slane %v46, %v73
  %v75 = vcombine.high %v53, %v53
  %v76 = vcombine.high %v60, %v60
  %v77 = vcombine.high %v67, %v67
  %v78 = vcombine.high %v74, %v74
  %v79 = vcombine.high %v15, %v15
  %v81 = vunpack.c.l.s4 1966171168
  %v82 = vunpack.c.0.s8 %v81
  %v83 = vlaneseq
  %v84 = vshrl.u32 %v83, 7
  %v85 = vsub.s32 %v82, %v84
  %v86 = vrot.slane %v15, %v85
  %v88 = vunpack.c.l.s4 1966171168
  %v89 = vunpack.c.0.s8 %v88
  %v90 = vlaneseq
  %v91 = vshrl.u32 %v90, 7
  %v92 = vsub.s32 %v89, %v91
  %v93 = vrot.slane %v79, %v92
  %v94 = vcombine.high %v86, %v86
  %v95 = vcombine.high %v93, %v93
  %v97 = vunpack.c.l.s4 1966171168
  %v98 = vunpack.c.0.s8 %v97
  %v99 = vlaneseq
  %v100 = vshrl.u32 %v99, 7
  %v101 = vsub.s32 %v98, %v100
  %v102 = vrot.slane %v86, %v101
  %v104 = vunpack.c.l.s4 1966171168
  %v105 = vunpack.c.0.s8 %v104
  %v106 = vlaneseq
  %v107 = vshrl.u32 %v106, 7
  %v108 = vsub.s32 %v105, %v107
  %v109 = vrot.slane %v93, %v108
  %v111 = vunpack.c.l.s4 1966171168
  %v112 = vunpack.c.0.s8 %v111
  %v113 = vlaneseq
  %v114 = vshrl.u32 %v113, 7
  %v115 = vsub.s32 %v112, %v114
  %v116 = vrot.slane %v94, %v115
  %v118 = vunpack.c.l.s4 1966171168
  %v119 = vunpack.c.0.s8 %v118
  %v120 = vlaneseq
  %v121 = vshrl.u32 %v120, 7
  %v122 = vsub.s32 %v119, %v121
  %v123 = vrot.slane %v95, %v122
  %v124 = vcombine.high %v102, %v102
  %v125 = vcombine.high %v109, %v109
  %v126 = vcombine.high %v116, %v116
  %v127 = vcombine.high %v123, %v123
  %v128 = vcombine.high %v16, %v16
  %v130 = vunpack.c.l.s4 1966171168
  %v131 = vunpack.c.0.s8 %v130
  %v132 = vlaneseq
  %v133 = vshrl.u32 %v132, 7
  %v134 = vsub.s32 %v131, %v133
  %v135 = vrot.slane %v16, %v134
  %v137 = vunpack.c.l.s4 1966171168
  %v138 = vunpack.c.0.s8 %v137
  %v139 = vlaneseq
  %v140 = vshrl.u32 %v139, 7
  %v141 = vsub.s32 %v138, %v140
  %v142 = vrot.slane %v128, %v141
  %v143 = vcombine.high %v135, %v135
  %v144 = vcombine.high %v142, %v142
  %v146 = vunpack.c.l.s4 1966171168
  %v147 = vunpack.c.0.s8 %v146
  %v148 = vlaneseq
  %v149 = vshrl.u32 %v148, 7
  %v150 = vsub.s32 %v147, %v149
  %v151 = vrot.slane %v135, %v150
  %v153 = vunpack.c.l.s4 1966171168
  %v154 = vunpack.c.0.s8 %v153
  %v155 = vlaneseq
  %v156 = vshrl.u32 %v155, 7
  %v157 = vsub.s32 %v154, %v156
  %v158 = vrot.slane %v142, %v157
  %v160 = vunpack.c.l.s4 1966171168
  %v161 = vunpack.c.0.s8 %v160
  %v162 = vlaneseq
  %v163 = vshrl.u32 %v162, 7
  %v164 = vsub.s32 %v161, %v163
  %v165 = vrot.slane %v143, %v164
  %v167 = vunpack.c.l.s4 1966171168
  %v168 = vunpack.c.0.s8 %v167
  %v169 = vlaneseq
  %v170 = vshrl.u32 %v169, 7
  %v171 = vsub.s32 %v168, %v170
  %v172 = vrot.slane %v144, %v171
  %v173 = vcombine.high %v151, %v151
  %v174 = vcombine.high %v158, %v158
  %v175 = vcombine.high %v165, %v165
  %v176 = vcombine.high %v172, %v172
  %v177 = vcombine.high %v17, %v17
  %v179 = vunpack.c.l.s4 1966171168
  %v180 = vunpack.c.0.s8 %v179
  %v181 = vlaneseq
  %v182 = vshrl.u32 %v181, 7
  %v183 = vsub.s32 %v180, %v182
  %v184 = vrot.slane %v17, %v183
  %v186 = vunpack.c.l.s4 1966171168
  %v187 = vunpack.c.0.s8 %v186
  %v188 = vlaneseq
  %v189 = vshrl.u32 %v188, 7
  %v190 = vsub.s32 %v187, %v189
  %v191 = vrot.slane %v177, %v190
  %v192 = vcombine.high %v184, %v184
  %v193 = vcombine.high %v191, %v191
  %v195 = vunpack.c.l.s4 1966171168
  %v196 = vunpack.c.0.s8 %v195
  %v197 = vlaneseq
  %v198 = vshrl.u32 %v197, 7
  %v199 = vsub.s32 %v196, %v198
  %v200 = vrot.slane %v184, %v199
  %v202 = vunpack.c.l.s4 1966171168
  %v203 = vunpack.c.0.s8 %v202
  %v204 = vlaneseq
  %v205 = vshrl.u32 %v204, 7
  %v206 = vsub.s32 %v203, %v205
  %v207 = vrot.slane %v191, %v206
  %v209 = vunpack.c.l.s4 1966171168
  %v210 = vunpack.c.0.s8 %v209
  %v211 = vlaneseq
  %v212 = vshrl.u32 %v211, 7
  %v213 = vsub.s32 %v210, %v212
  %v214 = vrot.slane %v192, %v213
  %v216 = vunpack.c.l.s4 1966171168
  %v217 = vunpack.c.0.s8 %v216
  %v218 = vlaneseq
  %v219 = vshrl.u32 %v218, 7
  %v220 = vsub.s32 %v217, %v219
  %v221 = vrot.slane %v193, %v220
  %v222 = vcombine.high %v200, %v200
  %v223 = vcombine.high %v207, %v207
  %v224 = vcombine.high %v214, %v214
  %v225 = vcombine.high %v221, %v221
  %v226 = vcombine.high %v18, %v18
  %v228 = vunpack.c.l.s4 1966171168
  %v229 = vunpack.c.0.s8 %v228
  %v230 = vlaneseq
  %v231 = vshrl.u32 %v230, 7
  %v232 = vsub.s32 %v229, %v231
  %v233 = vrot.slane %v18, %v232
  %v235 = vunpack.c.l.s4 1966171168
  %v236 = vunpack.c.0.s8 %v235
  %v237 = vlaneseq
  %v238 = vshrl.u32 %v237, 7
  %v239 = vsub.s32 %v236, %v238
  %v240 = vrot.slane %v226, %v239
  %v241 = vcombine.high %v233, %v233
  %v242 = vcombine.high %v240, %v240
  %v244 = vunpack.c.l.s4 1966171168
  %v245 = vunpack.c.0.s8 %v244
  %v246 = vlaneseq
  %v247 = vshrl.u32 %v246, 7
  %v248 = vsub.s32 %v245, %v247
  %v249 = vrot.slane %v233, %v248
  %v251 = vunpack.c.l.s4 1966171168
  %v252 = vunpack.c.0.s8 %v251
  %v253 = vlaneseq
  %v254 = vshrl.u32 %v253, 7
  %v255 = vsub.s32 %v252, %v254
  %v256 = vrot.slane %v240, %v255
  %v258 = vunpack.c.l.s4 1966171168
  %v259 = vunpack.c.0.s8 %v258
  %v260 = vlaneseq
  %v261 = vshrl.u32 %v260, 7
  %v262 = vsub.s32 %v259, %v261
  %v263 = vrot.slane %v241, %v262
  %v265 = vunpack.c.l.s4 1966171168
  %v266 = vunpack.c.0.s8 %v265
  %v267 = vlaneseq
  %v268 = vshrl.u32 %v267, 7
  %v269 = vsub.s32 %v266, %v268
  %v270 = vrot.slane %v242, %v269
  %v271 = vcombine.high %v249, %v249
  %v272 = vcombine.high %v256, %v256
  %v273 = vcombine.high %v263, %v263
  %v274 = vcombine.high %v270, %v270
  %v275 = vcombine.high %v19, %v19
  %v277 = vunpack.c.l.s4 1966171168
  %v278 = vunpack.c.0.s8 %v277
  %v279 = vlaneseq
  %v280 = vshrl.u32 %v279, 7
  %v281 = vsub.s32 %v278, %v280
  %v282 = vrot.slane %v19, %v281
  %v284 = vunpack.c.l.s4 1966171168
  %v285 = vunpack.c.0.s8 %v284
  %v286 = vlaneseq
  %v287 = vshrl.u32 %v286, 7
  %v288 = vsub.s32 %v285, %v287
  %v289 = vrot.slane %v275, %v288
  %v290 = vcombine.high %v282, %v282
  %v291 = vcombine.high %v289, %v289
  %v293 = vunpack.c.l.s4 1966171168
  %v294 = vunpack.c.0.s8 %v293
  %v295 = vlaneseq
  %v296 = vshrl.u32 %v295, 7
  %v297 = vsub.s32 %v294, %v296
  %v298 = vrot.slane %v282, %v297
  %v300 = vunpack.c.l.s4 1966171168
  %v301 = vunpack.c.0.s8 %v300
  %v302 = vlaneseq
  %v303 = vshrl.u32 %v302, 7
  %v304 = vsub.s32 %v301, %v303
  %v305 = vrot.slane %v289, %v304
  %v307 = vunpack.c.l.s4 1966171168
  %v308 = vunpack.c.0.s8 %v307
  %v309 = vlaneseq
  %v310 = vshrl.u32 %v309, 7
  %v311 = vsub.s32 %v308, %v310
  %v312 = vrot.slane %v290, %v311
  %v314 = vunpack.c.l.s4 1966171168
  %v315 = vunpack.c.0.s8 %v314
  %v316 = vlaneseq
  %v317 = vshrl.u32 %v316, 7
  %v318 = vsub.s32 %v315, %v317
  %v319 = vrot.slane %v291, %v318
  %v320 = vcombine.high %v298, %v298
  %v321 = vcombine.high %v305, %v305
  %v322 = vcombine.high %v312, %v312
  %v323 = vcombine.high %v319, %v319
  %v324 = vcombine.high %v20, %v20
  %v326 = vunpack.c.l.s4 1966171168
  %v327 = vunpack.c.0.s8 %v326
  %v328 = vlaneseq
  %v329 = vshrl.u32 %v328, 7
  %v330 = vsub.s32 %v327, %v329
  %v331 = vrot.slane %v20, %v330
  %v333 = vunpack.c.l.s4 1966171168
  %v334 = vunpack.c.0.s8 %v333
  %v335 = vlaneseq
  %v336 = vshrl.u32 %v335, 7
  %v337 = vsub.s32 %v334, %v336
  %v338 = vrot.slane %v324, %v337
  %v339 = vcombine.high %v331, %v331
  %v340 = vcombine.high %v338, %v338
  %v342 = vunpack.c.l.s4 1966171168
  %v343 = vunpack.c.0.s8 %v342
  %v344 = vlaneseq
  %v345 = vshrl.u32 %v344, 7
  %v346 = vsub.s32 %v343, %v345
  %v347 = vrot.slane %v331, %v346
  %v349 = vunpack.c.l.s4 1966171168
  %v350 = vunpack.c.0.s8 %v349
  %v351 = vlaneseq
  %v352 = vshrl.u32 %v351, 7
  %v353 = vsub.s32 %v350, %v352
  %v354 = vrot.slane %v338, %v353
  %v356 = vunpack.c.l.s4 1966171168
  %v357 = vunpack.c.0.s8 %v356
  %v358 = vlaneseq
  %v359 = vshrl.u32 %v358, 7
  %v360 = vsub.s32 %v357, %v359
  %v361 = vrot.slane %v339, %v360
  %v363 = vunpack.c.l.s4 1966171168
  %v364 = vunpack.c.0.s8 %v363
  %v365 = vlaneseq
  %v366 = vshrl.u32 %v365, 7
  %v367 = vsub.s32 %v364, %v366
  %v368 = vrot.slane %v340, %v367
  %v369 = vcombine.high %v347, %v347
  %v370 = vcombine.high %v354, %v354
  %v371 = vcombine.high %v361, %v361
  %v372 = vcombine.high %v368, %v368
  %v373 = vcombine.high %v21, %v21
  %v375 = vunpack.c.l.s4 1966171168
  %v376 = vunpack.c.0.s8 %v375
  %v377 = vlaneseq
  %v378 = vshrl.u32 %v377, 7
  %v379 = vsub.s32 %v376, %v378
  %v380 = vrot.slane %v21, %v379
  %v382 = vunpack.c.l.s4 1966171168
  %v383 = vunpack.c.0.s8 %v382
  %v384 = vlaneseq
  %v385 = vshrl.u32 %v384, 7
  %v386 = vsub.s32 %v383, %v385
  %v387 = vrot.slane %v373, %v386
  %v388 = vcombine.high %v380, %v380
  %v389 = vcombine.high %v387, %v387
  %v391 = vunpack.c.l.s4 1966171168
  %v392 = vunpack.c.0.s8 %v391
  %v393 = vlaneseq
  %v394 = vshrl.u32 %v393, 7
  %v395 = vsub.s32 %v392, %v394
  %v396 = vrot.slane %v380, %v395
  %v398 = vunpack.c.l.s4 1966171168
  %v399 = vunpack.c.0.s8 %v398
  %v400 = vlaneseq
  %v401 = vshrl.u32 %v400, 7
  %v402 = vsub.s32 %v399, %v401
  %v403 = vrot.slane %v387, %v402
  %v405 = vunpack.c.l.s4 1966171168
  %v406 = vunpack.c.0.s8 %v405
  %v407 = vlaneseq
  %v408 = vshrl.u32 %v407, 7
  %v409 = vsub.s32 %v406, %v408
  %v410 = vrot.slane %v388, %v409
  %v412 = vunpack.c.l.s4 1966171168
  %v413 = vunpack.c.0.s8 %v412
  %v414 = vlaneseq
  %v415 = vshrl.u32 %v414, 7
  %v416 = vsub.s32 %v413, %v415
  %v417 = vrot.slane %v389, %v416
  %v418 = vcombine.high %v396, %v396
  %v419 = vcombine.high %v403, %v403
  %v420 = vcombine.high %v410, %v410
  %v421 = vcombine.high %v417, %v417
  %v422 = vlaneseq
  %v423 = vshrl.u32 %v422, 7
  %v424 = vadd.s32 %v423, 8
  %v425 = vlaneseq
  %v426 = vshrl.u32 %v425, 7
  %v427 = vsub.s32 0, %v426
  %v428 = vrot.slane %v53, %v427
  %v429 = vlaneseq
  %v430 = vshrl.u32 %v429, 7
  %v431 = vsub.s32 0, %v430
  %v432 = vrot.slane %v67, %v431
  %v433 = vlaneseq
  %v434 = vshrl.u32 %v433, 7
  %v435 = vsub.s32 0, %v434
  %v436 = vrot.slane %v75, %v435
  %v437 = vlaneseq
  %v438 = vshrl.u32 %v437, 7
  %v439 = vsub.s32 0, %v438
  %v440 = vrot.slane %v77, %v439
  %v441 = vlaneseq
  %v442 = vshrl.u32 %v441, 7
  %v443 = vsub.s32 0, %v442
  %v444 = vrot.slane %v60, %v443
  %v445 = vlaneseq
  %v446 = vshrl.u32 %v445, 7
  %v447 = vsub.s32 0, %v446
  %v448 = vrot.slane %v74, %v447
  %v449 = vlaneseq
  %v450 = vshrl.u32 %v449, 7
  %v451 = vsub.s32 0, %v450
  %v452 = vrot.slane %v76, %v451
  %v453 = vlaneseq
  %v454 = vshrl.u32 %v453, 7
  %v455 = vsub.s32 0, %v454
  %v456 = vrot.slane %v78, %v455
  %v457 = vlaneseq
  %v458 = vshrl.u32 %v457, 7
  %v459 = vsub.s32 0, %v458
  %v460 = vrot.slane %v102, %v459
  %v461 = vlaneseq
  %v462 = vshrl.u32 %v461, 7
  %v463 = vsub.s32 0, %v462
  %v464 = vrot.slane %v116, %v463
  %v465 = vlaneseq
  %v466 = vshrl.u32 %v465, 7
  %v467 = vsub.s32 0, %v466
  %v468 = vrot.slane %v124, %v467
  %v469 = vlaneseq
  %v470 = vshrl.u32 %v469, 7
  %v471 = vsub.s32 0, %v470
  %v472 = vrot.slane %v126, %v471
  %v473 = vlaneseq
  %v474 = vshrl.u32 %v473, 7
  %v475 = vsub.s32 0, %v474
  %v476 = vrot.slane %v109, %v475
  %v477 = vlaneseq
  %v478 = vshrl.u32 %v477, 7
  %v479 = vsub.s32 0, %v478
  %v480 = vrot.slane %v123, %v479
  %v481 = vlaneseq
  %v482 = vshrl.u32 %v481, 7
  %v483 = vsub.s32 0, %v482
  %v484 = vrot.slane %v125, %v483
  %v485 = vlaneseq
  %v486 = vshrl.u32 %v485, 7
  %v487 = vsub.s32 0, %v486
  %v488 = vrot.slane %v127, %v487
  %v489 = vlaneseq
  %v490 = vshrl.u32 %v489, 7
  %v491 = vsub.s32 0, %v490
  %v492 = vrot.slane %v151, %v491
  %v493 = vlaneseq
  %v494 = vshrl.u32 %v493, 7
  %v495 = vsub.s32 0, %v494
  %v496 = vrot.slane %v165, %v495
  %v497 = vlaneseq
  %v498 = vshrl.u32 %v497, 7
  %v499 = vsub.s32 0, %v498
  %v500 = vrot.slane %v173, %v499
  %v501 = vlaneseq
  %v502 = vshrl.u32 %v501, 7
  %v503 = vsub.s32 0, %v502
  %v504 = vrot.slane %v175, %v503
  %v505 = vlaneseq
  %v506 = vshrl.u32 %v505, 7
  %v507 = vsub.s32 0, %v506
  %v508 = vrot.slane %v158, %v507
  %v509 = vlaneseq
  %v510 = vshrl.u32 %v509, 7
  %v511 = vsub.s32 0, %v510
  %v512 = vrot.slane %v172, %v511
  %v513 = vlaneseq
  %v514 = vshrl.u32 %v513, 7
  %v515 = vsub.s32 0, %v514
  %v516 = vrot.slane %v174, %v515
  %v517 = vlaneseq
  %v518 = vshrl.u32 %v517, 7
  %v519 = vsub.s32 0, %v518
  %v520 = vrot.slane %v176, %v519
  %v521 = vlaneseq
  %v522 = vshrl.u32 %v521, 7
  %v523 = vsub.s32 0, %v522
  %v524 = vrot.slane %v200, %v523
  %v525 = vlaneseq
  %v526 = vshrl.u32 %v525, 7
  %v527 = vsub.s32 0, %v526
  %v528 = vrot.slane %v214, %v527
  %v529 = vlaneseq
  %v530 = vshrl.u32 %v529, 7
  %v531 = vsub.s32 0, %v530
  %v532 = vrot.slane %v222, %v531
  %v533 = vlaneseq
  %v534 = vshrl.u32 %v533, 7
  %v535 = vsub.s32 0, %v534
  %v536 = vrot.slane %v224, %v535
  %v537 = vlaneseq
  %v538 = vshrl.u32 %v537, 7
  %v539 = vsub.s32 0, %v538
  %v540 = vrot.slane %v207, %v539
  %v541 = vlaneseq
  %v542 = vshrl.u32 %v541, 7
  %v543 = vsub.s32 0, %v542
  %v544 = vrot.slane %v221, %v543
  %v545 = vlaneseq
  %v546 = vshrl.u32 %v545, 7
  %v547 = vsub.s32 0, %v546
  %v548 = vrot.slane %v223, %v547
  %v549 = vlaneseq
  %v550 = vshrl.u32 %v549, 7
  %v551 = vsub.s32 0, %v550
  %v552 = vrot.slane %v225, %v551
  %v553 = vlaneseq
  %v554 = vshrl.u32 %v553, 7
  %v555 = vsub.s32 0, %v554
  %v556 = vrot.slane %v249, %v555
  %v557 = vlaneseq
  %v558 = vshrl.u32 %v557, 7
  %v559 = vsub.s32 0, %v558
  %v560 = vrot.slane %v263, %v559
  %v561 = vlaneseq
  %v562 = vshrl.u32 %v561, 7
  %v563 = vsub.s32 0, %v562
  %v564 = vrot.slane %v271, %v563
  %v565 = vlaneseq
  %v566 = vshrl.u32 %v565, 7
  %v567 = vsub.s32 0, %v566
  %v568 = vrot.slane %v273, %v567
  %v569 = vlaneseq
  %v570 = vshrl.u32 %v569, 7
  %v571 = vsub.s32 0, %v570
  %v572 = vrot.slane %v256, %v571
  %v573 = vlaneseq
  %v574 = vshrl.u32 %v573, 7
  %v575 = vsub.s32 0, %v574
  %v576 = vrot.slane %v270, %v575
  %v577 = vlaneseq
  %v578 = vshrl.u32 %v577, 7
  %v579 = vsub.s32 0, %v578
  %v580 = vrot.slane %v272, %v579
  %v581 = vlaneseq
  %v582 = vshrl.u32 %v581, 7
  %v583 = vsub.s32 0, %v582
  %v584 = vrot.slane %v274, %v583
  %v585 = vlaneseq
  %v586 = vshrl.u32 %v585, 7
  %v587 = vsub.s32 0, %v586
  %v588 = vrot.slane %v298, %v587
  %v589 = vlaneseq
  %v590 = vshrl.u32 %v589, 7
  %v591 = vsub.s32 0, %v590
  %v592 = vrot.slane %v312, %v591
  %v593 = vlaneseq
  %v594 = vshrl.u32 %v593, 7
  %v595 = vsub.s32 0, %v594
  %v596 = vrot.slane %v320, %v595
  %v597 = vlaneseq
  %v598 = vshrl.u32 %v597, 7
  %v599 = vsub.s32 0, %v598
  %v600 = vrot.slane %v322, %v599
  %v601 = vlaneseq
  %v602 = vshrl.u32 %v601, 7
  %v603 = vsub.s32 0, %v602
  %v604 = vrot.slane %v305, %v603
  %v605 = vlaneseq
  %v606 = vshrl.u32 %v605, 7
  %v607 = vsub.s32 0, %v606
  %v608 = vrot.slane %v319, %v607
  %v609 = vlaneseq
  %v610 = vshrl.u32 %v609, 7
  %v611 = vsub.s32 0, %v610
  %v612 = vrot.slane %v321, %v611
  %v613 = vlaneseq
  %v614 = vshrl.u32 %v613, 7
  %v615 = vsub.s32 0, %v614
  %v616 = vrot.slane %v323, %v615
  %v617 = vlaneseq
  %v618 = vshrl.u32 %v617, 7
  %v619 = vsub.s32 0, %v618
  %v620 = vrot.slane %v347, %v619
  %v621 = vlaneseq
  %v622 = vshrl.u32 %v621, 7
  %v623 = vsub.s32 0, %v622
  %v624 = vrot.slane %v361, %v623
  %v625 = vlaneseq
  %v626 = vshrl.u32 %v625, 7
  %v627 = vsub.s32 0, %v626
  %v628 = vrot.slane %v369, %v627
  %v629 = vlaneseq
  %v630 = vshrl.u32 %v629, 7
  %v631 = vsub.s32 0, %v630
  %v632 = vrot.slane %v371, %v631
  %v633 = vlaneseq
  %v634 = vshrl.u32 %v633, 7
  %v635 = vsub.s32 0, %v634
  %v636 = vrot.slane %v354, %v635
  %v637 = vlaneseq
  %v638 = vshrl.u32 %v637, 7
  %v639 = vsub.s32 0, %v638
  %v640 = vrot.slane %v368, %v639
  %v641 = vlaneseq
  %v642 = vshrl.u32 %v641, 7
  %v643 = vsub.s32 0, %v642
  %v644 = vrot.slane %v370, %v643
  %v645 = vlaneseq
  %v646 = vshrl.u32 %v645, 7
  %v647 = vsub.s32 0, %v646
  %v648 = vrot.slane %v372, %v647
  %v649 = vlaneseq
  %v650 = vshrl.u32 %v649, 7
  %v651 = vsub.s32 0, %v650
  %v652 = vrot.slane %v396, %v651
  %v653 = vlaneseq
  %v654 = vshrl.u32 %v653, 7
  %v655 = vsub.s32 0, %v654
  %v656 = vrot.slane %v410, %v655
  %v657 = vlaneseq
  %v658 = vshrl.u32 %v657, 7
  %v659 = vsub.s32 0, %v658
  %v660 = vrot.slane %v418, %v659
  %v661 = vlaneseq
  %v662 = vshrl.u32 %v661, 7
  %v663 = vsub.s32 0, %v662
  %v664 = vrot.slane %v420, %v663
  %v665 = vlaneseq
  %v666 = vshrl.u32 %v665, 7
  %v667 = vsub.s32 0, %v666
  %v668 = vrot.slane %v403, %v667
  %v669 = vlaneseq
  %v670 = vshrl.u32 %v669, 7
  %v671 = vsub.s32 0, %v670
  %v672 = vrot.slane %v417, %v671
  %v673 = vlaneseq
  %v674 = vshrl.u32 %v673, 7
  %v675 = vsub.s32 0, %v674
  %v676 = vrot.slane %v419, %v675
  %v677 = vlaneseq
  %v678 = vshrl.u32 %v677, 7
  %v679 = vsub.s32 0, %v678
  %v680 = vrot.slane %v421, %v679
  %vm745 = vcmp.lt.f32.partialorder %v14, %v428
  %vm746 = vcmp.lt.f32.partialorder %v15, %v428
  %vm747 = vcmp.lt.f32.partialorder %v14, %v432
  %vm748 = vcmp.lt.f32.partialorder %v15, %v432
  %vm749 = vcmp.lt.f32.partialorder %v14, %v436
  %vm750 = vcmp.lt.f32.partialorder %v15, %v436
  %vm751 = vcmp.lt.f32.partialorder %v14, %v440
  %vm752 = vcmp.lt.f32.partialorder %v15, %v440
  %vm753 = vcmp.lt.f32.partialorder %v14, %v444
  %vm754 = vcmp.lt.f32.partialorder %v15, %v444
  %vm755 = vcmp.lt.f32.partialorder %v14, %v448
  %vm756 = vcmp.lt.f32.partialorder %v15, %v448
  %vm757 = vcmp.lt.f32.partialorder %v14, %v452
  %vm758 = vcmp.lt.f32.partialorder %v15, %v452
  %vm759 = vcmp.lt.f32.partialorder %v14, %v456
  %vm760 = vcmp.lt.f32.partialorder %v15, %v456
  %vm761 = vcmp.lt.f32.partialorder %v14, %v460
  %vm762 = vcmp.lt.f32.partialorder %v15, %v460
  %vm763 = vcmp.lt.f32.partialorder %v14, %v464
  %vm764 = vcmp.lt.f32.partialorder %v15, %v464
  %vm765 = vcmp.lt.f32.partialorder %v14, %v468
  %vm766 = vcmp.lt.f32.partialorder %v15, %v468
  %vm767 = vcmp.lt.f32.partialorder %v14, %v472
  %vm768 = vcmp.lt.f32.partialorder %v15, %v472
  %vm769 = vcmp.lt.f32.partialorder %v14, %v476
  %vm770 = vcmp.lt.f32.partialorder %v15, %v476
  %vm771 = vcmp.lt.f32.partialorder %v14, %v480
  %vm772 = vcmp.lt.f32.partialorder %v15, %v480
  %vm773 = vcmp.lt.f32.partialorder %v14, %v484
  %vm774 = vcmp.lt.f32.partialorder %v15, %v484
  %vm775 = vcmp.lt.f32.partialorder %v14, %v488
  %vm776 = vcmp.lt.f32.partialorder %v15, %v488
  %vm777 = vcmp.lt.f32.partialorder %v16, %v492
  %vm778 = vcmp.lt.f32.partialorder %v17, %v492
  %vm779 = vcmp.lt.f32.partialorder %v16, %v496
  %vm780 = vcmp.lt.f32.partialorder %v17, %v496
  %vm781 = vcmp.lt.f32.partialorder %v16, %v500
  %vm782 = vcmp.lt.f32.partialorder %v17, %v500
  %vm783 = vcmp.lt.f32.partialorder %v16, %v504
  %vm784 = vcmp.lt.f32.partialorder %v17, %v504
  %vm785 = vcmp.lt.f32.partialorder %v16, %v508
  %vm786 = vcmp.lt.f32.partialorder %v17, %v508
  %vm787 = vcmp.lt.f32.partialorder %v16, %v512
  %vm788 = vcmp.lt.f32.partialorder %v17, %v512
  %vm789 = vcmp.lt.f32.partialorder %v16, %v516
  %vm790 = vcmp.lt.f32.partialorder %v17, %v516
  %vm791 = vcmp.lt.f32.partialorder %v16, %v520
  %vm792 = vcmp.lt.f32.partialorder %v17, %v520
  %vm793 = vcmp.lt.f32.partialorder %v16, %v524
  %vm794 = vcmp.lt.f32.partialorder %v17, %v524
  %vm795 = vcmp.lt.f32.partialorder %v16, %v528
  %vm796 = vcmp.lt.f32.partialorder %v17, %v528
  %vm797 = vcmp.lt.f32.partialorder %v16, %v532
  %vm798 = vcmp.lt.f32.partialorder %v17, %v532
  %vm799 = vcmp.lt.f32.partialorder %v16, %v536
  %vm800 = vcmp.lt.f32.partialorder %v17, %v536
  %vm801 = vcmp.lt.f32.partialorder %v16, %v540
  %vm802 = vcmp.lt.f32.partialorder %v17, %v540
  %vm803 = vcmp.lt.f32.partialorder %v16, %v544
  %vm804 = vcmp.lt.f32.partialorder %v17, %v544
  %vm805 = vcmp.lt.f32.partialorder %v16, %v548
  %vm806 = vcmp.lt.f32.partialorder %v17, %v548
  %vm807 = vcmp.lt.f32.partialorder %v16, %v552
  %vm808 = vcmp.lt.f32.partialorder %v17, %v552
  %vm809 = vcmp.lt.f32.partialorder %v18, %v556
  %vm810 = vcmp.lt.f32.partialorder %v19, %v556
  %vm811 = vcmp.lt.f32.partialorder %v18, %v560
  %vm812 = vcmp.lt.f32.partialorder %v19, %v560
  %vm813 = vcmp.lt.f32.partialorder %v18, %v564
  %vm814 = vcmp.lt.f32.partialorder %v19, %v564
  %vm815 = vcmp.lt.f32.partialorder %v18, %v568
  %vm816 = vcmp.lt.f32.partialorder %v19, %v568
  %vm817 = vcmp.lt.f32.partialorder %v18, %v572
  %vm818 = vcmp.lt.f32.partialorder %v19, %v572
  %vm819 = vcmp.lt.f32.partialorder %v18, %v576
  %vm820 = vcmp.lt.f32.partialorder %v19, %v576
  %vm821 = vcmp.lt.f32.partialorder %v18, %v580
  %vm822 = vcmp.lt.f32.partialorder %v19, %v580
  %vm823 = vcmp.lt.f32.partialorder %v18, %v584
  %vm824 = vcmp.lt.f32.partialorder %v19, %v584
  %vm825 = vcmp.lt.f32.partialorder %v18, %v588
  %vm826 = vcmp.lt.f32.partialorder %v19, %v588
  %vm827 = vcmp.lt.f32.partialorder %v18, %v592
  %vm828 = vcmp.lt.f32.partialorder %v19, %v592
  %vm829 = vcmp.lt.f32.partialorder %v18, %v596
  %vm830 = vcmp.lt.f32.partialorder %v19, %v596
  %vm831 = vcmp.lt.f32.partialorder %v18, %v600
  %vm832 = vcmp.lt.f32.partialorder %v19, %v600
  %vm833 = vcmp.lt.f32.partialorder %v18, %v604
  %vm834 = vcmp.lt.f32.partialorder %v19, %v604
  %vm835 = vcmp.lt.f32.partialorder %v18, %v608
  %vm836 = vcmp.lt.f32.partialorder %v19, %v608
  %vm837 = vcmp.lt.f32.partialorder %v18, %v612
  %vm838 = vcmp.lt.f32.partialorder %v19, %v612
  %vm839 = vcmp.lt.f32.partialorder %v18, %v616
  %vm840 = vcmp.lt.f32.partialorder %v19, %v616
  %vm841 = vcmp.lt.f32.partialorder %v20, %v620
  %vm842 = vcmp.lt.f32.partialorder %v21, %v620
  %vm843 = vcmp.lt.f32.partialorder %v20, %v624
  %vm844 = vcmp.lt.f32.partialorder %v21, %v624
  %vm845 = vcmp.lt.f32.partialorder %v20, %v628
  %vm846 = vcmp.lt.f32.partialorder %v21, %v628
  %vm847 = vcmp.lt.f32.partialorder %v20, %v632
  %vm848 = vcmp.lt.f32.partialorder %v21, %v632
  %vm849 = vcmp.lt.f32.partialorder %v20, %v636
  %vm850 = vcmp.lt.f32.partialorder %v21, %v636
  %vm851 = vcmp.lt.f32.partialorder %v20, %v640
  %vm852 = vcmp.lt.f32.partialorder %v21, %v640
  %vm853 = vcmp.lt.f32.partialorder %v20, %v644
  %vm854 = vcmp.lt.f32.partialorder %v21, %v644
  %vm855 = vcmp.lt.f32.partialorder %v20, %v648
  %vm856 = vcmp.lt.f32.partialorder %v21, %v648
  %vm857 = vcmp.lt.f32.partialorder %v20, %v652
  %vm858 = vcmp.lt.f32.partialorder %v21, %v652
  %vm859 = vcmp.lt.f32.partialorder %v20, %v656
  %vm860 = vcmp.lt.f32.partialorder %v21, %v656
  %vm861 = vcmp.lt.f32.partialorder %v20, %v660
  %vm862 = vcmp.lt.f32.partialorder %v21, %v660
  %vm863 = vcmp.lt.f32.partialorder %v20, %v664
  %vm864 = vcmp.lt.f32.partialorder %v21, %v664
  %vm865 = vcmp.lt.f32.partialorder %v20, %v668
  %vm866 = vcmp.lt.f32.partialorder %v21, %v668
  %vm867 = vcmp.lt.f32.partialorder %v20, %v672
  %vm868 = vcmp.lt.f32.partialorder %v21, %v672
  %vm869 = vcmp.lt.f32.partialorder %v20, %v676
  %vm870 = vcmp.lt.f32.partialorder %v21, %v676
  %vm871 = vcmp.lt.f32.partialorder %v20, %v680
  %vm872 = vcmp.lt.f32.partialorder %v21, %v680
  %vm873 = vcmp.eq.f32.partialorder %v14, %v428
  %vm874 = vcmp.eq.f32.partialorder %v15, %v428
  %vm875 = vcmp.eq.f32.partialorder %v14, %v432
  %vm876 = vcmp.eq.f32.partialorder %v15, %v432
  %vm877 = vcmp.eq.f32.partialorder %v14, %v436
  %vm878 = vcmp.eq.f32.partialorder %v15, %v436
  %vm879 = vcmp.eq.f32.partialorder %v14, %v440
  %vm880 = vcmp.eq.f32.partialorder %v15, %v440
  %vm881 = vcmp.eq.f32.partialorder %v14, %v444
  %vm882 = vcmp.eq.f32.partialorder %v15, %v444
  %vm883 = vcmp.eq.f32.partialorder %v14, %v448
  %vm884 = vcmp.eq.f32.partialorder %v15, %v448
  %vm885 = vcmp.eq.f32.partialorder %v14, %v452
  %vm886 = vcmp.eq.f32.partialorder %v15, %v452
  %vm887 = vcmp.eq.f32.partialorder %v14, %v456
  %vm888 = vcmp.eq.f32.partialorder %v15, %v456
  %vm889 = vcmp.eq.f32.partialorder %v14, %v460
  %vm890 = vcmp.eq.f32.partialorder %v15, %v460
  %vm891 = vcmp.eq.f32.partialorder %v14, %v464
  %vm892 = vcmp.eq.f32.partialorder %v15, %v464
  %vm893 = vcmp.eq.f32.partialorder %v14, %v468
  %vm894 = vcmp.eq.f32.partialorder %v15, %v468
  %vm895 = vcmp.eq.f32.partialorder %v14, %v472
  %vm896 = vcmp.eq.f32.partialorder %v15, %v472
  %vm897 = vcmp.eq.f32.partialorder %v14, %v476
  %vm898 = vcmp.eq.f32.partialorder %v15, %v476
  %vm899 = vcmp.eq.f32.partialorder %v14, %v480
  %vm900 = vcmp.eq.f32.partialorder %v15, %v480
  %vm901 = vcmp.eq.f32.partialorder %v14, %v484
  %vm902 = vcmp.eq.f32.partialorder %v15, %v484
  %vm903 = vcmp.eq.f32.partialorder %v14, %v488
  %vm904 = vcmp.eq.f32.partialorder %v15, %v488
  %vm905 = vcmp.eq.f32.partialorder %v16, %v492
  %vm906 = vcmp.eq.f32.partialorder %v17, %v492
  %vm907 = vcmp.eq.f32.partialorder %v16, %v496
  %vm908 = vcmp.eq.f32.partialorder %v17, %v496
  %vm909 = vcmp.eq.f32.partialorder %v16, %v500
  %vm910 = vcmp.eq.f32.partialorder %v17, %v500
  %vm911 = vcmp.eq.f32.partialorder %v16, %v504
  %vm912 = vcmp.eq.f32.partialorder %v17, %v504
  %vm913 = vcmp.eq.f32.partialorder %v16, %v508
  %vm914 = vcmp.eq.f32.partialorder %v17, %v508
  %vm915 = vcmp.eq.f32.partialorder %v16, %v512
  %vm916 = vcmp.eq.f32.partialorder %v17, %v512
  %vm917 = vcmp.eq.f32.partialorder %v16, %v516
  %vm918 = vcmp.eq.f32.partialorder %v17, %v516
  %vm919 = vcmp.eq.f32.partialorder %v16, %v520
  %vm920 = vcmp.eq.f32.partialorder %v17, %v520
  %vm921 = vcmp.eq.f32.partialorder %v16, %v524
  %vm922 = vcmp.eq.f32.partialorder %v17, %v524
  %vm923 = vcmp.eq.f32.partialorder %v16, %v528
  %vm924 = vcmp.eq.f32.partialorder %v17, %v528
  %vm925 = vcmp.eq.f32.partialorder %v16, %v532
  %vm926 = vcmp.eq.f32.partialorder %v17, %v532
  %vm927 = vcmp.eq.f32.partialorder %v16, %v536
  %vm928 = vcmp.eq.f32.partialorder %v17, %v536
  %vm929 = vcmp.eq.f32.partialorder %v16, %v540
  %vm930 = vcmp.eq.f32.partialorder %v17, %v540
  %vm931 = vcmp.eq.f32.partialorder %v16, %v544
  %vm932 = vcmp.eq.f32.partialorder %v17, %v544
  %vm933 = vcmp.eq.f32.partialorder %v16, %v548
  %vm934 = vcmp.eq.f32.partialorder %v17, %v548
  %vm935 = vcmp.eq.f32.partialorder %v16, %v552
  %vm936 = vcmp.eq.f32.partialorder %v17, %v552
  %vm937 = vcmp.eq.f32.partialorder %v18, %v556
  %vm938 = vcmp.eq.f32.partialorder %v19, %v556
  %vm939 = vcmp.eq.f32.partialorder %v18, %v560
  %vm940 = vcmp.eq.f32.partialorder %v19, %v560
  %vm941 = vcmp.eq.f32.partialorder %v18, %v564
  %vm942 = vcmp.eq.f32.partialorder %v19, %v564
  %vm943 = vcmp.eq.f32.partialorder %v18, %v568
  %vm944 = vcmp.eq.f32.partialorder %v19, %v568
  %vm945 = vcmp.eq.f32.partialorder %v18, %v572
  %vm946 = vcmp.eq.f32.partialorder %v19, %v572
  %vm947 = vcmp.eq.f32.partialorder %v18, %v576
  %vm948 = vcmp.eq.f32.partialorder %v19, %v576
  %vm949 = vcmp.eq.f32.partialorder %v18, %v580
  %vm950 = vcmp.eq.f32.partialorder %v19, %v580
  %vm951 = vcmp.eq.f32.partialorder %v18, %v584
  %vm952 = vcmp.eq.f32.partialorder %v19, %v584
  %vm953 = vcmp.eq.f32.partialorder %v18, %v588
  %vm954 = vcmp.eq.f32.partialorder %v19, %v588
  %vm955 = vcmp.eq.f32.partialorder %v18, %v592
  %vm956 = vcmp.eq.f32.partialorder %v19, %v592
  %vm957 = vcmp.eq.f32.partialorder %v18, %v596
  %vm958 = vcmp.eq.f32.partialorder %v19, %v596
  %vm959 = vcmp.eq.f32.partialorder %v18, %v600
  %vm960 = vcmp.eq.f32.partialorder %v19, %v600
  %vm961 = vcmp.eq.f32.partialorder %v18, %v604
  %vm962 = vcmp.eq.f32.partialorder %v19, %v604
  %vm963 = vcmp.eq.f32.partialorder %v18, %v608
  %vm964 = vcmp.eq.f32.partialorder %v19, %v608
  %vm965 = vcmp.eq.f32.partialorder %v18, %v612
  %vm966 = vcmp.eq.f32.partialorder %v19, %v612
  %vm967 = vcmp.eq.f32.partialorder %v18, %v616
  %vm968 = vcmp.eq.f32.partialorder %v19, %v616
  %vm969 = vcmp.eq.f32.partialorder %v20, %v620
  %vm970 = vcmp.eq.f32.partialorder %v21, %v620
  %vm971 = vcmp.eq.f32.partialorder %v20, %v624
  %vm972 = vcmp.eq.f32.partialorder %v21, %v624
  %vm973 = vcmp.eq.f32.partialorder %v20, %v628
  %vm974 = vcmp.eq.f32.partialorder %v21, %v628
  %vm975 = vcmp.eq.f32.partialorder %v20, %v632
  %vm976 = vcmp.eq.f32.partialorder %v21, %v632
  %vm977 = vcmp.eq.f32.partialorder %v20, %v636
  %vm978 = vcmp.eq.f32.partialorder %v21, %v636
  %vm979 = vcmp.eq.f32.partialorder %v20, %v640
  %vm980 = vcmp.eq.f32.partialorder %v21, %v640
  %vm981 = vcmp.eq.f32.partialorder %v20, %v644
  %vm982 = vcmp.eq.f32.partialorder %v21, %v644
  %vm983 = vcmp.eq.f32.partialorder %v20, %v648
  %vm984 = vcmp.eq.f32.partialorder %v21, %v648
  %vm985 = vcmp.eq.f32.partialorder %v20, %v652
  %vm986 = vcmp.eq.f32.partialorder %v21, %v652
  %vm987 = vcmp.eq.f32.partialorder %v20, %v656
  %vm988 = vcmp.eq.f32.partialorder %v21, %v656
  %vm989 = vcmp.eq.f32.partialorder %v20, %v660
  %vm990 = vcmp.eq.f32.partialorder %v21, %v660
  %vm991 = vcmp.eq.f32.partialorder %v20, %v664
  %vm992 = vcmp.eq.f32.partialorder %v21, %v664
  %vm993 = vcmp.eq.f32.partialorder %v20, %v668
  %vm994 = vcmp.eq.f32.partialorder %v21, %v668
  %vm995 = vcmp.eq.f32.partialorder %v20, %v672
  %vm996 = vcmp.eq.f32.partialorder %v21, %v672
  %vm997 = vcmp.eq.f32.partialorder %v20, %v676
  %vm998 = vcmp.eq.f32.partialorder %v21, %v676
  %vm999 = vcmp.eq.f32.partialorder %v20, %v680
  %vm1000 = vcmp.eq.f32.partialorder %v21, %v680
  %vm1001 = vcmp.lt.s32.totalorder %v423, 0
  %vm1002 = vcmp.lt.s32.totalorder %v424, 0
  %vm1003 = vcmp.lt.s32.totalorder %v423, 1
  %vm1004 = vcmp.lt.s32.totalorder %v424, 1
  %vm1005 = vcmp.lt.s32.totalorder %v423, 2
  %vm1006 = vcmp.lt.s32.totalorder %v424, 2
  %vm1007 = vcmp.lt.s32.totalorder %v423, 3
  %vm1008 = vcmp.lt.s32.totalorder %v424, 3
  %vm1009 = vcmp.lt.s32.totalorder %v423, 4
  %vm1010 = vcmp.lt.s32.totalorder %v424, 4
  %vm1011 = vcmp.lt.s32.totalorder %v423, 5
  %vm1012 = vcmp.lt.s32.totalorder %v424, 5
  %vm1013 = vcmp.lt.s32.totalorder %v423, 6
  %vm1014 = vcmp.lt.s32.totalorder %v424, 6
  %vm1015 = vcmp.lt.s32.totalorder %v423, 7
  %vm1016 = vcmp.lt.s32.totalorder %v424, 7
  %vm1017 = vcmp.lt.s32.totalorder %v423, 8
  %vm1018 = vcmp.lt.s32.totalorder %v424, 8
  %vm1019 = vcmp.lt.s32.totalorder %v423, 9
  %vm1020 = vcmp.lt.s32.totalorder %v424, 9
  %vm1021 = vcmp.lt.s32.totalorder %v423, 10
  %vm1022 = vcmp.lt.s32.totalorder %v424, 10
  %vm1023 = vcmp.lt.s32.totalorder %v423, 11
  %vm1024 = vcmp.lt.s32.totalorder %v424, 11
  %vm1025 = vcmp.lt.s32.totalorder %v423, 12
  %vm1026 = vcmp.lt.s32.totalorder %v424, 12
  %vm1027 = vcmp.lt.s32.totalorder %v423, 13
  %vm1028 = vcmp.lt.s32.totalorder %v424, 13
  %vm1029 = vcmp.lt.s32.totalorder %v423, 14
  %vm1030 = vcmp.lt.s32.totalorder %v424, 14
  %vm1031 = vcmp.lt.s32.totalorder %v423, 15
  %vm1032 = vcmp.lt.s32.totalorder %v424, 15
  %vm1033 = vmand %vm873, %vm1001
  %vm1034 = vmand %vm874, %vm1002
  %vm1035 = vmand %vm875, %vm1003
  %vm1036 = vmand %vm876, %vm1004
  %vm1037 = vmand %vm877, %vm1005
  %vm1038 = vmand %vm878, %vm1006
  %vm1039 = vmand %vm879, %vm1007
  %vm1040 = vmand %vm880, %vm1008
  %vm1041 = vmand %vm881, %vm1009
  %vm1042 = vmand %vm882, %vm1010
  %vm1043 = vmand %vm883, %vm1011
  %vm1044 = vmand %vm884, %vm1012
  %vm1045 = vmand %vm885, %vm1013
  %vm1046 = vmand %vm886, %vm1014
  %vm1047 = vmand %vm887, %vm1015
  %vm1048 = vmand %vm888, %vm1016
  %vm1049 = vmand %vm889, %vm1017
  %vm1050 = vmand %vm890, %vm1018
  %vm1051 = vmand %vm891, %vm1019
  %vm1052 = vmand %vm892, %vm1020
  %vm1053 = vmand %vm893, %vm1021
  %vm1054 = vmand %vm894, %vm1022
  %vm1055 = vmand %vm895, %vm1023
  %vm1056 = vmand %vm896, %vm1024
  %vm1057 = vmand %vm897, %vm1025
  %vm1058 = vmand %vm898, %vm1026
  %vm1059 = vmand %vm899, %vm1027
  %vm1060 = vmand %vm900, %vm1028
  %vm1061 = vmand %vm901, %vm1029
  %vm1062 = vmand %vm902, %vm1030
  %vm1063 = vmand %vm903, %vm1031
  %vm1064 = vmand %vm904, %vm1032
  %vm1065 = vmand %vm905, %vm1001
  %vm1066 = vmand %vm906, %vm1002
  %vm1067 = vmand %vm907, %vm1003
  %vm1068 = vmand %vm908, %vm1004
  %vm1069 = vmand %vm909, %vm1005
  %vm1070 = vmand %vm910, %vm1006
  %vm1071 = vmand %vm911, %vm1007
  %vm1072 = vmand %vm912, %vm1008
  %vm1073 = vmand %vm913, %vm1009
  %vm1074 = vmand %vm914, %vm1010
  %vm1075 = vmand %vm915, %vm1011
  %vm1076 = vmand %vm916, %vm1012
  %vm1077 = vmand %vm917, %vm1013
  %vm1078 = vmand %vm918, %vm1014
  %vm1079 = vmand %vm919, %vm1015
  %vm1080 = vmand %vm920, %vm1016
  %vm1081 = vmand %vm921, %vm1017
  %vm1082 = vmand %vm922, %vm1018
  %vm1083 = vmand %vm923, %vm1019
  %vm1084 = vmand %vm924, %vm1020
  %vm1085 = vmand %vm925, %vm1021
  %vm1086 = vmand %vm926, %vm1022
  %vm1087 = vmand %vm927, %vm1023
  %vm1088 = vmand %vm928, %vm1024
  %vm1089 = vmand %vm929, %vm1025
  %vm1090 = vmand %vm930, %vm1026
  %vm1091 = vmand %vm931, %vm1027
  %vm1092 = vmand %vm932, %vm1028
  %vm1093 = vmand %vm933, %vm1029
  %vm1094 = vmand %vm934, %vm1030
  %vm1095 = vmand %vm935, %vm1031
  %vm1096 = vmand %vm936, %vm1032
  %vm1097 = vmand %vm937, %vm1001
  %vm1098 = vmand %vm938, %vm1002
  %vm1099 = vmand %vm939, %vm1003
  %vm1100 = vmand %vm940, %vm1004
  %vm1101 = vmand %vm941, %vm1005
  %vm1102 = vmand %vm942, %vm1006
  %vm1103 = vmand %vm943, %vm1007
  %vm1104 = vmand %vm944, %vm1008
  %vm1105 = vmand %vm945, %vm1009
  %vm1106 = vmand %vm946, %vm1010
  %vm1107 = vmand %vm947, %vm1011
  %vm1108 = vmand %vm948, %vm1012
  %vm1109 = vmand %vm949, %vm1013
  %vm1110 = vmand %vm950, %vm1014
  %vm1111 = vmand %vm951, %vm1015
  %vm1112 = vmand %vm952, %vm1016
  %vm1113 = vmand %vm953, %vm1017
  %vm1114 = vmand %vm954, %vm1018
  %vm1115 = vmand %vm955, %vm1019
  %vm1116 = vmand %vm956, %vm1020
  %vm1117 = vmand %vm957, %vm1021
  %vm1118 = vmand %vm958, %vm1022
  %vm1119 = vmand %vm959, %vm1023
  %vm1120 = vmand %vm960, %vm1024
  %vm1121 = vmand %vm961, %vm1025
  %vm1122 = vmand %vm962, %vm1026
  %vm1123 = vmand %vm963, %vm1027
  %vm1124 = vmand %vm964, %vm1028
  %vm1125 = vmand %vm965, %vm1029
  %vm1126 = vmand %vm966, %vm1030
  %vm1127 = vmand %vm967, %vm1031
  %vm1128 = vmand %vm968, %vm1032
  %vm1129 = vmand %vm969, %vm1001
  %vm1130 = vmand %vm970, %vm1002
  %vm1131 = vmand %vm971, %vm1003
  %vm1132 = vmand %vm972, %vm1004
  %vm1133 = vmand %vm973, %vm1005
  %vm1134 = vmand %vm974, %vm1006
  %vm1135 = vmand %vm975, %vm1007
  %vm1136 = vmand %vm976, %vm1008
  %vm1137 = vmand %vm977, %vm1009
  %vm1138 = vmand %vm978, %vm1010
  %vm1139 = vmand %vm979, %vm1011
  %vm1140 = vmand %vm980, %vm1012
  %vm1141 = vmand %vm981, %vm1013
  %vm1142 = vmand %vm982, %vm1014
  %vm1143 = vmand %vm983, %vm1015
  %vm1144 = vmand %vm984, %vm1016
  %vm1145 = vmand %vm985, %vm1017
  %vm1146 = vmand %vm986, %vm1018
  %vm1147 = vmand %vm987, %vm1019
  %vm1148 = vmand %vm988, %vm1020
  %vm1149 = vmand %vm989, %vm1021
  %vm1150 = vmand %vm990, %vm1022
  %vm1151 = vmand %vm991, %vm1023
  %vm1152 = vmand %vm992, %vm1024
  %vm1153 = vmand %vm993, %vm1025
  %vm1154 = vmand %vm994, %vm1026
  %vm1155 = vmand %vm995, %vm1027
  %vm1156 = vmand %vm996, %vm1028
  %vm1157 = vmand %vm997, %vm1029
  %vm1158 = vmand %vm998, %vm1030
  %vm1159 = vmand %vm999, %vm1031
  %vm1160 = vmand %vm1000, %vm1032
  %vm1161 = vmor %vm745, %vm1033
  %vm1162 = vmor %vm746, %vm1034
  %vm1163 = vmor %vm747, %vm1035
  %vm1164 = vmor %vm748, %vm1036
  %vm1165 = vmor %vm749, %vm1037
  %vm1166 = vmor %vm750, %vm1038
  %vm1167 = vmor %vm751, %vm1039
  %vm1168 = vmor %vm752, %vm1040
  %vm1169 = vmor %vm753, %vm1041
  %vm1170 = vmor %vm754, %vm1042
  %vm1171 = vmor %vm755, %vm1043
  %vm1172 = vmor %vm756, %vm1044
  %vm1173 = vmor %vm757, %vm1045
  %vm1174 = vmor %vm758, %vm1046
  %vm1175 = vmor %vm759, %vm1047
  %vm1176 = vmor %vm760, %vm1048
  %vm1177 = vmor %vm761, %vm1049
  %vm1178 = vmor %vm762, %vm1050
  %vm1179 = vmor %vm763, %vm1051
  %vm1180 = vmor %vm764, %vm1052
  %vm1181 = vmor %vm765, %vm1053
  %vm1182 = vmor %vm766, %vm1054
  %vm1183 = vmor %vm767, %vm1055
  %vm1184 = vmor %vm768, %vm1056
  %vm1185 = vmor %vm769, %vm1057
  %vm1186 = vmor %vm770, %vm1058
  %vm1187 = vmor %vm771, %vm1059
  %vm1188 = vmor %vm772, %vm1060
  %vm1189 = vmor %vm773, %vm1061
  %vm1190 = vmor %vm774, %vm1062
  %vm1191 = vmor %vm775, %vm1063
  %vm1192 = vmor %vm776, %vm1064
  %vm1193 = vmor %vm777, %vm1065
  %vm1194 = vmor %vm778, %vm1066
  %vm1195 = vmor %vm779, %vm1067
  %vm1196 = vmor %vm780, %vm1068
  %vm1197 = vmor %vm781, %vm1069
  %vm1198 = vmor %vm782, %vm1070
  %vm1199 = vmor %vm783, %vm1071
  %vm1200 = vmor %vm784, %vm1072
  %vm1201 = vmor %vm785, %vm1073
  %vm1202 = vmor %vm786, %vm1074
  %vm1203 = vmor %vm787, %vm1075
  %vm1204 = vmor %vm788, %vm1076
  %vm1205 = vmor %vm789, %vm1077
  %vm1206 = vmor %vm790, %vm1078
  %vm1207 = vmor %vm791, %vm1079
  %vm1208 = vmor %vm792, %vm1080
  %vm1209 = vmor %vm793, %vm1081
  %vm1210 = vmor %vm794, %vm1082
  %vm1211 = vmor %vm795, %vm1083
  %vm1212 = vmor %vm796, %vm1084
  %vm1213 = vmor %vm797, %vm1085
  %vm1214 = vmor %vm798, %vm1086
  %vm1215 = vmor %vm799, %vm1087
  %vm1216 = vmor %vm800, %vm1088
  %vm1217 = vmor %vm801, %vm1089
  %vm1218 = vmor %vm802, %vm1090
  %vm1219 = vmor %vm803, %vm1091
  %vm1220 = vmor %vm804, %vm1092
  %vm1221 = vmor %vm805, %vm1093
  %vm1222 = vmor %vm806, %vm1094
  %vm1223 = vmor %vm807, %vm1095
  %vm1224 = vmor %vm808, %vm1096
  %vm1225 = vmor %vm809, %vm1097
  %vm1226 = vmor %vm810, %vm1098
  %vm1227 = vmor %vm811, %vm1099
  %vm1228 = vmor %vm812, %vm1100
  %vm1229 = vmor %vm813, %vm1101
  %vm1230 = vmor %vm814, %vm1102
  %vm1231 = vmor %vm815, %vm1103
  %vm1232 = vmor %vm816, %vm1104
  %vm1233 = vmor %vm817, %vm1105
  %vm1234 = vmor %vm818, %vm1106
  %vm1235 = vmor %vm819, %vm1107
  %vm1236 = vmor %vm820, %vm1108
  %vm1237 = vmor %vm821, %vm1109
  %vm1238 = vmor %vm822, %vm1110
  %vm1239 = vmor %vm823, %vm1111
  %vm1240 = vmor %vm824, %vm1112
  %vm1241 = vmor %vm825, %vm1113
  %vm1242 = vmor %vm826, %vm1114
  %vm1243 = vmor %vm827, %vm1115
  %vm1244 = vmor %vm828, %vm1116
  %vm1245 = vmor %vm829, %vm1117
  %vm1246 = vmor %vm830, %vm1118
  %vm1247 = vmor %vm831, %vm1119
  %vm1248 = vmor %vm832, %vm1120
  %vm1249 = vmor %vm833, %vm1121
  %vm1250 = vmor %vm834, %vm1122
  %vm1251 = vmor %vm835, %vm1123
  %vm1252 = vmor %vm836, %vm1124
  %vm1253 = vmor %vm837, %vm1125
  %vm1254 = vmor %vm838, %vm1126
  %vm1255 = vmor %vm839, %vm1127
  %vm1256 = vmor %vm840, %vm1128
  %vm1257 = vmor %vm841, %vm1129
  %vm1258 = vmor %vm842, %vm1130
  %vm1259 = vmor %vm843, %vm1131
  %vm1260 = vmor %vm844, %vm1132
  %vm1261 = vmor %vm845, %vm1133
  %vm1262 = vmor %vm846, %vm1134
  %vm1263 = vmor %vm847, %vm1135
  %vm1264 = vmor %vm848, %vm1136
  %vm1265 = vmor %vm849, %vm1137
  %vm1266 = vmor %vm850, %vm1138
  %vm1267 = vmor %vm851, %vm1139
  %vm1268 = vmor %vm852, %vm1140
  %vm1269 = vmor %vm853, %vm1141
  %vm1270 = vmor %vm854, %vm1142
  %vm1271 = vmor %vm855, %vm1143
  %vm1272 = vmor %vm856, %vm1144
  %vm1273 = vmor %vm857, %vm1145
  %vm1274 = vmor %vm858, %vm1146
  %vm1275 = vmor %vm859, %vm1147
  %vm1276 = vmor %vm860, %vm1148
  %vm1277 = vmor %vm861, %vm1149
  %vm1278 = vmor %vm862, %vm1150
  %vm1279 = vmor %vm863, %vm1151
  %vm1280 = vmor %vm864, %vm1152
  %vm1281 = vmor %vm865, %vm1153
  %vm1282 = vmor %vm866, %vm1154
  %vm1283 = vmor %vm867, %vm1155
  %vm1284 = vmor %vm868, %vm1156
  %vm1285 = vmor %vm869, %vm1157
  %vm1286 = vmor %vm870, %vm1158
  %vm1287 = vmor %vm871, %vm1159
  %vm1288 = vmor %vm872, %vm1160
  %v1289 = vsel %vm1161, 1, 0
  %v1290 = vsel %vm1162, 1, 0
  %v1291 = vsel %vm1163, 1, 0
  %v1292 = vsel %vm1164, 1, 0
  %v1293 = vsel %vm1165, 1, 0
  %v1294 = vsel %vm1166, 1, 0
  %v1295 = vsel %vm1167, 1, 0
  %v1296 = vsel %vm1168, 1, 0
  %v1297 = vsel %vm1169, 1, 0
  %v1298 = vsel %vm1170, 1, 0
  %v1299 = vsel %vm1171, 1, 0
  %v1300 = vsel %vm1172, 1, 0
  %v1301 = vsel %vm1173, 1, 0
  %v1302 = vsel %vm1174, 1, 0
  %v1303 = vsel %vm1175, 1, 0
  %v1304 = vsel %vm1176, 1, 0
  %v1305 = vsel %vm1177, 1, 0
  %v1306 = vsel %vm1178, 1, 0
  %v1307 = vsel %vm1179, 1, 0
  %v1308 = vsel %vm1180, 1, 0
  %v1309 = vsel %vm1181, 1, 0
  %v1310 = vsel %vm1182, 1, 0
  %v1311 = vsel %vm1183, 1, 0
  %v1312 = vsel %vm1184, 1, 0
  %v1313 = vsel %vm1185, 1, 0
  %v1314 = vsel %vm1186, 1, 0
  %v1315 = vsel %vm1187, 1, 0
  %v1316 = vsel %vm1188, 1, 0
  %v1317 = vsel %vm1189, 1, 0
  %v1318 = vsel %vm1190, 1, 0
  %v1319 = vsel %vm1191, 1, 0
  %v1320 = vsel %vm1192, 1, 0
  %v1321 = vsel %vm1193, 1, 0
  %v1322 = vsel %vm1194, 1, 0
  %v1323 = vsel %vm1195, 1, 0
  %v1324 = vsel %vm1196, 1, 0
  %v1325 = vsel %vm1197, 1, 0
  %v1326 = vsel %vm1198, 1, 0
  %v1327 = vsel %vm1199, 1, 0
  %v1328 = vsel %vm1200, 1, 0
  %v1329 = vsel %vm1201, 1, 0
  %v1330 = vsel %vm1202, 1, 0
  %v1331 = vsel %vm1203, 1, 0
  %v1332 = vsel %vm1204, 1, 0
  %v1333 = vsel %vm1205, 1, 0
  %v1334 = vsel %vm1206, 1, 0
  %v1335 = vsel %vm1207, 1, 0
  %v1336 = vsel %vm1208, 1, 0
  %v1337 = vsel %vm1209, 1, 0
  %v1338 = vsel %vm1210, 1, 0
  %v1339 = vsel %vm1211, 1, 0
  %v1340 = vsel %vm1212, 1, 0
  %v1341 = vsel %vm1213, 1, 0
  %v1342 = vsel %vm1214, 1, 0
  %v1343 = vsel %vm1215, 1, 0
  %v1344 = vsel %vm1216, 1, 0
  %v1345 = vsel %vm1217, 1, 0
  %v1346 = vsel %vm1218, 1, 0
  %v1347 = vsel %vm1219, 1, 0
  %v1348 = vsel %vm1220, 1, 0
  %v1349 = vsel %vm1221, 1, 0
  %v1350 = vsel %vm1222, 1, 0
  %v1351 = vsel %vm1223, 1, 0
  %v1352 = vsel %vm1224, 1, 0
  %v1353 = vsel %vm1225, 1, 0
  %v1354 = vsel %vm1226, 1, 0
  %v1355 = vsel %vm1227, 1, 0
  %v1356 = vsel %vm1228, 1, 0
  %v1357 = vsel %vm1229, 1, 0
  %v1358 = vsel %vm1230, 1, 0
  %v1359 = vsel %vm1231, 1, 0
  %v1360 = vsel %vm1232, 1, 0
  %v1361 = vsel %vm1233, 1, 0
  %v1362 = vsel %vm1234, 1, 0
  %v1363 = vsel %vm1235, 1, 0
  %v1364 = vsel %vm1236, 1, 0
  %v1365 = vsel %vm1237, 1, 0
  %v1366 = vsel %vm1238, 1, 0
  %v1367 = vsel %vm1239, 1, 0
  %v1368 = vsel %vm1240, 1, 0
  %v1369 = vsel %vm1241, 1, 0
  %v1370 = vsel %vm1242, 1, 0
  %v1371 = vsel %vm1243, 1, 0
  %v1372 = vsel %vm1244, 1, 0
  %v1373 = vsel %vm1245, 1, 0
  %v1374 = vsel %vm1246, 1, 0
  %v1375 = vsel %vm1247, 1, 0
  %v1376 = vsel %vm1248, 1, 0
  %v1377 = vsel %vm1249, 1, 0
  %v1378 = vsel %vm1250, 1, 0
  %v1379 = vsel %vm1251, 1, 0
  %v1380 = vsel %vm1252, 1, 0
  %v1381 = vsel %vm1253, 1, 0
  %v1382 = vsel %vm1254, 1, 0
  %v1383 = vsel %vm1255, 1, 0
  %v1384 = vsel %vm1256, 1, 0
  %v1385 = vsel %vm1257, 1, 0
  %v1386 = vsel %vm1258, 1, 0
  %v1387 = vsel %vm1259, 1, 0
  %v1388 = vsel %vm1260, 1, 0
  %v1389 = vsel %vm1261, 1, 0
  %v1390 = vsel %vm1262, 1, 0
  %v1391 = vsel %vm1263, 1, 0
  %v1392 = vsel %vm1264, 1, 0
  %v1393 = vsel %vm1265, 1, 0
  %v1394 = vsel %vm1266, 1, 0
  %v1395 = vsel %vm1267, 1, 0
  %v1396 = vsel %vm1268, 1, 0
  %v1397 = vsel %vm1269, 1, 0
  %v1398 = vsel %vm1270, 1, 0
  %v1399 = vsel %vm1271, 1, 0
  %v1400 = vsel %vm1272, 1, 0
  %v1401 = vsel %vm1273, 1, 0
  %v1402 = vsel %vm1274, 1, 0
  %v1403 = vsel %vm1275, 1, 0
  %v1404 = vsel %vm1276, 1, 0
  %v1405 = vsel %vm1277, 1, 0
  %v1406 = vsel %vm1278, 1, 0
  %v1407 = vsel %vm1279, 1, 0
  %v1408 = vsel %vm1280, 1, 0
  %v1409 = vsel %vm1281, 1, 0
  %v1410 = vsel %vm1282, 1, 0
  %v1411 = vsel %vm1283, 1, 0
  %v1412 = vsel %vm1284, 1, 0
  %v1413 = vsel %vm1285, 1, 0
  %v1414 = vsel %vm1286, 1, 0
  %v1415 = vsel %vm1287, 1, 0
  %v1416 = vsel %vm1288, 1, 0
  %vm1417 = vcmask 130048
  %v1418 = vsel %vm1417, %v1289, 0
  %v1419 = vsel %vm1417, %v1290, 0
  %v1420 = vadd.s32 %v1418, %v1419
  %v1421 = vrot.slane %v1420, 4
  %v1422 = vadd.s32 %v1420, %v1421
  %v1423 = vrot.slane %v1422, 2
  %v1424 = vadd.s32 %v1422, %v1423
  %v1425 = vrot.slane %v1424, 1
  %v1426 = vadd.s32 %v1424, %v1425
  %v1427 = vsel %vm1417, %v1291, 0
  %v1428 = vsel %vm1417, %v1292, 0
  %v1429 = vadd.s32 %v1427, %v1428
  %v1430 = vrot.slane %v1429, 4
  %v1431 = vadd.s32 %v1429, %v1430
  %v1432 = vrot.slane %v1431, 2
  %v1433 = vadd.s32 %v1431, %v1432
  %v1434 = vrot.slane %v1433, 1
  %v1435 = vadd.s32 %v1433, %v1434
  %v1436 = vsel %vm1417, %v1293, 0
  %v1437 = vsel %vm1417, %v1294, 0
  %v1438 = vadd.s32 %v1436, %v1437
  %v1439 = vrot.slane %v1438, 4
  %v1440 = vadd.s32 %v1438, %v1439
  %v1441 = vrot.slane %v1440, 2
  %v1442 = vadd.s32 %v1440, %v1441
  %v1443 = vrot.slane %v1442, 1
  %v1444 = vadd.s32 %v1442, %v1443
  %v1445 = vsel %vm1417, %v1295, 0
  %v1446 = vsel %vm1417, %v1296, 0
  %v1447 = vadd.s32 %v1445, %v1446
  %v1448 = vrot.slane %v1447, 4
  %v1449 = vadd.s32 %v1447, %v1448
  %v1450 = vrot.slane %v1449, 2
  %v1451 = vadd.s32 %v1449, %v1450
  %v1452 = vrot.slane %v1451, 1
  %v1453 = vadd.s32 %v1451, %v1452
  %v1454 = vsel %vm1417, %v1297, 0
  %v1455 = vsel %vm1417, %v1298, 0
  %v1456 = vadd.s32 %v1454, %v1455
  %v1457 = vrot.slane %v1456, 4
  %v1458 = vadd.s32 %v1456, %v1457
  %v1459 = vrot.slane %v1458, 2
  %v1460 = vadd.s32 %v1458, %v1459
  %v1461 = vrot.slane %v1460, 1
  %v1462 = vadd.s32 %v1460, %v1461
  %v1463 = vsel %vm1417, %v1299, 0
  %v1464 = vsel %vm1417, %v1300, 0
  %v1465 = vadd.s32 %v1463, %v1464
  %v1466 = vrot.slane %v1465, 4
  %v1467 = vadd.s32 %v1465, %v1466
  %v1468 = vrot.slane %v1467, 2
  %v1469 = vadd.s32 %v1467, %v1468
  %v1470 = vrot.slane %v1469, 1
  %v1471 = vadd.s32 %v1469, %v1470
  %v1472 = vsel %vm1417, %v1301, 0
  %v1473 = vsel %vm1417, %v1302, 0
  %v1474 = vadd.s32 %v1472, %v1473
  %v1475 = vrot.slane %v1474, 4
  %v1476 = vadd.s32 %v1474, %v1475
  %v1477 = vrot.slane %v1476, 2
  %v1478 = vadd.s32 %v1476, %v1477
  %v1479 = vrot.slane %v1478, 1
  %v1480 = vadd.s32 %v1478, %v1479
  %v1481 = vsel %vm1417, %v1303, 0
  %v1482 = vsel %vm1417, %v1304, 0
  %v1483 = vadd.s32 %v1481, %v1482
  %v1484 = vrot.slane %v1483, 4
  %v1485 = vadd.s32 %v1483, %v1484
  %v1486 = vrot.slane %v1485, 2
  %v1487 = vadd.s32 %v1485, %v1486
  %v1488 = vrot.slane %v1487, 1
  %v1489 = vadd.s32 %v1487, %v1488
  %v1490 = vsel %vm1417, %v1305, 0
  %v1491 = vsel %vm1417, %v1306, 0
  %v1492 = vadd.s32 %v1490, %v1491
  %v1493 = vrot.slane %v1492, 4
  %v1494 = vadd.s32 %v1492, %v1493
  %v1495 = vrot.slane %v1494, 2
  %v1496 = vadd.s32 %v1494, %v1495
  %v1497 = vrot.slane %v1496, 1
  %v1498 = vadd.s32 %v1496, %v1497
  %v1499 = vsel %vm1417, %v1307, 0
  %v1500 = vsel %vm1417, %v1308, 0
  %v1501 = vadd.s32 %v1499, %v1500
  %v1502 = vrot.slane %v1501, 4
  %v1503 = vadd.s32 %v1501, %v1502
  %v1504 = vrot.slane %v1503, 2
  %v1505 = vadd.s32 %v1503, %v1504
  %v1506 = vrot.slane %v1505, 1
  %v1507 = vadd.s32 %v1505, %v1506
  %v1508 = vsel %vm1417, %v1309, 0
  %v1509 = vsel %vm1417, %v1310, 0
  %v1510 = vadd.s32 %v1508, %v1509
  %v1511 = vrot.slane %v1510, 4
  %v1512 = vadd.s32 %v1510, %v1511
  %v1513 = vrot.slane %v1512, 2
  %v1514 = vadd.s32 %v1512, %v1513
  %v1515 = vrot.slane %v1514, 1
  %v1516 = vadd.s32 %v1514, %v1515
  %v1517 = vsel %vm1417, %v1311, 0
  %v1518 = vsel %vm1417, %v1312, 0
  %v1519 = vadd.s32 %v1517, %v1518
  %v1520 = vrot.slane %v1519, 4
  %v1521 = vadd.s32 %v1519, %v1520
  %v1522 = vrot.slane %v1521, 2
  %v1523 = vadd.s32 %v1521, %v1522
  %v1524 = vrot.slane %v1523, 1
  %v1525 = vadd.s32 %v1523, %v1524
  %v1526 = vsel %vm1417, %v1313, 0
  %v1527 = vsel %vm1417, %v1314, 0
  %v1528 = vadd.s32 %v1526, %v1527
  %v1529 = vrot.slane %v1528, 4
  %v1530 = vadd.s32 %v1528, %v1529
  %v1531 = vrot.slane %v1530, 2
  %v1532 = vadd.s32 %v1530, %v1531
  %v1533 = vrot.slane %v1532, 1
  %v1534 = vadd.s32 %v1532, %v1533
  %v1535 = vsel %vm1417, %v1315, 0
  %v1536 = vsel %vm1417, %v1316, 0
  %v1537 = vadd.s32 %v1535, %v1536
  %v1538 = vrot.slane %v1537, 4
  %v1539 = vadd.s32 %v1537, %v1538
  %v1540 = vrot.slane %v1539, 2
  %v1541 = vadd.s32 %v1539, %v1540
  %v1542 = vrot.slane %v1541, 1
  %v1543 = vadd.s32 %v1541, %v1542
  %v1544 = vsel %vm1417, %v1317, 0
  %v1545 = vsel %vm1417, %v1318, 0
  %v1546 = vadd.s32 %v1544, %v1545
  %v1547 = vrot.slane %v1546, 4
  %v1548 = vadd.s32 %v1546, %v1547
  %v1549 = vrot.slane %v1548, 2
  %v1550 = vadd.s32 %v1548, %v1549
  %v1551 = vrot.slane %v1550, 1
  %v1552 = vadd.s32 %v1550, %v1551
  %v1553 = vsel %vm1417, %v1319, 0
  %v1554 = vsel %vm1417, %v1320, 0
  %v1555 = vadd.s32 %v1553, %v1554
  %v1556 = vrot.slane %v1555, 4
  %v1557 = vadd.s32 %v1555, %v1556
  %v1558 = vrot.slane %v1557, 2
  %v1559 = vadd.s32 %v1557, %v1558
  %v1560 = vrot.slane %v1559, 1
  %v1561 = vadd.s32 %v1559, %v1560
  %v1562 = vsel %vm1417, %v1321, 0
  %v1563 = vsel %vm1417, %v1322, 0
  %v1564 = vadd.s32 %v1562, %v1563
  %v1565 = vrot.slane %v1564, 4
  %v1566 = vadd.s32 %v1564, %v1565
  %v1567 = vrot.slane %v1566, 2
  %v1568 = vadd.s32 %v1566, %v1567
  %v1569 = vrot.slane %v1568, 1
  %v1570 = vadd.s32 %v1568, %v1569
  %v1571 = vsel %vm1417, %v1323, 0
  %v1572 = vsel %vm1417, %v1324, 0
  %v1573 = vadd.s32 %v1571, %v1572
  %v1574 = vrot.slane %v1573, 4
  %v1575 = vadd.s32 %v1573, %v1574
  %v1576 = vrot.slane %v1575, 2
  %v1577 = vadd.s32 %v1575, %v1576
  %v1578 = vrot.slane %v1577, 1
  %v1579 = vadd.s32 %v1577, %v1578
  %v1580 = vsel %vm1417, %v1325, 0
  %v1581 = vsel %vm1417, %v1326, 0
  %v1582 = vadd.s32 %v1580, %v1581
  %v1583 = vrot.slane %v1582, 4
  %v1584 = vadd.s32 %v1582, %v1583
  %v1585 = vrot.slane %v1584, 2
  %v1586 = vadd.s32 %v1584, %v1585
  %v1587 = vrot.slane %v1586, 1
  %v1588 = vadd.s32 %v1586, %v1587
  %v1589 = vsel %vm1417, %v1327, 0
  %v1590 = vsel %vm1417, %v1328, 0
  %v1591 = vadd.s32 %v1589, %v1590
  %v1592 = vrot.slane %v1591, 4
  %v1593 = vadd.s32 %v1591, %v1592
  %v1594 = vrot.slane %v1593, 2
  %v1595 = vadd.s32 %v1593, %v1594
  %v1596 = vrot.slane %v1595, 1
  %v1597 = vadd.s32 %v1595, %v1596
  %v1598 = vsel %vm1417, %v1329, 0
  %v1599 = vsel %vm1417, %v1330, 0
  %v1600 = vadd.s32 %v1598, %v1599
  %v1601 = vrot.slane %v1600, 4
  %v1602 = vadd.s32 %v1600, %v1601
  %v1603 = vrot.slane %v1602, 2
  %v1604 = vadd.s32 %v1602, %v1603
  %v1605 = vrot.slane %v1604, 1
  %v1606 = vadd.s32 %v1604, %v1605
  %v1607 = vsel %vm1417, %v1331, 0
  %v1608 = vsel %vm1417, %v1332, 0
  %v1609 = vadd.s32 %v1607, %v1608
  %v1610 = vrot.slane %v1609, 4
  %v1611 = vadd.s32 %v1609, %v1610
  %v1612 = vrot.slane %v1611, 2
  %v1613 = vadd.s32 %v1611, %v1612
  %v1614 = vrot.slane %v1613, 1
  %v1615 = vadd.s32 %v1613, %v1614
  %v1616 = vsel %vm1417, %v1333, 0
  %v1617 = vsel %vm1417, %v1334, 0
  %v1618 = vadd.s32 %v1616, %v1617
  %v1619 = vrot.slane %v1618, 4
  %v1620 = vadd.s32 %v1618, %v1619
  %v1621 = vrot.slane %v1620, 2
  %v1622 = vadd.s32 %v1620, %v1621
  %v1623 = vrot.slane %v1622, 1
  %v1624 = vadd.s32 %v1622, %v1623
  %v1625 = vsel %vm1417, %v1335, 0
  %v1626 = vsel %vm1417, %v1336, 0
  %v1627 = vadd.s32 %v1625, %v1626
  %v1628 = vrot.slane %v1627, 4
  %v1629 = vadd.s32 %v1627, %v1628
  %v1630 = vrot.slane %v1629, 2
  %v1631 = vadd.s32 %v1629, %v1630
  %v1632 = vrot.slane %v1631, 1
  %v1633 = vadd.s32 %v1631, %v1632
  %v1634 = vsel %vm1417, %v1337, 0
  %v1635 = vsel %vm1417, %v1338, 0
  %v1636 = vadd.s32 %v1634, %v1635
  %v1637 = vrot.slane %v1636, 4
  %v1638 = vadd.s32 %v1636, %v1637
  %v1639 = vrot.slane %v1638, 2
  %v1640 = vadd.s32 %v1638, %v1639
  %v1641 = vrot.slane %v1640, 1
  %v1642 = vadd.s32 %v1640, %v1641
  %v1643 = vsel %vm1417, %v1339, 0
  %v1644 = vsel %vm1417, %v1340, 0
  %v1645 = vadd.s32 %v1643, %v1644
  %v1646 = vrot.slane %v1645, 4
  %v1647 = vadd.s32 %v1645, %v1646
  %v1648 = vrot.slane %v1647, 2
  %v1649 = vadd.s32 %v1647, %v1648
  %v1650 = vrot.slane %v1649, 1
  %v1651 = vadd.s32 %v1649, %v1650
  %v1652 = vsel %vm1417, %v1341, 0
  %v1653 = vsel %vm1417, %v1342, 0
  %v1654 = vadd.s32 %v1652, %v1653
  %v1655 = vrot.slane %v1654, 4
  %v1656 = vadd.s32 %v1654, %v1655
  %v1657 = vrot.slane %v1656, 2
  %v1658 = vadd.s32 %v1656, %v1657
  %v1659 = vrot.slane %v1658, 1
  %v1660 = vadd.s32 %v1658, %v1659
  %v1661 = vsel %vm1417, %v1343, 0
  %v1662 = vsel %vm1417, %v1344, 0
  %v1663 = vadd.s32 %v1661, %v1662
  %v1664 = vrot.slane %v1663, 4
  %v1665 = vadd.s32 %v1663, %v1664
  %v1666 = vrot.slane %v1665, 2
  %v1667 = vadd.s32 %v1665, %v1666
  %v1668 = vrot.slane %v1667, 1
  %v1669 = vadd.s32 %v1667, %v1668
  %v1670 = vsel %vm1417, %v1345, 0
  %v1671 = vsel %vm1417, %v1346, 0
  %v1672 = vadd.s32 %v1670, %v1671
  %v1673 = vrot.slane %v1672, 4
  %v1674 = vadd.s32 %v1672, %v1673
  %v1675 = vrot.slane %v1674, 2
  %v1676 = vadd.s32 %v1674, %v1675
  %v1677 = vrot.slane %v1676, 1
  %v1678 = vadd.s32 %v1676, %v1677
  %v1679 = vsel %vm1417, %v1347, 0
  %v1680 = vsel %vm1417, %v1348, 0
  %v1681 = vadd.s32 %v1679, %v1680
  %v1682 = vrot.slane %v1681, 4
  %v1683 = vadd.s32 %v1681, %v1682
  %v1684 = vrot.slane %v1683, 2
  %v1685 = vadd.s32 %v1683, %v1684
  %v1686 = vrot.slane %v1685, 1
  %v1687 = vadd.s32 %v1685, %v1686
  %v1688 = vsel %vm1417, %v1349, 0
  %v1689 = vsel %vm1417, %v1350, 0
  %v1690 = vadd.s32 %v1688, %v1689
  %v1691 = vrot.slane %v1690, 4
  %v1692 = vadd.s32 %v1690, %v1691
  %v1693 = vrot.slane %v1692, 2
  %v1694 = vadd.s32 %v1692, %v1693
  %v1695 = vrot.slane %v1694, 1
  %v1696 = vadd.s32 %v1694, %v1695
  %v1697 = vsel %vm1417, %v1351, 0
  %v1698 = vsel %vm1417, %v1352, 0
  %v1699 = vadd.s32 %v1697, %v1698
  %v1700 = vrot.slane %v1699, 4
  %v1701 = vadd.s32 %v1699, %v1700
  %v1702 = vrot.slane %v1701, 2
  %v1703 = vadd.s32 %v1701, %v1702
  %v1704 = vrot.slane %v1703, 1
  %v1705 = vadd.s32 %v1703, %v1704
  %v1706 = vsel %vm1417, %v1353, 0
  %v1707 = vsel %vm1417, %v1354, 0
  %v1708 = vadd.s32 %v1706, %v1707
  %v1709 = vrot.slane %v1708, 4
  %v1710 = vadd.s32 %v1708, %v1709
  %v1711 = vrot.slane %v1710, 2
  %v1712 = vadd.s32 %v1710, %v1711
  %v1713 = vrot.slane %v1712, 1
  %v1714 = vadd.s32 %v1712, %v1713
  %v1715 = vsel %vm1417, %v1355, 0
  %v1716 = vsel %vm1417, %v1356, 0
  %v1717 = vadd.s32 %v1715, %v1716
  %v1718 = vrot.slane %v1717, 4
  %v1719 = vadd.s32 %v1717, %v1718
  %v1720 = vrot.slane %v1719, 2
  %v1721 = vadd.s32 %v1719, %v1720
  %v1722 = vrot.slane %v1721, 1
  %v1723 = vadd.s32 %v1721, %v1722
  %v1724 = vsel %vm1417, %v1357, 0
  %v1725 = vsel %vm1417, %v1358, 0
  %v1726 = vadd.s32 %v1724, %v1725
  %v1727 = vrot.slane %v1726, 4
  %v1728 = vadd.s32 %v1726, %v1727
  %v1729 = vrot.slane %v1728, 2
  %v1730 = vadd.s32 %v1728, %v1729
  %v1731 = vrot.slane %v1730, 1
  %v1732 = vadd.s32 %v1730, %v1731
  %v1733 = vsel %vm1417, %v1359, 0
  %v1734 = vsel %vm1417, %v1360, 0
  %v1735 = vadd.s32 %v1733, %v1734
  %v1736 = vrot.slane %v1735, 4
  %v1737 = vadd.s32 %v1735, %v1736
  %v1738 = vrot.slane %v1737, 2
  %v1739 = vadd.s32 %v1737, %v1738
  %v1740 = vrot.slane %v1739, 1
  %v1741 = vadd.s32 %v1739, %v1740
  %v1742 = vsel %vm1417, %v1361, 0
  %v1743 = vsel %vm1417, %v1362, 0
  %v1744 = vadd.s32 %v1742, %v1743
  %v1745 = vrot.slane %v1744, 4
  %v1746 = vadd.s32 %v1744, %v1745
  %v1747 = vrot.slane %v1746, 2
  %v1748 = vadd.s32 %v1746, %v1747
  %v1749 = vrot.slane %v1748, 1
  %v1750 = vadd.s32 %v1748, %v1749
  %v1751 = vsel %vm1417, %v1363, 0
  %v1752 = vsel %vm1417, %v1364, 0
  %v1753 = vadd.s32 %v1751, %v1752
  %v1754 = vrot.slane %v1753, 4
  %v1755 = vadd.s32 %v1753, %v1754
  %v1756 = vrot.slane %v1755, 2
  %v1757 = vadd.s32 %v1755, %v1756
  %v1758 = vrot.slane %v1757, 1
  %v1759 = vadd.s32 %v1757, %v1758
  %v1760 = vsel %vm1417, %v1365, 0
  %v1761 = vsel %vm1417, %v1366, 0
  %v1762 = vadd.s32 %v1760, %v1761
  %v1763 = vrot.slane %v1762, 4
  %v1764 = vadd.s32 %v1762, %v1763
  %v1765 = vrot.slane %v1764, 2
  %v1766 = vadd.s32 %v1764, %v1765
  %v1767 = vrot.slane %v1766, 1
  %v1768 = vadd.s32 %v1766, %v1767
  %v1769 = vsel %vm1417, %v1367, 0
  %v1770 = vsel %vm1417, %v1368, 0
  %v1771 = vadd.s32 %v1769, %v1770
  %v1772 = vrot.slane %v1771, 4
  %v1773 = vadd.s32 %v1771, %v1772
  %v1774 = vrot.slane %v1773, 2
  %v1775 = vadd.s32 %v1773, %v1774
  %v1776 = vrot.slane %v1775, 1
  %v1777 = vadd.s32 %v1775, %v1776
  %v1778 = vsel %vm1417, %v1369, 0
  %v1779 = vsel %vm1417, %v1370, 0
  %v1780 = vadd.s32 %v1778, %v1779
  %v1781 = vrot.slane %v1780, 4
  %v1782 = vadd.s32 %v1780, %v1781
  %v1783 = vrot.slane %v1782, 2
  %v1784 = vadd.s32 %v1782, %v1783
  %v1785 = vrot.slane %v1784, 1
  %v1786 = vadd.s32 %v1784, %v1785
  %v1787 = vsel %vm1417, %v1371, 0
  %v1788 = vsel %vm1417, %v1372, 0
  %v1789 = vadd.s32 %v1787, %v1788
  %v1790 = vrot.slane %v1789, 4
  %v1791 = vadd.s32 %v1789, %v1790
  %v1792 = vrot.slane %v1791, 2
  %v1793 = vadd.s32 %v1791, %v1792
  %v1794 = vrot.slane %v1793, 1
  %v1795 = vadd.s32 %v1793, %v1794
  %v1796 = vsel %vm1417, %v1373, 0
  %v1797 = vsel %vm1417, %v1374, 0
  %v1798 = vadd.s32 %v1796, %v1797
  %v1799 = vrot.slane %v1798, 4
  %v1800 = vadd.s32 %v1798, %v1799
  %v1801 = vrot.slane %v1800, 2
  %v1802 = vadd.s32 %v1800, %v1801
  %v1803 = vrot.slane %v1802, 1
  %v1804 = vadd.s32 %v1802, %v1803
  %v1805 = vsel %vm1417, %v1375, 0
  %v1806 = vsel %vm1417, %v1376, 0
  %v1807 = vadd.s32 %v1805, %v1806
  %v1808 = vrot.slane %v1807, 4
  %v1809 = vadd.s32 %v1807, %v1808
  %v1810 = vrot.slane %v1809, 2
  %v1811 = vadd.s32 %v1809, %v1810
  %v1812 = vrot.slane %v1811, 1
  %v1813 = vadd.s32 %v1811, %v1812
  %v1814 = vsel %vm1417, %v1377, 0
  %v1815 = vsel %vm1417, %v1378, 0
  %v1816 = vadd.s32 %v1814, %v1815
  %v1817 = vrot.slane %v1816, 4
  %v1818 = vadd.s32 %v1816, %v1817
  %v1819 = vrot.slane %v1818, 2
  %v1820 = vadd.s32 %v1818, %v1819
  %v1821 = vrot.slane %v1820, 1
  %v1822 = vadd.s32 %v1820, %v1821
  %v1823 = vsel %vm1417, %v1379, 0
  %v1824 = vsel %vm1417, %v1380, 0
  %v1825 = vadd.s32 %v1823, %v1824
  %v1826 = vrot.slane %v1825, 4
  %v1827 = vadd.s32 %v1825, %v1826
  %v1828 = vrot.slane %v1827, 2
  %v1829 = vadd.s32 %v1827, %v1828
  %v1830 = vrot.slane %v1829, 1
  %v1831 = vadd.s32 %v1829, %v1830
  %v1832 = vsel %vm1417, %v1381, 0
  %v1833 = vsel %vm1417, %v1382, 0
  %v1834 = vadd.s32 %v1832, %v1833
  %v1835 = vrot.slane %v1834, 4
  %v1836 = vadd.s32 %v1834, %v1835
  %v1837 = vrot.slane %v1836, 2
  %v1838 = vadd.s32 %v1836, %v1837
  %v1839 = vrot.slane %v1838, 1
  %v1840 = vadd.s32 %v1838, %v1839
  %v1841 = vsel %vm1417, %v1383, 0
  %v1842 = vsel %vm1417, %v1384, 0
  %v1843 = vadd.s32 %v1841, %v1842
  %v1844 = vrot.slane %v1843, 4
  %v1845 = vadd.s32 %v1843, %v1844
  %v1846 = vrot.slane %v1845, 2
  %v1847 = vadd.s32 %v1845, %v1846
  %v1848 = vrot.slane %v1847, 1
  %v1849 = vadd.s32 %v1847, %v1848
  %v1850 = vsel %vm1417, %v1385, 0
  %v1851 = vsel %vm1417, %v1386, 0
  %v1852 = vadd.s32 %v1850, %v1851
  %v1853 = vrot.slane %v1852, 4
  %v1854 = vadd.s32 %v1852, %v1853
  %v1855 = vrot.slane %v1854, 2
  %v1856 = vadd.s32 %v1854, %v1855
  %v1857 = vrot.slane %v1856, 1
  %v1858 = vadd.s32 %v1856, %v1857
  %v1859 = vsel %vm1417, %v1387, 0
  %v1860 = vsel %vm1417, %v1388, 0
  %v1861 = vadd.s32 %v1859, %v1860
  %v1862 = vrot.slane %v1861, 4
  %v1863 = vadd.s32 %v1861, %v1862
  %v1864 = vrot.slane %v1863, 2
  %v1865 = vadd.s32 %v1863, %v1864
  %v1866 = vrot.slane %v1865, 1
  %v1867 = vadd.s32 %v1865, %v1866
  %v1868 = vsel %vm1417, %v1389, 0
  %v1869 = vsel %vm1417, %v1390, 0
  %v1870 = vadd.s32 %v1868, %v1869
  %v1871 = vrot.slane %v1870, 4
  %v1872 = vadd.s32 %v1870, %v1871
  %v1873 = vrot.slane %v1872, 2
  %v1874 = vadd.s32 %v1872, %v1873
  %v1875 = vrot.slane %v1874, 1
  %v1876 = vadd.s32 %v1874, %v1875
  %v1877 = vsel %vm1417, %v1391, 0
  %v1878 = vsel %vm1417, %v1392, 0
  %v1879 = vadd.s32 %v1877, %v1878
  %v1880 = vrot.slane %v1879, 4
  %v1881 = vadd.s32 %v1879, %v1880
  %v1882 = vrot.slane %v1881, 2
  %v1883 = vadd.s32 %v1881, %v1882
  %v1884 = vrot.slane %v1883, 1
  %v1885 = vadd.s32 %v1883, %v1884
  %v1886 = vsel %vm1417, %v1393, 0
  %v1887 = vsel %vm1417, %v1394, 0
  %v1888 = vadd.s32 %v1886, %v1887
  %v1889 = vrot.slane %v1888, 4
  %v1890 = vadd.s32 %v1888, %v1889
  %v1891 = vrot.slane %v1890, 2
  %v1892 = vadd.s32 %v1890, %v1891
  %v1893 = vrot.slane %v1892, 1
  %v1894 = vadd.s32 %v1892, %v1893
  %v1895 = vsel %vm1417, %v1395, 0
  %v1896 = vsel %vm1417, %v1396, 0
  %v1897 = vadd.s32 %v1895, %v1896
  %v1898 = vrot.slane %v1897, 4
  %v1899 = vadd.s32 %v1897, %v1898
  %v1900 = vrot.slane %v1899, 2
  %v1901 = vadd.s32 %v1899, %v1900
  %v1902 = vrot.slane %v1901, 1
  %v1903 = vadd.s32 %v1901, %v1902
  %v1904 = vsel %vm1417, %v1397, 0
  %v1905 = vsel %vm1417, %v1398, 0
  %v1906 = vadd.s32 %v1904, %v1905
  %v1907 = vrot.slane %v1906, 4
  %v1908 = vadd.s32 %v1906, %v1907
  %v1909 = vrot.slane %v1908, 2
  %v1910 = vadd.s32 %v1908, %v1909
  %v1911 = vrot.slane %v1910, 1
  %v1912 = vadd.s32 %v1910, %v1911
  %v1913 = vsel %vm1417, %v1399, 0
  %v1914 = vsel %vm1417, %v1400, 0
  %v1915 = vadd.s32 %v1913, %v1914
  %v1916 = vrot.slane %v1915, 4
  %v1917 = vadd.s32 %v1915, %v1916
  %v1918 = vrot.slane %v1917, 2
  %v1919 = vadd.s32 %v1917, %v1918
  %v1920 = vrot.slane %v1919, 1
  %v1921 = vadd.s32 %v1919, %v1920
  %v1922 = vsel %vm1417, %v1401, 0
  %v1923 = vsel %vm1417, %v1402, 0
  %v1924 = vadd.s32 %v1922, %v1923
  %v1925 = vrot.slane %v1924, 4
  %v1926 = vadd.s32 %v1924, %v1925
  %v1927 = vrot.slane %v1926, 2
  %v1928 = vadd.s32 %v1926, %v1927
  %v1929 = vrot.slane %v1928, 1
  %v1930 = vadd.s32 %v1928, %v1929
  %v1931 = vsel %vm1417, %v1403, 0
  %v1932 = vsel %vm1417, %v1404, 0
  %v1933 = vadd.s32 %v1931, %v1932
  %v1934 = vrot.slane %v1933, 4
  %v1935 = vadd.s32 %v1933, %v1934
  %v1936 = vrot.slane %v1935, 2
  %v1937 = vadd.s32 %v1935, %v1936
  %v1938 = vrot.slane %v1937, 1
  %v1939 = vadd.s32 %v1937, %v1938
  %v1940 = vsel %vm1417, %v1405, 0
  %v1941 = vsel %vm1417, %v1406, 0
  %v1942 = vadd.s32 %v1940, %v1941
  %v1943 = vrot.slane %v1942, 4
  %v1944 = vadd.s32 %v1942, %v1943
  %v1945 = vrot.slane %v1944, 2
  %v1946 = vadd.s32 %v1944, %v1945
  %v1947 = vrot.slane %v1946, 1
  %v1948 = vadd.s32 %v1946, %v1947
  %v1949 = vsel %vm1417, %v1407, 0
  %v1950 = vsel %vm1417, %v1408, 0
  %v1951 = vadd.s32 %v1949, %v1950
  %v1952 = vrot.slane %v1951, 4
  %v1953 = vadd.s32 %v1951, %v1952
  %v1954 = vrot.slane %v1953, 2
  %v1955 = vadd.s32 %v1953, %v1954
  %v1956 = vrot.slane %v1955, 1
  %v1957 = vadd.s32 %v1955, %v1956
  %v1958 = vsel %vm1417, %v1409, 0
  %v1959 = vsel %vm1417, %v1410, 0
  %v1960 = vadd.s32 %v1958, %v1959
  %v1961 = vrot.slane %v1960, 4
  %v1962 = vadd.s32 %v1960, %v1961
  %v1963 = vrot.slane %v1962, 2
  %v1964 = vadd.s32 %v1962, %v1963
  %v1965 = vrot.slane %v1964, 1
  %v1966 = vadd.s32 %v1964, %v1965
  %v1967 = vsel %vm1417, %v1411, 0
  %v1968 = vsel %vm1417, %v1412, 0
  %v1969 = vadd.s32 %v1967, %v1968
  %v1970 = vrot.slane %v1969, 4
  %v1971 = vadd.s32 %v1969, %v1970
  %v1972 = vrot.slane %v1971, 2
  %v1973 = vadd.s32 %v1971, %v1972
  %v1974 = vrot.slane %v1973, 1
  %v1975 = vadd.s32 %v1973, %v1974
  %v1976 = vsel %vm1417, %v1413, 0
  %v1977 = vsel %vm1417, %v1414, 0
  %v1978 = vadd.s32 %v1976, %v1977
  %v1979 = vrot.slane %v1978, 4
  %v1980 = vadd.s32 %v1978, %v1979
  %v1981 = vrot.slane %v1980, 2
  %v1982 = vadd.s32 %v1980, %v1981
  %v1983 = vrot.slane %v1982, 1
  %v1984 = vadd.s32 %v1982, %v1983
  %v1985 = vsel %vm1417, %v1415, 0
  %v1986 = vsel %vm1417, %v1416, 0
  %v1987 = vadd.s32 %v1985, %v1986
  %v1988 = vrot.slane %v1987, 4
  %v1989 = vadd.s32 %v1987, %v1988
  %v1990 = vrot.slane %v1989, 2
  %v1991 = vadd.s32 %v1989, %v1990
  %v1992 = vrot.slane %v1991, 1
  %v1993 = vadd.s32 %v1991, %v1992
  %vm1994 = vcmp.eq.s32.totalorder %v1426, 3
  %vm1995 = vcmp.eq.s32.totalorder %v1435, 3
  %vm1996 = vcmp.eq.s32.totalorder %v1444, 3
  %vm1997 = vcmp.eq.s32.totalorder %v1453, 3
  %vm1998 = vcmp.eq.s32.totalorder %v1462, 3
  %vm1999 = vcmp.eq.s32.totalorder %v1471, 3
  %vm2000 = vcmp.eq.s32.totalorder %v1480, 3
  %vm2001 = vcmp.eq.s32.totalorder %v1489, 3
  %vm2002 = vcmp.eq.s32.totalorder %v1498, 3
  %vm2003 = vcmp.eq.s32.totalorder %v1507, 3
  %vm2004 = vcmp.eq.s32.totalorder %v1516, 3
  %vm2005 = vcmp.eq.s32.totalorder %v1525, 3
  %vm2006 = vcmp.eq.s32.totalorder %v1534, 3
  %vm2007 = vcmp.eq.s32.totalorder %v1543, 3
  %vm2008 = vcmp.eq.s32.totalorder %v1552, 3
  %vm2009 = vcmp.eq.s32.totalorder %v1561, 3
  %vm2010 = vcmp.eq.s32.totalorder %v1570, 3
  %vm2011 = vcmp.eq.s32.totalorder %v1579, 3
  %vm2012 = vcmp.eq.s32.totalorder %v1588, 3
  %vm2013 = vcmp.eq.s32.totalorder %v1597, 3
  %vm2014 = vcmp.eq.s32.totalorder %v1606, 3
  %vm2015 = vcmp.eq.s32.totalorder %v1615, 3
  %vm2016 = vcmp.eq.s32.totalorder %v1624, 3
  %vm2017 = vcmp.eq.s32.totalorder %v1633, 3
  %vm2018 = vcmp.eq.s32.totalorder %v1642, 3
  %vm2019 = vcmp.eq.s32.totalorder %v1651, 3
  %vm2020 = vcmp.eq.s32.totalorder %v1660, 3
  %vm2021 = vcmp.eq.s32.totalorder %v1669, 3
  %vm2022 = vcmp.eq.s32.totalorder %v1678, 3
  %vm2023 = vcmp.eq.s32.totalorder %v1687, 3
  %vm2024 = vcmp.eq.s32.totalorder %v1696, 3
  %vm2025 = vcmp.eq.s32.totalorder %v1705, 3
  %vm2026 = vcmp.eq.s32.totalorder %v1714, 3
  %vm2027 = vcmp.eq.s32.totalorder %v1723, 3
  %vm2028 = vcmp.eq.s32.totalorder %v1732, 3
  %vm2029 = vcmp.eq.s32.totalorder %v1741, 3
  %vm2030 = vcmp.eq.s32.totalorder %v1750, 3
  %vm2031 = vcmp.eq.s32.totalorder %v1759, 3
  %vm2032 = vcmp.eq.s32.totalorder %v1768, 3
  %vm2033 = vcmp.eq.s32.totalorder %v1777, 3
  %vm2034 = vcmp.eq.s32.totalorder %v1786, 3
  %vm2035 = vcmp.eq.s32.totalorder %v1795, 3
  %vm2036 = vcmp.eq.s32.totalorder %v1804, 3
  %vm2037 = vcmp.eq.s32.totalorder %v1813, 3
  %vm2038 = vcmp.eq.s32.totalorder %v1822, 3
  %vm2039 = vcmp.eq.s32.totalorder %v1831, 3
  %vm2040 = vcmp.eq.s32.totalorder %v1840, 3
  %vm2041 = vcmp.eq.s32.totalorder %v1849, 3
  %vm2042 = vcmp.eq.s32.totalorder %v1858, 3
  %vm2043 = vcmp.eq.s32.totalorder %v1867, 3
  %vm2044 = vcmp.eq.s32.totalorder %v1876, 3
  %vm2045 = vcmp.eq.s32.totalorder %v1885, 3
  %vm2046 = vcmp.eq.s32.totalorder %v1894, 3
  %vm2047 = vcmp.eq.s32.totalorder %v1903, 3
  %vm2048 = vcmp.eq.s32.totalorder %v1912, 3
  %vm2049 = vcmp.eq.s32.totalorder %v1921, 3
  %vm2050 = vcmp.eq.s32.totalorder %v1930, 3
  %vm2051 = vcmp.eq.s32.totalorder %v1939, 3
  %vm2052 = vcmp.eq.s32.totalorder %v1948, 3
  %vm2053 = vcmp.eq.s32.totalorder %v1957, 3
  %vm2054 = vcmp.eq.s32.totalorder %v1966, 3
  %vm2055 = vcmp.eq.s32.totalorder %v1975, 3
  %vm2056 = vcmp.eq.s32.totalorder %v1984, 3
  %vm2057 = vcmp.eq.s32.totalorder %v1993, 3
  %v2058 = vrot.slane %v14, 1
  %v2059 = vrot.slane %v14, 2
  %v2060 = vrot.slane %v14, 3
  %v2061 = vrot.slane %v14, 4
  %v2062 = vrot.slane %v14, 5
  %v2063 = vrot.slane %v14, 6
  %v2064 = vrot.slane %v14, 7
  %v2065 = vrot.slane %v15, 1
  %v2066 = vrot.slane %v15, 2
  %v2067 = vrot.slane %v15, 3
  %v2068 = vrot.slane %v15, 4
  %v2069 = vrot.slane %v15, 5
  %v2070 = vrot.slane %v15, 6
  %v2071 = vrot.slane %v15, 7
  %v2072 = vrot.slane %v16, 1
  %v2073 = vrot.slane %v16, 2
  %v2074 = vrot.slane %v16, 3
  %v2075 = vrot.slane %v16, 4
  %v2076 = vrot.slane %v16, 5
  %v2077 = vrot.slane %v16, 6
  %v2078 = vrot.slane %v16, 7
  %v2079 = vrot.slane %v17, 1
  %v2080 = vrot.slane %v17, 2
  %v2081 = vrot.slane %v17, 3
  %v2082 = vrot.slane %v17, 4
  %v2083 = vrot.slane %v17, 5
  %v2084 = vrot.slane %v17, 6
  %v2085 = vrot.slane %v17, 7
  %v2086 = vrot.slane %v18, 1
  %v2087 = vrot.slane %v18, 2
  %v2088 = vrot.slane %v18, 3
  %v2089 = vrot.slane %v18, 4
  %v2090 = vrot.slane %v18, 5
  %v2091 = vrot.slane %v18, 6
  %v2092 = vrot.slane %v18, 7
  %v2093 = vrot.slane %v19, 1
  %v2094 = vrot.slane %v19, 2
  %v2095 = vrot.slane %v19, 3
  %v2096 = vrot.slane %v19, 4
  %v2097 = vrot.slane %v19, 5
  %v2098 = vrot.slane %v19, 6
  %v2099 = vrot.slane %v19, 7
  %v2100 = vrot.slane %v20, 1
  %v2101 = vrot.slane %v20, 2
  %v2102 = vrot.slane %v20, 3
  %v2103 = vrot.slane %v20, 4
  %v2104 = vrot.slane %v20, 5
  %v2105 = vrot.slane %v20, 6
  %v2106 = vrot.slane %v20, 7
  %v2107 = vrot.slane %v21, 1
  %v2108 = vrot.slane %v21, 2
  %v2109 = vrot.slane %v21, 3
  %v2110 = vrot.slane %v21, 4
  %v2111 = vrot.slane %v21, 5
  %v2112 = vrot.slane %v21, 6
  %v2113 = vrot.slane %v21, 7
  %v2178 = vsel %vm1994, %v14, 0.0
  %v2179 = vsel %vm1995, %v2058, 0.0
  %v2180 = vsel %vm1996, %v2059, 0.0
  %v2181 = vsel %vm1997, %v2060, 0.0
  %v2182 = vsel %vm1998, %v2061, 0.0
  %v2183 = vsel %vm1999, %v2062, 0.0
  %v2184 = vsel %vm2000, %v2063, 0.0
  %v2185 = vsel %vm2001, %v2064, 0.0
  %v2186 = vsel %vm2002, %v15, 0.0
  %v2187 = vsel %vm2003, %v2065, 0.0
  %v2188 = vsel %vm2004, %v2066, 0.0
  %v2189 = vsel %vm2005, %v2067, 0.0
  %v2190 = vsel %vm2006, %v2068, 0.0
  %v2191 = vsel %vm2007, %v2069, 0.0
  %v2192 = vsel %vm2008, %v2070, 0.0
  %v2193 = vsel %vm2009, %v2071, 0.0
  %v2194 = vsel %vm2010, %v16, 0.0
  %v2195 = vsel %vm2011, %v2072, 0.0
  %v2196 = vsel %vm2012, %v2073, 0.0
  %v2197 = vsel %vm2013, %v2074, 0.0
  %v2198 = vsel %vm2014, %v2075, 0.0
  %v2199 = vsel %vm2015, %v2076, 0.0
  %v2200 = vsel %vm2016, %v2077, 0.0
  %v2201 = vsel %vm2017, %v2078, 0.0
  %v2202 = vsel %vm2018, %v17, 0.0
  %v2203 = vsel %vm2019, %v2079, 0.0
  %v2204 = vsel %vm2020, %v2080, 0.0
  %v2205 = vsel %vm2021, %v2081, 0.0
  %v2206 = vsel %vm2022, %v2082, 0.0
  %v2207 = vsel %vm2023, %v2083, 0.0
  %v2208 = vsel %vm2024, %v2084, 0.0
  %v2209 = vsel %vm2025, %v2085, 0.0
  %v2210 = vsel %vm2026, %v18, 0.0
  %v2211 = vsel %vm2027, %v2086, 0.0
  %v2212 = vsel %vm2028, %v2087, 0.0
  %v2213 = vsel %vm2029, %v2088, 0.0
  %v2214 = vsel %vm2030, %v2089, 0.0
  %v2215 = vsel %vm2031, %v2090, 0.0
  %v2216 = vsel %vm2032, %v2091, 0.0
  %v2217 = vsel %vm2033, %v2092, 0.0
  %v2218 = vsel %vm2034, %v19, 0.0
  %v2219 = vsel %vm2035, %v2093, 0.0
  %v2220 = vsel %vm2036, %v2094, 0.0
  %v2221 = vsel %vm2037, %v2095, 0.0
  %v2222 = vsel %vm2038, %v2096, 0.0
  %v2223 = vsel %vm2039, %v2097, 0.0
  %v2224 = vsel %vm2040, %v2098, 0.0
  %v2225 = vsel %vm2041, %v2099, 0.0
  %v2226 = vsel %vm2042, %v20, 0.0
  %v2227 = vsel %vm2043, %v2100, 0.0
  %v2228 = vsel %vm2044, %v2101, 0.0
  %v2229 = vsel %vm2045, %v2102, 0.0
  %v2230 = vsel %vm2046, %v2103, 0.0
  %v2231 = vsel %vm2047, %v2104, 0.0
  %v2232 = vsel %vm2048, %v2105, 0.0
  %v2233 = vsel %vm2049, %v2106, 0.0
  %v2234 = vsel %vm2050, %v21, 0.0
  %v2235 = vsel %vm2051, %v2107, 0.0
  %v2236 = vsel %vm2052, %v2108, 0.0
  %v2237 = vsel %vm2053, %v2109, 0.0
  %v2238 = vsel %vm2054, %v2110, 0.0
  %v2239 = vsel %vm2055, %v2111, 0.0
  %v2240 = vsel %vm2056, %v2112, 0.0
  %v2241 = vsel %vm2057, %v2113, 0.0
  %v2306 = vrot.slane %v2179, 7
  %vm2307 = vcmask 1041409
  %v2308 = vsel %vm2307, %v2306, %v2178
  %v2309 = vrot.slane %v2180, 6
  %vm2310 = vcmask 1042434
  %v2311 = vsel %vm2310, %v2309, %v2308
  %v2312 = vrot.slane %v2181, 5
  %vm2313 = vcmask 1043459
  %v2314 = vsel %vm2313, %v2312, %v2311
  %v2315 = vrot.slane %v2182, 4
  %vm2316 = vcmask 1044484
  %v2317 = vsel %vm2316, %v2315, %v2314
  %v2318 = vrot.slane %v2183, 3
  %vm2319 = vcmask 1045509
  %v2320 = vsel %vm2319, %v2318, %v2317
  %v2321 = vrot.slane %v2184, 2
  %vm2322 = vcmask 1046534
  %v2323 = vsel %vm2322, %v2321, %v2320
  %v2324 = vrot.slane %v2185, 1
  %vm2325 = vcmask 1047559
  %v2326 = vsel %vm2325, %v2324, %v2323
  %v2327 = vrot.slane %v2187, 7
  %v2328 = vsel %vm2307, %v2327, %v2186
  %v2329 = vrot.slane %v2188, 6
  %v2330 = vsel %vm2310, %v2329, %v2328
  %v2331 = vrot.slane %v2189, 5
  %v2332 = vsel %vm2313, %v2331, %v2330
  %v2333 = vrot.slane %v2190, 4
  %v2334 = vsel %vm2316, %v2333, %v2332
  %v2335 = vrot.slane %v2191, 3
  %v2336 = vsel %vm2319, %v2335, %v2334
  %v2337 = vrot.slane %v2192, 2
  %v2338 = vsel %vm2322, %v2337, %v2336
  %v2339 = vrot.slane %v2193, 1
  %v2340 = vsel %vm2325, %v2339, %v2338
  %v2341 = vrot.slane %v2195, 7
  %v2342 = vsel %vm2307, %v2341, %v2194
  %v2343 = vrot.slane %v2196, 6
  %v2344 = vsel %vm2310, %v2343, %v2342
  %v2345 = vrot.slane %v2197, 5
  %v2346 = vsel %vm2313, %v2345, %v2344
  %v2347 = vrot.slane %v2198, 4
  %v2348 = vsel %vm2316, %v2347, %v2346
  %v2349 = vrot.slane %v2199, 3
  %v2350 = vsel %vm2319, %v2349, %v2348
  %v2351 = vrot.slane %v2200, 2
  %v2352 = vsel %vm2322, %v2351, %v2350
  %v2353 = vrot.slane %v2201, 1
  %v2354 = vsel %vm2325, %v2353, %v2352
  %v2355 = vrot.slane %v2203, 7
  %v2356 = vsel %vm2307, %v2355, %v2202
  %v2357 = vrot.slane %v2204, 6
  %v2358 = vsel %vm2310, %v2357, %v2356
  %v2359 = vrot.slane %v2205, 5
  %v2360 = vsel %vm2313, %v2359, %v2358
  %v2361 = vrot.slane %v2206, 4
  %v2362 = vsel %vm2316, %v2361, %v2360
  %v2363 = vrot.slane %v2207, 3
  %v2364 = vsel %vm2319, %v2363, %v2362
  %v2365 = vrot.slane %v2208, 2
  %v2366 = vsel %vm2322, %v2365, %v2364
  %v2367 = vrot.slane %v2209, 1
  %v2368 = vsel %vm2325, %v2367, %v2366
  %v2369 = vrot.slane %v2211, 7
  %v2370 = vsel %vm2307, %v2369, %v2210
  %v2371 = vrot.slane %v2212, 6
  %v2372 = vsel %vm2310, %v2371, %v2370
  %v2373 = vrot.slane %v2213, 5
  %v2374 = vsel %vm2313, %v2373, %v2372
  %v2375 = vrot.slane %v2214, 4
  %v2376 = vsel %vm2316, %v2375, %v2374
  %v2377 = vrot.slane %v2215, 3
  %v2378 = vsel %vm2319, %v2377, %v2376
  %v2379 = vrot.slane %v2216, 2
  %v2380 = vsel %vm2322, %v2379, %v2378
  %v2381 = vrot.slane %v2217, 1
  %v2382 = vsel %vm2325, %v2381, %v2380
  %v2383 = vrot.slane %v2219, 7
  %v2384 = vsel %vm2307, %v2383, %v2218
  %v2385 = vrot.slane %v2220, 6
  %v2386 = vsel %vm2310, %v2385, %v2384
  %v2387 = vrot.slane %v2221, 5
  %v2388 = vsel %vm2313, %v2387, %v2386
  %v2389 = vrot.slane %v2222, 4
  %v2390 = vsel %vm2316, %v2389, %v2388
  %v2391 = vrot.slane %v2223, 3
  %v2392 = vsel %vm2319, %v2391, %v2390
  %v2393 = vrot.slane %v2224, 2
  %v2394 = vsel %vm2322, %v2393, %v2392
  %v2395 = vrot.slane %v2225, 1
  %v2396 = vsel %vm2325, %v2395, %v2394
  %v2397 = vrot.slane %v2227, 7
  %v2398 = vsel %vm2307, %v2397, %v2226
  %v2399 = vrot.slane %v2228, 6
  %v2400 = vsel %vm2310, %v2399, %v2398
  %v2401 = vrot.slane %v2229, 5
  %v2402 = vsel %vm2313, %v2401, %v2400
  %v2403 = vrot.slane %v2230, 4
  %v2404 = vsel %vm2316, %v2403, %v2402
  %v2405 = vrot.slane %v2231, 3
  %v2406 = vsel %vm2319, %v2405, %v2404
  %v2407 = vrot.slane %v2232, 2
  %v2408 = vsel %vm2322, %v2407, %v2406
  %v2409 = vrot.slane %v2233, 1
  %v2410 = vsel %vm2325, %v2409, %v2408
  %v2411 = vrot.slane %v2235, 7
  %v2412 = vsel %vm2307, %v2411, %v2234
  %v2413 = vrot.slane %v2236, 6
  %v2414 = vsel %vm2310, %v2413, %v2412
  %v2415 = vrot.slane %v2237, 5
  %v2416 = vsel %vm2313, %v2415, %v2414
  %v2417 = vrot.slane %v2238, 4
  %v2418 = vsel %vm2316, %v2417, %v2416
  %v2419 = vrot.slane %v2239, 3
  %v2420 = vsel %vm2319, %v2419, %v2418
  %v2421 = vrot.slane %v2240, 2
  %v2422 = vsel %vm2322, %v2421, %v2420
  %v2423 = vrot.slane %v2241, 1
  %v2424 = vsel %vm2325, %v2423, %v2422
  %v2433 = vsel %vm1417, %v2326, 0.0
  %v2434 = vsel %vm1417, %v2340, 0.0
  %v2435 = vadd.f32 %v2433, %v2434
  %v2436 = vrot.slane %v2435, 4
  %v2437 = vadd.f32 %v2435, %v2436
  %v2438 = vrot.slane %v2437, 2
  %v2439 = vadd.f32 %v2437, %v2438
  %v2440 = vrot.slane %v2439, 1
  %v2441 = vadd.f32 %v2439, %v2440
  %v2442 = vsel %vm1417, %v2354, 0.0
  %v2443 = vsel %vm1417, %v2368, 0.0
  %v2444 = vadd.f32 %v2442, %v2443
  %v2445 = vrot.slane %v2444, 4
  %v2446 = vadd.f32 %v2444, %v2445
  %v2447 = vrot.slane %v2446, 2
  %v2448 = vadd.f32 %v2446, %v2447
  %v2449 = vrot.slane %v2448, 1
  %v2450 = vadd.f32 %v2448, %v2449
  %v2451 = vsel %vm1417, %v2382, 0.0
  %v2452 = vsel %vm1417, %v2396, 0.0
  %v2453 = vadd.f32 %v2451, %v2452
  %v2454 = vrot.slane %v2453, 4
  %v2455 = vadd.f32 %v2453, %v2454
  %v2456 = vrot.slane %v2455, 2
  %v2457 = vadd.f32 %v2455, %v2456
  %v2458 = vrot.slane %v2457, 1
  %v2459 = vadd.f32 %v2457, %v2458
  %v2460 = vsel %vm1417, %v2410, 0.0
  %v2461 = vsel %vm1417, %v2424, 0.0
  %v2462 = vadd.f32 %v2460, %v2461
  %v2463 = vrot.slane %v2462, 4
  %v2464 = vadd.f32 %v2462, %v2463
  %v2465 = vrot.slane %v2464, 2
  %v2466 = vadd.f32 %v2464, %v2465
  %v2467 = vrot.slane %v2466, 1
  %v2468 = vadd.f32 %v2466, %v2467
  %vm2469 = vcmp.eq.s32.totalorder %v1426, 4
  %vm2470 = vcmp.eq.s32.totalorder %v1435, 4
  %vm2471 = vcmp.eq.s32.totalorder %v1444, 4
  %vm2472 = vcmp.eq.s32.totalorder %v1453, 4
  %vm2473 = vcmp.eq.s32.totalorder %v1462, 4
  %vm2474 = vcmp.eq.s32.totalorder %v1471, 4
  %vm2475 = vcmp.eq.s32.totalorder %v1480, 4
  %vm2476 = vcmp.eq.s32.totalorder %v1489, 4
  %vm2477 = vcmp.eq.s32.totalorder %v1498, 4
  %vm2478 = vcmp.eq.s32.totalorder %v1507, 4
  %vm2479 = vcmp.eq.s32.totalorder %v1516, 4
  %vm2480 = vcmp.eq.s32.totalorder %v1525, 4
  %vm2481 = vcmp.eq.s32.totalorder %v1534, 4
  %vm2482 = vcmp.eq.s32.totalorder %v1543, 4
  %vm2483 = vcmp.eq.s32.totalorder %v1552, 4
  %vm2484 = vcmp.eq.s32.totalorder %v1561, 4
  %vm2485 = vcmp.eq.s32.totalorder %v1570, 4
  %vm2486 = vcmp.eq.s32.totalorder %v1579, 4
  %vm2487 = vcmp.eq.s32.totalorder %v1588, 4
  %vm2488 = vcmp.eq.s32.totalorder %v1597, 4
  %vm2489 = vcmp.eq.s32.totalorder %v1606, 4
  %vm2490 = vcmp.eq.s32.totalorder %v1615, 4
  %vm2491 = vcmp.eq.s32.totalorder %v1624, 4
  %vm2492 = vcmp.eq.s32.totalorder %v1633, 4
  %vm2493 = vcmp.eq.s32.totalorder %v1642, 4
  %vm2494 = vcmp.eq.s32.totalorder %v1651, 4
  %vm2495 = vcmp.eq.s32.totalorder %v1660, 4
  %vm2496 = vcmp.eq.s32.totalorder %v1669, 4
  %vm2497 = vcmp.eq.s32.totalorder %v1678, 4
  %vm2498 = vcmp.eq.s32.totalorder %v1687, 4
  %vm2499 = vcmp.eq.s32.totalorder %v1696, 4
  %vm2500 = vcmp.eq.s32.totalorder %v1705, 4
  %vm2501 = vcmp.eq.s32.totalorder %v1714, 4
  %vm2502 = vcmp.eq.s32.totalorder %v1723, 4
  %vm2503 = vcmp.eq.s32.totalorder %v1732, 4
  %vm2504 = vcmp.eq.s32.totalorder %v1741, 4
  %vm2505 = vcmp.eq.s32.totalorder %v1750, 4
  %vm2506 = vcmp.eq.s32.totalorder %v1759, 4
  %vm2507 = vcmp.eq.s32.totalorder %v1768, 4
  %vm2508 = vcmp.eq.s32.totalorder %v1777, 4
  %vm2509 = vcmp.eq.s32.totalorder %v1786, 4
  %vm2510 = vcmp.eq.s32.totalorder %v1795, 4
  %vm2511 = vcmp.eq.s32.totalorder %v1804, 4
  %vm2512 = vcmp.eq.s32.totalorder %v1813, 4
  %vm2513 = vcmp.eq.s32.totalorder %v1822, 4
  %vm2514 = vcmp.eq.s32.totalorder %v1831, 4
  %vm2515 = vcmp.eq.s32.totalorder %v1840, 4
  %vm2516 = vcmp.eq.s32.totalorder %v1849, 4
  %vm2517 = vcmp.eq.s32.totalorder %v1858, 4
  %vm2518 = vcmp.eq.s32.totalorder %v1867, 4
  %vm2519 = vcmp.eq.s32.totalorder %v1876, 4
  %vm2520 = vcmp.eq.s32.totalorder %v1885, 4
  %vm2521 = vcmp.eq.s32.totalorder %v1894, 4
  %vm2522 = vcmp.eq.s32.totalorder %v1903, 4
  %vm2523 = vcmp.eq.s32.totalorder %v1912, 4
  %vm2524 = vcmp.eq.s32.totalorder %v1921, 4
  %vm2525 = vcmp.eq.s32.totalorder %v1930, 4
  %vm2526 = vcmp.eq.s32.totalorder %v1939, 4
  %vm2527 = vcmp.eq.s32.totalorder %v1948, 4
  %vm2528 = vcmp.eq.s32.totalorder %v1957, 4
  %vm2529 = vcmp.eq.s32.totalorder %v1966, 4
  %vm2530 = vcmp.eq.s32.totalorder %v1975, 4
  %vm2531 = vcmp.eq.s32.totalorder %v1984, 4
  %vm2532 = vcmp.eq.s32.totalorder %v1993, 4
  %v2533 = vsel %vm2469, %v14, 0.0
  %v2534 = vsel %vm2470, %v2058, 0.0
  %v2535 = vsel %vm2471, %v2059, 0.0
  %v2536 = vsel %vm2472, %v2060, 0.0
  %v2537 = vsel %vm2473, %v2061, 0.0
  %v2538 = vsel %vm2474, %v2062, 0.0
  %v2539 = vsel %vm2475, %v2063, 0.0
  %v2540 = vsel %vm2476, %v2064, 0.0
  %v2541 = vsel %vm2477, %v15, 0.0
  %v2542 = vsel %vm2478, %v2065, 0.0
  %v2543 = vsel %vm2479, %v2066, 0.0
  %v2544 = vsel %vm2480, %v2067, 0.0
  %v2545 = vsel %vm2481, %v2068, 0.0
  %v2546 = vsel %vm2482, %v2069, 0.0
  %v2547 = vsel %vm2483, %v2070, 0.0
  %v2548 = vsel %vm2484, %v2071, 0.0
  %v2549 = vsel %vm2485, %v16, 0.0
  %v2550 = vsel %vm2486, %v2072, 0.0
  %v2551 = vsel %vm2487, %v2073, 0.0
  %v2552 = vsel %vm2488, %v2074, 0.0
  %v2553 = vsel %vm2489, %v2075, 0.0
  %v2554 = vsel %vm2490, %v2076, 0.0
  %v2555 = vsel %vm2491, %v2077, 0.0
  %v2556 = vsel %vm2492, %v2078, 0.0
  %v2557 = vsel %vm2493, %v17, 0.0
  %v2558 = vsel %vm2494, %v2079, 0.0
  %v2559 = vsel %vm2495, %v2080, 0.0
  %v2560 = vsel %vm2496, %v2081, 0.0
  %v2561 = vsel %vm2497, %v2082, 0.0
  %v2562 = vsel %vm2498, %v2083, 0.0
  %v2563 = vsel %vm2499, %v2084, 0.0
  %v2564 = vsel %vm2500, %v2085, 0.0
  %v2565 = vsel %vm2501, %v18, 0.0
  %v2566 = vsel %vm2502, %v2086, 0.0
  %v2567 = vsel %vm2503, %v2087, 0.0
  %v2568 = vsel %vm2504, %v2088, 0.0
  %v2569 = vsel %vm2505, %v2089, 0.0
  %v2570 = vsel %vm2506, %v2090, 0.0
  %v2571 = vsel %vm2507, %v2091, 0.0
  %v2572 = vsel %vm2508, %v2092, 0.0
  %v2573 = vsel %vm2509, %v19, 0.0
  %v2574 = vsel %vm2510, %v2093, 0.0
  %v2575 = vsel %vm2511, %v2094, 0.0
  %v2576 = vsel %vm2512, %v2095, 0.0
  %v2577 = vsel %vm2513, %v2096, 0.0
  %v2578 = vsel %vm2514, %v2097, 0.0
  %v2579 = vsel %vm2515, %v2098, 0.0
  %v2580 = vsel %vm2516, %v2099, 0.0
  %v2581 = vsel %vm2517, %v20, 0.0
  %v2582 = vsel %vm2518, %v2100, 0.0
  %v2583 = vsel %vm2519, %v2101, 0.0
  %v2584 = vsel %vm2520, %v2102, 0.0
  %v2585 = vsel %vm2521, %v2103, 0.0
  %v2586 = vsel %vm2522, %v2104, 0.0
  %v2587 = vsel %vm2523, %v2105, 0.0
  %v2588 = vsel %vm2524, %v2106, 0.0
  %v2589 = vsel %vm2525, %v21, 0.0
  %v2590 = vsel %vm2526, %v2107, 0.0
  %v2591 = vsel %vm2527, %v2108, 0.0
  %v2592 = vsel %vm2528, %v2109, 0.0
  %v2593 = vsel %vm2529, %v2110, 0.0
  %v2594 = vsel %vm2530, %v2111, 0.0
  %v2595 = vsel %vm2531, %v2112, 0.0
  %v2596 = vsel %vm2532, %v2113, 0.0
  %v2661 = vrot.slane %v2534, 7
  %v2662 = vsel %vm2307, %v2661, %v2533
  %v2663 = vrot.slane %v2535, 6
  %v2664 = vsel %vm2310, %v2663, %v2662
  %v2665 = vrot.slane %v2536, 5
  %v2666 = vsel %vm2313, %v2665, %v2664
  %v2667 = vrot.slane %v2537, 4
  %v2668 = vsel %vm2316, %v2667, %v2666
  %v2669 = vrot.slane %v2538, 3
  %v2670 = vsel %vm2319, %v2669, %v2668
  %v2671 = vrot.slane %v2539, 2
  %v2672 = vsel %vm2322, %v2671, %v2670
  %v2673 = vrot.slane %v2540, 1
  %v2674 = vsel %vm2325, %v2673, %v2672
  %v2675 = vrot.slane %v2542, 7
  %v2676 = vsel %vm2307, %v2675, %v2541
  %v2677 = vrot.slane %v2543, 6
  %v2678 = vsel %vm2310, %v2677, %v2676
  %v2679 = vrot.slane %v2544, 5
  %v2680 = vsel %vm2313, %v2679, %v2678
  %v2681 = vrot.slane %v2545, 4
  %v2682 = vsel %vm2316, %v2681, %v2680
  %v2683 = vrot.slane %v2546, 3
  %v2684 = vsel %vm2319, %v2683, %v2682
  %v2685 = vrot.slane %v2547, 2
  %v2686 = vsel %vm2322, %v2685, %v2684
  %v2687 = vrot.slane %v2548, 1
  %v2688 = vsel %vm2325, %v2687, %v2686
  %v2689 = vrot.slane %v2550, 7
  %v2690 = vsel %vm2307, %v2689, %v2549
  %v2691 = vrot.slane %v2551, 6
  %v2692 = vsel %vm2310, %v2691, %v2690
  %v2693 = vrot.slane %v2552, 5
  %v2694 = vsel %vm2313, %v2693, %v2692
  %v2695 = vrot.slane %v2553, 4
  %v2696 = vsel %vm2316, %v2695, %v2694
  %v2697 = vrot.slane %v2554, 3
  %v2698 = vsel %vm2319, %v2697, %v2696
  %v2699 = vrot.slane %v2555, 2
  %v2700 = vsel %vm2322, %v2699, %v2698
  %v2701 = vrot.slane %v2556, 1
  %v2702 = vsel %vm2325, %v2701, %v2700
  %v2703 = vrot.slane %v2558, 7
  %v2704 = vsel %vm2307, %v2703, %v2557
  %v2705 = vrot.slane %v2559, 6
  %v2706 = vsel %vm2310, %v2705, %v2704
  %v2707 = vrot.slane %v2560, 5
  %v2708 = vsel %vm2313, %v2707, %v2706
  %v2709 = vrot.slane %v2561, 4
  %v2710 = vsel %vm2316, %v2709, %v2708
  %v2711 = vrot.slane %v2562, 3
  %v2712 = vsel %vm2319, %v2711, %v2710
  %v2713 = vrot.slane %v2563, 2
  %v2714 = vsel %vm2322, %v2713, %v2712
  %v2715 = vrot.slane %v2564, 1
  %v2716 = vsel %vm2325, %v2715, %v2714
  %v2717 = vrot.slane %v2566, 7
  %v2718 = vsel %vm2307, %v2717, %v2565
  %v2719 = vrot.slane %v2567, 6
  %v2720 = vsel %vm2310, %v2719, %v2718
  %v2721 = vrot.slane %v2568, 5
  %v2722 = vsel %vm2313, %v2721, %v2720
  %v2723 = vrot.slane %v2569, 4
  %v2724 = vsel %vm2316, %v2723, %v2722
  %v2725 = vrot.slane %v2570, 3
  %v2726 = vsel %vm2319, %v2725, %v2724
  %v2727 = vrot.slane %v2571, 2
  %v2728 = vsel %vm2322, %v2727, %v2726
  %v2729 = vrot.slane %v2572, 1
  %v2730 = vsel %vm2325, %v2729, %v2728
  %v2731 = vrot.slane %v2574, 7
  %v2732 = vsel %vm2307, %v2731, %v2573
  %v2733 = vrot.slane %v2575, 6
  %v2734 = vsel %vm2310, %v2733, %v2732
  %v2735 = vrot.slane %v2576, 5
  %v2736 = vsel %vm2313, %v2735, %v2734
  %v2737 = vrot.slane %v2577, 4
  %v2738 = vsel %vm2316, %v2737, %v2736
  %v2739 = vrot.slane %v2578, 3
  %v2740 = vsel %vm2319, %v2739, %v2738
  %v2741 = vrot.slane %v2579, 2
  %v2742 = vsel %vm2322, %v2741, %v2740
  %v2743 = vrot.slane %v2580, 1
  %v2744 = vsel %vm2325, %v2743, %v2742
  %v2745 = vrot.slane %v2582, 7
  %v2746 = vsel %vm2307, %v2745, %v2581
  %v2747 = vrot.slane %v2583, 6
  %v2748 = vsel %vm2310, %v2747, %v2746
  %v2749 = vrot.slane %v2584, 5
  %v2750 = vsel %vm2313, %v2749, %v2748
  %v2751 = vrot.slane %v2585, 4
  %v2752 = vsel %vm2316, %v2751, %v2750
  %v2753 = vrot.slane %v2586, 3
  %v2754 = vsel %vm2319, %v2753, %v2752
  %v2755 = vrot.slane %v2587, 2
  %v2756 = vsel %vm2322, %v2755, %v2754
  %v2757 = vrot.slane %v2588, 1
  %v2758 = vsel %vm2325, %v2757, %v2756
  %v2759 = vrot.slane %v2590, 7
  %v2760 = vsel %vm2307, %v2759, %v2589
  %v2761 = vrot.slane %v2591, 6
  %v2762 = vsel %vm2310, %v2761, %v2760
  %v2763 = vrot.slane %v2592, 5
  %v2764 = vsel %vm2313, %v2763, %v2762
  %v2765 = vrot.slane %v2593, 4
  %v2766 = vsel %vm2316, %v2765, %v2764
  %v2767 = vrot.slane %v2594, 3
  %v2768 = vsel %vm2319, %v2767, %v2766
  %v2769 = vrot.slane %v2595, 2
  %v2770 = vsel %vm2322, %v2769, %v2768
  %v2771 = vrot.slane %v2596, 1
  %v2772 = vsel %vm2325, %v2771, %v2770
  %v2781 = vsel %vm1417, %v2674, 0.0
  %v2782 = vsel %vm1417, %v2688, 0.0
  %v2783 = vadd.f32 %v2781, %v2782
  %v2784 = vrot.slane %v2783, 4
  %v2785 = vadd.f32 %v2783, %v2784
  %v2786 = vrot.slane %v2785, 2
  %v2787 = vadd.f32 %v2785, %v2786
  %v2788 = vrot.slane %v2787, 1
  %v2789 = vadd.f32 %v2787, %v2788
  %v2790 = vsel %vm1417, %v2702, 0.0
  %v2791 = vsel %vm1417, %v2716, 0.0
  %v2792 = vadd.f32 %v2790, %v2791
  %v2793 = vrot.slane %v2792, 4
  %v2794 = vadd.f32 %v2792, %v2793
  %v2795 = vrot.slane %v2794, 2
  %v2796 = vadd.f32 %v2794, %v2795
  %v2797 = vrot.slane %v2796, 1
  %v2798 = vadd.f32 %v2796, %v2797
  %v2799 = vsel %vm1417, %v2730, 0.0
  %v2800 = vsel %vm1417, %v2744, 0.0
  %v2801 = vadd.f32 %v2799, %v2800
  %v2802 = vrot.slane %v2801, 4
  %v2803 = vadd.f32 %v2801, %v2802
  %v2804 = vrot.slane %v2803, 2
  %v2805 = vadd.f32 %v2803, %v2804
  %v2806 = vrot.slane %v2805, 1
  %v2807 = vadd.f32 %v2805, %v2806
  %v2808 = vsel %vm1417, %v2758, 0.0
  %v2809 = vsel %vm1417, %v2772, 0.0
  %v2810 = vadd.f32 %v2808, %v2809
  %v2811 = vrot.slane %v2810, 4
  %v2812 = vadd.f32 %v2810, %v2811
  %v2813 = vrot.slane %v2812, 2
  %v2814 = vadd.f32 %v2812, %v2813
  %v2815 = vrot.slane %v2814, 1
  %v2816 = vadd.f32 %v2814, %v2815
  %v2817 = vmul.f32 %v2441, 0.25
  %v2818 = vmul.f32 %v2450, 0.25
  %v2819 = vmul.f32 %v2459, 0.25
  %v2820 = vmul.f32 %v2468, 0.25
  %v2821 = vmul.f32 %v2789, 0.75
  %v2822 = vmul.f32 %v2798, 0.75
  %v2823 = vmul.f32 %v2807, 0.75
  %v2824 = vmul.f32 %v2816, 0.75
  %v2825 = vadd.f32 %v2817, %v2821
  %v2826 = vadd.f32 %v2818, %v2822
  %v2827 = vadd.f32 %v2819, %v2823
  %v2828 = vadd.f32 %v2820, %v2824
  %v2829 = vlaneseq
  %v2830 = vshrl.u32 %v2829, 7
  %v2831 = vsub.s32 0, %v2830
  %v2832 = vrot.slane %v2825, %v2831
  %v2833 = vlaneseq
  %v2834 = vshrl.u32 %v2833, 7
  %v2835 = vsub.s32 0, %v2834
  %v2836 = vrot.slane %v2826, %v2835
  %v2837 = vlaneseq
  %v2838 = vshrl.u32 %v2837, 7
  %v2839 = vsub.s32 0, %v2838
  %v2840 = vrot.slane %v2827, %v2839
  %v2841 = vlaneseq
  %v2842 = vshrl.u32 %v2841, 7
  %v2843 = vsub.s32 0, %v2842
  %v2844 = vrot.slane %v2828, %v2843
  %v2845 = vsub.f32 %v14, %v2832
  %v2846 = vsub.f32 %v15, %v2832
  %v2847 = vsub.f32 %v16, %v2836
  %v2848 = vsub.f32 %v17, %v2836
  %v2849 = vsub.f32 %v18, %v2840
  %v2850 = vsub.f32 %v19, %v2840
  %v2851 = vsub.f32 %v20, %v2844
  %v2852 = vsub.f32 %v21, %v2844
  %v2853 = vlaneseq
  %v2854 = vshrl.u32 %v2853, 7
  %v2855 = vsub.s32 0, %v2854
  %v2856 = vrot.slane %v2845, %v2855
  %2858 = vbcast.lane.b32.xlu0 %v2856, 256
  %v2859 = vpop.permute.xlu0 %2858
  %s2861 = sor.u32 256, 8
  %2862 = vbcast.lane.b32.xlu0 %v2856, %s2861
  %v2863 = vpop.permute.xlu0 %2862
  %v2864 = vlaneseq
  %v2865 = vshrl.u32 %v2864, 7
  %v2866 = vsub.s32 1, %v2865
  %v2867 = vrot.slane %v2845, %v2866
  %2869 = vbcast.lane.b32.xlu0 %v2867, 256
  %v2870 = vpop.permute.xlu0 %2869
  %s2872 = sor.u32 256, 8
  %2873 = vbcast.lane.b32.xlu0 %v2867, %s2872
  %v2874 = vpop.permute.xlu0 %2873
  %v2875 = vlaneseq
  %v2876 = vshrl.u32 %v2875, 7
  %v2877 = vsub.s32 2, %v2876
  %v2878 = vrot.slane %v2845, %v2877
  %2880 = vbcast.lane.b32.xlu0 %v2878, 256
  %v2881 = vpop.permute.xlu0 %2880
  %s2883 = sor.u32 256, 8
  %2884 = vbcast.lane.b32.xlu0 %v2878, %s2883
  %v2885 = vpop.permute.xlu0 %2884
  %v2886 = vlaneseq
  %v2887 = vshrl.u32 %v2886, 7
  %v2888 = vsub.s32 3, %v2887
  %v2889 = vrot.slane %v2845, %v2888
  %2891 = vbcast.lane.b32.xlu0 %v2889, 256
  %v2892 = vpop.permute.xlu0 %2891
  %s2894 = sor.u32 256, 8
  %2895 = vbcast.lane.b32.xlu0 %v2889, %s2894
  %v2896 = vpop.permute.xlu0 %2895
  %v2897 = vlaneseq
  %v2898 = vshrl.u32 %v2897, 7
  %v2899 = vsub.s32 4, %v2898
  %v2900 = vrot.slane %v2845, %v2899
  %2902 = vbcast.lane.b32.xlu0 %v2900, 256
  %v2903 = vpop.permute.xlu0 %2902
  %s2905 = sor.u32 256, 8
  %2906 = vbcast.lane.b32.xlu0 %v2900, %s2905
  %v2907 = vpop.permute.xlu0 %2906
  %v2908 = vlaneseq
  %v2909 = vshrl.u32 %v2908, 7
  %v2910 = vsub.s32 5, %v2909
  %v2911 = vrot.slane %v2845, %v2910
  %2913 = vbcast.lane.b32.xlu0 %v2911, 256
  %v2914 = vpop.permute.xlu0 %2913
  %s2916 = sor.u32 256, 8
  %2917 = vbcast.lane.b32.xlu0 %v2911, %s2916
  %v2918 = vpop.permute.xlu0 %2917
  %v2919 = vlaneseq
  %v2920 = vshrl.u32 %v2919, 7
  %v2921 = vsub.s32 6, %v2920
  %v2922 = vrot.slane %v2845, %v2921
  %2924 = vbcast.lane.b32.xlu0 %v2922, 256
  %v2925 = vpop.permute.xlu0 %2924
  %s2927 = sor.u32 256, 8
  %2928 = vbcast.lane.b32.xlu0 %v2922, %s2927
  %v2929 = vpop.permute.xlu0 %2928
  %v2930 = vlaneseq
  %v2931 = vshrl.u32 %v2930, 7
  %v2932 = vsub.s32 7, %v2931
  %v2933 = vrot.slane %v2845, %v2932
  %2935 = vbcast.lane.b32.xlu0 %v2933, 256
  %v2936 = vpop.permute.xlu0 %2935
  %s2938 = sor.u32 256, 8
  %2939 = vbcast.lane.b32.xlu0 %v2933, %s2938
  %v2940 = vpop.permute.xlu0 %2939
  %v2941 = vlaneseq
  %v2942 = vshrl.u32 %v2941, 7
  %v2943 = vsub.s32 0, %v2942
  %v2944 = vrot.slane %v2846, %v2943
  %2946 = vbcast.lane.b32.xlu0 %v2944, 256
  %v2947 = vpop.permute.xlu0 %2946
  %s2949 = sor.u32 256, 8
  %2950 = vbcast.lane.b32.xlu0 %v2944, %s2949
  %v2951 = vpop.permute.xlu0 %2950
  %v2952 = vlaneseq
  %v2953 = vshrl.u32 %v2952, 7
  %v2954 = vsub.s32 1, %v2953
  %v2955 = vrot.slane %v2846, %v2954
  %2957 = vbcast.lane.b32.xlu0 %v2955, 256
  %v2958 = vpop.permute.xlu0 %2957
  %s2960 = sor.u32 256, 8
  %2961 = vbcast.lane.b32.xlu0 %v2955, %s2960
  %v2962 = vpop.permute.xlu0 %2961
  %v2963 = vlaneseq
  %v2964 = vshrl.u32 %v2963, 7
  %v2965 = vsub.s32 2, %v2964
  %v2966 = vrot.slane %v2846, %v2965
  %2968 = vbcast.lane.b32.xlu0 %v2966, 256
  %v2969 = vpop.permute.xlu0 %2968
  %s2971 = sor.u32 256, 8
  %2972 = vbcast.lane.b32.xlu0 %v2966, %s2971
  %v2973 = vpop.permute.xlu0 %2972
  %v2974 = vlaneseq
  %v2975 = vshrl.u32 %v2974, 7
  %v2976 = vsub.s32 3, %v2975
  %v2977 = vrot.slane %v2846, %v2976
  %2979 = vbcast.lane.b32.xlu0 %v2977, 256
  %v2980 = vpop.permute.xlu0 %2979
  %s2982 = sor.u32 256, 8
  %2983 = vbcast.lane.b32.xlu0 %v2977, %s2982
  %v2984 = vpop.permute.xlu0 %2983
  %v2985 = vlaneseq
  %v2986 = vshrl.u32 %v2985, 7
  %v2987 = vsub.s32 4, %v2986
  %v2988 = vrot.slane %v2846, %v2987
  %2990 = vbcast.lane.b32.xlu0 %v2988, 256
  %v2991 = vpop.permute.xlu0 %2990
  %s2993 = sor.u32 256, 8
  %2994 = vbcast.lane.b32.xlu0 %v2988, %s2993
  %v2995 = vpop.permute.xlu0 %2994
  %v2996 = vlaneseq
  %v2997 = vshrl.u32 %v2996, 7
  %v2998 = vsub.s32 5, %v2997
  %v2999 = vrot.slane %v2846, %v2998
  %3001 = vbcast.lane.b32.xlu0 %v2999, 256
  %v3002 = vpop.permute.xlu0 %3001
  %s3004 = sor.u32 256, 8
  %3005 = vbcast.lane.b32.xlu0 %v2999, %s3004
  %v3006 = vpop.permute.xlu0 %3005
  %v3007 = vlaneseq
  %v3008 = vshrl.u32 %v3007, 7
  %v3009 = vsub.s32 6, %v3008
  %v3010 = vrot.slane %v2846, %v3009
  %3012 = vbcast.lane.b32.xlu0 %v3010, 256
  %v3013 = vpop.permute.xlu0 %3012
  %s3015 = sor.u32 256, 8
  %3016 = vbcast.lane.b32.xlu0 %v3010, %s3015
  %v3017 = vpop.permute.xlu0 %3016
  %v3018 = vlaneseq
  %v3019 = vshrl.u32 %v3018, 7
  %v3020 = vsub.s32 7, %v3019
  %v3021 = vrot.slane %v2846, %v3020
  %3023 = vbcast.lane.b32.xlu0 %v3021, 256
  %v3024 = vpop.permute.xlu0 %3023
  %s3026 = sor.u32 256, 8
  %3027 = vbcast.lane.b32.xlu0 %v3021, %s3026
  %v3028 = vpop.permute.xlu0 %3027
  %v3029 = vlaneseq
  %v3030 = vshrl.u32 %v3029, 7
  %v3031 = vsub.s32 0, %v3030
  %v3032 = vrot.slane %v2847, %v3031
  %3034 = vbcast.lane.b32.xlu0 %v3032, 256
  %v3035 = vpop.permute.xlu0 %3034
  %s3037 = sor.u32 256, 8
  %3038 = vbcast.lane.b32.xlu0 %v3032, %s3037
  %v3039 = vpop.permute.xlu0 %3038
  %v3040 = vlaneseq
  %v3041 = vshrl.u32 %v3040, 7
  %v3042 = vsub.s32 1, %v3041
  %v3043 = vrot.slane %v2847, %v3042
  %3045 = vbcast.lane.b32.xlu0 %v3043, 256
  %v3046 = vpop.permute.xlu0 %3045
  %s3048 = sor.u32 256, 8
  %3049 = vbcast.lane.b32.xlu0 %v3043, %s3048
  %v3050 = vpop.permute.xlu0 %3049
  %v3051 = vlaneseq
  %v3052 = vshrl.u32 %v3051, 7
  %v3053 = vsub.s32 2, %v3052
  %v3054 = vrot.slane %v2847, %v3053
  %3056 = vbcast.lane.b32.xlu0 %v3054, 256
  %v3057 = vpop.permute.xlu0 %3056
  %s3059 = sor.u32 256, 8
  %3060 = vbcast.lane.b32.xlu0 %v3054, %s3059
  %v3061 = vpop.permute.xlu0 %3060
  %v3062 = vlaneseq
  %v3063 = vshrl.u32 %v3062, 7
  %v3064 = vsub.s32 3, %v3063
  %v3065 = vrot.slane %v2847, %v3064
  %3067 = vbcast.lane.b32.xlu0 %v3065, 256
  %v3068 = vpop.permute.xlu0 %3067
  %s3070 = sor.u32 256, 8
  %3071 = vbcast.lane.b32.xlu0 %v3065, %s3070
  %v3072 = vpop.permute.xlu0 %3071
  %v3073 = vlaneseq
  %v3074 = vshrl.u32 %v3073, 7
  %v3075 = vsub.s32 4, %v3074
  %v3076 = vrot.slane %v2847, %v3075
  %3078 = vbcast.lane.b32.xlu0 %v3076, 256
  %v3079 = vpop.permute.xlu0 %3078
  %s3081 = sor.u32 256, 8
  %3082 = vbcast.lane.b32.xlu0 %v3076, %s3081
  %v3083 = vpop.permute.xlu0 %3082
  %v3084 = vlaneseq
  %v3085 = vshrl.u32 %v3084, 7
  %v3086 = vsub.s32 5, %v3085
  %v3087 = vrot.slane %v2847, %v3086
  %3089 = vbcast.lane.b32.xlu0 %v3087, 256
  %v3090 = vpop.permute.xlu0 %3089
  %s3092 = sor.u32 256, 8
  %3093 = vbcast.lane.b32.xlu0 %v3087, %s3092
  %v3094 = vpop.permute.xlu0 %3093
  %v3095 = vlaneseq
  %v3096 = vshrl.u32 %v3095, 7
  %v3097 = vsub.s32 6, %v3096
  %v3098 = vrot.slane %v2847, %v3097
  %3100 = vbcast.lane.b32.xlu0 %v3098, 256
  %v3101 = vpop.permute.xlu0 %3100
  %s3103 = sor.u32 256, 8
  %3104 = vbcast.lane.b32.xlu0 %v3098, %s3103
  %v3105 = vpop.permute.xlu0 %3104
  %v3106 = vlaneseq
  %v3107 = vshrl.u32 %v3106, 7
  %v3108 = vsub.s32 7, %v3107
  %v3109 = vrot.slane %v2847, %v3108
  %3111 = vbcast.lane.b32.xlu0 %v3109, 256
  %v3112 = vpop.permute.xlu0 %3111
  %s3114 = sor.u32 256, 8
  %3115 = vbcast.lane.b32.xlu0 %v3109, %s3114
  %v3116 = vpop.permute.xlu0 %3115
  %v3117 = vlaneseq
  %v3118 = vshrl.u32 %v3117, 7
  %v3119 = vsub.s32 0, %v3118
  %v3120 = vrot.slane %v2848, %v3119
  %3122 = vbcast.lane.b32.xlu0 %v3120, 256
  %v3123 = vpop.permute.xlu0 %3122
  %s3125 = sor.u32 256, 8
  %3126 = vbcast.lane.b32.xlu0 %v3120, %s3125
  %v3127 = vpop.permute.xlu0 %3126
  %v3128 = vlaneseq
  %v3129 = vshrl.u32 %v3128, 7
  %v3130 = vsub.s32 1, %v3129
  %v3131 = vrot.slane %v2848, %v3130
  %3133 = vbcast.lane.b32.xlu0 %v3131, 256
  %v3134 = vpop.permute.xlu0 %3133
  %s3136 = sor.u32 256, 8
  %3137 = vbcast.lane.b32.xlu0 %v3131, %s3136
  %v3138 = vpop.permute.xlu0 %3137
  %v3139 = vlaneseq
  %v3140 = vshrl.u32 %v3139, 7
  %v3141 = vsub.s32 2, %v3140
  %v3142 = vrot.slane %v2848, %v3141
  %3144 = vbcast.lane.b32.xlu0 %v3142, 256
  %v3145 = vpop.permute.xlu0 %3144
  %s3147 = sor.u32 256, 8
  %3148 = vbcast.lane.b32.xlu0 %v3142, %s3147
  %v3149 = vpop.permute.xlu0 %3148
  %v3150 = vlaneseq
  %v3151 = vshrl.u32 %v3150, 7
  %v3152 = vsub.s32 3, %v3151
  %v3153 = vrot.slane %v2848, %v3152
  %3155 = vbcast.lane.b32.xlu0 %v3153, 256
  %v3156 = vpop.permute.xlu0 %3155
  %s3158 = sor.u32 256, 8
  %3159 = vbcast.lane.b32.xlu0 %v3153, %s3158
  %v3160 = vpop.permute.xlu0 %3159
  %v3161 = vlaneseq
  %v3162 = vshrl.u32 %v3161, 7
  %v3163 = vsub.s32 4, %v3162
  %v3164 = vrot.slane %v2848, %v3163
  %3166 = vbcast.lane.b32.xlu0 %v3164, 256
  %v3167 = vpop.permute.xlu0 %3166
  %s3169 = sor.u32 256, 8
  %3170 = vbcast.lane.b32.xlu0 %v3164, %s3169
  %v3171 = vpop.permute.xlu0 %3170
  %v3172 = vlaneseq
  %v3173 = vshrl.u32 %v3172, 7
  %v3174 = vsub.s32 5, %v3173
  %v3175 = vrot.slane %v2848, %v3174
  %3177 = vbcast.lane.b32.xlu0 %v3175, 256
  %v3178 = vpop.permute.xlu0 %3177
  %s3180 = sor.u32 256, 8
  %3181 = vbcast.lane.b32.xlu0 %v3175, %s3180
  %v3182 = vpop.permute.xlu0 %3181
  %v3183 = vlaneseq
  %v3184 = vshrl.u32 %v3183, 7
  %v3185 = vsub.s32 6, %v3184
  %v3186 = vrot.slane %v2848, %v3185
  %3188 = vbcast.lane.b32.xlu0 %v3186, 256
  %v3189 = vpop.permute.xlu0 %3188
  %s3191 = sor.u32 256, 8
  %3192 = vbcast.lane.b32.xlu0 %v3186, %s3191
  %v3193 = vpop.permute.xlu0 %3192
  %v3194 = vlaneseq
  %v3195 = vshrl.u32 %v3194, 7
  %v3196 = vsub.s32 7, %v3195
  %v3197 = vrot.slane %v2848, %v3196
  %3199 = vbcast.lane.b32.xlu0 %v3197, 256
  %v3200 = vpop.permute.xlu0 %3199
  %s3202 = sor.u32 256, 8
  %3203 = vbcast.lane.b32.xlu0 %v3197, %s3202
  %v3204 = vpop.permute.xlu0 %3203
  %v3205 = vlaneseq
  %v3206 = vshrl.u32 %v3205, 7
  %v3207 = vsub.s32 0, %v3206
  %v3208 = vrot.slane %v2849, %v3207
  %3210 = vbcast.lane.b32.xlu0 %v3208, 256
  %v3211 = vpop.permute.xlu0 %3210
  %s3213 = sor.u32 256, 8
  %3214 = vbcast.lane.b32.xlu0 %v3208, %s3213
  %v3215 = vpop.permute.xlu0 %3214
  %v3216 = vlaneseq
  %v3217 = vshrl.u32 %v3216, 7
  %v3218 = vsub.s32 1, %v3217
  %v3219 = vrot.slane %v2849, %v3218
  %3221 = vbcast.lane.b32.xlu0 %v3219, 256
  %v3222 = vpop.permute.xlu0 %3221
  %s3224 = sor.u32 256, 8
  %3225 = vbcast.lane.b32.xlu0 %v3219, %s3224
  %v3226 = vpop.permute.xlu0 %3225
  %v3227 = vlaneseq
  %v3228 = vshrl.u32 %v3227, 7
  %v3229 = vsub.s32 2, %v3228
  %v3230 = vrot.slane %v2849, %v3229
  %3232 = vbcast.lane.b32.xlu0 %v3230, 256
  %v3233 = vpop.permute.xlu0 %3232
  %s3235 = sor.u32 256, 8
  %3236 = vbcast.lane.b32.xlu0 %v3230, %s3235
  %v3237 = vpop.permute.xlu0 %3236
  %v3238 = vlaneseq
  %v3239 = vshrl.u32 %v3238, 7
  %v3240 = vsub.s32 3, %v3239
  %v3241 = vrot.slane %v2849, %v3240
  %3243 = vbcast.lane.b32.xlu0 %v3241, 256
  %v3244 = vpop.permute.xlu0 %3243
  %s3246 = sor.u32 256, 8
  %3247 = vbcast.lane.b32.xlu0 %v3241, %s3246
  %v3248 = vpop.permute.xlu0 %3247
  %v3249 = vlaneseq
  %v3250 = vshrl.u32 %v3249, 7
  %v3251 = vsub.s32 4, %v3250
  %v3252 = vrot.slane %v2849, %v3251
  %3254 = vbcast.lane.b32.xlu0 %v3252, 256
  %v3255 = vpop.permute.xlu0 %3254
  %s3257 = sor.u32 256, 8
  %3258 = vbcast.lane.b32.xlu0 %v3252, %s3257
  %v3259 = vpop.permute.xlu0 %3258
  %v3260 = vlaneseq
  %v3261 = vshrl.u32 %v3260, 7
  %v3262 = vsub.s32 5, %v3261
  %v3263 = vrot.slane %v2849, %v3262
  %3265 = vbcast.lane.b32.xlu0 %v3263, 256
  %v3266 = vpop.permute.xlu0 %3265
  %s3268 = sor.u32 256, 8
  %3269 = vbcast.lane.b32.xlu0 %v3263, %s3268
  %v3270 = vpop.permute.xlu0 %3269
  %v3271 = vlaneseq
  %v3272 = vshrl.u32 %v3271, 7
  %v3273 = vsub.s32 6, %v3272
  %v3274 = vrot.slane %v2849, %v3273
  %3276 = vbcast.lane.b32.xlu0 %v3274, 256
  %v3277 = vpop.permute.xlu0 %3276
  %s3279 = sor.u32 256, 8
  %3280 = vbcast.lane.b32.xlu0 %v3274, %s3279
  %v3281 = vpop.permute.xlu0 %3280
  %v3282 = vlaneseq
  %v3283 = vshrl.u32 %v3282, 7
  %v3284 = vsub.s32 7, %v3283
  %v3285 = vrot.slane %v2849, %v3284
  %3287 = vbcast.lane.b32.xlu0 %v3285, 256
  %v3288 = vpop.permute.xlu0 %3287
  %s3290 = sor.u32 256, 8
  %3291 = vbcast.lane.b32.xlu0 %v3285, %s3290
  %v3292 = vpop.permute.xlu0 %3291
  %v3293 = vlaneseq
  %v3294 = vshrl.u32 %v3293, 7
  %v3295 = vsub.s32 0, %v3294
  %v3296 = vrot.slane %v2850, %v3295
  %3298 = vbcast.lane.b32.xlu0 %v3296, 256
  %v3299 = vpop.permute.xlu0 %3298
  %s3301 = sor.u32 256, 8
  %3302 = vbcast.lane.b32.xlu0 %v3296, %s3301
  %v3303 = vpop.permute.xlu0 %3302
  %v3304 = vlaneseq
  %v3305 = vshrl.u32 %v3304, 7
  %v3306 = vsub.s32 1, %v3305
  %v3307 = vrot.slane %v2850, %v3306
  %3309 = vbcast.lane.b32.xlu0 %v3307, 256
  %v3310 = vpop.permute.xlu0 %3309
  %s3312 = sor.u32 256, 8
  %3313 = vbcast.lane.b32.xlu0 %v3307, %s3312
  %v3314 = vpop.permute.xlu0 %3313
  %v3315 = vlaneseq
  %v3316 = vshrl.u32 %v3315, 7
  %v3317 = vsub.s32 2, %v3316
  %v3318 = vrot.slane %v2850, %v3317
  %3320 = vbcast.lane.b32.xlu0 %v3318, 256
  %v3321 = vpop.permute.xlu0 %3320
  %s3323 = sor.u32 256, 8
  %3324 = vbcast.lane.b32.xlu0 %v3318, %s3323
  %v3325 = vpop.permute.xlu0 %3324
  %v3326 = vlaneseq
  %v3327 = vshrl.u32 %v3326, 7
  %v3328 = vsub.s32 3, %v3327
  %v3329 = vrot.slane %v2850, %v3328
  %3331 = vbcast.lane.b32.xlu0 %v3329, 256
  %v3332 = vpop.permute.xlu0 %3331
  %s3334 = sor.u32 256, 8
  %3335 = vbcast.lane.b32.xlu0 %v3329, %s3334
  %v3336 = vpop.permute.xlu0 %3335
  %v3337 = vlaneseq
  %v3338 = vshrl.u32 %v3337, 7
  %v3339 = vsub.s32 4, %v3338
  %v3340 = vrot.slane %v2850, %v3339
  %3342 = vbcast.lane.b32.xlu0 %v3340, 256
  %v3343 = vpop.permute.xlu0 %3342
  %s3345 = sor.u32 256, 8
  %3346 = vbcast.lane.b32.xlu0 %v3340, %s3345
  %v3347 = vpop.permute.xlu0 %3346
  %v3348 = vlaneseq
  %v3349 = vshrl.u32 %v3348, 7
  %v3350 = vsub.s32 5, %v3349
  %v3351 = vrot.slane %v2850, %v3350
  %3353 = vbcast.lane.b32.xlu0 %v3351, 256
  %v3354 = vpop.permute.xlu0 %3353
  %s3356 = sor.u32 256, 8
  %3357 = vbcast.lane.b32.xlu0 %v3351, %s3356
  %v3358 = vpop.permute.xlu0 %3357
  %v3359 = vlaneseq
  %v3360 = vshrl.u32 %v3359, 7
  %v3361 = vsub.s32 6, %v3360
  %v3362 = vrot.slane %v2850, %v3361
  %3364 = vbcast.lane.b32.xlu0 %v3362, 256
  %v3365 = vpop.permute.xlu0 %3364
  %s3367 = sor.u32 256, 8
  %3368 = vbcast.lane.b32.xlu0 %v3362, %s3367
  %v3369 = vpop.permute.xlu0 %3368
  %v3370 = vlaneseq
  %v3371 = vshrl.u32 %v3370, 7
  %v3372 = vsub.s32 7, %v3371
  %v3373 = vrot.slane %v2850, %v3372
  %3375 = vbcast.lane.b32.xlu0 %v3373, 256
  %v3376 = vpop.permute.xlu0 %3375
  %s3378 = sor.u32 256, 8
  %3379 = vbcast.lane.b32.xlu0 %v3373, %s3378
  %v3380 = vpop.permute.xlu0 %3379
  %v3381 = vlaneseq
  %v3382 = vshrl.u32 %v3381, 7
  %v3383 = vsub.s32 0, %v3382
  %v3384 = vrot.slane %v2851, %v3383
  %3386 = vbcast.lane.b32.xlu0 %v3384, 256
  %v3387 = vpop.permute.xlu0 %3386
  %s3389 = sor.u32 256, 8
  %3390 = vbcast.lane.b32.xlu0 %v3384, %s3389
  %v3391 = vpop.permute.xlu0 %3390
  %v3392 = vlaneseq
  %v3393 = vshrl.u32 %v3392, 7
  %v3394 = vsub.s32 1, %v3393
  %v3395 = vrot.slane %v2851, %v3394
  %3397 = vbcast.lane.b32.xlu0 %v3395, 256
  %v3398 = vpop.permute.xlu0 %3397
  %s3400 = sor.u32 256, 8
  %3401 = vbcast.lane.b32.xlu0 %v3395, %s3400
  %v3402 = vpop.permute.xlu0 %3401
  %v3403 = vlaneseq
  %v3404 = vshrl.u32 %v3403, 7
  %v3405 = vsub.s32 2, %v3404
  %v3406 = vrot.slane %v2851, %v3405
  %3408 = vbcast.lane.b32.xlu0 %v3406, 256
  %v3409 = vpop.permute.xlu0 %3408
  %s3411 = sor.u32 256, 8
  %3412 = vbcast.lane.b32.xlu0 %v3406, %s3411
  %v3413 = vpop.permute.xlu0 %3412
  %v3414 = vlaneseq
  %v3415 = vshrl.u32 %v3414, 7
  %v3416 = vsub.s32 3, %v3415
  %v3417 = vrot.slane %v2851, %v3416
  %3419 = vbcast.lane.b32.xlu0 %v3417, 256
  %v3420 = vpop.permute.xlu0 %3419
  %s3422 = sor.u32 256, 8
  %3423 = vbcast.lane.b32.xlu0 %v3417, %s3422
  %v3424 = vpop.permute.xlu0 %3423
  %v3425 = vlaneseq
  %v3426 = vshrl.u32 %v3425, 7
  %v3427 = vsub.s32 4, %v3426
  %v3428 = vrot.slane %v2851, %v3427
  %3430 = vbcast.lane.b32.xlu0 %v3428, 256
  %v3431 = vpop.permute.xlu0 %3430
  %s3433 = sor.u32 256, 8
  %3434 = vbcast.lane.b32.xlu0 %v3428, %s3433
  %v3435 = vpop.permute.xlu0 %3434
  %v3436 = vlaneseq
  %v3437 = vshrl.u32 %v3436, 7
  %v3438 = vsub.s32 5, %v3437
  %v3439 = vrot.slane %v2851, %v3438
  %3441 = vbcast.lane.b32.xlu0 %v3439, 256
  %v3442 = vpop.permute.xlu0 %3441
  %s3444 = sor.u32 256, 8
  %3445 = vbcast.lane.b32.xlu0 %v3439, %s3444
  %v3446 = vpop.permute.xlu0 %3445
  %v3447 = vlaneseq
  %v3448 = vshrl.u32 %v3447, 7
  %v3449 = vsub.s32 6, %v3448
  %v3450 = vrot.slane %v2851, %v3449
  %3452 = vbcast.lane.b32.xlu0 %v3450, 256
  %v3453 = vpop.permute.xlu0 %3452
  %s3455 = sor.u32 256, 8
  %3456 = vbcast.lane.b32.xlu0 %v3450, %s3455
  %v3457 = vpop.permute.xlu0 %3456
  %v3458 = vlaneseq
  %v3459 = vshrl.u32 %v3458, 7
  %v3460 = vsub.s32 7, %v3459
  %v3461 = vrot.slane %v2851, %v3460
  %3463 = vbcast.lane.b32.xlu0 %v3461, 256
  %v3464 = vpop.permute.xlu0 %3463
  %s3466 = sor.u32 256, 8
  %3467 = vbcast.lane.b32.xlu0 %v3461, %s3466
  %v3468 = vpop.permute.xlu0 %3467
  %v3469 = vlaneseq
  %v3470 = vshrl.u32 %v3469, 7
  %v3471 = vsub.s32 0, %v3470
  %v3472 = vrot.slane %v2852, %v3471
  %3474 = vbcast.lane.b32.xlu0 %v3472, 256
  %v3475 = vpop.permute.xlu0 %3474
  %s3477 = sor.u32 256, 8
  %3478 = vbcast.lane.b32.xlu0 %v3472, %s3477
  %v3479 = vpop.permute.xlu0 %3478
  %v3480 = vlaneseq
  %v3481 = vshrl.u32 %v3480, 7
  %v3482 = vsub.s32 1, %v3481
  %v3483 = vrot.slane %v2852, %v3482
  %3485 = vbcast.lane.b32.xlu0 %v3483, 256
  %v3486 = vpop.permute.xlu0 %3485
  %s3488 = sor.u32 256, 8
  %3489 = vbcast.lane.b32.xlu0 %v3483, %s3488
  %v3490 = vpop.permute.xlu0 %3489
  %v3491 = vlaneseq
  %v3492 = vshrl.u32 %v3491, 7
  %v3493 = vsub.s32 2, %v3492
  %v3494 = vrot.slane %v2852, %v3493
  %3496 = vbcast.lane.b32.xlu0 %v3494, 256
  %v3497 = vpop.permute.xlu0 %3496
  %s3499 = sor.u32 256, 8
  %3500 = vbcast.lane.b32.xlu0 %v3494, %s3499
  %v3501 = vpop.permute.xlu0 %3500
  %v3502 = vlaneseq
  %v3503 = vshrl.u32 %v3502, 7
  %v3504 = vsub.s32 3, %v3503
  %v3505 = vrot.slane %v2852, %v3504
  %3507 = vbcast.lane.b32.xlu0 %v3505, 256
  %v3508 = vpop.permute.xlu0 %3507
  %s3510 = sor.u32 256, 8
  %3511 = vbcast.lane.b32.xlu0 %v3505, %s3510
  %v3512 = vpop.permute.xlu0 %3511
  %v3513 = vlaneseq
  %v3514 = vshrl.u32 %v3513, 7
  %v3515 = vsub.s32 4, %v3514
  %v3516 = vrot.slane %v2852, %v3515
  %3518 = vbcast.lane.b32.xlu0 %v3516, 256
  %v3519 = vpop.permute.xlu0 %3518
  %s3521 = sor.u32 256, 8
  %3522 = vbcast.lane.b32.xlu0 %v3516, %s3521
  %v3523 = vpop.permute.xlu0 %3522
  %v3524 = vlaneseq
  %v3525 = vshrl.u32 %v3524, 7
  %v3526 = vsub.s32 5, %v3525
  %v3527 = vrot.slane %v2852, %v3526
  %3529 = vbcast.lane.b32.xlu0 %v3527, 256
  %v3530 = vpop.permute.xlu0 %3529
  %s3532 = sor.u32 256, 8
  %3533 = vbcast.lane.b32.xlu0 %v3527, %s3532
  %v3534 = vpop.permute.xlu0 %3533
  %v3535 = vlaneseq
  %v3536 = vshrl.u32 %v3535, 7
  %v3537 = vsub.s32 6, %v3536
  %v3538 = vrot.slane %v2852, %v3537
  %3540 = vbcast.lane.b32.xlu0 %v3538, 256
  %v3541 = vpop.permute.xlu0 %3540
  %s3543 = sor.u32 256, 8
  %3544 = vbcast.lane.b32.xlu0 %v3538, %s3543
  %v3545 = vpop.permute.xlu0 %3544
  %v3546 = vlaneseq
  %v3547 = vshrl.u32 %v3546, 7
  %v3548 = vsub.s32 7, %v3547
  %v3549 = vrot.slane %v2852, %v3548
  %3551 = vbcast.lane.b32.xlu0 %v3549, 256
  %v3552 = vpop.permute.xlu0 %3551
  %s3554 = sor.u32 256, 8
  %3555 = vbcast.lane.b32.xlu0 %v3549, %s3554
  %v3556 = vpop.permute.xlu0 %3555
  %v3565 = vcombine.high %v2845, %v2845
  %v3567 = vunpack.c.l.s4 1966171168
  %v3568 = vunpack.c.0.s8 %v3567
  %v3569 = vlaneseq
  %v3570 = vshrl.u32 %v3569, 7
  %v3571 = vsub.s32 %v3568, %v3570
  %v3572 = vrot.slane %v2845, %v3571
  %v3574 = vunpack.c.l.s4 1966171168
  %v3575 = vunpack.c.0.s8 %v3574
  %v3576 = vlaneseq
  %v3577 = vshrl.u32 %v3576, 7
  %v3578 = vsub.s32 %v3575, %v3577
  %v3579 = vrot.slane %v3565, %v3578
  %v3580 = vcombine.high %v3572, %v3572
  %v3581 = vcombine.high %v3579, %v3579
  %v3583 = vunpack.c.l.s4 1966171168
  %v3584 = vunpack.c.0.s8 %v3583
  %v3585 = vlaneseq
  %v3586 = vshrl.u32 %v3585, 7
  %v3587 = vsub.s32 %v3584, %v3586
  %v3588 = vrot.slane %v3572, %v3587
  %v3590 = vunpack.c.l.s4 1966171168
  %v3591 = vunpack.c.0.s8 %v3590
  %v3592 = vlaneseq
  %v3593 = vshrl.u32 %v3592, 7
  %v3594 = vsub.s32 %v3591, %v3593
  %v3595 = vrot.slane %v3579, %v3594
  %v3597 = vunpack.c.l.s4 1966171168
  %v3598 = vunpack.c.0.s8 %v3597
  %v3599 = vlaneseq
  %v3600 = vshrl.u32 %v3599, 7
  %v3601 = vsub.s32 %v3598, %v3600
  %v3602 = vrot.slane %v3580, %v3601
  %v3604 = vunpack.c.l.s4 1966171168
  %v3605 = vunpack.c.0.s8 %v3604
  %v3606 = vlaneseq
  %v3607 = vshrl.u32 %v3606, 7
  %v3608 = vsub.s32 %v3605, %v3607
  %v3609 = vrot.slane %v3581, %v3608
  %v3610 = vcombine.high %v3588, %v3588
  %v3611 = vcombine.high %v3595, %v3595
  %v3612 = vcombine.high %v3602, %v3602
  %v3613 = vcombine.high %v3609, %v3609
  %v3614 = vcombine.high %v2846, %v2846
  %v3616 = vunpack.c.l.s4 1966171168
  %v3617 = vunpack.c.0.s8 %v3616
  %v3618 = vlaneseq
  %v3619 = vshrl.u32 %v3618, 7
  %v3620 = vsub.s32 %v3617, %v3619
  %v3621 = vrot.slane %v2846, %v3620
  %v3623 = vunpack.c.l.s4 1966171168
  %v3624 = vunpack.c.0.s8 %v3623
  %v3625 = vlaneseq
  %v3626 = vshrl.u32 %v3625, 7
  %v3627 = vsub.s32 %v3624, %v3626
  %v3628 = vrot.slane %v3614, %v3627
  %v3629 = vcombine.high %v3621, %v3621
  %v3630 = vcombine.high %v3628, %v3628
  %v3632 = vunpack.c.l.s4 1966171168
  %v3633 = vunpack.c.0.s8 %v3632
  %v3634 = vlaneseq
  %v3635 = vshrl.u32 %v3634, 7
  %v3636 = vsub.s32 %v3633, %v3635
  %v3637 = vrot.slane %v3621, %v3636
  %v3639 = vunpack.c.l.s4 1966171168
  %v3640 = vunpack.c.0.s8 %v3639
  %v3641 = vlaneseq
  %v3642 = vshrl.u32 %v3641, 7
  %v3643 = vsub.s32 %v3640, %v3642
  %v3644 = vrot.slane %v3628, %v3643
  %v3646 = vunpack.c.l.s4 1966171168
  %v3647 = vunpack.c.0.s8 %v3646
  %v3648 = vlaneseq
  %v3649 = vshrl.u32 %v3648, 7
  %v3650 = vsub.s32 %v3647, %v3649
  %v3651 = vrot.slane %v3629, %v3650
  %v3653 = vunpack.c.l.s4 1966171168
  %v3654 = vunpack.c.0.s8 %v3653
  %v3655 = vlaneseq
  %v3656 = vshrl.u32 %v3655, 7
  %v3657 = vsub.s32 %v3654, %v3656
  %v3658 = vrot.slane %v3630, %v3657
  %v3659 = vcombine.high %v3637, %v3637
  %v3660 = vcombine.high %v3644, %v3644
  %v3661 = vcombine.high %v3651, %v3651
  %v3662 = vcombine.high %v3658, %v3658
  %v3663 = vcombine.high %v2847, %v2847
  %v3665 = vunpack.c.l.s4 1966171168
  %v3666 = vunpack.c.0.s8 %v3665
  %v3667 = vlaneseq
  %v3668 = vshrl.u32 %v3667, 7
  %v3669 = vsub.s32 %v3666, %v3668
  %v3670 = vrot.slane %v2847, %v3669
  %v3672 = vunpack.c.l.s4 1966171168
  %v3673 = vunpack.c.0.s8 %v3672
  %v3674 = vlaneseq
  %v3675 = vshrl.u32 %v3674, 7
  %v3676 = vsub.s32 %v3673, %v3675
  %v3677 = vrot.slane %v3663, %v3676
  %v3678 = vcombine.high %v3670, %v3670
  %v3679 = vcombine.high %v3677, %v3677
  %v3681 = vunpack.c.l.s4 1966171168
  %v3682 = vunpack.c.0.s8 %v3681
  %v3683 = vlaneseq
  %v3684 = vshrl.u32 %v3683, 7
  %v3685 = vsub.s32 %v3682, %v3684
  %v3686 = vrot.slane %v3670, %v3685
  %v3688 = vunpack.c.l.s4 1966171168
  %v3689 = vunpack.c.0.s8 %v3688
  %v3690 = vlaneseq
  %v3691 = vshrl.u32 %v3690, 7
  %v3692 = vsub.s32 %v3689, %v3691
  %v3693 = vrot.slane %v3677, %v3692
  %v3695 = vunpack.c.l.s4 1966171168
  %v3696 = vunpack.c.0.s8 %v3695
  %v3697 = vlaneseq
  %v3698 = vshrl.u32 %v3697, 7
  %v3699 = vsub.s32 %v3696, %v3698
  %v3700 = vrot.slane %v3678, %v3699
  %v3702 = vunpack.c.l.s4 1966171168
  %v3703 = vunpack.c.0.s8 %v3702
  %v3704 = vlaneseq
  %v3705 = vshrl.u32 %v3704, 7
  %v3706 = vsub.s32 %v3703, %v3705
  %v3707 = vrot.slane %v3679, %v3706
  %v3708 = vcombine.high %v3686, %v3686
  %v3709 = vcombine.high %v3693, %v3693
  %v3710 = vcombine.high %v3700, %v3700
  %v3711 = vcombine.high %v3707, %v3707
  %v3712 = vcombine.high %v2848, %v2848
  %v3714 = vunpack.c.l.s4 1966171168
  %v3715 = vunpack.c.0.s8 %v3714
  %v3716 = vlaneseq
  %v3717 = vshrl.u32 %v3716, 7
  %v3718 = vsub.s32 %v3715, %v3717
  %v3719 = vrot.slane %v2848, %v3718
  %v3721 = vunpack.c.l.s4 1966171168
  %v3722 = vunpack.c.0.s8 %v3721
  %v3723 = vlaneseq
  %v3724 = vshrl.u32 %v3723, 7
  %v3725 = vsub.s32 %v3722, %v3724
  %v3726 = vrot.slane %v3712, %v3725
  %v3727 = vcombine.high %v3719, %v3719
  %v3728 = vcombine.high %v3726, %v3726
  %v3730 = vunpack.c.l.s4 1966171168
  %v3731 = vunpack.c.0.s8 %v3730
  %v3732 = vlaneseq
  %v3733 = vshrl.u32 %v3732, 7
  %v3734 = vsub.s32 %v3731, %v3733
  %v3735 = vrot.slane %v3719, %v3734
  %v3737 = vunpack.c.l.s4 1966171168
  %v3738 = vunpack.c.0.s8 %v3737
  %v3739 = vlaneseq
  %v3740 = vshrl.u32 %v3739, 7
  %v3741 = vsub.s32 %v3738, %v3740
  %v3742 = vrot.slane %v3726, %v3741
  %v3744 = vunpack.c.l.s4 1966171168
  %v3745 = vunpack.c.0.s8 %v3744
  %v3746 = vlaneseq
  %v3747 = vshrl.u32 %v3746, 7
  %v3748 = vsub.s32 %v3745, %v3747
  %v3749 = vrot.slane %v3727, %v3748
  %v3751 = vunpack.c.l.s4 1966171168
  %v3752 = vunpack.c.0.s8 %v3751
  %v3753 = vlaneseq
  %v3754 = vshrl.u32 %v3753, 7
  %v3755 = vsub.s32 %v3752, %v3754
  %v3756 = vrot.slane %v3728, %v3755
  %v3757 = vcombine.high %v3735, %v3735
  %v3758 = vcombine.high %v3742, %v3742
  %v3759 = vcombine.high %v3749, %v3749
  %v3760 = vcombine.high %v3756, %v3756
  %v3761 = vcombine.high %v2849, %v2849
  %v3763 = vunpack.c.l.s4 1966171168
  %v3764 = vunpack.c.0.s8 %v3763
  %v3765 = vlaneseq
  %v3766 = vshrl.u32 %v3765, 7
  %v3767 = vsub.s32 %v3764, %v3766
  %v3768 = vrot.slane %v2849, %v3767
  %v3770 = vunpack.c.l.s4 1966171168
  %v3771 = vunpack.c.0.s8 %v3770
  %v3772 = vlaneseq
  %v3773 = vshrl.u32 %v3772, 7
  %v3774 = vsub.s32 %v3771, %v3773
  %v3775 = vrot.slane %v3761, %v3774
  %v3776 = vcombine.high %v3768, %v3768
  %v3777 = vcombine.high %v3775, %v3775
  %v3779 = vunpack.c.l.s4 1966171168
  %v3780 = vunpack.c.0.s8 %v3779
  %v3781 = vlaneseq
  %v3782 = vshrl.u32 %v3781, 7
  %v3783 = vsub.s32 %v3780, %v3782
  %v3784 = vrot.slane %v3768, %v3783
  %v3786 = vunpack.c.l.s4 1966171168
  %v3787 = vunpack.c.0.s8 %v3786
  %v3788 = vlaneseq
  %v3789 = vshrl.u32 %v3788, 7
  %v3790 = vsub.s32 %v3787, %v3789
  %v3791 = vrot.slane %v3775, %v3790
  %v3793 = vunpack.c.l.s4 1966171168
  %v3794 = vunpack.c.0.s8 %v3793
  %v3795 = vlaneseq
  %v3796 = vshrl.u32 %v3795, 7
  %v3797 = vsub.s32 %v3794, %v3796
  %v3798 = vrot.slane %v3776, %v3797
  %v3800 = vunpack.c.l.s4 1966171168
  %v3801 = vunpack.c.0.s8 %v3800
  %v3802 = vlaneseq
  %v3803 = vshrl.u32 %v3802, 7
  %v3804 = vsub.s32 %v3801, %v3803
  %v3805 = vrot.slane %v3777, %v3804
  %v3806 = vcombine.high %v3784, %v3784
  %v3807 = vcombine.high %v3791, %v3791
  %v3808 = vcombine.high %v3798, %v3798
  %v3809 = vcombine.high %v3805, %v3805
  %v3810 = vcombine.high %v2850, %v2850
  %v3812 = vunpack.c.l.s4 1966171168
  %v3813 = vunpack.c.0.s8 %v3812
  %v3814 = vlaneseq
  %v3815 = vshrl.u32 %v3814, 7
  %v3816 = vsub.s32 %v3813, %v3815
  %v3817 = vrot.slane %v2850, %v3816
  %v3819 = vunpack.c.l.s4 1966171168
  %v3820 = vunpack.c.0.s8 %v3819
  %v3821 = vlaneseq
  %v3822 = vshrl.u32 %v3821, 7
  %v3823 = vsub.s32 %v3820, %v3822
  %v3824 = vrot.slane %v3810, %v3823
  %v3825 = vcombine.high %v3817, %v3817
  %v3826 = vcombine.high %v3824, %v3824
  %v3828 = vunpack.c.l.s4 1966171168
  %v3829 = vunpack.c.0.s8 %v3828
  %v3830 = vlaneseq
  %v3831 = vshrl.u32 %v3830, 7
  %v3832 = vsub.s32 %v3829, %v3831
  %v3833 = vrot.slane %v3817, %v3832
  %v3835 = vunpack.c.l.s4 1966171168
  %v3836 = vunpack.c.0.s8 %v3835
  %v3837 = vlaneseq
  %v3838 = vshrl.u32 %v3837, 7
  %v3839 = vsub.s32 %v3836, %v3838
  %v3840 = vrot.slane %v3824, %v3839
  %v3842 = vunpack.c.l.s4 1966171168
  %v3843 = vunpack.c.0.s8 %v3842
  %v3844 = vlaneseq
  %v3845 = vshrl.u32 %v3844, 7
  %v3846 = vsub.s32 %v3843, %v3845
  %v3847 = vrot.slane %v3825, %v3846
  %v3849 = vunpack.c.l.s4 1966171168
  %v3850 = vunpack.c.0.s8 %v3849
  %v3851 = vlaneseq
  %v3852 = vshrl.u32 %v3851, 7
  %v3853 = vsub.s32 %v3850, %v3852
  %v3854 = vrot.slane %v3826, %v3853
  %v3855 = vcombine.high %v3833, %v3833
  %v3856 = vcombine.high %v3840, %v3840
  %v3857 = vcombine.high %v3847, %v3847
  %v3858 = vcombine.high %v3854, %v3854
  %v3859 = vcombine.high %v2851, %v2851
  %v3861 = vunpack.c.l.s4 1966171168
  %v3862 = vunpack.c.0.s8 %v3861
  %v3863 = vlaneseq
  %v3864 = vshrl.u32 %v3863, 7
  %v3865 = vsub.s32 %v3862, %v3864
  %v3866 = vrot.slane %v2851, %v3865
  %v3868 = vunpack.c.l.s4 1966171168
  %v3869 = vunpack.c.0.s8 %v3868
  %v3870 = vlaneseq
  %v3871 = vshrl.u32 %v3870, 7
  %v3872 = vsub.s32 %v3869, %v3871
  %v3873 = vrot.slane %v3859, %v3872
  %v3874 = vcombine.high %v3866, %v3866
  %v3875 = vcombine.high %v3873, %v3873
  %v3877 = vunpack.c.l.s4 1966171168
  %v3878 = vunpack.c.0.s8 %v3877
  %v3879 = vlaneseq
  %v3880 = vshrl.u32 %v3879, 7
  %v3881 = vsub.s32 %v3878, %v3880
  %v3882 = vrot.slane %v3866, %v3881
  %v3884 = vunpack.c.l.s4 1966171168
  %v3885 = vunpack.c.0.s8 %v3884
  %v3886 = vlaneseq
  %v3887 = vshrl.u32 %v3886, 7
  %v3888 = vsub.s32 %v3885, %v3887
  %v3889 = vrot.slane %v3873, %v3888
  %v3891 = vunpack.c.l.s4 1966171168
  %v3892 = vunpack.c.0.s8 %v3891
  %v3893 = vlaneseq
  %v3894 = vshrl.u32 %v3893, 7
  %v3895 = vsub.s32 %v3892, %v3894
  %v3896 = vrot.slane %v3874, %v3895
  %v3898 = vunpack.c.l.s4 1966171168
  %v3899 = vunpack.c.0.s8 %v3898
  %v3900 = vlaneseq
  %v3901 = vshrl.u32 %v3900, 7
  %v3902 = vsub.s32 %v3899, %v3901
  %v3903 = vrot.slane %v3875, %v3902
  %v3904 = vcombine.high %v3882, %v3882
  %v3905 = vcombine.high %v3889, %v3889
  %v3906 = vcombine.high %v3896, %v3896
  %v3907 = vcombine.high %v3903, %v3903
  %v3908 = vcombine.high %v2852, %v2852
  %v3910 = vunpack.c.l.s4 1966171168
  %v3911 = vunpack.c.0.s8 %v3910
  %v3912 = vlaneseq
  %v3913 = vshrl.u32 %v3912, 7
  %v3914 = vsub.s32 %v3911, %v3913
  %v3915 = vrot.slane %v2852, %v3914
  %v3917 = vunpack.c.l.s4 1966171168
  %v3918 = vunpack.c.0.s8 %v3917
  %v3919 = vlaneseq
  %v3920 = vshrl.u32 %v3919, 7
  %v3921 = vsub.s32 %v3918, %v3920
  %v3922 = vrot.slane %v3908, %v3921
  %v3923 = vcombine.high %v3915, %v3915
  %v3924 = vcombine.high %v3922, %v3922
  %v3926 = vunpack.c.l.s4 1966171168
  %v3927 = vunpack.c.0.s8 %v3926
  %v3928 = vlaneseq
  %v3929 = vshrl.u32 %v3928, 7
  %v3930 = vsub.s32 %v3927, %v3929
  %v3931 = vrot.slane %v3915, %v3930
  %v3933 = vunpack.c.l.s4 1966171168
  %v3934 = vunpack.c.0.s8 %v3933
  %v3935 = vlaneseq
  %v3936 = vshrl.u32 %v3935, 7
  %v3937 = vsub.s32 %v3934, %v3936
  %v3938 = vrot.slane %v3922, %v3937
  %v3940 = vunpack.c.l.s4 1966171168
  %v3941 = vunpack.c.0.s8 %v3940
  %v3942 = vlaneseq
  %v3943 = vshrl.u32 %v3942, 7
  %v3944 = vsub.s32 %v3941, %v3943
  %v3945 = vrot.slane %v3923, %v3944
  %v3947 = vunpack.c.l.s4 1966171168
  %v3948 = vunpack.c.0.s8 %v3947
  %v3949 = vlaneseq
  %v3950 = vshrl.u32 %v3949, 7
  %v3951 = vsub.s32 %v3948, %v3950
  %v3952 = vrot.slane %v3924, %v3951
  %v3953 = vcombine.high %v3931, %v3931
  %v3954 = vcombine.high %v3938, %v3938
  %v3955 = vcombine.high %v3945, %v3945
  %v3956 = vcombine.high %v3952, %v3952
  %v3957 = vlaneseq
  %v3958 = vand.u32 %v3957, 127
  %v3959 = vlaneseq
  %v3960 = vshrl.u32 %v3959, 7
  %v3961 = vsub.s32 0, %v3960
  %v3962 = vrot.slane %v3588, %v3961
  %v3963 = vlaneseq
  %v3964 = vshrl.u32 %v3963, 7
  %v3965 = vsub.s32 0, %v3964
  %v3966 = vrot.slane %v3602, %v3965
  %v3967 = vlaneseq
  %v3968 = vshrl.u32 %v3967, 7
  %v3969 = vsub.s32 0, %v3968
  %v3970 = vrot.slane %v3610, %v3969
  %v3971 = vlaneseq
  %v3972 = vshrl.u32 %v3971, 7
  %v3973 = vsub.s32 0, %v3972
  %v3974 = vrot.slane %v3612, %v3973
  %v3975 = vlaneseq
  %v3976 = vshrl.u32 %v3975, 7
  %v3977 = vsub.s32 0, %v3976
  %v3978 = vrot.slane %v3595, %v3977
  %v3979 = vlaneseq
  %v3980 = vshrl.u32 %v3979, 7
  %v3981 = vsub.s32 0, %v3980
  %v3982 = vrot.slane %v3609, %v3981
  %v3983 = vlaneseq
  %v3984 = vshrl.u32 %v3983, 7
  %v3985 = vsub.s32 0, %v3984
  %v3986 = vrot.slane %v3611, %v3985
  %v3987 = vlaneseq
  %v3988 = vshrl.u32 %v3987, 7
  %v3989 = vsub.s32 0, %v3988
  %v3990 = vrot.slane %v3613, %v3989
  %v3991 = vlaneseq
  %v3992 = vshrl.u32 %v3991, 7
  %v3993 = vsub.s32 0, %v3992
  %v3994 = vrot.slane %v3637, %v3993
  %v3995 = vlaneseq
  %v3996 = vshrl.u32 %v3995, 7
  %v3997 = vsub.s32 0, %v3996
  %v3998 = vrot.slane %v3651, %v3997
  %v3999 = vlaneseq
  %v4000 = vshrl.u32 %v3999, 7
  %v4001 = vsub.s32 0, %v4000
  %v4002 = vrot.slane %v3659, %v4001
  %v4003 = vlaneseq
  %v4004 = vshrl.u32 %v4003, 7
  %v4005 = vsub.s32 0, %v4004
  %v4006 = vrot.slane %v3661, %v4005
  %v4007 = vlaneseq
  %v4008 = vshrl.u32 %v4007, 7
  %v4009 = vsub.s32 0, %v4008
  %v4010 = vrot.slane %v3644, %v4009
  %v4011 = vlaneseq
  %v4012 = vshrl.u32 %v4011, 7
  %v4013 = vsub.s32 0, %v4012
  %v4014 = vrot.slane %v3658, %v4013
  %v4015 = vlaneseq
  %v4016 = vshrl.u32 %v4015, 7
  %v4017 = vsub.s32 0, %v4016
  %v4018 = vrot.slane %v3660, %v4017
  %v4019 = vlaneseq
  %v4020 = vshrl.u32 %v4019, 7
  %v4021 = vsub.s32 0, %v4020
  %v4022 = vrot.slane %v3662, %v4021
  %v4023 = vlaneseq
  %v4024 = vshrl.u32 %v4023, 7
  %v4025 = vsub.s32 0, %v4024
  %v4026 = vrot.slane %v3686, %v4025
  %v4027 = vlaneseq
  %v4028 = vshrl.u32 %v4027, 7
  %v4029 = vsub.s32 0, %v4028
  %v4030 = vrot.slane %v3700, %v4029
  %v4031 = vlaneseq
  %v4032 = vshrl.u32 %v4031, 7
  %v4033 = vsub.s32 0, %v4032
  %v4034 = vrot.slane %v3708, %v4033
  %v4035 = vlaneseq
  %v4036 = vshrl.u32 %v4035, 7
  %v4037 = vsub.s32 0, %v4036
  %v4038 = vrot.slane %v3710, %v4037
  %v4039 = vlaneseq
  %v4040 = vshrl.u32 %v4039, 7
  %v4041 = vsub.s32 0, %v4040
  %v4042 = vrot.slane %v3693, %v4041
  %v4043 = vlaneseq
  %v4044 = vshrl.u32 %v4043, 7
  %v4045 = vsub.s32 0, %v4044
  %v4046 = vrot.slane %v3707, %v4045
  %v4047 = vlaneseq
  %v4048 = vshrl.u32 %v4047, 7
  %v4049 = vsub.s32 0, %v4048
  %v4050 = vrot.slane %v3709, %v4049
  %v4051 = vlaneseq
  %v4052 = vshrl.u32 %v4051, 7
  %v4053 = vsub.s32 0, %v4052
  %v4054 = vrot.slane %v3711, %v4053
  %v4055 = vlaneseq
  %v4056 = vshrl.u32 %v4055, 7
  %v4057 = vsub.s32 0, %v4056
  %v4058 = vrot.slane %v3735, %v4057
  %v4059 = vlaneseq
  %v4060 = vshrl.u32 %v4059, 7
  %v4061 = vsub.s32 0, %v4060
  %v4062 = vrot.slane %v3749, %v4061
  %v4063 = vlaneseq
  %v4064 = vshrl.u32 %v4063, 7
  %v4065 = vsub.s32 0, %v4064
  %v4066 = vrot.slane %v3757, %v4065
  %v4067 = vlaneseq
  %v4068 = vshrl.u32 %v4067, 7
  %v4069 = vsub.s32 0, %v4068
  %v4070 = vrot.slane %v3759, %v4069
  %v4071 = vlaneseq
  %v4072 = vshrl.u32 %v4071, 7
  %v4073 = vsub.s32 0, %v4072
  %v4074 = vrot.slane %v3742, %v4073
  %v4075 = vlaneseq
  %v4076 = vshrl.u32 %v4075, 7
  %v4077 = vsub.s32 0, %v4076
  %v4078 = vrot.slane %v3756, %v4077
  %v4079 = vlaneseq
  %v4080 = vshrl.u32 %v4079, 7
  %v4081 = vsub.s32 0, %v4080
  %v4082 = vrot.slane %v3758, %v4081
  %v4083 = vlaneseq
  %v4084 = vshrl.u32 %v4083, 7
  %v4085 = vsub.s32 0, %v4084
  %v4086 = vrot.slane %v3760, %v4085
  %v4087 = vlaneseq
  %v4088 = vshrl.u32 %v4087, 7
  %v4089 = vsub.s32 0, %v4088
  %v4090 = vrot.slane %v3784, %v4089
  %v4091 = vlaneseq
  %v4092 = vshrl.u32 %v4091, 7
  %v4093 = vsub.s32 0, %v4092
  %v4094 = vrot.slane %v3798, %v4093
  %v4095 = vlaneseq
  %v4096 = vshrl.u32 %v4095, 7
  %v4097 = vsub.s32 0, %v4096
  %v4098 = vrot.slane %v3806, %v4097
  %v4099 = vlaneseq
  %v4100 = vshrl.u32 %v4099, 7
  %v4101 = vsub.s32 0, %v4100
  %v4102 = vrot.slane %v3808, %v4101
  %v4103 = vlaneseq
  %v4104 = vshrl.u32 %v4103, 7
  %v4105 = vsub.s32 0, %v4104
  %v4106 = vrot.slane %v3791, %v4105
  %v4107 = vlaneseq
  %v4108 = vshrl.u32 %v4107, 7
  %v4109 = vsub.s32 0, %v4108
  %v4110 = vrot.slane %v3805, %v4109
  %v4111 = vlaneseq
  %v4112 = vshrl.u32 %v4111, 7
  %v4113 = vsub.s32 0, %v4112
  %v4114 = vrot.slane %v3807, %v4113
  %v4115 = vlaneseq
  %v4116 = vshrl.u32 %v4115, 7
  %v4117 = vsub.s32 0, %v4116
  %v4118 = vrot.slane %v3809, %v4117
  %v4119 = vlaneseq
  %v4120 = vshrl.u32 %v4119, 7
  %v4121 = vsub.s32 0, %v4120
  %v4122 = vrot.slane %v3833, %v4121
  %v4123 = vlaneseq
  %v4124 = vshrl.u32 %v4123, 7
  %v4125 = vsub.s32 0, %v4124
  %v4126 = vrot.slane %v3847, %v4125
  %v4127 = vlaneseq
  %v4128 = vshrl.u32 %v4127, 7
  %v4129 = vsub.s32 0, %v4128
  %v4130 = vrot.slane %v3855, %v4129
  %v4131 = vlaneseq
  %v4132 = vshrl.u32 %v4131, 7
  %v4133 = vsub.s32 0, %v4132
  %v4134 = vrot.slane %v3857, %v4133
  %v4135 = vlaneseq
  %v4136 = vshrl.u32 %v4135, 7
  %v4137 = vsub.s32 0, %v4136
  %v4138 = vrot.slane %v3840, %v4137
  %v4139 = vlaneseq
  %v4140 = vshrl.u32 %v4139, 7
  %v4141 = vsub.s32 0, %v4140
  %v4142 = vrot.slane %v3854, %v4141
  %v4143 = vlaneseq
  %v4144 = vshrl.u32 %v4143, 7
  %v4145 = vsub.s32 0, %v4144
  %v4146 = vrot.slane %v3856, %v4145
  %v4147 = vlaneseq
  %v4148 = vshrl.u32 %v4147, 7
  %v4149 = vsub.s32 0, %v4148
  %v4150 = vrot.slane %v3858, %v4149
  %v4151 = vlaneseq
  %v4152 = vshrl.u32 %v4151, 7
  %v4153 = vsub.s32 0, %v4152
  %v4154 = vrot.slane %v3882, %v4153
  %v4155 = vlaneseq
  %v4156 = vshrl.u32 %v4155, 7
  %v4157 = vsub.s32 0, %v4156
  %v4158 = vrot.slane %v3896, %v4157
  %v4159 = vlaneseq
  %v4160 = vshrl.u32 %v4159, 7
  %v4161 = vsub.s32 0, %v4160
  %v4162 = vrot.slane %v3904, %v4161
  %v4163 = vlaneseq
  %v4164 = vshrl.u32 %v4163, 7
  %v4165 = vsub.s32 0, %v4164
  %v4166 = vrot.slane %v3906, %v4165
  %v4167 = vlaneseq
  %v4168 = vshrl.u32 %v4167, 7
  %v4169 = vsub.s32 0, %v4168
  %v4170 = vrot.slane %v3889, %v4169
  %v4171 = vlaneseq
  %v4172 = vshrl.u32 %v4171, 7
  %v4173 = vsub.s32 0, %v4172
  %v4174 = vrot.slane %v3903, %v4173
  %v4175 = vlaneseq
  %v4176 = vshrl.u32 %v4175, 7
  %v4177 = vsub.s32 0, %v4176
  %v4178 = vrot.slane %v3905, %v4177
  %v4179 = vlaneseq
  %v4180 = vshrl.u32 %v4179, 7
  %v4181 = vsub.s32 0, %v4180
  %v4182 = vrot.slane %v3907, %v4181
  %v4183 = vlaneseq
  %v4184 = vshrl.u32 %v4183, 7
  %v4185 = vsub.s32 0, %v4184
  %v4186 = vrot.slane %v3931, %v4185
  %v4187 = vlaneseq
  %v4188 = vshrl.u32 %v4187, 7
  %v4189 = vsub.s32 0, %v4188
  %v4190 = vrot.slane %v3945, %v4189
  %v4191 = vlaneseq
  %v4192 = vshrl.u32 %v4191, 7
  %v4193 = vsub.s32 0, %v4192
  %v4194 = vrot.slane %v3953, %v4193
  %v4195 = vlaneseq
  %v4196 = vshrl.u32 %v4195, 7
  %v4197 = vsub.s32 0, %v4196
  %v4198 = vrot.slane %v3955, %v4197
  %v4199 = vlaneseq
  %v4200 = vshrl.u32 %v4199, 7
  %v4201 = vsub.s32 0, %v4200
  %v4202 = vrot.slane %v3938, %v4201
  %v4203 = vlaneseq
  %v4204 = vshrl.u32 %v4203, 7
  %v4205 = vsub.s32 0, %v4204
  %v4206 = vrot.slane %v3952, %v4205
  %v4207 = vlaneseq
  %v4208 = vshrl.u32 %v4207, 7
  %v4209 = vsub.s32 0, %v4208
  %v4210 = vrot.slane %v3954, %v4209
  %v4211 = vlaneseq
  %v4212 = vshrl.u32 %v4211, 7
  %v4213 = vsub.s32 0, %v4212
  %v4214 = vrot.slane %v3956, %v4213
  %vm4279 = vcmp.lt.f32.partialorder %v3962, %v2859
  %vm4280 = vcmp.lt.f32.partialorder %v3962, %v2863
  %vm4281 = vcmp.lt.f32.partialorder %v3966, %v2870
  %vm4282 = vcmp.lt.f32.partialorder %v3966, %v2874
  %vm4283 = vcmp.lt.f32.partialorder %v3970, %v2881
  %vm4284 = vcmp.lt.f32.partialorder %v3970, %v2885
  %vm4285 = vcmp.lt.f32.partialorder %v3974, %v2892
  %vm4286 = vcmp.lt.f32.partialorder %v3974, %v2896
  %vm4287 = vcmp.lt.f32.partialorder %v3978, %v2903
  %vm4288 = vcmp.lt.f32.partialorder %v3978, %v2907
  %vm4289 = vcmp.lt.f32.partialorder %v3982, %v2914
  %vm4290 = vcmp.lt.f32.partialorder %v3982, %v2918
  %vm4291 = vcmp.lt.f32.partialorder %v3986, %v2925
  %vm4292 = vcmp.lt.f32.partialorder %v3986, %v2929
  %vm4293 = vcmp.lt.f32.partialorder %v3990, %v2936
  %vm4294 = vcmp.lt.f32.partialorder %v3990, %v2940
  %vm4295 = vcmp.lt.f32.partialorder %v3994, %v2947
  %vm4296 = vcmp.lt.f32.partialorder %v3994, %v2951
  %vm4297 = vcmp.lt.f32.partialorder %v3998, %v2958
  %vm4298 = vcmp.lt.f32.partialorder %v3998, %v2962
  %vm4299 = vcmp.lt.f32.partialorder %v4002, %v2969
  %vm4300 = vcmp.lt.f32.partialorder %v4002, %v2973
  %vm4301 = vcmp.lt.f32.partialorder %v4006, %v2980
  %vm4302 = vcmp.lt.f32.partialorder %v4006, %v2984
  %vm4303 = vcmp.lt.f32.partialorder %v4010, %v2991
  %vm4304 = vcmp.lt.f32.partialorder %v4010, %v2995
  %vm4305 = vcmp.lt.f32.partialorder %v4014, %v3002
  %vm4306 = vcmp.lt.f32.partialorder %v4014, %v3006
  %vm4307 = vcmp.lt.f32.partialorder %v4018, %v3013
  %vm4308 = vcmp.lt.f32.partialorder %v4018, %v3017
  %vm4309 = vcmp.lt.f32.partialorder %v4022, %v3024
  %vm4310 = vcmp.lt.f32.partialorder %v4022, %v3028
  %vm4311 = vcmp.lt.f32.partialorder %v4026, %v3035
  %vm4312 = vcmp.lt.f32.partialorder %v4026, %v3039
  %vm4313 = vcmp.lt.f32.partialorder %v4030, %v3046
  %vm4314 = vcmp.lt.f32.partialorder %v4030, %v3050
  %vm4315 = vcmp.lt.f32.partialorder %v4034, %v3057
  %vm4316 = vcmp.lt.f32.partialorder %v4034, %v3061
  %vm4317 = vcmp.lt.f32.partialorder %v4038, %v3068
  %vm4318 = vcmp.lt.f32.partialorder %v4038, %v3072
  %vm4319 = vcmp.lt.f32.partialorder %v4042, %v3079
  %vm4320 = vcmp.lt.f32.partialorder %v4042, %v3083
  %vm4321 = vcmp.lt.f32.partialorder %v4046, %v3090
  %vm4322 = vcmp.lt.f32.partialorder %v4046, %v3094
  %vm4323 = vcmp.lt.f32.partialorder %v4050, %v3101
  %vm4324 = vcmp.lt.f32.partialorder %v4050, %v3105
  %vm4325 = vcmp.lt.f32.partialorder %v4054, %v3112
  %vm4326 = vcmp.lt.f32.partialorder %v4054, %v3116
  %vm4327 = vcmp.lt.f32.partialorder %v4058, %v3123
  %vm4328 = vcmp.lt.f32.partialorder %v4058, %v3127
  %vm4329 = vcmp.lt.f32.partialorder %v4062, %v3134
  %vm4330 = vcmp.lt.f32.partialorder %v4062, %v3138
  %vm4331 = vcmp.lt.f32.partialorder %v4066, %v3145
  %vm4332 = vcmp.lt.f32.partialorder %v4066, %v3149
  %vm4333 = vcmp.lt.f32.partialorder %v4070, %v3156
  %vm4334 = vcmp.lt.f32.partialorder %v4070, %v3160
  %vm4335 = vcmp.lt.f32.partialorder %v4074, %v3167
  %vm4336 = vcmp.lt.f32.partialorder %v4074, %v3171
  %vm4337 = vcmp.lt.f32.partialorder %v4078, %v3178
  %vm4338 = vcmp.lt.f32.partialorder %v4078, %v3182
  %vm4339 = vcmp.lt.f32.partialorder %v4082, %v3189
  %vm4340 = vcmp.lt.f32.partialorder %v4082, %v3193
  %vm4341 = vcmp.lt.f32.partialorder %v4086, %v3200
  %vm4342 = vcmp.lt.f32.partialorder %v4086, %v3204
  %vm4343 = vcmp.lt.f32.partialorder %v4090, %v3211
  %vm4344 = vcmp.lt.f32.partialorder %v4090, %v3215
  %vm4345 = vcmp.lt.f32.partialorder %v4094, %v3222
  %vm4346 = vcmp.lt.f32.partialorder %v4094, %v3226
  %vm4347 = vcmp.lt.f32.partialorder %v4098, %v3233
  %vm4348 = vcmp.lt.f32.partialorder %v4098, %v3237
  %vm4349 = vcmp.lt.f32.partialorder %v4102, %v3244
  %vm4350 = vcmp.lt.f32.partialorder %v4102, %v3248
  %vm4351 = vcmp.lt.f32.partialorder %v4106, %v3255
  %vm4352 = vcmp.lt.f32.partialorder %v4106, %v3259
  %vm4353 = vcmp.lt.f32.partialorder %v4110, %v3266
  %vm4354 = vcmp.lt.f32.partialorder %v4110, %v3270
  %vm4355 = vcmp.lt.f32.partialorder %v4114, %v3277
  %vm4356 = vcmp.lt.f32.partialorder %v4114, %v3281
  %vm4357 = vcmp.lt.f32.partialorder %v4118, %v3288
  %vm4358 = vcmp.lt.f32.partialorder %v4118, %v3292
  %vm4359 = vcmp.lt.f32.partialorder %v4122, %v3299
  %vm4360 = vcmp.lt.f32.partialorder %v4122, %v3303
  %vm4361 = vcmp.lt.f32.partialorder %v4126, %v3310
  %vm4362 = vcmp.lt.f32.partialorder %v4126, %v3314
  %vm4363 = vcmp.lt.f32.partialorder %v4130, %v3321
  %vm4364 = vcmp.lt.f32.partialorder %v4130, %v3325
  %vm4365 = vcmp.lt.f32.partialorder %v4134, %v3332
  %vm4366 = vcmp.lt.f32.partialorder %v4134, %v3336
  %vm4367 = vcmp.lt.f32.partialorder %v4138, %v3343
  %vm4368 = vcmp.lt.f32.partialorder %v4138, %v3347
  %vm4369 = vcmp.lt.f32.partialorder %v4142, %v3354
  %vm4370 = vcmp.lt.f32.partialorder %v4142, %v3358
  %vm4371 = vcmp.lt.f32.partialorder %v4146, %v3365
  %vm4372 = vcmp.lt.f32.partialorder %v4146, %v3369
  %vm4373 = vcmp.lt.f32.partialorder %v4150, %v3376
  %vm4374 = vcmp.lt.f32.partialorder %v4150, %v3380
  %vm4375 = vcmp.lt.f32.partialorder %v4154, %v3387
  %vm4376 = vcmp.lt.f32.partialorder %v4154, %v3391
  %vm4377 = vcmp.lt.f32.partialorder %v4158, %v3398
  %vm4378 = vcmp.lt.f32.partialorder %v4158, %v3402
  %vm4379 = vcmp.lt.f32.partialorder %v4162, %v3409
  %vm4380 = vcmp.lt.f32.partialorder %v4162, %v3413
  %vm4381 = vcmp.lt.f32.partialorder %v4166, %v3420
  %vm4382 = vcmp.lt.f32.partialorder %v4166, %v3424
  %vm4383 = vcmp.lt.f32.partialorder %v4170, %v3431
  %vm4384 = vcmp.lt.f32.partialorder %v4170, %v3435
  %vm4385 = vcmp.lt.f32.partialorder %v4174, %v3442
  %vm4386 = vcmp.lt.f32.partialorder %v4174, %v3446
  %vm4387 = vcmp.lt.f32.partialorder %v4178, %v3453
  %vm4388 = vcmp.lt.f32.partialorder %v4178, %v3457
  %vm4389 = vcmp.lt.f32.partialorder %v4182, %v3464
  %vm4390 = vcmp.lt.f32.partialorder %v4182, %v3468
  %vm4391 = vcmp.lt.f32.partialorder %v4186, %v3475
  %vm4392 = vcmp.lt.f32.partialorder %v4186, %v3479
  %vm4393 = vcmp.lt.f32.partialorder %v4190, %v3486
  %vm4394 = vcmp.lt.f32.partialorder %v4190, %v3490
  %vm4395 = vcmp.lt.f32.partialorder %v4194, %v3497
  %vm4396 = vcmp.lt.f32.partialorder %v4194, %v3501
  %vm4397 = vcmp.lt.f32.partialorder %v4198, %v3508
  %vm4398 = vcmp.lt.f32.partialorder %v4198, %v3512
  %vm4399 = vcmp.lt.f32.partialorder %v4202, %v3519
  %vm4400 = vcmp.lt.f32.partialorder %v4202, %v3523
  %vm4401 = vcmp.lt.f32.partialorder %v4206, %v3530
  %vm4402 = vcmp.lt.f32.partialorder %v4206, %v3534
  %vm4403 = vcmp.lt.f32.partialorder %v4210, %v3541
  %vm4404 = vcmp.lt.f32.partialorder %v4210, %v3545
  %vm4405 = vcmp.lt.f32.partialorder %v4214, %v3552
  %vm4406 = vcmp.lt.f32.partialorder %v4214, %v3556
  %vm4407 = vcmp.eq.f32.partialorder %v3962, %v2859
  %vm4408 = vcmp.eq.f32.partialorder %v3962, %v2863
  %vm4409 = vcmp.eq.f32.partialorder %v3966, %v2870
  %vm4410 = vcmp.eq.f32.partialorder %v3966, %v2874
  %vm4411 = vcmp.eq.f32.partialorder %v3970, %v2881
  %vm4412 = vcmp.eq.f32.partialorder %v3970, %v2885
  %vm4413 = vcmp.eq.f32.partialorder %v3974, %v2892
  %vm4414 = vcmp.eq.f32.partialorder %v3974, %v2896
  %vm4415 = vcmp.eq.f32.partialorder %v3978, %v2903
  %vm4416 = vcmp.eq.f32.partialorder %v3978, %v2907
  %vm4417 = vcmp.eq.f32.partialorder %v3982, %v2914
  %vm4418 = vcmp.eq.f32.partialorder %v3982, %v2918
  %vm4419 = vcmp.eq.f32.partialorder %v3986, %v2925
  %vm4420 = vcmp.eq.f32.partialorder %v3986, %v2929
  %vm4421 = vcmp.eq.f32.partialorder %v3990, %v2936
  %vm4422 = vcmp.eq.f32.partialorder %v3990, %v2940
  %vm4423 = vcmp.eq.f32.partialorder %v3994, %v2947
  %vm4424 = vcmp.eq.f32.partialorder %v3994, %v2951
  %vm4425 = vcmp.eq.f32.partialorder %v3998, %v2958
  %vm4426 = vcmp.eq.f32.partialorder %v3998, %v2962
  %vm4427 = vcmp.eq.f32.partialorder %v4002, %v2969
  %vm4428 = vcmp.eq.f32.partialorder %v4002, %v2973
  %vm4429 = vcmp.eq.f32.partialorder %v4006, %v2980
  %vm4430 = vcmp.eq.f32.partialorder %v4006, %v2984
  %vm4431 = vcmp.eq.f32.partialorder %v4010, %v2991
  %vm4432 = vcmp.eq.f32.partialorder %v4010, %v2995
  %vm4433 = vcmp.eq.f32.partialorder %v4014, %v3002
  %vm4434 = vcmp.eq.f32.partialorder %v4014, %v3006
  %vm4435 = vcmp.eq.f32.partialorder %v4018, %v3013
  %vm4436 = vcmp.eq.f32.partialorder %v4018, %v3017
  %vm4437 = vcmp.eq.f32.partialorder %v4022, %v3024
  %vm4438 = vcmp.eq.f32.partialorder %v4022, %v3028
  %vm4439 = vcmp.eq.f32.partialorder %v4026, %v3035
  %vm4440 = vcmp.eq.f32.partialorder %v4026, %v3039
  %vm4441 = vcmp.eq.f32.partialorder %v4030, %v3046
  %vm4442 = vcmp.eq.f32.partialorder %v4030, %v3050
  %vm4443 = vcmp.eq.f32.partialorder %v4034, %v3057
  %vm4444 = vcmp.eq.f32.partialorder %v4034, %v3061
  %vm4445 = vcmp.eq.f32.partialorder %v4038, %v3068
  %vm4446 = vcmp.eq.f32.partialorder %v4038, %v3072
  %vm4447 = vcmp.eq.f32.partialorder %v4042, %v3079
  %vm4448 = vcmp.eq.f32.partialorder %v4042, %v3083
  %vm4449 = vcmp.eq.f32.partialorder %v4046, %v3090
  %vm4450 = vcmp.eq.f32.partialorder %v4046, %v3094
  %vm4451 = vcmp.eq.f32.partialorder %v4050, %v3101
  %vm4452 = vcmp.eq.f32.partialorder %v4050, %v3105
  %vm4453 = vcmp.eq.f32.partialorder %v4054, %v3112
  %vm4454 = vcmp.eq.f32.partialorder %v4054, %v3116
  %vm4455 = vcmp.eq.f32.partialorder %v4058, %v3123
  %vm4456 = vcmp.eq.f32.partialorder %v4058, %v3127
  %vm4457 = vcmp.eq.f32.partialorder %v4062, %v3134
  %vm4458 = vcmp.eq.f32.partialorder %v4062, %v3138
  %vm4459 = vcmp.eq.f32.partialorder %v4066, %v3145
  %vm4460 = vcmp.eq.f32.partialorder %v4066, %v3149
  %vm4461 = vcmp.eq.f32.partialorder %v4070, %v3156
  %vm4462 = vcmp.eq.f32.partialorder %v4070, %v3160
  %vm4463 = vcmp.eq.f32.partialorder %v4074, %v3167
  %vm4464 = vcmp.eq.f32.partialorder %v4074, %v3171
  %vm4465 = vcmp.eq.f32.partialorder %v4078, %v3178
  %vm4466 = vcmp.eq.f32.partialorder %v4078, %v3182
  %vm4467 = vcmp.eq.f32.partialorder %v4082, %v3189
  %vm4468 = vcmp.eq.f32.partialorder %v4082, %v3193
  %vm4469 = vcmp.eq.f32.partialorder %v4086, %v3200
  %vm4470 = vcmp.eq.f32.partialorder %v4086, %v3204
  %vm4471 = vcmp.eq.f32.partialorder %v4090, %v3211
  %vm4472 = vcmp.eq.f32.partialorder %v4090, %v3215
  %vm4473 = vcmp.eq.f32.partialorder %v4094, %v3222
  %vm4474 = vcmp.eq.f32.partialorder %v4094, %v3226
  %vm4475 = vcmp.eq.f32.partialorder %v4098, %v3233
  %vm4476 = vcmp.eq.f32.partialorder %v4098, %v3237
  %vm4477 = vcmp.eq.f32.partialorder %v4102, %v3244
  %vm4478 = vcmp.eq.f32.partialorder %v4102, %v3248
  %vm4479 = vcmp.eq.f32.partialorder %v4106, %v3255
  %vm4480 = vcmp.eq.f32.partialorder %v4106, %v3259
  %vm4481 = vcmp.eq.f32.partialorder %v4110, %v3266
  %vm4482 = vcmp.eq.f32.partialorder %v4110, %v3270
  %vm4483 = vcmp.eq.f32.partialorder %v4114, %v3277
  %vm4484 = vcmp.eq.f32.partialorder %v4114, %v3281
  %vm4485 = vcmp.eq.f32.partialorder %v4118, %v3288
  %vm4486 = vcmp.eq.f32.partialorder %v4118, %v3292
  %vm4487 = vcmp.eq.f32.partialorder %v4122, %v3299
  %vm4488 = vcmp.eq.f32.partialorder %v4122, %v3303
  %vm4489 = vcmp.eq.f32.partialorder %v4126, %v3310
  %vm4490 = vcmp.eq.f32.partialorder %v4126, %v3314
  %vm4491 = vcmp.eq.f32.partialorder %v4130, %v3321
  %vm4492 = vcmp.eq.f32.partialorder %v4130, %v3325
  %vm4493 = vcmp.eq.f32.partialorder %v4134, %v3332
  %vm4494 = vcmp.eq.f32.partialorder %v4134, %v3336
  %vm4495 = vcmp.eq.f32.partialorder %v4138, %v3343
  %vm4496 = vcmp.eq.f32.partialorder %v4138, %v3347
  %vm4497 = vcmp.eq.f32.partialorder %v4142, %v3354
  %vm4498 = vcmp.eq.f32.partialorder %v4142, %v3358
  %vm4499 = vcmp.eq.f32.partialorder %v4146, %v3365
  %vm4500 = vcmp.eq.f32.partialorder %v4146, %v3369
  %vm4501 = vcmp.eq.f32.partialorder %v4150, %v3376
  %vm4502 = vcmp.eq.f32.partialorder %v4150, %v3380
  %vm4503 = vcmp.eq.f32.partialorder %v4154, %v3387
  %vm4504 = vcmp.eq.f32.partialorder %v4154, %v3391
  %vm4505 = vcmp.eq.f32.partialorder %v4158, %v3398
  %vm4506 = vcmp.eq.f32.partialorder %v4158, %v3402
  %vm4507 = vcmp.eq.f32.partialorder %v4162, %v3409
  %vm4508 = vcmp.eq.f32.partialorder %v4162, %v3413
  %vm4509 = vcmp.eq.f32.partialorder %v4166, %v3420
  %vm4510 = vcmp.eq.f32.partialorder %v4166, %v3424
  %vm4511 = vcmp.eq.f32.partialorder %v4170, %v3431
  %vm4512 = vcmp.eq.f32.partialorder %v4170, %v3435
  %vm4513 = vcmp.eq.f32.partialorder %v4174, %v3442
  %vm4514 = vcmp.eq.f32.partialorder %v4174, %v3446
  %vm4515 = vcmp.eq.f32.partialorder %v4178, %v3453
  %vm4516 = vcmp.eq.f32.partialorder %v4178, %v3457
  %vm4517 = vcmp.eq.f32.partialorder %v4182, %v3464
  %vm4518 = vcmp.eq.f32.partialorder %v4182, %v3468
  %vm4519 = vcmp.eq.f32.partialorder %v4186, %v3475
  %vm4520 = vcmp.eq.f32.partialorder %v4186, %v3479
  %vm4521 = vcmp.eq.f32.partialorder %v4190, %v3486
  %vm4522 = vcmp.eq.f32.partialorder %v4190, %v3490
  %vm4523 = vcmp.eq.f32.partialorder %v4194, %v3497
  %vm4524 = vcmp.eq.f32.partialorder %v4194, %v3501
  %vm4525 = vcmp.eq.f32.partialorder %v4198, %v3508
  %vm4526 = vcmp.eq.f32.partialorder %v4198, %v3512
  %vm4527 = vcmp.eq.f32.partialorder %v4202, %v3519
  %vm4528 = vcmp.eq.f32.partialorder %v4202, %v3523
  %vm4529 = vcmp.eq.f32.partialorder %v4206, %v3530
  %vm4530 = vcmp.eq.f32.partialorder %v4206, %v3534
  %vm4531 = vcmp.eq.f32.partialorder %v4210, %v3541
  %vm4532 = vcmp.eq.f32.partialorder %v4210, %v3545
  %vm4533 = vcmp.eq.f32.partialorder %v4214, %v3552
  %vm4534 = vcmp.eq.f32.partialorder %v4214, %v3556
  %vm4535 = vcmp.lt.s32.totalorder %v3958, %v423
  %vm4536 = vcmp.lt.s32.totalorder %v3958, %v424
  %vm4537 = vmand %vm4407, %vm4535
  %vm4538 = vmand %vm4408, %vm4536
  %vm4539 = vmand %vm4409, %vm4535
  %vm4540 = vmand %vm4410, %vm4536
  %vm4541 = vmand %vm4411, %vm4535
  %vm4542 = vmand %vm4412, %vm4536
  %vm4543 = vmand %vm4413, %vm4535
  %vm4544 = vmand %vm4414, %vm4536
  %vm4545 = vmand %vm4415, %vm4535
  %vm4546 = vmand %vm4416, %vm4536
  %vm4547 = vmand %vm4417, %vm4535
  %vm4548 = vmand %vm4418, %vm4536
  %vm4549 = vmand %vm4419, %vm4535
  %vm4550 = vmand %vm4420, %vm4536
  %vm4551 = vmand %vm4421, %vm4535
  %vm4552 = vmand %vm4422, %vm4536
  %vm4553 = vmand %vm4423, %vm4535
  %vm4554 = vmand %vm4424, %vm4536
  %vm4555 = vmand %vm4425, %vm4535
  %vm4556 = vmand %vm4426, %vm4536
  %vm4557 = vmand %vm4427, %vm4535
  %vm4558 = vmand %vm4428, %vm4536
  %vm4559 = vmand %vm4429, %vm4535
  %vm4560 = vmand %vm4430, %vm4536
  %vm4561 = vmand %vm4431, %vm4535
  %vm4562 = vmand %vm4432, %vm4536
  %vm4563 = vmand %vm4433, %vm4535
  %vm4564 = vmand %vm4434, %vm4536
  %vm4565 = vmand %vm4435, %vm4535
  %vm4566 = vmand %vm4436, %vm4536
  %vm4567 = vmand %vm4437, %vm4535
  %vm4568 = vmand %vm4438, %vm4536
  %vm4569 = vmand %vm4439, %vm4535
  %vm4570 = vmand %vm4440, %vm4536
  %vm4571 = vmand %vm4441, %vm4535
  %vm4572 = vmand %vm4442, %vm4536
  %vm4573 = vmand %vm4443, %vm4535
  %vm4574 = vmand %vm4444, %vm4536
  %vm4575 = vmand %vm4445, %vm4535
  %vm4576 = vmand %vm4446, %vm4536
  %vm4577 = vmand %vm4447, %vm4535
  %vm4578 = vmand %vm4448, %vm4536
  %vm4579 = vmand %vm4449, %vm4535
  %vm4580 = vmand %vm4450, %vm4536
  %vm4581 = vmand %vm4451, %vm4535
  %vm4582 = vmand %vm4452, %vm4536
  %vm4583 = vmand %vm4453, %vm4535
  %vm4584 = vmand %vm4454, %vm4536
  %vm4585 = vmand %vm4455, %vm4535
  %vm4586 = vmand %vm4456, %vm4536
  %vm4587 = vmand %vm4457, %vm4535
  %vm4588 = vmand %vm4458, %vm4536
  %vm4589 = vmand %vm4459, %vm4535
  %vm4590 = vmand %vm4460, %vm4536
  %vm4591 = vmand %vm4461, %vm4535
  %vm4592 = vmand %vm4462, %vm4536
  %vm4593 = vmand %vm4463, %vm4535
  %vm4594 = vmand %vm4464, %vm4536
  %vm4595 = vmand %vm4465, %vm4535
  %vm4596 = vmand %vm4466, %vm4536
  %vm4597 = vmand %vm4467, %vm4535
  %vm4598 = vmand %vm4468, %vm4536
  %vm4599 = vmand %vm4469, %vm4535
  %vm4600 = vmand %vm4470, %vm4536
  %vm4601 = vmand %vm4471, %vm4535
  %vm4602 = vmand %vm4472, %vm4536
  %vm4603 = vmand %vm4473, %vm4535
  %vm4604 = vmand %vm4474, %vm4536
  %vm4605 = vmand %vm4475, %vm4535
  %vm4606 = vmand %vm4476, %vm4536
  %vm4607 = vmand %vm4477, %vm4535
  %vm4608 = vmand %vm4478, %vm4536
  %vm4609 = vmand %vm4479, %vm4535
  %vm4610 = vmand %vm4480, %vm4536
  %vm4611 = vmand %vm4481, %vm4535
  %vm4612 = vmand %vm4482, %vm4536
  %vm4613 = vmand %vm4483, %vm4535
  %vm4614 = vmand %vm4484, %vm4536
  %vm4615 = vmand %vm4485, %vm4535
  %vm4616 = vmand %vm4486, %vm4536
  %vm4617 = vmand %vm4487, %vm4535
  %vm4618 = vmand %vm4488, %vm4536
  %vm4619 = vmand %vm4489, %vm4535
  %vm4620 = vmand %vm4490, %vm4536
  %vm4621 = vmand %vm4491, %vm4535
  %vm4622 = vmand %vm4492, %vm4536
  %vm4623 = vmand %vm4493, %vm4535
  %vm4624 = vmand %vm4494, %vm4536
  %vm4625 = vmand %vm4495, %vm4535
  %vm4626 = vmand %vm4496, %vm4536
  %vm4627 = vmand %vm4497, %vm4535
  %vm4628 = vmand %vm4498, %vm4536
  %vm4629 = vmand %vm4499, %vm4535
  %vm4630 = vmand %vm4500, %vm4536
  %vm4631 = vmand %vm4501, %vm4535
  %vm4632 = vmand %vm4502, %vm4536
  %vm4633 = vmand %vm4503, %vm4535
  %vm4634 = vmand %vm4504, %vm4536
  %vm4635 = vmand %vm4505, %vm4535
  %vm4636 = vmand %vm4506, %vm4536
  %vm4637 = vmand %vm4507, %vm4535
  %vm4638 = vmand %vm4508, %vm4536
  %vm4639 = vmand %vm4509, %vm4535
  %vm4640 = vmand %vm4510, %vm4536
  %vm4641 = vmand %vm4511, %vm4535
  %vm4642 = vmand %vm4512, %vm4536
  %vm4643 = vmand %vm4513, %vm4535
  %vm4644 = vmand %vm4514, %vm4536
  %vm4645 = vmand %vm4515, %vm4535
  %vm4646 = vmand %vm4516, %vm4536
  %vm4647 = vmand %vm4517, %vm4535
  %vm4648 = vmand %vm4518, %vm4536
  %vm4649 = vmand %vm4519, %vm4535
  %vm4650 = vmand %vm4520, %vm4536
  %vm4651 = vmand %vm4521, %vm4535
  %vm4652 = vmand %vm4522, %vm4536
  %vm4653 = vmand %vm4523, %vm4535
  %vm4654 = vmand %vm4524, %vm4536
  %vm4655 = vmand %vm4525, %vm4535
  %vm4656 = vmand %vm4526, %vm4536
  %vm4657 = vmand %vm4527, %vm4535
  %vm4658 = vmand %vm4528, %vm4536
  %vm4659 = vmand %vm4529, %vm4535
  %vm4660 = vmand %vm4530, %vm4536
  %vm4661 = vmand %vm4531, %vm4535
  %vm4662 = vmand %vm4532, %vm4536
  %vm4663 = vmand %vm4533, %vm4535
  %vm4664 = vmand %vm4534, %vm4536
  %vm4665 = vmor %vm4279, %vm4537
  %vm4666 = vmor %vm4280, %vm4538
  %vm4667 = vmor %vm4281, %vm4539
  %vm4668 = vmor %vm4282, %vm4540
  %vm4669 = vmor %vm4283, %vm4541
  %vm4670 = vmor %vm4284, %vm4542
  %vm4671 = vmor %vm4285, %vm4543
  %vm4672 = vmor %vm4286, %vm4544
  %vm4673 = vmor %vm4287, %vm4545
  %vm4674 = vmor %vm4288, %vm4546
  %vm4675 = vmor %vm4289, %vm4547
  %vm4676 = vmor %vm4290, %vm4548
  %vm4677 = vmor %vm4291, %vm4549
  %vm4678 = vmor %vm4292, %vm4550
  %vm4679 = vmor %vm4293, %vm4551
  %vm4680 = vmor %vm4294, %vm4552
  %vm4681 = vmor %vm4295, %vm4553
  %vm4682 = vmor %vm4296, %vm4554
  %vm4683 = vmor %vm4297, %vm4555
  %vm4684 = vmor %vm4298, %vm4556
  %vm4685 = vmor %vm4299, %vm4557
  %vm4686 = vmor %vm4300, %vm4558
  %vm4687 = vmor %vm4301, %vm4559
  %vm4688 = vmor %vm4302, %vm4560
  %vm4689 = vmor %vm4303, %vm4561
  %vm4690 = vmor %vm4304, %vm4562
  %vm4691 = vmor %vm4305, %vm4563
  %vm4692 = vmor %vm4306, %vm4564
  %vm4693 = vmor %vm4307, %vm4565
  %vm4694 = vmor %vm4308, %vm4566
  %vm4695 = vmor %vm4309, %vm4567
  %vm4696 = vmor %vm4310, %vm4568
  %vm4697 = vmor %vm4311, %vm4569
  %vm4698 = vmor %vm4312, %vm4570
  %vm4699 = vmor %vm4313, %vm4571
  %vm4700 = vmor %vm4314, %vm4572
  %vm4701 = vmor %vm4315, %vm4573
  %vm4702 = vmor %vm4316, %vm4574
  %vm4703 = vmor %vm4317, %vm4575
  %vm4704 = vmor %vm4318, %vm4576
  %vm4705 = vmor %vm4319, %vm4577
  %vm4706 = vmor %vm4320, %vm4578
  %vm4707 = vmor %vm4321, %vm4579
  %vm4708 = vmor %vm4322, %vm4580
  %vm4709 = vmor %vm4323, %vm4581
  %vm4710 = vmor %vm4324, %vm4582
  %vm4711 = vmor %vm4325, %vm4583
  %vm4712 = vmor %vm4326, %vm4584
  %vm4713 = vmor %vm4327, %vm4585
  %vm4714 = vmor %vm4328, %vm4586
  %vm4715 = vmor %vm4329, %vm4587
  %vm4716 = vmor %vm4330, %vm4588
  %vm4717 = vmor %vm4331, %vm4589
  %vm4718 = vmor %vm4332, %vm4590
  %vm4719 = vmor %vm4333, %vm4591
  %vm4720 = vmor %vm4334, %vm4592
  %vm4721 = vmor %vm4335, %vm4593
  %vm4722 = vmor %vm4336, %vm4594
  %vm4723 = vmor %vm4337, %vm4595
  %vm4724 = vmor %vm4338, %vm4596
  %vm4725 = vmor %vm4339, %vm4597
  %vm4726 = vmor %vm4340, %vm4598
  %vm4727 = vmor %vm4341, %vm4599
  %vm4728 = vmor %vm4342, %vm4600
  %vm4729 = vmor %vm4343, %vm4601
  %vm4730 = vmor %vm4344, %vm4602
  %vm4731 = vmor %vm4345, %vm4603
  %vm4732 = vmor %vm4346, %vm4604
  %vm4733 = vmor %vm4347, %vm4605
  %vm4734 = vmor %vm4348, %vm4606
  %vm4735 = vmor %vm4349, %vm4607
  %vm4736 = vmor %vm4350, %vm4608
  %vm4737 = vmor %vm4351, %vm4609
  %vm4738 = vmor %vm4352, %vm4610
  %vm4739 = vmor %vm4353, %vm4611
  %vm4740 = vmor %vm4354, %vm4612
  %vm4741 = vmor %vm4355, %vm4613
  %vm4742 = vmor %vm4356, %vm4614
  %vm4743 = vmor %vm4357, %vm4615
  %vm4744 = vmor %vm4358, %vm4616
  %vm4745 = vmor %vm4359, %vm4617
  %vm4746 = vmor %vm4360, %vm4618
  %vm4747 = vmor %vm4361, %vm4619
  %vm4748 = vmor %vm4362, %vm4620
  %vm4749 = vmor %vm4363, %vm4621
  %vm4750 = vmor %vm4364, %vm4622
  %vm4751 = vmor %vm4365, %vm4623
  %vm4752 = vmor %vm4366, %vm4624
  %vm4753 = vmor %vm4367, %vm4625
  %vm4754 = vmor %vm4368, %vm4626
  %vm4755 = vmor %vm4369, %vm4627
  %vm4756 = vmor %vm4370, %vm4628
  %vm4757 = vmor %vm4371, %vm4629
  %vm4758 = vmor %vm4372, %vm4630
  %vm4759 = vmor %vm4373, %vm4631
  %vm4760 = vmor %vm4374, %vm4632
  %vm4761 = vmor %vm4375, %vm4633
  %vm4762 = vmor %vm4376, %vm4634
  %vm4763 = vmor %vm4377, %vm4635
  %vm4764 = vmor %vm4378, %vm4636
  %vm4765 = vmor %vm4379, %vm4637
  %vm4766 = vmor %vm4380, %vm4638
  %vm4767 = vmor %vm4381, %vm4639
  %vm4768 = vmor %vm4382, %vm4640
  %vm4769 = vmor %vm4383, %vm4641
  %vm4770 = vmor %vm4384, %vm4642
  %vm4771 = vmor %vm4385, %vm4643
  %vm4772 = vmor %vm4386, %vm4644
  %vm4773 = vmor %vm4387, %vm4645
  %vm4774 = vmor %vm4388, %vm4646
  %vm4775 = vmor %vm4389, %vm4647
  %vm4776 = vmor %vm4390, %vm4648
  %vm4777 = vmor %vm4391, %vm4649
  %vm4778 = vmor %vm4392, %vm4650
  %vm4779 = vmor %vm4393, %vm4651
  %vm4780 = vmor %vm4394, %vm4652
  %vm4781 = vmor %vm4395, %vm4653
  %vm4782 = vmor %vm4396, %vm4654
  %vm4783 = vmor %vm4397, %vm4655
  %vm4784 = vmor %vm4398, %vm4656
  %vm4785 = vmor %vm4399, %vm4657
  %vm4786 = vmor %vm4400, %vm4658
  %vm4787 = vmor %vm4401, %vm4659
  %vm4788 = vmor %vm4402, %vm4660
  %vm4789 = vmor %vm4403, %vm4661
  %vm4790 = vmor %vm4404, %vm4662
  %vm4791 = vmor %vm4405, %vm4663
  %vm4792 = vmor %vm4406, %vm4664
  %v4793 = vsel %vm4665, 1, 0
  %v4794 = vsel %vm4666, 1, 0
  %v4795 = vsel %vm4667, 1, 0
  %v4796 = vsel %vm4668, 1, 0
  %v4797 = vsel %vm4669, 1, 0
  %v4798 = vsel %vm4670, 1, 0
  %v4799 = vsel %vm4671, 1, 0
  %v4800 = vsel %vm4672, 1, 0
  %v4801 = vsel %vm4673, 1, 0
  %v4802 = vsel %vm4674, 1, 0
  %v4803 = vsel %vm4675, 1, 0
  %v4804 = vsel %vm4676, 1, 0
  %v4805 = vsel %vm4677, 1, 0
  %v4806 = vsel %vm4678, 1, 0
  %v4807 = vsel %vm4679, 1, 0
  %v4808 = vsel %vm4680, 1, 0
  %v4809 = vsel %vm4681, 1, 0
  %v4810 = vsel %vm4682, 1, 0
  %v4811 = vsel %vm4683, 1, 0
  %v4812 = vsel %vm4684, 1, 0
  %v4813 = vsel %vm4685, 1, 0
  %v4814 = vsel %vm4686, 1, 0
  %v4815 = vsel %vm4687, 1, 0
  %v4816 = vsel %vm4688, 1, 0
  %v4817 = vsel %vm4689, 1, 0
  %v4818 = vsel %vm4690, 1, 0
  %v4819 = vsel %vm4691, 1, 0
  %v4820 = vsel %vm4692, 1, 0
  %v4821 = vsel %vm4693, 1, 0
  %v4822 = vsel %vm4694, 1, 0
  %v4823 = vsel %vm4695, 1, 0
  %v4824 = vsel %vm4696, 1, 0
  %v4825 = vsel %vm4697, 1, 0
  %v4826 = vsel %vm4698, 1, 0
  %v4827 = vsel %vm4699, 1, 0
  %v4828 = vsel %vm4700, 1, 0
  %v4829 = vsel %vm4701, 1, 0
  %v4830 = vsel %vm4702, 1, 0
  %v4831 = vsel %vm4703, 1, 0
  %v4832 = vsel %vm4704, 1, 0
  %v4833 = vsel %vm4705, 1, 0
  %v4834 = vsel %vm4706, 1, 0
  %v4835 = vsel %vm4707, 1, 0
  %v4836 = vsel %vm4708, 1, 0
  %v4837 = vsel %vm4709, 1, 0
  %v4838 = vsel %vm4710, 1, 0
  %v4839 = vsel %vm4711, 1, 0
  %v4840 = vsel %vm4712, 1, 0
  %v4841 = vsel %vm4713, 1, 0
  %v4842 = vsel %vm4714, 1, 0
  %v4843 = vsel %vm4715, 1, 0
  %v4844 = vsel %vm4716, 1, 0
  %v4845 = vsel %vm4717, 1, 0
  %v4846 = vsel %vm4718, 1, 0
  %v4847 = vsel %vm4719, 1, 0
  %v4848 = vsel %vm4720, 1, 0
  %v4849 = vsel %vm4721, 1, 0
  %v4850 = vsel %vm4722, 1, 0
  %v4851 = vsel %vm4723, 1, 0
  %v4852 = vsel %vm4724, 1, 0
  %v4853 = vsel %vm4725, 1, 0
  %v4854 = vsel %vm4726, 1, 0
  %v4855 = vsel %vm4727, 1, 0
  %v4856 = vsel %vm4728, 1, 0
  %v4857 = vsel %vm4729, 1, 0
  %v4858 = vsel %vm4730, 1, 0
  %v4859 = vsel %vm4731, 1, 0
  %v4860 = vsel %vm4732, 1, 0
  %v4861 = vsel %vm4733, 1, 0
  %v4862 = vsel %vm4734, 1, 0
  %v4863 = vsel %vm4735, 1, 0
  %v4864 = vsel %vm4736, 1, 0
  %v4865 = vsel %vm4737, 1, 0
  %v4866 = vsel %vm4738, 1, 0
  %v4867 = vsel %vm4739, 1, 0
  %v4868 = vsel %vm4740, 1, 0
  %v4869 = vsel %vm4741, 1, 0
  %v4870 = vsel %vm4742, 1, 0
  %v4871 = vsel %vm4743, 1, 0
  %v4872 = vsel %vm4744, 1, 0
  %v4873 = vsel %vm4745, 1, 0
  %v4874 = vsel %vm4746, 1, 0
  %v4875 = vsel %vm4747, 1, 0
  %v4876 = vsel %vm4748, 1, 0
  %v4877 = vsel %vm4749, 1, 0
  %v4878 = vsel %vm4750, 1, 0
  %v4879 = vsel %vm4751, 1, 0
  %v4880 = vsel %vm4752, 1, 0
  %v4881 = vsel %vm4753, 1, 0
  %v4882 = vsel %vm4754, 1, 0
  %v4883 = vsel %vm4755, 1, 0
  %v4884 = vsel %vm4756, 1, 0
  %v4885 = vsel %vm4757, 1, 0
  %v4886 = vsel %vm4758, 1, 0
  %v4887 = vsel %vm4759, 1, 0
  %v4888 = vsel %vm4760, 1, 0
  %v4889 = vsel %vm4761, 1, 0
  %v4890 = vsel %vm4762, 1, 0
  %v4891 = vsel %vm4763, 1, 0
  %v4892 = vsel %vm4764, 1, 0
  %v4893 = vsel %vm4765, 1, 0
  %v4894 = vsel %vm4766, 1, 0
  %v4895 = vsel %vm4767, 1, 0
  %v4896 = vsel %vm4768, 1, 0
  %v4897 = vsel %vm4769, 1, 0
  %v4898 = vsel %vm4770, 1, 0
  %v4899 = vsel %vm4771, 1, 0
  %v4900 = vsel %vm4772, 1, 0
  %v4901 = vsel %vm4773, 1, 0
  %v4902 = vsel %vm4774, 1, 0
  %v4903 = vsel %vm4775, 1, 0
  %v4904 = vsel %vm4776, 1, 0
  %v4905 = vsel %vm4777, 1, 0
  %v4906 = vsel %vm4778, 1, 0
  %v4907 = vsel %vm4779, 1, 0
  %v4908 = vsel %vm4780, 1, 0
  %v4909 = vsel %vm4781, 1, 0
  %v4910 = vsel %vm4782, 1, 0
  %v4911 = vsel %vm4783, 1, 0
  %v4912 = vsel %vm4784, 1, 0
  %v4913 = vsel %vm4785, 1, 0
  %v4914 = vsel %vm4786, 1, 0
  %v4915 = vsel %vm4787, 1, 0
  %v4916 = vsel %vm4788, 1, 0
  %v4917 = vsel %vm4789, 1, 0
  %v4918 = vsel %vm4790, 1, 0
  %v4919 = vsel %vm4791, 1, 0
  %v4920 = vsel %vm4792, 1, 0
  %v4921 = vsel %vm1417, %v4793, 0
  %v4922 = vand.u32 %v4921, 65535
  %v4923 = vshrl.u32 %v4921, 16
  %v4924 = vcvt.s32.f32 %v4922
  %v4925 = vcvt.s32.f32 %v4923
  %4926 = vadd.xlane.f32.xlu0 %v4924
  %v4927 = vpop.xlane.xlu0 %4926
  %4928 = vadd.xlane.f32.xlu0 %v4925
  %v4929 = vpop.xlane.xlu0 %4928
  %v4930 = vcvt.f32.s32 %v4927
  %v4931 = vcvt.f32.s32 %v4929
  %v4932 = vshll.u32 %v4931, 16
  %v4933 = vadd.s32 %v4932, %v4930
  %v4934 = vsel %vm1417, %v4794, 0
  %v4935 = vand.u32 %v4934, 65535
  %v4936 = vshrl.u32 %v4934, 16
  %v4937 = vcvt.s32.f32 %v4935
  %v4938 = vcvt.s32.f32 %v4936
  %4939 = vadd.xlane.f32.xlu0 %v4937
  %v4940 = vpop.xlane.xlu0 %4939
  %4941 = vadd.xlane.f32.xlu0 %v4938
  %v4942 = vpop.xlane.xlu0 %4941
  %v4943 = vcvt.f32.s32 %v4940
  %v4944 = vcvt.f32.s32 %v4942
  %v4945 = vshll.u32 %v4944, 16
  %v4946 = vadd.s32 %v4945, %v4943
  %v4947 = vsel %vm1417, %v4795, 0
  %v4948 = vand.u32 %v4947, 65535
  %v4949 = vshrl.u32 %v4947, 16
  %v4950 = vcvt.s32.f32 %v4948
  %v4951 = vcvt.s32.f32 %v4949
  %4952 = vadd.xlane.f32.xlu0 %v4950
  %v4953 = vpop.xlane.xlu0 %4952
  %4954 = vadd.xlane.f32.xlu0 %v4951
  %v4955 = vpop.xlane.xlu0 %4954
  %v4956 = vcvt.f32.s32 %v4953
  %v4957 = vcvt.f32.s32 %v4955
  %v4958 = vshll.u32 %v4957, 16
  %v4959 = vadd.s32 %v4958, %v4956
  %v4960 = vsel %vm1417, %v4796, 0
  %v4961 = vand.u32 %v4960, 65535
  %v4962 = vshrl.u32 %v4960, 16
  %v4963 = vcvt.s32.f32 %v4961
  %v4964 = vcvt.s32.f32 %v4962
  %4965 = vadd.xlane.f32.xlu0 %v4963
  %v4966 = vpop.xlane.xlu0 %4965
  %4967 = vadd.xlane.f32.xlu0 %v4964
  %v4968 = vpop.xlane.xlu0 %4967
  %v4969 = vcvt.f32.s32 %v4966
  %v4970 = vcvt.f32.s32 %v4968
  %v4971 = vshll.u32 %v4970, 16
  %v4972 = vadd.s32 %v4971, %v4969
  %v4973 = vsel %vm1417, %v4797, 0
  %v4974 = vand.u32 %v4973, 65535
  %v4975 = vshrl.u32 %v4973, 16
  %v4976 = vcvt.s32.f32 %v4974
  %v4977 = vcvt.s32.f32 %v4975
  %4978 = vadd.xlane.f32.xlu0 %v4976
  %v4979 = vpop.xlane.xlu0 %4978
  %4980 = vadd.xlane.f32.xlu0 %v4977
  %v4981 = vpop.xlane.xlu0 %4980
  %v4982 = vcvt.f32.s32 %v4979
  %v4983 = vcvt.f32.s32 %v4981
  %v4984 = vshll.u32 %v4983, 16
  %v4985 = vadd.s32 %v4984, %v4982
  %v4986 = vsel %vm1417, %v4798, 0
  %v4987 = vand.u32 %v4986, 65535
  %v4988 = vshrl.u32 %v4986, 16
  %v4989 = vcvt.s32.f32 %v4987
  %v4990 = vcvt.s32.f32 %v4988
  %4991 = vadd.xlane.f32.xlu0 %v4989
  %v4992 = vpop.xlane.xlu0 %4991
  %4993 = vadd.xlane.f32.xlu0 %v4990
  %v4994 = vpop.xlane.xlu0 %4993
  %v4995 = vcvt.f32.s32 %v4992
  %v4996 = vcvt.f32.s32 %v4994
  %v4997 = vshll.u32 %v4996, 16
  %v4998 = vadd.s32 %v4997, %v4995
  %v4999 = vsel %vm1417, %v4799, 0
  %v5000 = vand.u32 %v4999, 65535
  %v5001 = vshrl.u32 %v4999, 16
  %v5002 = vcvt.s32.f32 %v5000
  %v5003 = vcvt.s32.f32 %v5001
  %5004 = vadd.xlane.f32.xlu0 %v5002
  %v5005 = vpop.xlane.xlu0 %5004
  %5006 = vadd.xlane.f32.xlu0 %v5003
  %v5007 = vpop.xlane.xlu0 %5006
  %v5008 = vcvt.f32.s32 %v5005
  %v5009 = vcvt.f32.s32 %v5007
  %v5010 = vshll.u32 %v5009, 16
  %v5011 = vadd.s32 %v5010, %v5008
  %v5012 = vsel %vm1417, %v4800, 0
  %v5013 = vand.u32 %v5012, 65535
  %v5014 = vshrl.u32 %v5012, 16
  %v5015 = vcvt.s32.f32 %v5013
  %v5016 = vcvt.s32.f32 %v5014
  %5017 = vadd.xlane.f32.xlu0 %v5015
  %v5018 = vpop.xlane.xlu0 %5017
  %5019 = vadd.xlane.f32.xlu0 %v5016
  %v5020 = vpop.xlane.xlu0 %5019
  %v5021 = vcvt.f32.s32 %v5018
  %v5022 = vcvt.f32.s32 %v5020
  %v5023 = vshll.u32 %v5022, 16
  %v5024 = vadd.s32 %v5023, %v5021
  %v5025 = vsel %vm1417, %v4801, 0
  %v5026 = vand.u32 %v5025, 65535
  %v5027 = vshrl.u32 %v5025, 16
  %v5028 = vcvt.s32.f32 %v5026
  %v5029 = vcvt.s32.f32 %v5027
  %5030 = vadd.xlane.f32.xlu0 %v5028
  %v5031 = vpop.xlane.xlu0 %5030
  %5032 = vadd.xlane.f32.xlu0 %v5029
  %v5033 = vpop.xlane.xlu0 %5032
  %v5034 = vcvt.f32.s32 %v5031
  %v5035 = vcvt.f32.s32 %v5033
  %v5036 = vshll.u32 %v5035, 16
  %v5037 = vadd.s32 %v5036, %v5034
  %v5038 = vsel %vm1417, %v4802, 0
  %v5039 = vand.u32 %v5038, 65535
  %v5040 = vshrl.u32 %v5038, 16
  %v5041 = vcvt.s32.f32 %v5039
  %v5042 = vcvt.s32.f32 %v5040
  %5043 = vadd.xlane.f32.xlu0 %v5041
  %v5044 = vpop.xlane.xlu0 %5043
  %5045 = vadd.xlane.f32.xlu0 %v5042
  %v5046 = vpop.xlane.xlu0 %5045
  %v5047 = vcvt.f32.s32 %v5044
  %v5048 = vcvt.f32.s32 %v5046
  %v5049 = vshll.u32 %v5048, 16
  %v5050 = vadd.s32 %v5049, %v5047
  %v5051 = vsel %vm1417, %v4803, 0
  %v5052 = vand.u32 %v5051, 65535
  %v5053 = vshrl.u32 %v5051, 16
  %v5054 = vcvt.s32.f32 %v5052
  %v5055 = vcvt.s32.f32 %v5053
  %5056 = vadd.xlane.f32.xlu0 %v5054
  %v5057 = vpop.xlane.xlu0 %5056
  %5058 = vadd.xlane.f32.xlu0 %v5055
  %v5059 = vpop.xlane.xlu0 %5058
  %v5060 = vcvt.f32.s32 %v5057
  %v5061 = vcvt.f32.s32 %v5059
  %v5062 = vshll.u32 %v5061, 16
  %v5063 = vadd.s32 %v5062, %v5060
  %v5064 = vsel %vm1417, %v4804, 0
  %v5065 = vand.u32 %v5064, 65535
  %v5066 = vshrl.u32 %v5064, 16
  %v5067 = vcvt.s32.f32 %v5065
  %v5068 = vcvt.s32.f32 %v5066
  %5069 = vadd.xlane.f32.xlu0 %v5067
  %v5070 = vpop.xlane.xlu0 %5069
  %5071 = vadd.xlane.f32.xlu0 %v5068
  %v5072 = vpop.xlane.xlu0 %5071
  %v5073 = vcvt.f32.s32 %v5070
  %v5074 = vcvt.f32.s32 %v5072
  %v5075 = vshll.u32 %v5074, 16
  %v5076 = vadd.s32 %v5075, %v5073
  %v5077 = vsel %vm1417, %v4805, 0
  %v5078 = vand.u32 %v5077, 65535
  %v5079 = vshrl.u32 %v5077, 16
  %v5080 = vcvt.s32.f32 %v5078
  %v5081 = vcvt.s32.f32 %v5079
  %5082 = vadd.xlane.f32.xlu0 %v5080
  %v5083 = vpop.xlane.xlu0 %5082
  %5084 = vadd.xlane.f32.xlu0 %v5081
  %v5085 = vpop.xlane.xlu0 %5084
  %v5086 = vcvt.f32.s32 %v5083
  %v5087 = vcvt.f32.s32 %v5085
  %v5088 = vshll.u32 %v5087, 16
  %v5089 = vadd.s32 %v5088, %v5086
  %v5090 = vsel %vm1417, %v4806, 0
  %v5091 = vand.u32 %v5090, 65535
  %v5092 = vshrl.u32 %v5090, 16
  %v5093 = vcvt.s32.f32 %v5091
  %v5094 = vcvt.s32.f32 %v5092
  %5095 = vadd.xlane.f32.xlu0 %v5093
  %v5096 = vpop.xlane.xlu0 %5095
  %5097 = vadd.xlane.f32.xlu0 %v5094
  %v5098 = vpop.xlane.xlu0 %5097
  %v5099 = vcvt.f32.s32 %v5096
  %v5100 = vcvt.f32.s32 %v5098
  %v5101 = vshll.u32 %v5100, 16
  %v5102 = vadd.s32 %v5101, %v5099
  %v5103 = vsel %vm1417, %v4807, 0
  %v5104 = vand.u32 %v5103, 65535
  %v5105 = vshrl.u32 %v5103, 16
  %v5106 = vcvt.s32.f32 %v5104
  %v5107 = vcvt.s32.f32 %v5105
  %5108 = vadd.xlane.f32.xlu0 %v5106
  %v5109 = vpop.xlane.xlu0 %5108
  %5110 = vadd.xlane.f32.xlu0 %v5107
  %v5111 = vpop.xlane.xlu0 %5110
  %v5112 = vcvt.f32.s32 %v5109
  %v5113 = vcvt.f32.s32 %v5111
  %v5114 = vshll.u32 %v5113, 16
  %v5115 = vadd.s32 %v5114, %v5112
  %v5116 = vsel %vm1417, %v4808, 0
  %v5117 = vand.u32 %v5116, 65535
  %v5118 = vshrl.u32 %v5116, 16
  %v5119 = vcvt.s32.f32 %v5117
  %v5120 = vcvt.s32.f32 %v5118
  %5121 = vadd.xlane.f32.xlu0 %v5119
  %v5122 = vpop.xlane.xlu0 %5121
  %5123 = vadd.xlane.f32.xlu0 %v5120
  %v5124 = vpop.xlane.xlu0 %5123
  %v5125 = vcvt.f32.s32 %v5122
  %v5126 = vcvt.f32.s32 %v5124
  %v5127 = vshll.u32 %v5126, 16
  %v5128 = vadd.s32 %v5127, %v5125
  %v5129 = vsel %vm1417, %v4809, 0
  %v5130 = vand.u32 %v5129, 65535
  %v5131 = vshrl.u32 %v5129, 16
  %v5132 = vcvt.s32.f32 %v5130
  %v5133 = vcvt.s32.f32 %v5131
  %5134 = vadd.xlane.f32.xlu0 %v5132
  %v5135 = vpop.xlane.xlu0 %5134
  %5136 = vadd.xlane.f32.xlu0 %v5133
  %v5137 = vpop.xlane.xlu0 %5136
  %v5138 = vcvt.f32.s32 %v5135
  %v5139 = vcvt.f32.s32 %v5137
  %v5140 = vshll.u32 %v5139, 16
  %v5141 = vadd.s32 %v5140, %v5138
  %v5142 = vsel %vm1417, %v4810, 0
  %v5143 = vand.u32 %v5142, 65535
  %v5144 = vshrl.u32 %v5142, 16
  %v5145 = vcvt.s32.f32 %v5143
  %v5146 = vcvt.s32.f32 %v5144
  %5147 = vadd.xlane.f32.xlu0 %v5145
  %v5148 = vpop.xlane.xlu0 %5147
  %5149 = vadd.xlane.f32.xlu0 %v5146
  %v5150 = vpop.xlane.xlu0 %5149
  %v5151 = vcvt.f32.s32 %v5148
  %v5152 = vcvt.f32.s32 %v5150
  %v5153 = vshll.u32 %v5152, 16
  %v5154 = vadd.s32 %v5153, %v5151
  %v5155 = vsel %vm1417, %v4811, 0
  %v5156 = vand.u32 %v5155, 65535
  %v5157 = vshrl.u32 %v5155, 16
  %v5158 = vcvt.s32.f32 %v5156
  %v5159 = vcvt.s32.f32 %v5157
  %5160 = vadd.xlane.f32.xlu0 %v5158
  %v5161 = vpop.xlane.xlu0 %5160
  %5162 = vadd.xlane.f32.xlu0 %v5159
  %v5163 = vpop.xlane.xlu0 %5162
  %v5164 = vcvt.f32.s32 %v5161
  %v5165 = vcvt.f32.s32 %v5163
  %v5166 = vshll.u32 %v5165, 16
  %v5167 = vadd.s32 %v5166, %v5164
  %v5168 = vsel %vm1417, %v4812, 0
  %v5169 = vand.u32 %v5168, 65535
  %v5170 = vshrl.u32 %v5168, 16
  %v5171 = vcvt.s32.f32 %v5169
  %v5172 = vcvt.s32.f32 %v5170
  %5173 = vadd.xlane.f32.xlu0 %v5171
  %v5174 = vpop.xlane.xlu0 %5173
  %5175 = vadd.xlane.f32.xlu0 %v5172
  %v5176 = vpop.xlane.xlu0 %5175
  %v5177 = vcvt.f32.s32 %v5174
  %v5178 = vcvt.f32.s32 %v5176
  %v5179 = vshll.u32 %v5178, 16
  %v5180 = vadd.s32 %v5179, %v5177
  %v5181 = vsel %vm1417, %v4813, 0
  %v5182 = vand.u32 %v5181, 65535
  %v5183 = vshrl.u32 %v5181, 16
  %v5184 = vcvt.s32.f32 %v5182
  %v5185 = vcvt.s32.f32 %v5183
  %5186 = vadd.xlane.f32.xlu0 %v5184
  %v5187 = vpop.xlane.xlu0 %5186
  %5188 = vadd.xlane.f32.xlu0 %v5185
  %v5189 = vpop.xlane.xlu0 %5188
  %v5190 = vcvt.f32.s32 %v5187
  %v5191 = vcvt.f32.s32 %v5189
  %v5192 = vshll.u32 %v5191, 16
  %v5193 = vadd.s32 %v5192, %v5190
  %v5194 = vsel %vm1417, %v4814, 0
  %v5195 = vand.u32 %v5194, 65535
  %v5196 = vshrl.u32 %v5194, 16
  %v5197 = vcvt.s32.f32 %v5195
  %v5198 = vcvt.s32.f32 %v5196
  %5199 = vadd.xlane.f32.xlu0 %v5197
  %v5200 = vpop.xlane.xlu0 %5199
  %5201 = vadd.xlane.f32.xlu0 %v5198
  %v5202 = vpop.xlane.xlu0 %5201
  %v5203 = vcvt.f32.s32 %v5200
  %v5204 = vcvt.f32.s32 %v5202
  %v5205 = vshll.u32 %v5204, 16
  %v5206 = vadd.s32 %v5205, %v5203
  %v5207 = vsel %vm1417, %v4815, 0
  %v5208 = vand.u32 %v5207, 65535
  %v5209 = vshrl.u32 %v5207, 16
  %v5210 = vcvt.s32.f32 %v5208
  %v5211 = vcvt.s32.f32 %v5209
  %5212 = vadd.xlane.f32.xlu0 %v5210
  %v5213 = vpop.xlane.xlu0 %5212
  %5214 = vadd.xlane.f32.xlu0 %v5211
  %v5215 = vpop.xlane.xlu0 %5214
  %v5216 = vcvt.f32.s32 %v5213
  %v5217 = vcvt.f32.s32 %v5215
  %v5218 = vshll.u32 %v5217, 16
  %v5219 = vadd.s32 %v5218, %v5216
  %v5220 = vsel %vm1417, %v4816, 0
  %v5221 = vand.u32 %v5220, 65535
  %v5222 = vshrl.u32 %v5220, 16
  %v5223 = vcvt.s32.f32 %v5221
  %v5224 = vcvt.s32.f32 %v5222
  %5225 = vadd.xlane.f32.xlu0 %v5223
  %v5226 = vpop.xlane.xlu0 %5225
  %5227 = vadd.xlane.f32.xlu0 %v5224
  %v5228 = vpop.xlane.xlu0 %5227
  %v5229 = vcvt.f32.s32 %v5226
  %v5230 = vcvt.f32.s32 %v5228
  %v5231 = vshll.u32 %v5230, 16
  %v5232 = vadd.s32 %v5231, %v5229
  %v5233 = vsel %vm1417, %v4817, 0
  %v5234 = vand.u32 %v5233, 65535
  %v5235 = vshrl.u32 %v5233, 16
  %v5236 = vcvt.s32.f32 %v5234
  %v5237 = vcvt.s32.f32 %v5235
  %5238 = vadd.xlane.f32.xlu0 %v5236
  %v5239 = vpop.xlane.xlu0 %5238
  %5240 = vadd.xlane.f32.xlu0 %v5237
  %v5241 = vpop.xlane.xlu0 %5240
  %v5242 = vcvt.f32.s32 %v5239
  %v5243 = vcvt.f32.s32 %v5241
  %v5244 = vshll.u32 %v5243, 16
  %v5245 = vadd.s32 %v5244, %v5242
  %v5246 = vsel %vm1417, %v4818, 0
  %v5247 = vand.u32 %v5246, 65535
  %v5248 = vshrl.u32 %v5246, 16
  %v5249 = vcvt.s32.f32 %v5247
  %v5250 = vcvt.s32.f32 %v5248
  %5251 = vadd.xlane.f32.xlu0 %v5249
  %v5252 = vpop.xlane.xlu0 %5251
  %5253 = vadd.xlane.f32.xlu0 %v5250
  %v5254 = vpop.xlane.xlu0 %5253
  %v5255 = vcvt.f32.s32 %v5252
  %v5256 = vcvt.f32.s32 %v5254
  %v5257 = vshll.u32 %v5256, 16
  %v5258 = vadd.s32 %v5257, %v5255
  %v5259 = vsel %vm1417, %v4819, 0
  %v5260 = vand.u32 %v5259, 65535
  %v5261 = vshrl.u32 %v5259, 16
  %v5262 = vcvt.s32.f32 %v5260
  %v5263 = vcvt.s32.f32 %v5261
  %5264 = vadd.xlane.f32.xlu0 %v5262
  %v5265 = vpop.xlane.xlu0 %5264
  %5266 = vadd.xlane.f32.xlu0 %v5263
  %v5267 = vpop.xlane.xlu0 %5266
  %v5268 = vcvt.f32.s32 %v5265
  %v5269 = vcvt.f32.s32 %v5267
  %v5270 = vshll.u32 %v5269, 16
  %v5271 = vadd.s32 %v5270, %v5268
  %v5272 = vsel %vm1417, %v4820, 0
  %v5273 = vand.u32 %v5272, 65535
  %v5274 = vshrl.u32 %v5272, 16
  %v5275 = vcvt.s32.f32 %v5273
  %v5276 = vcvt.s32.f32 %v5274
  %5277 = vadd.xlane.f32.xlu0 %v5275
  %v5278 = vpop.xlane.xlu0 %5277
  %5279 = vadd.xlane.f32.xlu0 %v5276
  %v5280 = vpop.xlane.xlu0 %5279
  %v5281 = vcvt.f32.s32 %v5278
  %v5282 = vcvt.f32.s32 %v5280
  %v5283 = vshll.u32 %v5282, 16
  %v5284 = vadd.s32 %v5283, %v5281
  %v5285 = vsel %vm1417, %v4821, 0
  %v5286 = vand.u32 %v5285, 65535
  %v5287 = vshrl.u32 %v5285, 16
  %v5288 = vcvt.s32.f32 %v5286
  %v5289 = vcvt.s32.f32 %v5287
  %5290 = vadd.xlane.f32.xlu0 %v5288
  %v5291 = vpop.xlane.xlu0 %5290
  %5292 = vadd.xlane.f32.xlu0 %v5289
  %v5293 = vpop.xlane.xlu0 %5292
  %v5294 = vcvt.f32.s32 %v5291
  %v5295 = vcvt.f32.s32 %v5293
  %v5296 = vshll.u32 %v5295, 16
  %v5297 = vadd.s32 %v5296, %v5294
  %v5298 = vsel %vm1417, %v4822, 0
  %v5299 = vand.u32 %v5298, 65535
  %v5300 = vshrl.u32 %v5298, 16
  %v5301 = vcvt.s32.f32 %v5299
  %v5302 = vcvt.s32.f32 %v5300
  %5303 = vadd.xlane.f32.xlu0 %v5301
  %v5304 = vpop.xlane.xlu0 %5303
  %5305 = vadd.xlane.f32.xlu0 %v5302
  %v5306 = vpop.xlane.xlu0 %5305
  %v5307 = vcvt.f32.s32 %v5304
  %v5308 = vcvt.f32.s32 %v5306
  %v5309 = vshll.u32 %v5308, 16
  %v5310 = vadd.s32 %v5309, %v5307
  %v5311 = vsel %vm1417, %v4823, 0
  %v5312 = vand.u32 %v5311, 65535
  %v5313 = vshrl.u32 %v5311, 16
  %v5314 = vcvt.s32.f32 %v5312
  %v5315 = vcvt.s32.f32 %v5313
  %5316 = vadd.xlane.f32.xlu0 %v5314
  %v5317 = vpop.xlane.xlu0 %5316
  %5318 = vadd.xlane.f32.xlu0 %v5315
  %v5319 = vpop.xlane.xlu0 %5318
  %v5320 = vcvt.f32.s32 %v5317
  %v5321 = vcvt.f32.s32 %v5319
  %v5322 = vshll.u32 %v5321, 16
  %v5323 = vadd.s32 %v5322, %v5320
  %v5324 = vsel %vm1417, %v4824, 0
  %v5325 = vand.u32 %v5324, 65535
  %v5326 = vshrl.u32 %v5324, 16
  %v5327 = vcvt.s32.f32 %v5325
  %v5328 = vcvt.s32.f32 %v5326
  %5329 = vadd.xlane.f32.xlu0 %v5327
  %v5330 = vpop.xlane.xlu0 %5329
  %5331 = vadd.xlane.f32.xlu0 %v5328
  %v5332 = vpop.xlane.xlu0 %5331
  %v5333 = vcvt.f32.s32 %v5330
  %v5334 = vcvt.f32.s32 %v5332
  %v5335 = vshll.u32 %v5334, 16
  %v5336 = vadd.s32 %v5335, %v5333
  %v5337 = vsel %vm1417, %v4825, 0
  %v5338 = vand.u32 %v5337, 65535
  %v5339 = vshrl.u32 %v5337, 16
  %v5340 = vcvt.s32.f32 %v5338
  %v5341 = vcvt.s32.f32 %v5339
  %5342 = vadd.xlane.f32.xlu0 %v5340
  %v5343 = vpop.xlane.xlu0 %5342
  %5344 = vadd.xlane.f32.xlu0 %v5341
  %v5345 = vpop.xlane.xlu0 %5344
  %v5346 = vcvt.f32.s32 %v5343
  %v5347 = vcvt.f32.s32 %v5345
  %v5348 = vshll.u32 %v5347, 16
  %v5349 = vadd.s32 %v5348, %v5346
  %v5350 = vsel %vm1417, %v4826, 0
  %v5351 = vand.u32 %v5350, 65535
  %v5352 = vshrl.u32 %v5350, 16
  %v5353 = vcvt.s32.f32 %v5351
  %v5354 = vcvt.s32.f32 %v5352
  %5355 = vadd.xlane.f32.xlu0 %v5353
  %v5356 = vpop.xlane.xlu0 %5355
  %5357 = vadd.xlane.f32.xlu0 %v5354
  %v5358 = vpop.xlane.xlu0 %5357
  %v5359 = vcvt.f32.s32 %v5356
  %v5360 = vcvt.f32.s32 %v5358
  %v5361 = vshll.u32 %v5360, 16
  %v5362 = vadd.s32 %v5361, %v5359
  %v5363 = vsel %vm1417, %v4827, 0
  %v5364 = vand.u32 %v5363, 65535
  %v5365 = vshrl.u32 %v5363, 16
  %v5366 = vcvt.s32.f32 %v5364
  %v5367 = vcvt.s32.f32 %v5365
  %5368 = vadd.xlane.f32.xlu0 %v5366
  %v5369 = vpop.xlane.xlu0 %5368
  %5370 = vadd.xlane.f32.xlu0 %v5367
  %v5371 = vpop.xlane.xlu0 %5370
  %v5372 = vcvt.f32.s32 %v5369
  %v5373 = vcvt.f32.s32 %v5371
  %v5374 = vshll.u32 %v5373, 16
  %v5375 = vadd.s32 %v5374, %v5372
  %v5376 = vsel %vm1417, %v4828, 0
  %v5377 = vand.u32 %v5376, 65535
  %v5378 = vshrl.u32 %v5376, 16
  %v5379 = vcvt.s32.f32 %v5377
  %v5380 = vcvt.s32.f32 %v5378
  %5381 = vadd.xlane.f32.xlu0 %v5379
  %v5382 = vpop.xlane.xlu0 %5381
  %5383 = vadd.xlane.f32.xlu0 %v5380
  %v5384 = vpop.xlane.xlu0 %5383
  %v5385 = vcvt.f32.s32 %v5382
  %v5386 = vcvt.f32.s32 %v5384
  %v5387 = vshll.u32 %v5386, 16
  %v5388 = vadd.s32 %v5387, %v5385
  %v5389 = vsel %vm1417, %v4829, 0
  %v5390 = vand.u32 %v5389, 65535
  %v5391 = vshrl.u32 %v5389, 16
  %v5392 = vcvt.s32.f32 %v5390
  %v5393 = vcvt.s32.f32 %v5391
  %5394 = vadd.xlane.f32.xlu0 %v5392
  %v5395 = vpop.xlane.xlu0 %5394
  %5396 = vadd.xlane.f32.xlu0 %v5393
  %v5397 = vpop.xlane.xlu0 %5396
  %v5398 = vcvt.f32.s32 %v5395
  %v5399 = vcvt.f32.s32 %v5397
  %v5400 = vshll.u32 %v5399, 16
  %v5401 = vadd.s32 %v5400, %v5398
  %v5402 = vsel %vm1417, %v4830, 0
  %v5403 = vand.u32 %v5402, 65535
  %v5404 = vshrl.u32 %v5402, 16
  %v5405 = vcvt.s32.f32 %v5403
  %v5406 = vcvt.s32.f32 %v5404
  %5407 = vadd.xlane.f32.xlu0 %v5405
  %v5408 = vpop.xlane.xlu0 %5407
  %5409 = vadd.xlane.f32.xlu0 %v5406
  %v5410 = vpop.xlane.xlu0 %5409
  %v5411 = vcvt.f32.s32 %v5408
  %v5412 = vcvt.f32.s32 %v5410
  %v5413 = vshll.u32 %v5412, 16
  %v5414 = vadd.s32 %v5413, %v5411
  %v5415 = vsel %vm1417, %v4831, 0
  %v5416 = vand.u32 %v5415, 65535
  %v5417 = vshrl.u32 %v5415, 16
  %v5418 = vcvt.s32.f32 %v5416
  %v5419 = vcvt.s32.f32 %v5417
  %5420 = vadd.xlane.f32.xlu0 %v5418
  %v5421 = vpop.xlane.xlu0 %5420
  %5422 = vadd.xlane.f32.xlu0 %v5419
  %v5423 = vpop.xlane.xlu0 %5422
  %v5424 = vcvt.f32.s32 %v5421
  %v5425 = vcvt.f32.s32 %v5423
  %v5426 = vshll.u32 %v5425, 16
  %v5427 = vadd.s32 %v5426, %v5424
  %v5428 = vsel %vm1417, %v4832, 0
  %v5429 = vand.u32 %v5428, 65535
  %v5430 = vshrl.u32 %v5428, 16
  %v5431 = vcvt.s32.f32 %v5429
  %v5432 = vcvt.s32.f32 %v5430
  %5433 = vadd.xlane.f32.xlu0 %v5431
  %v5434 = vpop.xlane.xlu0 %5433
  %5435 = vadd.xlane.f32.xlu0 %v5432
  %v5436 = vpop.xlane.xlu0 %5435
  %v5437 = vcvt.f32.s32 %v5434
  %v5438 = vcvt.f32.s32 %v5436
  %v5439 = vshll.u32 %v5438, 16
  %v5440 = vadd.s32 %v5439, %v5437
  %v5441 = vsel %vm1417, %v4833, 0
  %v5442 = vand.u32 %v5441, 65535
  %v5443 = vshrl.u32 %v5441, 16
  %v5444 = vcvt.s32.f32 %v5442
  %v5445 = vcvt.s32.f32 %v5443
  %5446 = vadd.xlane.f32.xlu0 %v5444
  %v5447 = vpop.xlane.xlu0 %5446
  %5448 = vadd.xlane.f32.xlu0 %v5445
  %v5449 = vpop.xlane.xlu0 %5448
  %v5450 = vcvt.f32.s32 %v5447
  %v5451 = vcvt.f32.s32 %v5449
  %v5452 = vshll.u32 %v5451, 16
  %v5453 = vadd.s32 %v5452, %v5450
  %v5454 = vsel %vm1417, %v4834, 0
  %v5455 = vand.u32 %v5454, 65535
  %v5456 = vshrl.u32 %v5454, 16
  %v5457 = vcvt.s32.f32 %v5455
  %v5458 = vcvt.s32.f32 %v5456
  %5459 = vadd.xlane.f32.xlu0 %v5457
  %v5460 = vpop.xlane.xlu0 %5459
  %5461 = vadd.xlane.f32.xlu0 %v5458
  %v5462 = vpop.xlane.xlu0 %5461
  %v5463 = vcvt.f32.s32 %v5460
  %v5464 = vcvt.f32.s32 %v5462
  %v5465 = vshll.u32 %v5464, 16
  %v5466 = vadd.s32 %v5465, %v5463
  %v5467 = vsel %vm1417, %v4835, 0
  %v5468 = vand.u32 %v5467, 65535
  %v5469 = vshrl.u32 %v5467, 16
  %v5470 = vcvt.s32.f32 %v5468
  %v5471 = vcvt.s32.f32 %v5469
  %5472 = vadd.xlane.f32.xlu0 %v5470
  %v5473 = vpop.xlane.xlu0 %5472
  %5474 = vadd.xlane.f32.xlu0 %v5471
  %v5475 = vpop.xlane.xlu0 %5474
  %v5476 = vcvt.f32.s32 %v5473
  %v5477 = vcvt.f32.s32 %v5475
  %v5478 = vshll.u32 %v5477, 16
  %v5479 = vadd.s32 %v5478, %v5476
  %v5480 = vsel %vm1417, %v4836, 0
  %v5481 = vand.u32 %v5480, 65535
  %v5482 = vshrl.u32 %v5480, 16
  %v5483 = vcvt.s32.f32 %v5481
  %v5484 = vcvt.s32.f32 %v5482
  %5485 = vadd.xlane.f32.xlu0 %v5483
  %v5486 = vpop.xlane.xlu0 %5485
  %5487 = vadd.xlane.f32.xlu0 %v5484
  %v5488 = vpop.xlane.xlu0 %5487
  %v5489 = vcvt.f32.s32 %v5486
  %v5490 = vcvt.f32.s32 %v5488
  %v5491 = vshll.u32 %v5490, 16
  %v5492 = vadd.s32 %v5491, %v5489
  %v5493 = vsel %vm1417, %v4837, 0
  %v5494 = vand.u32 %v5493, 65535
  %v5495 = vshrl.u32 %v5493, 16
  %v5496 = vcvt.s32.f32 %v5494
  %v5497 = vcvt.s32.f32 %v5495
  %5498 = vadd.xlane.f32.xlu0 %v5496
  %v5499 = vpop.xlane.xlu0 %5498
  %5500 = vadd.xlane.f32.xlu0 %v5497
  %v5501 = vpop.xlane.xlu0 %5500
  %v5502 = vcvt.f32.s32 %v5499
  %v5503 = vcvt.f32.s32 %v5501
  %v5504 = vshll.u32 %v5503, 16
  %v5505 = vadd.s32 %v5504, %v5502
  %v5506 = vsel %vm1417, %v4838, 0
  %v5507 = vand.u32 %v5506, 65535
  %v5508 = vshrl.u32 %v5506, 16
  %v5509 = vcvt.s32.f32 %v5507
  %v5510 = vcvt.s32.f32 %v5508
  %5511 = vadd.xlane.f32.xlu0 %v5509
  %v5512 = vpop.xlane.xlu0 %5511
  %5513 = vadd.xlane.f32.xlu0 %v5510
  %v5514 = vpop.xlane.xlu0 %5513
  %v5515 = vcvt.f32.s32 %v5512
  %v5516 = vcvt.f32.s32 %v5514
  %v5517 = vshll.u32 %v5516, 16
  %v5518 = vadd.s32 %v5517, %v5515
  %v5519 = vsel %vm1417, %v4839, 0
  %v5520 = vand.u32 %v5519, 65535
  %v5521 = vshrl.u32 %v5519, 16
  %v5522 = vcvt.s32.f32 %v5520
  %v5523 = vcvt.s32.f32 %v5521
  %5524 = vadd.xlane.f32.xlu0 %v5522
  %v5525 = vpop.xlane.xlu0 %5524
  %5526 = vadd.xlane.f32.xlu0 %v5523
  %v5527 = vpop.xlane.xlu0 %5526
  %v5528 = vcvt.f32.s32 %v5525
  %v5529 = vcvt.f32.s32 %v5527
  %v5530 = vshll.u32 %v5529, 16
  %v5531 = vadd.s32 %v5530, %v5528
  %v5532 = vsel %vm1417, %v4840, 0
  %v5533 = vand.u32 %v5532, 65535
  %v5534 = vshrl.u32 %v5532, 16
  %v5535 = vcvt.s32.f32 %v5533
  %v5536 = vcvt.s32.f32 %v5534
  %5537 = vadd.xlane.f32.xlu0 %v5535
  %v5538 = vpop.xlane.xlu0 %5537
  %5539 = vadd.xlane.f32.xlu0 %v5536
  %v5540 = vpop.xlane.xlu0 %5539
  %v5541 = vcvt.f32.s32 %v5538
  %v5542 = vcvt.f32.s32 %v5540
  %v5543 = vshll.u32 %v5542, 16
  %v5544 = vadd.s32 %v5543, %v5541
  %v5545 = vsel %vm1417, %v4841, 0
  %v5546 = vand.u32 %v5545, 65535
  %v5547 = vshrl.u32 %v5545, 16
  %v5548 = vcvt.s32.f32 %v5546
  %v5549 = vcvt.s32.f32 %v5547
  %5550 = vadd.xlane.f32.xlu0 %v5548
  %v5551 = vpop.xlane.xlu0 %5550
  %5552 = vadd.xlane.f32.xlu0 %v5549
  %v5553 = vpop.xlane.xlu0 %5552
  %v5554 = vcvt.f32.s32 %v5551
  %v5555 = vcvt.f32.s32 %v5553
  %v5556 = vshll.u32 %v5555, 16
  %v5557 = vadd.s32 %v5556, %v5554
  %v5558 = vsel %vm1417, %v4842, 0
  %v5559 = vand.u32 %v5558, 65535
  %v5560 = vshrl.u32 %v5558, 16
  %v5561 = vcvt.s32.f32 %v5559
  %v5562 = vcvt.s32.f32 %v5560
  %5563 = vadd.xlane.f32.xlu0 %v5561
  %v5564 = vpop.xlane.xlu0 %5563
  %5565 = vadd.xlane.f32.xlu0 %v5562
  %v5566 = vpop.xlane.xlu0 %5565
  %v5567 = vcvt.f32.s32 %v5564
  %v5568 = vcvt.f32.s32 %v5566
  %v5569 = vshll.u32 %v5568, 16
  %v5570 = vadd.s32 %v5569, %v5567
  %v5571 = vsel %vm1417, %v4843, 0
  %v5572 = vand.u32 %v5571, 65535
  %v5573 = vshrl.u32 %v5571, 16
  %v5574 = vcvt.s32.f32 %v5572
  %v5575 = vcvt.s32.f32 %v5573
  %5576 = vadd.xlane.f32.xlu0 %v5574
  %v5577 = vpop.xlane.xlu0 %5576
  %5578 = vadd.xlane.f32.xlu0 %v5575
  %v5579 = vpop.xlane.xlu0 %5578
  %v5580 = vcvt.f32.s32 %v5577
  %v5581 = vcvt.f32.s32 %v5579
  %v5582 = vshll.u32 %v5581, 16
  %v5583 = vadd.s32 %v5582, %v5580
  %v5584 = vsel %vm1417, %v4844, 0
  %v5585 = vand.u32 %v5584, 65535
  %v5586 = vshrl.u32 %v5584, 16
  %v5587 = vcvt.s32.f32 %v5585
  %v5588 = vcvt.s32.f32 %v5586
  %5589 = vadd.xlane.f32.xlu0 %v5587
  %v5590 = vpop.xlane.xlu0 %5589
  %5591 = vadd.xlane.f32.xlu0 %v5588
  %v5592 = vpop.xlane.xlu0 %5591
  %v5593 = vcvt.f32.s32 %v5590
  %v5594 = vcvt.f32.s32 %v5592
  %v5595 = vshll.u32 %v5594, 16
  %v5596 = vadd.s32 %v5595, %v5593
  %v5597 = vsel %vm1417, %v4845, 0
  %v5598 = vand.u32 %v5597, 65535
  %v5599 = vshrl.u32 %v5597, 16
  %v5600 = vcvt.s32.f32 %v5598
  %v5601 = vcvt.s32.f32 %v5599
  %5602 = vadd.xlane.f32.xlu0 %v5600
  %v5603 = vpop.xlane.xlu0 %5602
  %5604 = vadd.xlane.f32.xlu0 %v5601
  %v5605 = vpop.xlane.xlu0 %5604
  %v5606 = vcvt.f32.s32 %v5603
  %v5607 = vcvt.f32.s32 %v5605
  %v5608 = vshll.u32 %v5607, 16
  %v5609 = vadd.s32 %v5608, %v5606
  %v5610 = vsel %vm1417, %v4846, 0
  %v5611 = vand.u32 %v5610, 65535
  %v5612 = vshrl.u32 %v5610, 16
  %v5613 = vcvt.s32.f32 %v5611
  %v5614 = vcvt.s32.f32 %v5612
  %5615 = vadd.xlane.f32.xlu0 %v5613
  %v5616 = vpop.xlane.xlu0 %5615
  %5617 = vadd.xlane.f32.xlu0 %v5614
  %v5618 = vpop.xlane.xlu0 %5617
  %v5619 = vcvt.f32.s32 %v5616
  %v5620 = vcvt.f32.s32 %v5618
  %v5621 = vshll.u32 %v5620, 16
  %v5622 = vadd.s32 %v5621, %v5619
  %v5623 = vsel %vm1417, %v4847, 0
  %v5624 = vand.u32 %v5623, 65535
  %v5625 = vshrl.u32 %v5623, 16
  %v5626 = vcvt.s32.f32 %v5624
  %v5627 = vcvt.s32.f32 %v5625
  %5628 = vadd.xlane.f32.xlu0 %v5626
  %v5629 = vpop.xlane.xlu0 %5628
  %5630 = vadd.xlane.f32.xlu0 %v5627
  %v5631 = vpop.xlane.xlu0 %5630
  %v5632 = vcvt.f32.s32 %v5629
  %v5633 = vcvt.f32.s32 %v5631
  %v5634 = vshll.u32 %v5633, 16
  %v5635 = vadd.s32 %v5634, %v5632
  %v5636 = vsel %vm1417, %v4848, 0
  %v5637 = vand.u32 %v5636, 65535
  %v5638 = vshrl.u32 %v5636, 16
  %v5639 = vcvt.s32.f32 %v5637
  %v5640 = vcvt.s32.f32 %v5638
  %5641 = vadd.xlane.f32.xlu0 %v5639
  %v5642 = vpop.xlane.xlu0 %5641
  %5643 = vadd.xlane.f32.xlu0 %v5640
  %v5644 = vpop.xlane.xlu0 %5643
  %v5645 = vcvt.f32.s32 %v5642
  %v5646 = vcvt.f32.s32 %v5644
  %v5647 = vshll.u32 %v5646, 16
  %v5648 = vadd.s32 %v5647, %v5645
  %v5649 = vsel %vm1417, %v4849, 0
  %v5650 = vand.u32 %v5649, 65535
  %v5651 = vshrl.u32 %v5649, 16
  %v5652 = vcvt.s32.f32 %v5650
  %v5653 = vcvt.s32.f32 %v5651
  %5654 = vadd.xlane.f32.xlu0 %v5652
  %v5655 = vpop.xlane.xlu0 %5654
  %5656 = vadd.xlane.f32.xlu0 %v5653
  %v5657 = vpop.xlane.xlu0 %5656
  %v5658 = vcvt.f32.s32 %v5655
  %v5659 = vcvt.f32.s32 %v5657
  %v5660 = vshll.u32 %v5659, 16
  %v5661 = vadd.s32 %v5660, %v5658
  %v5662 = vsel %vm1417, %v4850, 0
  %v5663 = vand.u32 %v5662, 65535
  %v5664 = vshrl.u32 %v5662, 16
  %v5665 = vcvt.s32.f32 %v5663
  %v5666 = vcvt.s32.f32 %v5664
  %5667 = vadd.xlane.f32.xlu0 %v5665
  %v5668 = vpop.xlane.xlu0 %5667
  %5669 = vadd.xlane.f32.xlu0 %v5666
  %v5670 = vpop.xlane.xlu0 %5669
  %v5671 = vcvt.f32.s32 %v5668
  %v5672 = vcvt.f32.s32 %v5670
  %v5673 = vshll.u32 %v5672, 16
  %v5674 = vadd.s32 %v5673, %v5671
  %v5675 = vsel %vm1417, %v4851, 0
  %v5676 = vand.u32 %v5675, 65535
  %v5677 = vshrl.u32 %v5675, 16
  %v5678 = vcvt.s32.f32 %v5676
  %v5679 = vcvt.s32.f32 %v5677
  %5680 = vadd.xlane.f32.xlu0 %v5678
  %v5681 = vpop.xlane.xlu0 %5680
  %5682 = vadd.xlane.f32.xlu0 %v5679
  %v5683 = vpop.xlane.xlu0 %5682
  %v5684 = vcvt.f32.s32 %v5681
  %v5685 = vcvt.f32.s32 %v5683
  %v5686 = vshll.u32 %v5685, 16
  %v5687 = vadd.s32 %v5686, %v5684
  %v5688 = vsel %vm1417, %v4852, 0
  %v5689 = vand.u32 %v5688, 65535
  %v5690 = vshrl.u32 %v5688, 16
  %v5691 = vcvt.s32.f32 %v5689
  %v5692 = vcvt.s32.f32 %v5690
  %5693 = vadd.xlane.f32.xlu0 %v5691
  %v5694 = vpop.xlane.xlu0 %5693
  %5695 = vadd.xlane.f32.xlu0 %v5692
  %v5696 = vpop.xlane.xlu0 %5695
  %v5697 = vcvt.f32.s32 %v5694
  %v5698 = vcvt.f32.s32 %v5696
  %v5699 = vshll.u32 %v5698, 16
  %v5700 = vadd.s32 %v5699, %v5697
  %v5701 = vsel %vm1417, %v4853, 0
  %v5702 = vand.u32 %v5701, 65535
  %v5703 = vshrl.u32 %v5701, 16
  %v5704 = vcvt.s32.f32 %v5702
  %v5705 = vcvt.s32.f32 %v5703
  %5706 = vadd.xlane.f32.xlu0 %v5704
  %v5707 = vpop.xlane.xlu0 %5706
  %5708 = vadd.xlane.f32.xlu0 %v5705
  %v5709 = vpop.xlane.xlu0 %5708
  %v5710 = vcvt.f32.s32 %v5707
  %v5711 = vcvt.f32.s32 %v5709
  %v5712 = vshll.u32 %v5711, 16
  %v5713 = vadd.s32 %v5712, %v5710
  %v5714 = vsel %vm1417, %v4854, 0
  %v5715 = vand.u32 %v5714, 65535
  %v5716 = vshrl.u32 %v5714, 16
  %v5717 = vcvt.s32.f32 %v5715
  %v5718 = vcvt.s32.f32 %v5716
  %5719 = vadd.xlane.f32.xlu0 %v5717
  %v5720 = vpop.xlane.xlu0 %5719
  %5721 = vadd.xlane.f32.xlu0 %v5718
  %v5722 = vpop.xlane.xlu0 %5721
  %v5723 = vcvt.f32.s32 %v5720
  %v5724 = vcvt.f32.s32 %v5722
  %v5725 = vshll.u32 %v5724, 16
  %v5726 = vadd.s32 %v5725, %v5723
  %v5727 = vsel %vm1417, %v4855, 0
  %v5728 = vand.u32 %v5727, 65535
  %v5729 = vshrl.u32 %v5727, 16
  %v5730 = vcvt.s32.f32 %v5728
  %v5731 = vcvt.s32.f32 %v5729
  %5732 = vadd.xlane.f32.xlu0 %v5730
  %v5733 = vpop.xlane.xlu0 %5732
  %5734 = vadd.xlane.f32.xlu0 %v5731
  %v5735 = vpop.xlane.xlu0 %5734
  %v5736 = vcvt.f32.s32 %v5733
  %v5737 = vcvt.f32.s32 %v5735
  %v5738 = vshll.u32 %v5737, 16
  %v5739 = vadd.s32 %v5738, %v5736
  %v5740 = vsel %vm1417, %v4856, 0
  %v5741 = vand.u32 %v5740, 65535
  %v5742 = vshrl.u32 %v5740, 16
  %v5743 = vcvt.s32.f32 %v5741
  %v5744 = vcvt.s32.f32 %v5742
  %5745 = vadd.xlane.f32.xlu0 %v5743
  %v5746 = vpop.xlane.xlu0 %5745
  %5747 = vadd.xlane.f32.xlu0 %v5744
  %v5748 = vpop.xlane.xlu0 %5747
  %v5749 = vcvt.f32.s32 %v5746
  %v5750 = vcvt.f32.s32 %v5748
  %v5751 = vshll.u32 %v5750, 16
  %v5752 = vadd.s32 %v5751, %v5749
  %v5753 = vsel %vm1417, %v4857, 0
  %v5754 = vand.u32 %v5753, 65535
  %v5755 = vshrl.u32 %v5753, 16
  %v5756 = vcvt.s32.f32 %v5754
  %v5757 = vcvt.s32.f32 %v5755
  %5758 = vadd.xlane.f32.xlu0 %v5756
  %v5759 = vpop.xlane.xlu0 %5758
  %5760 = vadd.xlane.f32.xlu0 %v5757
  %v5761 = vpop.xlane.xlu0 %5760
  %v5762 = vcvt.f32.s32 %v5759
  %v5763 = vcvt.f32.s32 %v5761
  %v5764 = vshll.u32 %v5763, 16
  %v5765 = vadd.s32 %v5764, %v5762
  %v5766 = vsel %vm1417, %v4858, 0
  %v5767 = vand.u32 %v5766, 65535
  %v5768 = vshrl.u32 %v5766, 16
  %v5769 = vcvt.s32.f32 %v5767
  %v5770 = vcvt.s32.f32 %v5768
  %5771 = vadd.xlane.f32.xlu0 %v5769
  %v5772 = vpop.xlane.xlu0 %5771
  %5773 = vadd.xlane.f32.xlu0 %v5770
  %v5774 = vpop.xlane.xlu0 %5773
  %v5775 = vcvt.f32.s32 %v5772
  %v5776 = vcvt.f32.s32 %v5774
  %v5777 = vshll.u32 %v5776, 16
  %v5778 = vadd.s32 %v5777, %v5775
  %v5779 = vsel %vm1417, %v4859, 0
  %v5780 = vand.u32 %v5779, 65535
  %v5781 = vshrl.u32 %v5779, 16
  %v5782 = vcvt.s32.f32 %v5780
  %v5783 = vcvt.s32.f32 %v5781
  %5784 = vadd.xlane.f32.xlu0 %v5782
  %v5785 = vpop.xlane.xlu0 %5784
  %5786 = vadd.xlane.f32.xlu0 %v5783
  %v5787 = vpop.xlane.xlu0 %5786
  %v5788 = vcvt.f32.s32 %v5785
  %v5789 = vcvt.f32.s32 %v5787
  %v5790 = vshll.u32 %v5789, 16
  %v5791 = vadd.s32 %v5790, %v5788
  %v5792 = vsel %vm1417, %v4860, 0
  %v5793 = vand.u32 %v5792, 65535
  %v5794 = vshrl.u32 %v5792, 16
  %v5795 = vcvt.s32.f32 %v5793
  %v5796 = vcvt.s32.f32 %v5794
  %5797 = vadd.xlane.f32.xlu0 %v5795
  %v5798 = vpop.xlane.xlu0 %5797
  %5799 = vadd.xlane.f32.xlu0 %v5796
  %v5800 = vpop.xlane.xlu0 %5799
  %v5801 = vcvt.f32.s32 %v5798
  %v5802 = vcvt.f32.s32 %v5800
  %v5803 = vshll.u32 %v5802, 16
  %v5804 = vadd.s32 %v5803, %v5801
  %v5805 = vsel %vm1417, %v4861, 0
  %v5806 = vand.u32 %v5805, 65535
  %v5807 = vshrl.u32 %v5805, 16
  %v5808 = vcvt.s32.f32 %v5806
  %v5809 = vcvt.s32.f32 %v5807
  %5810 = vadd.xlane.f32.xlu0 %v5808
  %v5811 = vpop.xlane.xlu0 %5810
  %5812 = vadd.xlane.f32.xlu0 %v5809
  %v5813 = vpop.xlane.xlu0 %5812
  %v5814 = vcvt.f32.s32 %v5811
  %v5815 = vcvt.f32.s32 %v5813
  %v5816 = vshll.u32 %v5815, 16
  %v5817 = vadd.s32 %v5816, %v5814
  %v5818 = vsel %vm1417, %v4862, 0
  %v5819 = vand.u32 %v5818, 65535
  %v5820 = vshrl.u32 %v5818, 16
  %v5821 = vcvt.s32.f32 %v5819
  %v5822 = vcvt.s32.f32 %v5820
  %5823 = vadd.xlane.f32.xlu0 %v5821
  %v5824 = vpop.xlane.xlu0 %5823
  %5825 = vadd.xlane.f32.xlu0 %v5822
  %v5826 = vpop.xlane.xlu0 %5825
  %v5827 = vcvt.f32.s32 %v5824
  %v5828 = vcvt.f32.s32 %v5826
  %v5829 = vshll.u32 %v5828, 16
  %v5830 = vadd.s32 %v5829, %v5827
  %v5831 = vsel %vm1417, %v4863, 0
  %v5832 = vand.u32 %v5831, 65535
  %v5833 = vshrl.u32 %v5831, 16
  %v5834 = vcvt.s32.f32 %v5832
  %v5835 = vcvt.s32.f32 %v5833
  %5836 = vadd.xlane.f32.xlu0 %v5834
  %v5837 = vpop.xlane.xlu0 %5836
  %5838 = vadd.xlane.f32.xlu0 %v5835
  %v5839 = vpop.xlane.xlu0 %5838
  %v5840 = vcvt.f32.s32 %v5837
  %v5841 = vcvt.f32.s32 %v5839
  %v5842 = vshll.u32 %v5841, 16
  %v5843 = vadd.s32 %v5842, %v5840
  %v5844 = vsel %vm1417, %v4864, 0
  %v5845 = vand.u32 %v5844, 65535
  %v5846 = vshrl.u32 %v5844, 16
  %v5847 = vcvt.s32.f32 %v5845
  %v5848 = vcvt.s32.f32 %v5846
  %5849 = vadd.xlane.f32.xlu0 %v5847
  %v5850 = vpop.xlane.xlu0 %5849
  %5851 = vadd.xlane.f32.xlu0 %v5848
  %v5852 = vpop.xlane.xlu0 %5851
  %v5853 = vcvt.f32.s32 %v5850
  %v5854 = vcvt.f32.s32 %v5852
  %v5855 = vshll.u32 %v5854, 16
  %v5856 = vadd.s32 %v5855, %v5853
  %v5857 = vsel %vm1417, %v4865, 0
  %v5858 = vand.u32 %v5857, 65535
  %v5859 = vshrl.u32 %v5857, 16
  %v5860 = vcvt.s32.f32 %v5858
  %v5861 = vcvt.s32.f32 %v5859
  %5862 = vadd.xlane.f32.xlu0 %v5860
  %v5863 = vpop.xlane.xlu0 %5862
  %5864 = vadd.xlane.f32.xlu0 %v5861
  %v5865 = vpop.xlane.xlu0 %5864
  %v5866 = vcvt.f32.s32 %v5863
  %v5867 = vcvt.f32.s32 %v5865
  %v5868 = vshll.u32 %v5867, 16
  %v5869 = vadd.s32 %v5868, %v5866
  %v5870 = vsel %vm1417, %v4866, 0
  %v5871 = vand.u32 %v5870, 65535
  %v5872 = vshrl.u32 %v5870, 16
  %v5873 = vcvt.s32.f32 %v5871
  %v5874 = vcvt.s32.f32 %v5872
  %5875 = vadd.xlane.f32.xlu0 %v5873
  %v5876 = vpop.xlane.xlu0 %5875
  %5877 = vadd.xlane.f32.xlu0 %v5874
  %v5878 = vpop.xlane.xlu0 %5877
  %v5879 = vcvt.f32.s32 %v5876
  %v5880 = vcvt.f32.s32 %v5878
  %v5881 = vshll.u32 %v5880, 16
  %v5882 = vadd.s32 %v5881, %v5879
  %v5883 = vsel %vm1417, %v4867, 0
  %v5884 = vand.u32 %v5883, 65535
  %v5885 = vshrl.u32 %v5883, 16
  %v5886 = vcvt.s32.f32 %v5884
  %v5887 = vcvt.s32.f32 %v5885
  %5888 = vadd.xlane.f32.xlu0 %v5886
  %v5889 = vpop.xlane.xlu0 %5888
  %5890 = vadd.xlane.f32.xlu0 %v5887
  %v5891 = vpop.xlane.xlu0 %5890
  %v5892 = vcvt.f32.s32 %v5889
  %v5893 = vcvt.f32.s32 %v5891
  %v5894 = vshll.u32 %v5893, 16
  %v5895 = vadd.s32 %v5894, %v5892
  %v5896 = vsel %vm1417, %v4868, 0
  %v5897 = vand.u32 %v5896, 65535
  %v5898 = vshrl.u32 %v5896, 16
  %v5899 = vcvt.s32.f32 %v5897
  %v5900 = vcvt.s32.f32 %v5898
  %5901 = vadd.xlane.f32.xlu0 %v5899
  %v5902 = vpop.xlane.xlu0 %5901
  %5903 = vadd.xlane.f32.xlu0 %v5900
  %v5904 = vpop.xlane.xlu0 %5903
  %v5905 = vcvt.f32.s32 %v5902
  %v5906 = vcvt.f32.s32 %v5904
  %v5907 = vshll.u32 %v5906, 16
  %v5908 = vadd.s32 %v5907, %v5905
  %v5909 = vsel %vm1417, %v4869, 0
  %v5910 = vand.u32 %v5909, 65535
  %v5911 = vshrl.u32 %v5909, 16
  %v5912 = vcvt.s32.f32 %v5910
  %v5913 = vcvt.s32.f32 %v5911
  %5914 = vadd.xlane.f32.xlu0 %v5912
  %v5915 = vpop.xlane.xlu0 %5914
  %5916 = vadd.xlane.f32.xlu0 %v5913
  %v5917 = vpop.xlane.xlu0 %5916
  %v5918 = vcvt.f32.s32 %v5915
  %v5919 = vcvt.f32.s32 %v5917
  %v5920 = vshll.u32 %v5919, 16
  %v5921 = vadd.s32 %v5920, %v5918
  %v5922 = vsel %vm1417, %v4870, 0
  %v5923 = vand.u32 %v5922, 65535
  %v5924 = vshrl.u32 %v5922, 16
  %v5925 = vcvt.s32.f32 %v5923
  %v5926 = vcvt.s32.f32 %v5924
  %5927 = vadd.xlane.f32.xlu0 %v5925
  %v5928 = vpop.xlane.xlu0 %5927
  %5929 = vadd.xlane.f32.xlu0 %v5926
  %v5930 = vpop.xlane.xlu0 %5929
  %v5931 = vcvt.f32.s32 %v5928
  %v5932 = vcvt.f32.s32 %v5930
  %v5933 = vshll.u32 %v5932, 16
  %v5934 = vadd.s32 %v5933, %v5931
  %v5935 = vsel %vm1417, %v4871, 0
  %v5936 = vand.u32 %v5935, 65535
  %v5937 = vshrl.u32 %v5935, 16
  %v5938 = vcvt.s32.f32 %v5936
  %v5939 = vcvt.s32.f32 %v5937
  %5940 = vadd.xlane.f32.xlu0 %v5938
  %v5941 = vpop.xlane.xlu0 %5940
  %5942 = vadd.xlane.f32.xlu0 %v5939
  %v5943 = vpop.xlane.xlu0 %5942
  %v5944 = vcvt.f32.s32 %v5941
  %v5945 = vcvt.f32.s32 %v5943
  %v5946 = vshll.u32 %v5945, 16
  %v5947 = vadd.s32 %v5946, %v5944
  %v5948 = vsel %vm1417, %v4872, 0
  %v5949 = vand.u32 %v5948, 65535
  %v5950 = vshrl.u32 %v5948, 16
  %v5951 = vcvt.s32.f32 %v5949
  %v5952 = vcvt.s32.f32 %v5950
  %5953 = vadd.xlane.f32.xlu0 %v5951
  %v5954 = vpop.xlane.xlu0 %5953
  %5955 = vadd.xlane.f32.xlu0 %v5952
  %v5956 = vpop.xlane.xlu0 %5955
  %v5957 = vcvt.f32.s32 %v5954
  %v5958 = vcvt.f32.s32 %v5956
  %v5959 = vshll.u32 %v5958, 16
  %v5960 = vadd.s32 %v5959, %v5957
  %v5961 = vsel %vm1417, %v4873, 0
  %v5962 = vand.u32 %v5961, 65535
  %v5963 = vshrl.u32 %v5961, 16
  %v5964 = vcvt.s32.f32 %v5962
  %v5965 = vcvt.s32.f32 %v5963
  %5966 = vadd.xlane.f32.xlu0 %v5964
  %v5967 = vpop.xlane.xlu0 %5966
  %5968 = vadd.xlane.f32.xlu0 %v5965
  %v5969 = vpop.xlane.xlu0 %5968
  %v5970 = vcvt.f32.s32 %v5967
  %v5971 = vcvt.f32.s32 %v5969
  %v5972 = vshll.u32 %v5971, 16
  %v5973 = vadd.s32 %v5972, %v5970
  %v5974 = vsel %vm1417, %v4874, 0
  %v5975 = vand.u32 %v5974, 65535
  %v5976 = vshrl.u32 %v5974, 16
  %v5977 = vcvt.s32.f32 %v5975
  %v5978 = vcvt.s32.f32 %v5976
  %5979 = vadd.xlane.f32.xlu0 %v5977
  %v5980 = vpop.xlane.xlu0 %5979
  %5981 = vadd.xlane.f32.xlu0 %v5978
  %v5982 = vpop.xlane.xlu0 %5981
  %v5983 = vcvt.f32.s32 %v5980
  %v5984 = vcvt.f32.s32 %v5982
  %v5985 = vshll.u32 %v5984, 16
  %v5986 = vadd.s32 %v5985, %v5983
  %v5987 = vsel %vm1417, %v4875, 0
  %v5988 = vand.u32 %v5987, 65535
  %v5989 = vshrl.u32 %v5987, 16
  %v5990 = vcvt.s32.f32 %v5988
  %v5991 = vcvt.s32.f32 %v5989
  %5992 = vadd.xlane.f32.xlu0 %v5990
  %v5993 = vpop.xlane.xlu0 %5992
  %5994 = vadd.xlane.f32.xlu0 %v5991
  %v5995 = vpop.xlane.xlu0 %5994
  %v5996 = vcvt.f32.s32 %v5993
  %v5997 = vcvt.f32.s32 %v5995
  %v5998 = vshll.u32 %v5997, 16
  %v5999 = vadd.s32 %v5998, %v5996
  %v6000 = vsel %vm1417, %v4876, 0
  %v6001 = vand.u32 %v6000, 65535
  %v6002 = vshrl.u32 %v6000, 16
  %v6003 = vcvt.s32.f32 %v6001
  %v6004 = vcvt.s32.f32 %v6002
  %6005 = vadd.xlane.f32.xlu0 %v6003
  %v6006 = vpop.xlane.xlu0 %6005
  %6007 = vadd.xlane.f32.xlu0 %v6004
  %v6008 = vpop.xlane.xlu0 %6007
  %v6009 = vcvt.f32.s32 %v6006
  %v6010 = vcvt.f32.s32 %v6008
  %v6011 = vshll.u32 %v6010, 16
  %v6012 = vadd.s32 %v6011, %v6009
  %v6013 = vsel %vm1417, %v4877, 0
  %v6014 = vand.u32 %v6013, 65535
  %v6015 = vshrl.u32 %v6013, 16
  %v6016 = vcvt.s32.f32 %v6014
  %v6017 = vcvt.s32.f32 %v6015
  %6018 = vadd.xlane.f32.xlu0 %v6016
  %v6019 = vpop.xlane.xlu0 %6018
  %6020 = vadd.xlane.f32.xlu0 %v6017
  %v6021 = vpop.xlane.xlu0 %6020
  %v6022 = vcvt.f32.s32 %v6019
  %v6023 = vcvt.f32.s32 %v6021
  %v6024 = vshll.u32 %v6023, 16
  %v6025 = vadd.s32 %v6024, %v6022
  %v6026 = vsel %vm1417, %v4878, 0
  %v6027 = vand.u32 %v6026, 65535
  %v6028 = vshrl.u32 %v6026, 16
  %v6029 = vcvt.s32.f32 %v6027
  %v6030 = vcvt.s32.f32 %v6028
  %6031 = vadd.xlane.f32.xlu0 %v6029
  %v6032 = vpop.xlane.xlu0 %6031
  %6033 = vadd.xlane.f32.xlu0 %v6030
  %v6034 = vpop.xlane.xlu0 %6033
  %v6035 = vcvt.f32.s32 %v6032
  %v6036 = vcvt.f32.s32 %v6034
  %v6037 = vshll.u32 %v6036, 16
  %v6038 = vadd.s32 %v6037, %v6035
  %v6039 = vsel %vm1417, %v4879, 0
  %v6040 = vand.u32 %v6039, 65535
  %v6041 = vshrl.u32 %v6039, 16
  %v6042 = vcvt.s32.f32 %v6040
  %v6043 = vcvt.s32.f32 %v6041
  %6044 = vadd.xlane.f32.xlu0 %v6042
  %v6045 = vpop.xlane.xlu0 %6044
  %6046 = vadd.xlane.f32.xlu0 %v6043
  %v6047 = vpop.xlane.xlu0 %6046
  %v6048 = vcvt.f32.s32 %v6045
  %v6049 = vcvt.f32.s32 %v6047
  %v6050 = vshll.u32 %v6049, 16
  %v6051 = vadd.s32 %v6050, %v6048
  %v6052 = vsel %vm1417, %v4880, 0
  %v6053 = vand.u32 %v6052, 65535
  %v6054 = vshrl.u32 %v6052, 16
  %v6055 = vcvt.s32.f32 %v6053
  %v6056 = vcvt.s32.f32 %v6054
  %6057 = vadd.xlane.f32.xlu0 %v6055
  %v6058 = vpop.xlane.xlu0 %6057
  %6059 = vadd.xlane.f32.xlu0 %v6056
  %v6060 = vpop.xlane.xlu0 %6059
  %v6061 = vcvt.f32.s32 %v6058
  %v6062 = vcvt.f32.s32 %v6060
  %v6063 = vshll.u32 %v6062, 16
  %v6064 = vadd.s32 %v6063, %v6061
  %v6065 = vsel %vm1417, %v4881, 0
  %v6066 = vand.u32 %v6065, 65535
  %v6067 = vshrl.u32 %v6065, 16
  %v6068 = vcvt.s32.f32 %v6066
  %v6069 = vcvt.s32.f32 %v6067
  %6070 = vadd.xlane.f32.xlu0 %v6068
  %v6071 = vpop.xlane.xlu0 %6070
  %6072 = vadd.xlane.f32.xlu0 %v6069
  %v6073 = vpop.xlane.xlu0 %6072
  %v6074 = vcvt.f32.s32 %v6071
  %v6075 = vcvt.f32.s32 %v6073
  %v6076 = vshll.u32 %v6075, 16
  %v6077 = vadd.s32 %v6076, %v6074
  %v6078 = vsel %vm1417, %v4882, 0
  %v6079 = vand.u32 %v6078, 65535
  %v6080 = vshrl.u32 %v6078, 16
  %v6081 = vcvt.s32.f32 %v6079
  %v6082 = vcvt.s32.f32 %v6080
  %6083 = vadd.xlane.f32.xlu0 %v6081
  %v6084 = vpop.xlane.xlu0 %6083
  %6085 = vadd.xlane.f32.xlu0 %v6082
  %v6086 = vpop.xlane.xlu0 %6085
  %v6087 = vcvt.f32.s32 %v6084
  %v6088 = vcvt.f32.s32 %v6086
  %v6089 = vshll.u32 %v6088, 16
  %v6090 = vadd.s32 %v6089, %v6087
  %v6091 = vsel %vm1417, %v4883, 0
  %v6092 = vand.u32 %v6091, 65535
  %v6093 = vshrl.u32 %v6091, 16
  %v6094 = vcvt.s32.f32 %v6092
  %v6095 = vcvt.s32.f32 %v6093
  %6096 = vadd.xlane.f32.xlu0 %v6094
  %v6097 = vpop.xlane.xlu0 %6096
  %6098 = vadd.xlane.f32.xlu0 %v6095
  %v6099 = vpop.xlane.xlu0 %6098
  %v6100 = vcvt.f32.s32 %v6097
  %v6101 = vcvt.f32.s32 %v6099
  %v6102 = vshll.u32 %v6101, 16
  %v6103 = vadd.s32 %v6102, %v6100
  %v6104 = vsel %vm1417, %v4884, 0
  %v6105 = vand.u32 %v6104, 65535
  %v6106 = vshrl.u32 %v6104, 16
  %v6107 = vcvt.s32.f32 %v6105
  %v6108 = vcvt.s32.f32 %v6106
  %6109 = vadd.xlane.f32.xlu0 %v6107
  %v6110 = vpop.xlane.xlu0 %6109
  %6111 = vadd.xlane.f32.xlu0 %v6108
  %v6112 = vpop.xlane.xlu0 %6111
  %v6113 = vcvt.f32.s32 %v6110
  %v6114 = vcvt.f32.s32 %v6112
  %v6115 = vshll.u32 %v6114, 16
  %v6116 = vadd.s32 %v6115, %v6113
  %v6117 = vsel %vm1417, %v4885, 0
  %v6118 = vand.u32 %v6117, 65535
  %v6119 = vshrl.u32 %v6117, 16
  %v6120 = vcvt.s32.f32 %v6118
  %v6121 = vcvt.s32.f32 %v6119
  %6122 = vadd.xlane.f32.xlu0 %v6120
  %v6123 = vpop.xlane.xlu0 %6122
  %6124 = vadd.xlane.f32.xlu0 %v6121
  %v6125 = vpop.xlane.xlu0 %6124
  %v6126 = vcvt.f32.s32 %v6123
  %v6127 = vcvt.f32.s32 %v6125
  %v6128 = vshll.u32 %v6127, 16
  %v6129 = vadd.s32 %v6128, %v6126
  %v6130 = vsel %vm1417, %v4886, 0
  %v6131 = vand.u32 %v6130, 65535
  %v6132 = vshrl.u32 %v6130, 16
  %v6133 = vcvt.s32.f32 %v6131
  %v6134 = vcvt.s32.f32 %v6132
  %6135 = vadd.xlane.f32.xlu0 %v6133
  %v6136 = vpop.xlane.xlu0 %6135
  %6137 = vadd.xlane.f32.xlu0 %v6134
  %v6138 = vpop.xlane.xlu0 %6137
  %v6139 = vcvt.f32.s32 %v6136
  %v6140 = vcvt.f32.s32 %v6138
  %v6141 = vshll.u32 %v6140, 16
  %v6142 = vadd.s32 %v6141, %v6139
  %v6143 = vsel %vm1417, %v4887, 0
  %v6144 = vand.u32 %v6143, 65535
  %v6145 = vshrl.u32 %v6143, 16
  %v6146 = vcvt.s32.f32 %v6144
  %v6147 = vcvt.s32.f32 %v6145
  %6148 = vadd.xlane.f32.xlu0 %v6146
  %v6149 = vpop.xlane.xlu0 %6148
  %6150 = vadd.xlane.f32.xlu0 %v6147
  %v6151 = vpop.xlane.xlu0 %6150
  %v6152 = vcvt.f32.s32 %v6149
  %v6153 = vcvt.f32.s32 %v6151
  %v6154 = vshll.u32 %v6153, 16
  %v6155 = vadd.s32 %v6154, %v6152
  %v6156 = vsel %vm1417, %v4888, 0
  %v6157 = vand.u32 %v6156, 65535
  %v6158 = vshrl.u32 %v6156, 16
  %v6159 = vcvt.s32.f32 %v6157
  %v6160 = vcvt.s32.f32 %v6158
  %6161 = vadd.xlane.f32.xlu0 %v6159
  %v6162 = vpop.xlane.xlu0 %6161
  %6163 = vadd.xlane.f32.xlu0 %v6160
  %v6164 = vpop.xlane.xlu0 %6163
  %v6165 = vcvt.f32.s32 %v6162
  %v6166 = vcvt.f32.s32 %v6164
  %v6167 = vshll.u32 %v6166, 16
  %v6168 = vadd.s32 %v6167, %v6165
  %v6169 = vsel %vm1417, %v4889, 0
  %v6170 = vand.u32 %v6169, 65535
  %v6171 = vshrl.u32 %v6169, 16
  %v6172 = vcvt.s32.f32 %v6170
  %v6173 = vcvt.s32.f32 %v6171
  %6174 = vadd.xlane.f32.xlu0 %v6172
  %v6175 = vpop.xlane.xlu0 %6174
  %6176 = vadd.xlane.f32.xlu0 %v6173
  %v6177 = vpop.xlane.xlu0 %6176
  %v6178 = vcvt.f32.s32 %v6175
  %v6179 = vcvt.f32.s32 %v6177
  %v6180 = vshll.u32 %v6179, 16
  %v6181 = vadd.s32 %v6180, %v6178
  %v6182 = vsel %vm1417, %v4890, 0
  %v6183 = vand.u32 %v6182, 65535
  %v6184 = vshrl.u32 %v6182, 16
  %v6185 = vcvt.s32.f32 %v6183
  %v6186 = vcvt.s32.f32 %v6184
  %6187 = vadd.xlane.f32.xlu0 %v6185
  %v6188 = vpop.xlane.xlu0 %6187
  %6189 = vadd.xlane.f32.xlu0 %v6186
  %v6190 = vpop.xlane.xlu0 %6189
  %v6191 = vcvt.f32.s32 %v6188
  %v6192 = vcvt.f32.s32 %v6190
  %v6193 = vshll.u32 %v6192, 16
  %v6194 = vadd.s32 %v6193, %v6191
  %v6195 = vsel %vm1417, %v4891, 0
  %v6196 = vand.u32 %v6195, 65535
  %v6197 = vshrl.u32 %v6195, 16
  %v6198 = vcvt.s32.f32 %v6196
  %v6199 = vcvt.s32.f32 %v6197
  %6200 = vadd.xlane.f32.xlu0 %v6198
  %v6201 = vpop.xlane.xlu0 %6200
  %6202 = vadd.xlane.f32.xlu0 %v6199
  %v6203 = vpop.xlane.xlu0 %6202
  %v6204 = vcvt.f32.s32 %v6201
  %v6205 = vcvt.f32.s32 %v6203
  %v6206 = vshll.u32 %v6205, 16
  %v6207 = vadd.s32 %v6206, %v6204
  %v6208 = vsel %vm1417, %v4892, 0
  %v6209 = vand.u32 %v6208, 65535
  %v6210 = vshrl.u32 %v6208, 16
  %v6211 = vcvt.s32.f32 %v6209
  %v6212 = vcvt.s32.f32 %v6210
  %6213 = vadd.xlane.f32.xlu0 %v6211
  %v6214 = vpop.xlane.xlu0 %6213
  %6215 = vadd.xlane.f32.xlu0 %v6212
  %v6216 = vpop.xlane.xlu0 %6215
  %v6217 = vcvt.f32.s32 %v6214
  %v6218 = vcvt.f32.s32 %v6216
  %v6219 = vshll.u32 %v6218, 16
  %v6220 = vadd.s32 %v6219, %v6217
  %v6221 = vsel %vm1417, %v4893, 0
  %v6222 = vand.u32 %v6221, 65535
  %v6223 = vshrl.u32 %v6221, 16
  %v6224 = vcvt.s32.f32 %v6222
  %v6225 = vcvt.s32.f32 %v6223
  %6226 = vadd.xlane.f32.xlu0 %v6224
  %v6227 = vpop.xlane.xlu0 %6226
  %6228 = vadd.xlane.f32.xlu0 %v6225
  %v6229 = vpop.xlane.xlu0 %6228
  %v6230 = vcvt.f32.s32 %v6227
  %v6231 = vcvt.f32.s32 %v6229
  %v6232 = vshll.u32 %v6231, 16
  %v6233 = vadd.s32 %v6232, %v6230
  %v6234 = vsel %vm1417, %v4894, 0
  %v6235 = vand.u32 %v6234, 65535
  %v6236 = vshrl.u32 %v6234, 16
  %v6237 = vcvt.s32.f32 %v6235
  %v6238 = vcvt.s32.f32 %v6236
  %6239 = vadd.xlane.f32.xlu0 %v6237
  %v6240 = vpop.xlane.xlu0 %6239
  %6241 = vadd.xlane.f32.xlu0 %v6238
  %v6242 = vpop.xlane.xlu0 %6241
  %v6243 = vcvt.f32.s32 %v6240
  %v6244 = vcvt.f32.s32 %v6242
  %v6245 = vshll.u32 %v6244, 16
  %v6246 = vadd.s32 %v6245, %v6243
  %v6247 = vsel %vm1417, %v4895, 0
  %v6248 = vand.u32 %v6247, 65535
  %v6249 = vshrl.u32 %v6247, 16
  %v6250 = vcvt.s32.f32 %v6248
  %v6251 = vcvt.s32.f32 %v6249
  %6252 = vadd.xlane.f32.xlu0 %v6250
  %v6253 = vpop.xlane.xlu0 %6252
  %6254 = vadd.xlane.f32.xlu0 %v6251
  %v6255 = vpop.xlane.xlu0 %6254
  %v6256 = vcvt.f32.s32 %v6253
  %v6257 = vcvt.f32.s32 %v6255
  %v6258 = vshll.u32 %v6257, 16
  %v6259 = vadd.s32 %v6258, %v6256
  %v6260 = vsel %vm1417, %v4896, 0
  %v6261 = vand.u32 %v6260, 65535
  %v6262 = vshrl.u32 %v6260, 16
  %v6263 = vcvt.s32.f32 %v6261
  %v6264 = vcvt.s32.f32 %v6262
  %6265 = vadd.xlane.f32.xlu0 %v6263
  %v6266 = vpop.xlane.xlu0 %6265
  %6267 = vadd.xlane.f32.xlu0 %v6264
  %v6268 = vpop.xlane.xlu0 %6267
  %v6269 = vcvt.f32.s32 %v6266
  %v6270 = vcvt.f32.s32 %v6268
  %v6271 = vshll.u32 %v6270, 16
  %v6272 = vadd.s32 %v6271, %v6269
  %v6273 = vsel %vm1417, %v4897, 0
  %v6274 = vand.u32 %v6273, 65535
  %v6275 = vshrl.u32 %v6273, 16
  %v6276 = vcvt.s32.f32 %v6274
  %v6277 = vcvt.s32.f32 %v6275
  %6278 = vadd.xlane.f32.xlu0 %v6276
  %v6279 = vpop.xlane.xlu0 %6278
  %6280 = vadd.xlane.f32.xlu0 %v6277
  %v6281 = vpop.xlane.xlu0 %6280
  %v6282 = vcvt.f32.s32 %v6279
  %v6283 = vcvt.f32.s32 %v6281
  %v6284 = vshll.u32 %v6283, 16
  %v6285 = vadd.s32 %v6284, %v6282
  %v6286 = vsel %vm1417, %v4898, 0
  %v6287 = vand.u32 %v6286, 65535
  %v6288 = vshrl.u32 %v6286, 16
  %v6289 = vcvt.s32.f32 %v6287
  %v6290 = vcvt.s32.f32 %v6288
  %6291 = vadd.xlane.f32.xlu0 %v6289
  %v6292 = vpop.xlane.xlu0 %6291
  %6293 = vadd.xlane.f32.xlu0 %v6290
  %v6294 = vpop.xlane.xlu0 %6293
  %v6295 = vcvt.f32.s32 %v6292
  %v6296 = vcvt.f32.s32 %v6294
  %v6297 = vshll.u32 %v6296, 16
  %v6298 = vadd.s32 %v6297, %v6295
  %v6299 = vsel %vm1417, %v4899, 0
  %v6300 = vand.u32 %v6299, 65535
  %v6301 = vshrl.u32 %v6299, 16
  %v6302 = vcvt.s32.f32 %v6300
  %v6303 = vcvt.s32.f32 %v6301
  %6304 = vadd.xlane.f32.xlu0 %v6302
  %v6305 = vpop.xlane.xlu0 %6304
  %6306 = vadd.xlane.f32.xlu0 %v6303
  %v6307 = vpop.xlane.xlu0 %6306
  %v6308 = vcvt.f32.s32 %v6305
  %v6309 = vcvt.f32.s32 %v6307
  %v6310 = vshll.u32 %v6309, 16
  %v6311 = vadd.s32 %v6310, %v6308
  %v6312 = vsel %vm1417, %v4900, 0
  %v6313 = vand.u32 %v6312, 65535
  %v6314 = vshrl.u32 %v6312, 16
  %v6315 = vcvt.s32.f32 %v6313
  %v6316 = vcvt.s32.f32 %v6314
  %6317 = vadd.xlane.f32.xlu0 %v6315
  %v6318 = vpop.xlane.xlu0 %6317
  %6319 = vadd.xlane.f32.xlu0 %v6316
  %v6320 = vpop.xlane.xlu0 %6319
  %v6321 = vcvt.f32.s32 %v6318
  %v6322 = vcvt.f32.s32 %v6320
  %v6323 = vshll.u32 %v6322, 16
  %v6324 = vadd.s32 %v6323, %v6321
  %v6325 = vsel %vm1417, %v4901, 0
  %v6326 = vand.u32 %v6325, 65535
  %v6327 = vshrl.u32 %v6325, 16
  %v6328 = vcvt.s32.f32 %v6326
  %v6329 = vcvt.s32.f32 %v6327
  %6330 = vadd.xlane.f32.xlu0 %v6328
  %v6331 = vpop.xlane.xlu0 %6330
  %6332 = vadd.xlane.f32.xlu0 %v6329
  %v6333 = vpop.xlane.xlu0 %6332
  %v6334 = vcvt.f32.s32 %v6331
  %v6335 = vcvt.f32.s32 %v6333
  %v6336 = vshll.u32 %v6335, 16
  %v6337 = vadd.s32 %v6336, %v6334
  %v6338 = vsel %vm1417, %v4902, 0
  %v6339 = vand.u32 %v6338, 65535
  %v6340 = vshrl.u32 %v6338, 16
  %v6341 = vcvt.s32.f32 %v6339
  %v6342 = vcvt.s32.f32 %v6340
  %6343 = vadd.xlane.f32.xlu0 %v6341
  %v6344 = vpop.xlane.xlu0 %6343
  %6345 = vadd.xlane.f32.xlu0 %v6342
  %v6346 = vpop.xlane.xlu0 %6345
  %v6347 = vcvt.f32.s32 %v6344
  %v6348 = vcvt.f32.s32 %v6346
  %v6349 = vshll.u32 %v6348, 16
  %v6350 = vadd.s32 %v6349, %v6347
  %v6351 = vsel %vm1417, %v4903, 0
  %v6352 = vand.u32 %v6351, 65535
  %v6353 = vshrl.u32 %v6351, 16
  %v6354 = vcvt.s32.f32 %v6352
  %v6355 = vcvt.s32.f32 %v6353
  %6356 = vadd.xlane.f32.xlu0 %v6354
  %v6357 = vpop.xlane.xlu0 %6356
  %6358 = vadd.xlane.f32.xlu0 %v6355
  %v6359 = vpop.xlane.xlu0 %6358
  %v6360 = vcvt.f32.s32 %v6357
  %v6361 = vcvt.f32.s32 %v6359
  %v6362 = vshll.u32 %v6361, 16
  %v6363 = vadd.s32 %v6362, %v6360
  %v6364 = vsel %vm1417, %v4904, 0
  %v6365 = vand.u32 %v6364, 65535
  %v6366 = vshrl.u32 %v6364, 16
  %v6367 = vcvt.s32.f32 %v6365
  %v6368 = vcvt.s32.f32 %v6366
  %6369 = vadd.xlane.f32.xlu0 %v6367
  %v6370 = vpop.xlane.xlu0 %6369
  %6371 = vadd.xlane.f32.xlu0 %v6368
  %v6372 = vpop.xlane.xlu0 %6371
  %v6373 = vcvt.f32.s32 %v6370
  %v6374 = vcvt.f32.s32 %v6372
  %v6375 = vshll.u32 %v6374, 16
  %v6376 = vadd.s32 %v6375, %v6373
  %v6377 = vsel %vm1417, %v4905, 0
  %v6378 = vand.u32 %v6377, 65535
  %v6379 = vshrl.u32 %v6377, 16
  %v6380 = vcvt.s32.f32 %v6378
  %v6381 = vcvt.s32.f32 %v6379
  %6382 = vadd.xlane.f32.xlu0 %v6380
  %v6383 = vpop.xlane.xlu0 %6382
  %6384 = vadd.xlane.f32.xlu0 %v6381
  %v6385 = vpop.xlane.xlu0 %6384
  %v6386 = vcvt.f32.s32 %v6383
  %v6387 = vcvt.f32.s32 %v6385
  %v6388 = vshll.u32 %v6387, 16
  %v6389 = vadd.s32 %v6388, %v6386
  %v6390 = vsel %vm1417, %v4906, 0
  %v6391 = vand.u32 %v6390, 65535
  %v6392 = vshrl.u32 %v6390, 16
  %v6393 = vcvt.s32.f32 %v6391
  %v6394 = vcvt.s32.f32 %v6392
  %6395 = vadd.xlane.f32.xlu0 %v6393
  %v6396 = vpop.xlane.xlu0 %6395
  %6397 = vadd.xlane.f32.xlu0 %v6394
  %v6398 = vpop.xlane.xlu0 %6397
  %v6399 = vcvt.f32.s32 %v6396
  %v6400 = vcvt.f32.s32 %v6398
  %v6401 = vshll.u32 %v6400, 16
  %v6402 = vadd.s32 %v6401, %v6399
  %v6403 = vsel %vm1417, %v4907, 0
  %v6404 = vand.u32 %v6403, 65535
  %v6405 = vshrl.u32 %v6403, 16
  %v6406 = vcvt.s32.f32 %v6404
  %v6407 = vcvt.s32.f32 %v6405
  %6408 = vadd.xlane.f32.xlu0 %v6406
  %v6409 = vpop.xlane.xlu0 %6408
  %6410 = vadd.xlane.f32.xlu0 %v6407
  %v6411 = vpop.xlane.xlu0 %6410
  %v6412 = vcvt.f32.s32 %v6409
  %v6413 = vcvt.f32.s32 %v6411
  %v6414 = vshll.u32 %v6413, 16
  %v6415 = vadd.s32 %v6414, %v6412
  %v6416 = vsel %vm1417, %v4908, 0
  %v6417 = vand.u32 %v6416, 65535
  %v6418 = vshrl.u32 %v6416, 16
  %v6419 = vcvt.s32.f32 %v6417
  %v6420 = vcvt.s32.f32 %v6418
  %6421 = vadd.xlane.f32.xlu0 %v6419
  %v6422 = vpop.xlane.xlu0 %6421
  %6423 = vadd.xlane.f32.xlu0 %v6420
  %v6424 = vpop.xlane.xlu0 %6423
  %v6425 = vcvt.f32.s32 %v6422
  %v6426 = vcvt.f32.s32 %v6424
  %v6427 = vshll.u32 %v6426, 16
  %v6428 = vadd.s32 %v6427, %v6425
  %v6429 = vsel %vm1417, %v4909, 0
  %v6430 = vand.u32 %v6429, 65535
  %v6431 = vshrl.u32 %v6429, 16
  %v6432 = vcvt.s32.f32 %v6430
  %v6433 = vcvt.s32.f32 %v6431
  %6434 = vadd.xlane.f32.xlu0 %v6432
  %v6435 = vpop.xlane.xlu0 %6434
  %6436 = vadd.xlane.f32.xlu0 %v6433
  %v6437 = vpop.xlane.xlu0 %6436
  %v6438 = vcvt.f32.s32 %v6435
  %v6439 = vcvt.f32.s32 %v6437
  %v6440 = vshll.u32 %v6439, 16
  %v6441 = vadd.s32 %v6440, %v6438
  %v6442 = vsel %vm1417, %v4910, 0
  %v6443 = vand.u32 %v6442, 65535
  %v6444 = vshrl.u32 %v6442, 16
  %v6445 = vcvt.s32.f32 %v6443
  %v6446 = vcvt.s32.f32 %v6444
  %6447 = vadd.xlane.f32.xlu0 %v6445
  %v6448 = vpop.xlane.xlu0 %6447
  %6449 = vadd.xlane.f32.xlu0 %v6446
  %v6450 = vpop.xlane.xlu0 %6449
  %v6451 = vcvt.f32.s32 %v6448
  %v6452 = vcvt.f32.s32 %v6450
  %v6453 = vshll.u32 %v6452, 16
  %v6454 = vadd.s32 %v6453, %v6451
  %v6455 = vsel %vm1417, %v4911, 0
  %v6456 = vand.u32 %v6455, 65535
  %v6457 = vshrl.u32 %v6455, 16
  %v6458 = vcvt.s32.f32 %v6456
  %v6459 = vcvt.s32.f32 %v6457
  %6460 = vadd.xlane.f32.xlu0 %v6458
  %v6461 = vpop.xlane.xlu0 %6460
  %6462 = vadd.xlane.f32.xlu0 %v6459
  %v6463 = vpop.xlane.xlu0 %6462
  %v6464 = vcvt.f32.s32 %v6461
  %v6465 = vcvt.f32.s32 %v6463
  %v6466 = vshll.u32 %v6465, 16
  %v6467 = vadd.s32 %v6466, %v6464
  %v6468 = vsel %vm1417, %v4912, 0
  %v6469 = vand.u32 %v6468, 65535
  %v6470 = vshrl.u32 %v6468, 16
  %v6471 = vcvt.s32.f32 %v6469
  %v6472 = vcvt.s32.f32 %v6470
  %6473 = vadd.xlane.f32.xlu0 %v6471
  %v6474 = vpop.xlane.xlu0 %6473
  %6475 = vadd.xlane.f32.xlu0 %v6472
  %v6476 = vpop.xlane.xlu0 %6475
  %v6477 = vcvt.f32.s32 %v6474
  %v6478 = vcvt.f32.s32 %v6476
  %v6479 = vshll.u32 %v6478, 16
  %v6480 = vadd.s32 %v6479, %v6477
  %v6481 = vsel %vm1417, %v4913, 0
  %v6482 = vand.u32 %v6481, 65535
  %v6483 = vshrl.u32 %v6481, 16
  %v6484 = vcvt.s32.f32 %v6482
  %v6485 = vcvt.s32.f32 %v6483
  %6486 = vadd.xlane.f32.xlu0 %v6484
  %v6487 = vpop.xlane.xlu0 %6486
  %6488 = vadd.xlane.f32.xlu0 %v6485
  %v6489 = vpop.xlane.xlu0 %6488
  %v6490 = vcvt.f32.s32 %v6487
  %v6491 = vcvt.f32.s32 %v6489
  %v6492 = vshll.u32 %v6491, 16
  %v6493 = vadd.s32 %v6492, %v6490
  %v6494 = vsel %vm1417, %v4914, 0
  %v6495 = vand.u32 %v6494, 65535
  %v6496 = vshrl.u32 %v6494, 16
  %v6497 = vcvt.s32.f32 %v6495
  %v6498 = vcvt.s32.f32 %v6496
  %6499 = vadd.xlane.f32.xlu0 %v6497
  %v6500 = vpop.xlane.xlu0 %6499
  %6501 = vadd.xlane.f32.xlu0 %v6498
  %v6502 = vpop.xlane.xlu0 %6501
  %v6503 = vcvt.f32.s32 %v6500
  %v6504 = vcvt.f32.s32 %v6502
  %v6505 = vshll.u32 %v6504, 16
  %v6506 = vadd.s32 %v6505, %v6503
  %v6507 = vsel %vm1417, %v4915, 0
  %v6508 = vand.u32 %v6507, 65535
  %v6509 = vshrl.u32 %v6507, 16
  %v6510 = vcvt.s32.f32 %v6508
  %v6511 = vcvt.s32.f32 %v6509
  %6512 = vadd.xlane.f32.xlu0 %v6510
  %v6513 = vpop.xlane.xlu0 %6512
  %6514 = vadd.xlane.f32.xlu0 %v6511
  %v6515 = vpop.xlane.xlu0 %6514
  %v6516 = vcvt.f32.s32 %v6513
  %v6517 = vcvt.f32.s32 %v6515
  %v6518 = vshll.u32 %v6517, 16
  %v6519 = vadd.s32 %v6518, %v6516
  %v6520 = vsel %vm1417, %v4916, 0
  %v6521 = vand.u32 %v6520, 65535
  %v6522 = vshrl.u32 %v6520, 16
  %v6523 = vcvt.s32.f32 %v6521
  %v6524 = vcvt.s32.f32 %v6522
  %6525 = vadd.xlane.f32.xlu0 %v6523
  %v6526 = vpop.xlane.xlu0 %6525
  %6527 = vadd.xlane.f32.xlu0 %v6524
  %v6528 = vpop.xlane.xlu0 %6527
  %v6529 = vcvt.f32.s32 %v6526
  %v6530 = vcvt.f32.s32 %v6528
  %v6531 = vshll.u32 %v6530, 16
  %v6532 = vadd.s32 %v6531, %v6529
  %v6533 = vsel %vm1417, %v4917, 0
  %v6534 = vand.u32 %v6533, 65535
  %v6535 = vshrl.u32 %v6533, 16
  %v6536 = vcvt.s32.f32 %v6534
  %v6537 = vcvt.s32.f32 %v6535
  %6538 = vadd.xlane.f32.xlu0 %v6536
  %v6539 = vpop.xlane.xlu0 %6538
  %6540 = vadd.xlane.f32.xlu0 %v6537
  %v6541 = vpop.xlane.xlu0 %6540
  %v6542 = vcvt.f32.s32 %v6539
  %v6543 = vcvt.f32.s32 %v6541
  %v6544 = vshll.u32 %v6543, 16
  %v6545 = vadd.s32 %v6544, %v6542
  %v6546 = vsel %vm1417, %v4918, 0
  %v6547 = vand.u32 %v6546, 65535
  %v6548 = vshrl.u32 %v6546, 16
  %v6549 = vcvt.s32.f32 %v6547
  %v6550 = vcvt.s32.f32 %v6548
  %6551 = vadd.xlane.f32.xlu0 %v6549
  %v6552 = vpop.xlane.xlu0 %6551
  %6553 = vadd.xlane.f32.xlu0 %v6550
  %v6554 = vpop.xlane.xlu0 %6553
  %v6555 = vcvt.f32.s32 %v6552
  %v6556 = vcvt.f32.s32 %v6554
  %v6557 = vshll.u32 %v6556, 16
  %v6558 = vadd.s32 %v6557, %v6555
  %v6559 = vsel %vm1417, %v4919, 0
  %v6560 = vand.u32 %v6559, 65535
  %v6561 = vshrl.u32 %v6559, 16
  %v6562 = vcvt.s32.f32 %v6560
  %v6563 = vcvt.s32.f32 %v6561
  %6564 = vadd.xlane.f32.xlu0 %v6562
  %v6565 = vpop.xlane.xlu0 %6564
  %6566 = vadd.xlane.f32.xlu0 %v6563
  %v6567 = vpop.xlane.xlu0 %6566
  %v6568 = vcvt.f32.s32 %v6565
  %v6569 = vcvt.f32.s32 %v6567
  %v6570 = vshll.u32 %v6569, 16
  %v6571 = vadd.s32 %v6570, %v6568
  %v6572 = vsel %vm1417, %v4920, 0
  %v6573 = vand.u32 %v6572, 65535
  %v6574 = vshrl.u32 %v6572, 16
  %v6575 = vcvt.s32.f32 %v6573
  %v6576 = vcvt.s32.f32 %v6574
  %6577 = vadd.xlane.f32.xlu0 %v6575
  %v6578 = vpop.xlane.xlu0 %6577
  %6579 = vadd.xlane.f32.xlu0 %v6576
  %v6580 = vpop.xlane.xlu0 %6579
  %v6581 = vcvt.f32.s32 %v6578
  %v6582 = vcvt.f32.s32 %v6580
  %v6583 = vshll.u32 %v6582, 16
  %v6584 = vadd.s32 %v6583, %v6581
  %vm6585 = vcmp.eq.s32.totalorder %v4933, 3
  %vm6586 = vcmp.eq.s32.totalorder %v4946, 3
  %vm6587 = vcmp.eq.s32.totalorder %v4959, 3
  %vm6588 = vcmp.eq.s32.totalorder %v4972, 3
  %vm6589 = vcmp.eq.s32.totalorder %v4985, 3
  %vm6590 = vcmp.eq.s32.totalorder %v4998, 3
  %vm6591 = vcmp.eq.s32.totalorder %v5011, 3
  %vm6592 = vcmp.eq.s32.totalorder %v5024, 3
  %vm6593 = vcmp.eq.s32.totalorder %v5037, 3
  %vm6594 = vcmp.eq.s32.totalorder %v5050, 3
  %vm6595 = vcmp.eq.s32.totalorder %v5063, 3
  %vm6596 = vcmp.eq.s32.totalorder %v5076, 3
  %vm6597 = vcmp.eq.s32.totalorder %v5089, 3
  %vm6598 = vcmp.eq.s32.totalorder %v5102, 3
  %vm6599 = vcmp.eq.s32.totalorder %v5115, 3
  %vm6600 = vcmp.eq.s32.totalorder %v5128, 3
  %vm6601 = vcmp.eq.s32.totalorder %v5141, 3
  %vm6602 = vcmp.eq.s32.totalorder %v5154, 3
  %vm6603 = vcmp.eq.s32.totalorder %v5167, 3
  %vm6604 = vcmp.eq.s32.totalorder %v5180, 3
  %vm6605 = vcmp.eq.s32.totalorder %v5193, 3
  %vm6606 = vcmp.eq.s32.totalorder %v5206, 3
  %vm6607 = vcmp.eq.s32.totalorder %v5219, 3
  %vm6608 = vcmp.eq.s32.totalorder %v5232, 3
  %vm6609 = vcmp.eq.s32.totalorder %v5245, 3
  %vm6610 = vcmp.eq.s32.totalorder %v5258, 3
  %vm6611 = vcmp.eq.s32.totalorder %v5271, 3
  %vm6612 = vcmp.eq.s32.totalorder %v5284, 3
  %vm6613 = vcmp.eq.s32.totalorder %v5297, 3
  %vm6614 = vcmp.eq.s32.totalorder %v5310, 3
  %vm6615 = vcmp.eq.s32.totalorder %v5323, 3
  %vm6616 = vcmp.eq.s32.totalorder %v5336, 3
  %vm6617 = vcmp.eq.s32.totalorder %v5349, 3
  %vm6618 = vcmp.eq.s32.totalorder %v5362, 3
  %vm6619 = vcmp.eq.s32.totalorder %v5375, 3
  %vm6620 = vcmp.eq.s32.totalorder %v5388, 3
  %vm6621 = vcmp.eq.s32.totalorder %v5401, 3
  %vm6622 = vcmp.eq.s32.totalorder %v5414, 3
  %vm6623 = vcmp.eq.s32.totalorder %v5427, 3
  %vm6624 = vcmp.eq.s32.totalorder %v5440, 3
  %vm6625 = vcmp.eq.s32.totalorder %v5453, 3
  %vm6626 = vcmp.eq.s32.totalorder %v5466, 3
  %vm6627 = vcmp.eq.s32.totalorder %v5479, 3
  %vm6628 = vcmp.eq.s32.totalorder %v5492, 3
  %vm6629 = vcmp.eq.s32.totalorder %v5505, 3
  %vm6630 = vcmp.eq.s32.totalorder %v5518, 3
  %vm6631 = vcmp.eq.s32.totalorder %v5531, 3
  %vm6632 = vcmp.eq.s32.totalorder %v5544, 3
  %vm6633 = vcmp.eq.s32.totalorder %v5557, 3
  %vm6634 = vcmp.eq.s32.totalorder %v5570, 3
  %vm6635 = vcmp.eq.s32.totalorder %v5583, 3
  %vm6636 = vcmp.eq.s32.totalorder %v5596, 3
  %vm6637 = vcmp.eq.s32.totalorder %v5609, 3
  %vm6638 = vcmp.eq.s32.totalorder %v5622, 3
  %vm6639 = vcmp.eq.s32.totalorder %v5635, 3
  %vm6640 = vcmp.eq.s32.totalorder %v5648, 3
  %vm6641 = vcmp.eq.s32.totalorder %v5661, 3
  %vm6642 = vcmp.eq.s32.totalorder %v5674, 3
  %vm6643 = vcmp.eq.s32.totalorder %v5687, 3
  %vm6644 = vcmp.eq.s32.totalorder %v5700, 3
  %vm6645 = vcmp.eq.s32.totalorder %v5713, 3
  %vm6646 = vcmp.eq.s32.totalorder %v5726, 3
  %vm6647 = vcmp.eq.s32.totalorder %v5739, 3
  %vm6648 = vcmp.eq.s32.totalorder %v5752, 3
  %vm6649 = vcmp.eq.s32.totalorder %v5765, 3
  %vm6650 = vcmp.eq.s32.totalorder %v5778, 3
  %vm6651 = vcmp.eq.s32.totalorder %v5791, 3
  %vm6652 = vcmp.eq.s32.totalorder %v5804, 3
  %vm6653 = vcmp.eq.s32.totalorder %v5817, 3
  %vm6654 = vcmp.eq.s32.totalorder %v5830, 3
  %vm6655 = vcmp.eq.s32.totalorder %v5843, 3
  %vm6656 = vcmp.eq.s32.totalorder %v5856, 3
  %vm6657 = vcmp.eq.s32.totalorder %v5869, 3
  %vm6658 = vcmp.eq.s32.totalorder %v5882, 3
  %vm6659 = vcmp.eq.s32.totalorder %v5895, 3
  %vm6660 = vcmp.eq.s32.totalorder %v5908, 3
  %vm6661 = vcmp.eq.s32.totalorder %v5921, 3
  %vm6662 = vcmp.eq.s32.totalorder %v5934, 3
  %vm6663 = vcmp.eq.s32.totalorder %v5947, 3
  %vm6664 = vcmp.eq.s32.totalorder %v5960, 3
  %vm6665 = vcmp.eq.s32.totalorder %v5973, 3
  %vm6666 = vcmp.eq.s32.totalorder %v5986, 3
  %vm6667 = vcmp.eq.s32.totalorder %v5999, 3
  %vm6668 = vcmp.eq.s32.totalorder %v6012, 3
  %vm6669 = vcmp.eq.s32.totalorder %v6025, 3
  %vm6670 = vcmp.eq.s32.totalorder %v6038, 3
  %vm6671 = vcmp.eq.s32.totalorder %v6051, 3
  %vm6672 = vcmp.eq.s32.totalorder %v6064, 3
  %vm6673 = vcmp.eq.s32.totalorder %v6077, 3
  %vm6674 = vcmp.eq.s32.totalorder %v6090, 3
  %vm6675 = vcmp.eq.s32.totalorder %v6103, 3
  %vm6676 = vcmp.eq.s32.totalorder %v6116, 3
  %vm6677 = vcmp.eq.s32.totalorder %v6129, 3
  %vm6678 = vcmp.eq.s32.totalorder %v6142, 3
  %vm6679 = vcmp.eq.s32.totalorder %v6155, 3
  %vm6680 = vcmp.eq.s32.totalorder %v6168, 3
  %vm6681 = vcmp.eq.s32.totalorder %v6181, 3
  %vm6682 = vcmp.eq.s32.totalorder %v6194, 3
  %vm6683 = vcmp.eq.s32.totalorder %v6207, 3
  %vm6684 = vcmp.eq.s32.totalorder %v6220, 3
  %vm6685 = vcmp.eq.s32.totalorder %v6233, 3
  %vm6686 = vcmp.eq.s32.totalorder %v6246, 3
  %vm6687 = vcmp.eq.s32.totalorder %v6259, 3
  %vm6688 = vcmp.eq.s32.totalorder %v6272, 3
  %vm6689 = vcmp.eq.s32.totalorder %v6285, 3
  %vm6690 = vcmp.eq.s32.totalorder %v6298, 3
  %vm6691 = vcmp.eq.s32.totalorder %v6311, 3
  %vm6692 = vcmp.eq.s32.totalorder %v6324, 3
  %vm6693 = vcmp.eq.s32.totalorder %v6337, 3
  %vm6694 = vcmp.eq.s32.totalorder %v6350, 3
  %vm6695 = vcmp.eq.s32.totalorder %v6363, 3
  %vm6696 = vcmp.eq.s32.totalorder %v6376, 3
  %vm6697 = vcmp.eq.s32.totalorder %v6389, 3
  %vm6698 = vcmp.eq.s32.totalorder %v6402, 3
  %vm6699 = vcmp.eq.s32.totalorder %v6415, 3
  %vm6700 = vcmp.eq.s32.totalorder %v6428, 3
  %vm6701 = vcmp.eq.s32.totalorder %v6441, 3
  %vm6702 = vcmp.eq.s32.totalorder %v6454, 3
  %vm6703 = vcmp.eq.s32.totalorder %v6467, 3
  %vm6704 = vcmp.eq.s32.totalorder %v6480, 3
  %vm6705 = vcmp.eq.s32.totalorder %v6493, 3
  %vm6706 = vcmp.eq.s32.totalorder %v6506, 3
  %vm6707 = vcmp.eq.s32.totalorder %v6519, 3
  %vm6708 = vcmp.eq.s32.totalorder %v6532, 3
  %vm6709 = vcmp.eq.s32.totalorder %v6545, 3
  %vm6710 = vcmp.eq.s32.totalorder %v6558, 3
  %vm6711 = vcmp.eq.s32.totalorder %v6571, 3
  %vm6712 = vcmp.eq.s32.totalorder %v6584, 3
  %v6713 = vlaneseq
  %v6714 = vshrl.u32 %v6713, 7
  %v6715 = vsub.s32 0, %v6714
  %v6716 = vrot.slane %v2845, %v6715
  %6718 = vbcast.lane.b32.xlu0 %v6716, 256
  %v6719 = vpop.permute.xlu0 %6718
  %s6721 = sor.u32 256, 8
  %6722 = vbcast.lane.b32.xlu0 %v6716, %s6721
  %v6723 = vpop.permute.xlu0 %6722
  %v6724 = vlaneseq
  %v6725 = vshrl.u32 %v6724, 7
  %v6726 = vsub.s32 1, %v6725
  %v6727 = vrot.slane %v2845, %v6726
  %6729 = vbcast.lane.b32.xlu0 %v6727, 256
  %v6730 = vpop.permute.xlu0 %6729
  %s6732 = sor.u32 256, 8
  %6733 = vbcast.lane.b32.xlu0 %v6727, %s6732
  %v6734 = vpop.permute.xlu0 %6733
  %v6735 = vlaneseq
  %v6736 = vshrl.u32 %v6735, 7
  %v6737 = vsub.s32 2, %v6736
  %v6738 = vrot.slane %v2845, %v6737
  %6740 = vbcast.lane.b32.xlu0 %v6738, 256
  %v6741 = vpop.permute.xlu0 %6740
  %s6743 = sor.u32 256, 8
  %6744 = vbcast.lane.b32.xlu0 %v6738, %s6743
  %v6745 = vpop.permute.xlu0 %6744
  %v6746 = vlaneseq
  %v6747 = vshrl.u32 %v6746, 7
  %v6748 = vsub.s32 3, %v6747
  %v6749 = vrot.slane %v2845, %v6748
  %6751 = vbcast.lane.b32.xlu0 %v6749, 256
  %v6752 = vpop.permute.xlu0 %6751
  %s6754 = sor.u32 256, 8
  %6755 = vbcast.lane.b32.xlu0 %v6749, %s6754
  %v6756 = vpop.permute.xlu0 %6755
  %v6757 = vlaneseq
  %v6758 = vshrl.u32 %v6757, 7
  %v6759 = vsub.s32 4, %v6758
  %v6760 = vrot.slane %v2845, %v6759
  %6762 = vbcast.lane.b32.xlu0 %v6760, 256
  %v6763 = vpop.permute.xlu0 %6762
  %s6765 = sor.u32 256, 8
  %6766 = vbcast.lane.b32.xlu0 %v6760, %s6765
  %v6767 = vpop.permute.xlu0 %6766
  %v6768 = vlaneseq
  %v6769 = vshrl.u32 %v6768, 7
  %v6770 = vsub.s32 5, %v6769
  %v6771 = vrot.slane %v2845, %v6770
  %6773 = vbcast.lane.b32.xlu0 %v6771, 256
  %v6774 = vpop.permute.xlu0 %6773
  %s6776 = sor.u32 256, 8
  %6777 = vbcast.lane.b32.xlu0 %v6771, %s6776
  %v6778 = vpop.permute.xlu0 %6777
  %v6779 = vlaneseq
  %v6780 = vshrl.u32 %v6779, 7
  %v6781 = vsub.s32 6, %v6780
  %v6782 = vrot.slane %v2845, %v6781
  %6784 = vbcast.lane.b32.xlu0 %v6782, 256
  %v6785 = vpop.permute.xlu0 %6784
  %s6787 = sor.u32 256, 8
  %6788 = vbcast.lane.b32.xlu0 %v6782, %s6787
  %v6789 = vpop.permute.xlu0 %6788
  %v6790 = vlaneseq
  %v6791 = vshrl.u32 %v6790, 7
  %v6792 = vsub.s32 7, %v6791
  %v6793 = vrot.slane %v2845, %v6792
  %6795 = vbcast.lane.b32.xlu0 %v6793, 256
  %v6796 = vpop.permute.xlu0 %6795
  %s6798 = sor.u32 256, 8
  %6799 = vbcast.lane.b32.xlu0 %v6793, %s6798
  %v6800 = vpop.permute.xlu0 %6799
  %v6801 = vlaneseq
  %v6802 = vshrl.u32 %v6801, 7
  %v6803 = vsub.s32 0, %v6802
  %v6804 = vrot.slane %v2846, %v6803
  %6806 = vbcast.lane.b32.xlu0 %v6804, 256
  %v6807 = vpop.permute.xlu0 %6806
  %s6809 = sor.u32 256, 8
  %6810 = vbcast.lane.b32.xlu0 %v6804, %s6809
  %v6811 = vpop.permute.xlu0 %6810
  %v6812 = vlaneseq
  %v6813 = vshrl.u32 %v6812, 7
  %v6814 = vsub.s32 1, %v6813
  %v6815 = vrot.slane %v2846, %v6814
  %6817 = vbcast.lane.b32.xlu0 %v6815, 256
  %v6818 = vpop.permute.xlu0 %6817
  %s6820 = sor.u32 256, 8
  %6821 = vbcast.lane.b32.xlu0 %v6815, %s6820
  %v6822 = vpop.permute.xlu0 %6821
  %v6823 = vlaneseq
  %v6824 = vshrl.u32 %v6823, 7
  %v6825 = vsub.s32 2, %v6824
  %v6826 = vrot.slane %v2846, %v6825
  %6828 = vbcast.lane.b32.xlu0 %v6826, 256
  %v6829 = vpop.permute.xlu0 %6828
  %s6831 = sor.u32 256, 8
  %6832 = vbcast.lane.b32.xlu0 %v6826, %s6831
  %v6833 = vpop.permute.xlu0 %6832
  %v6834 = vlaneseq
  %v6835 = vshrl.u32 %v6834, 7
  %v6836 = vsub.s32 3, %v6835
  %v6837 = vrot.slane %v2846, %v6836
  %6839 = vbcast.lane.b32.xlu0 %v6837, 256
  %v6840 = vpop.permute.xlu0 %6839
  %s6842 = sor.u32 256, 8
  %6843 = vbcast.lane.b32.xlu0 %v6837, %s6842
  %v6844 = vpop.permute.xlu0 %6843
  %v6845 = vlaneseq
  %v6846 = vshrl.u32 %v6845, 7
  %v6847 = vsub.s32 4, %v6846
  %v6848 = vrot.slane %v2846, %v6847
  %6850 = vbcast.lane.b32.xlu0 %v6848, 256
  %v6851 = vpop.permute.xlu0 %6850
  %s6853 = sor.u32 256, 8
  %6854 = vbcast.lane.b32.xlu0 %v6848, %s6853
  %v6855 = vpop.permute.xlu0 %6854
  %v6856 = vlaneseq
  %v6857 = vshrl.u32 %v6856, 7
  %v6858 = vsub.s32 5, %v6857
  %v6859 = vrot.slane %v2846, %v6858
  %6861 = vbcast.lane.b32.xlu0 %v6859, 256
  %v6862 = vpop.permute.xlu0 %6861
  %s6864 = sor.u32 256, 8
  %6865 = vbcast.lane.b32.xlu0 %v6859, %s6864
  %v6866 = vpop.permute.xlu0 %6865
  %v6867 = vlaneseq
  %v6868 = vshrl.u32 %v6867, 7
  %v6869 = vsub.s32 6, %v6868
  %v6870 = vrot.slane %v2846, %v6869
  %6872 = vbcast.lane.b32.xlu0 %v6870, 256
  %v6873 = vpop.permute.xlu0 %6872
  %s6875 = sor.u32 256, 8
  %6876 = vbcast.lane.b32.xlu0 %v6870, %s6875
  %v6877 = vpop.permute.xlu0 %6876
  %v6878 = vlaneseq
  %v6879 = vshrl.u32 %v6878, 7
  %v6880 = vsub.s32 7, %v6879
  %v6881 = vrot.slane %v2846, %v6880
  %6883 = vbcast.lane.b32.xlu0 %v6881, 256
  %v6884 = vpop.permute.xlu0 %6883
  %s6886 = sor.u32 256, 8
  %6887 = vbcast.lane.b32.xlu0 %v6881, %s6886
  %v6888 = vpop.permute.xlu0 %6887
  %v6889 = vlaneseq
  %v6890 = vshrl.u32 %v6889, 7
  %v6891 = vsub.s32 0, %v6890
  %v6892 = vrot.slane %v2847, %v6891
  %6894 = vbcast.lane.b32.xlu0 %v6892, 256
  %v6895 = vpop.permute.xlu0 %6894
  %s6897 = sor.u32 256, 8
  %6898 = vbcast.lane.b32.xlu0 %v6892, %s6897
  %v6899 = vpop.permute.xlu0 %6898
  %v6900 = vlaneseq
  %v6901 = vshrl.u32 %v6900, 7
  %v6902 = vsub.s32 1, %v6901
  %v6903 = vrot.slane %v2847, %v6902
  %6905 = vbcast.lane.b32.xlu0 %v6903, 256
  %v6906 = vpop.permute.xlu0 %6905
  %s6908 = sor.u32 256, 8
  %6909 = vbcast.lane.b32.xlu0 %v6903, %s6908
  %v6910 = vpop.permute.xlu0 %6909
  %v6911 = vlaneseq
  %v6912 = vshrl.u32 %v6911, 7
  %v6913 = vsub.s32 2, %v6912
  %v6914 = vrot.slane %v2847, %v6913
  %6916 = vbcast.lane.b32.xlu0 %v6914, 256
  %v6917 = vpop.permute.xlu0 %6916
  %s6919 = sor.u32 256, 8
  %6920 = vbcast.lane.b32.xlu0 %v6914, %s6919
  %v6921 = vpop.permute.xlu0 %6920
  %v6922 = vlaneseq
  %v6923 = vshrl.u32 %v6922, 7
  %v6924 = vsub.s32 3, %v6923
  %v6925 = vrot.slane %v2847, %v6924
  %6927 = vbcast.lane.b32.xlu0 %v6925, 256
  %v6928 = vpop.permute.xlu0 %6927
  %s6930 = sor.u32 256, 8
  %6931 = vbcast.lane.b32.xlu0 %v6925, %s6930
  %v6932 = vpop.permute.xlu0 %6931
  %v6933 = vlaneseq
  %v6934 = vshrl.u32 %v6933, 7
  %v6935 = vsub.s32 4, %v6934
  %v6936 = vrot.slane %v2847, %v6935
  %6938 = vbcast.lane.b32.xlu0 %v6936, 256
  %v6939 = vpop.permute.xlu0 %6938
  %s6941 = sor.u32 256, 8
  %6942 = vbcast.lane.b32.xlu0 %v6936, %s6941
  %v6943 = vpop.permute.xlu0 %6942
  %v6944 = vlaneseq
  %v6945 = vshrl.u32 %v6944, 7
  %v6946 = vsub.s32 5, %v6945
  %v6947 = vrot.slane %v2847, %v6946
  %6949 = vbcast.lane.b32.xlu0 %v6947, 256
  %v6950 = vpop.permute.xlu0 %6949
  %s6952 = sor.u32 256, 8
  %6953 = vbcast.lane.b32.xlu0 %v6947, %s6952
  %v6954 = vpop.permute.xlu0 %6953
  %v6955 = vlaneseq
  %v6956 = vshrl.u32 %v6955, 7
  %v6957 = vsub.s32 6, %v6956
  %v6958 = vrot.slane %v2847, %v6957
  %6960 = vbcast.lane.b32.xlu0 %v6958, 256
  %v6961 = vpop.permute.xlu0 %6960
  %s6963 = sor.u32 256, 8
  %6964 = vbcast.lane.b32.xlu0 %v6958, %s6963
  %v6965 = vpop.permute.xlu0 %6964
  %v6966 = vlaneseq
  %v6967 = vshrl.u32 %v6966, 7
  %v6968 = vsub.s32 7, %v6967
  %v6969 = vrot.slane %v2847, %v6968
  %6971 = vbcast.lane.b32.xlu0 %v6969, 256
  %v6972 = vpop.permute.xlu0 %6971
  %s6974 = sor.u32 256, 8
  %6975 = vbcast.lane.b32.xlu0 %v6969, %s6974
  %v6976 = vpop.permute.xlu0 %6975
  %v6977 = vlaneseq
  %v6978 = vshrl.u32 %v6977, 7
  %v6979 = vsub.s32 0, %v6978
  %v6980 = vrot.slane %v2848, %v6979
  %6982 = vbcast.lane.b32.xlu0 %v6980, 256
  %v6983 = vpop.permute.xlu0 %6982
  %s6985 = sor.u32 256, 8
  %6986 = vbcast.lane.b32.xlu0 %v6980, %s6985
  %v6987 = vpop.permute.xlu0 %6986
  %v6988 = vlaneseq
  %v6989 = vshrl.u32 %v6988, 7
  %v6990 = vsub.s32 1, %v6989
  %v6991 = vrot.slane %v2848, %v6990
  %6993 = vbcast.lane.b32.xlu0 %v6991, 256
  %v6994 = vpop.permute.xlu0 %6993
  %s6996 = sor.u32 256, 8
  %6997 = vbcast.lane.b32.xlu0 %v6991, %s6996
  %v6998 = vpop.permute.xlu0 %6997
  %v6999 = vlaneseq
  %v7000 = vshrl.u32 %v6999, 7
  %v7001 = vsub.s32 2, %v7000
  %v7002 = vrot.slane %v2848, %v7001
  %7004 = vbcast.lane.b32.xlu0 %v7002, 256
  %v7005 = vpop.permute.xlu0 %7004
  %s7007 = sor.u32 256, 8
  %7008 = vbcast.lane.b32.xlu0 %v7002, %s7007
  %v7009 = vpop.permute.xlu0 %7008
  %v7010 = vlaneseq
  %v7011 = vshrl.u32 %v7010, 7
  %v7012 = vsub.s32 3, %v7011
  %v7013 = vrot.slane %v2848, %v7012
  %7015 = vbcast.lane.b32.xlu0 %v7013, 256
  %v7016 = vpop.permute.xlu0 %7015
  %s7018 = sor.u32 256, 8
  %7019 = vbcast.lane.b32.xlu0 %v7013, %s7018
  %v7020 = vpop.permute.xlu0 %7019
  %v7021 = vlaneseq
  %v7022 = vshrl.u32 %v7021, 7
  %v7023 = vsub.s32 4, %v7022
  %v7024 = vrot.slane %v2848, %v7023
  %7026 = vbcast.lane.b32.xlu0 %v7024, 256
  %v7027 = vpop.permute.xlu0 %7026
  %s7029 = sor.u32 256, 8
  %7030 = vbcast.lane.b32.xlu0 %v7024, %s7029
  %v7031 = vpop.permute.xlu0 %7030
  %v7032 = vlaneseq
  %v7033 = vshrl.u32 %v7032, 7
  %v7034 = vsub.s32 5, %v7033
  %v7035 = vrot.slane %v2848, %v7034
  %7037 = vbcast.lane.b32.xlu0 %v7035, 256
  %v7038 = vpop.permute.xlu0 %7037
  %s7040 = sor.u32 256, 8
  %7041 = vbcast.lane.b32.xlu0 %v7035, %s7040
  %v7042 = vpop.permute.xlu0 %7041
  %v7043 = vlaneseq
  %v7044 = vshrl.u32 %v7043, 7
  %v7045 = vsub.s32 6, %v7044
  %v7046 = vrot.slane %v2848, %v7045
  %7048 = vbcast.lane.b32.xlu0 %v7046, 256
  %v7049 = vpop.permute.xlu0 %7048
  %s7051 = sor.u32 256, 8
  %7052 = vbcast.lane.b32.xlu0 %v7046, %s7051
  %v7053 = vpop.permute.xlu0 %7052
  %v7054 = vlaneseq
  %v7055 = vshrl.u32 %v7054, 7
  %v7056 = vsub.s32 7, %v7055
  %v7057 = vrot.slane %v2848, %v7056
  %7059 = vbcast.lane.b32.xlu0 %v7057, 256
  %v7060 = vpop.permute.xlu0 %7059
  %s7062 = sor.u32 256, 8
  %7063 = vbcast.lane.b32.xlu0 %v7057, %s7062
  %v7064 = vpop.permute.xlu0 %7063
  %v7065 = vlaneseq
  %v7066 = vshrl.u32 %v7065, 7
  %v7067 = vsub.s32 0, %v7066
  %v7068 = vrot.slane %v2849, %v7067
  %7070 = vbcast.lane.b32.xlu0 %v7068, 256
  %v7071 = vpop.permute.xlu0 %7070
  %s7073 = sor.u32 256, 8
  %7074 = vbcast.lane.b32.xlu0 %v7068, %s7073
  %v7075 = vpop.permute.xlu0 %7074
  %v7076 = vlaneseq
  %v7077 = vshrl.u32 %v7076, 7
  %v7078 = vsub.s32 1, %v7077
  %v7079 = vrot.slane %v2849, %v7078
  %7081 = vbcast.lane.b32.xlu0 %v7079, 256
  %v7082 = vpop.permute.xlu0 %7081
  %s7084 = sor.u32 256, 8
  %7085 = vbcast.lane.b32.xlu0 %v7079, %s7084
  %v7086 = vpop.permute.xlu0 %7085
  %v7087 = vlaneseq
  %v7088 = vshrl.u32 %v7087, 7
  %v7089 = vsub.s32 2, %v7088
  %v7090 = vrot.slane %v2849, %v7089
  %7092 = vbcast.lane.b32.xlu0 %v7090, 256
  %v7093 = vpop.permute.xlu0 %7092
  %s7095 = sor.u32 256, 8
  %7096 = vbcast.lane.b32.xlu0 %v7090, %s7095
  %v7097 = vpop.permute.xlu0 %7096
  %v7098 = vlaneseq
  %v7099 = vshrl.u32 %v7098, 7
  %v7100 = vsub.s32 3, %v7099
  %v7101 = vrot.slane %v2849, %v7100
  %7103 = vbcast.lane.b32.xlu0 %v7101, 256
  %v7104 = vpop.permute.xlu0 %7103
  %s7106 = sor.u32 256, 8
  %7107 = vbcast.lane.b32.xlu0 %v7101, %s7106
  %v7108 = vpop.permute.xlu0 %7107
  %v7109 = vlaneseq
  %v7110 = vshrl.u32 %v7109, 7
  %v7111 = vsub.s32 4, %v7110
  %v7112 = vrot.slane %v2849, %v7111
  %7114 = vbcast.lane.b32.xlu0 %v7112, 256
  %v7115 = vpop.permute.xlu0 %7114
  %s7117 = sor.u32 256, 8
  %7118 = vbcast.lane.b32.xlu0 %v7112, %s7117
  %v7119 = vpop.permute.xlu0 %7118
  %v7120 = vlaneseq
  %v7121 = vshrl.u32 %v7120, 7
  %v7122 = vsub.s32 5, %v7121
  %v7123 = vrot.slane %v2849, %v7122
  %7125 = vbcast.lane.b32.xlu0 %v7123, 256
  %v7126 = vpop.permute.xlu0 %7125
  %s7128 = sor.u32 256, 8
  %7129 = vbcast.lane.b32.xlu0 %v7123, %s7128
  %v7130 = vpop.permute.xlu0 %7129
  %v7131 = vlaneseq
  %v7132 = vshrl.u32 %v7131, 7
  %v7133 = vsub.s32 6, %v7132
  %v7134 = vrot.slane %v2849, %v7133
  %7136 = vbcast.lane.b32.xlu0 %v7134, 256
  %v7137 = vpop.permute.xlu0 %7136
  %s7139 = sor.u32 256, 8
  %7140 = vbcast.lane.b32.xlu0 %v7134, %s7139
  %v7141 = vpop.permute.xlu0 %7140
  %v7142 = vlaneseq
  %v7143 = vshrl.u32 %v7142, 7
  %v7144 = vsub.s32 7, %v7143
  %v7145 = vrot.slane %v2849, %v7144
  %7147 = vbcast.lane.b32.xlu0 %v7145, 256
  %v7148 = vpop.permute.xlu0 %7147
  %s7150 = sor.u32 256, 8
  %7151 = vbcast.lane.b32.xlu0 %v7145, %s7150
  %v7152 = vpop.permute.xlu0 %7151
  %v7153 = vlaneseq
  %v7154 = vshrl.u32 %v7153, 7
  %v7155 = vsub.s32 0, %v7154
  %v7156 = vrot.slane %v2850, %v7155
  %7158 = vbcast.lane.b32.xlu0 %v7156, 256
  %v7159 = vpop.permute.xlu0 %7158
  %s7161 = sor.u32 256, 8
  %7162 = vbcast.lane.b32.xlu0 %v7156, %s7161
  %v7163 = vpop.permute.xlu0 %7162
  %v7164 = vlaneseq
  %v7165 = vshrl.u32 %v7164, 7
  %v7166 = vsub.s32 1, %v7165
  %v7167 = vrot.slane %v2850, %v7166
  %7169 = vbcast.lane.b32.xlu0 %v7167, 256
  %v7170 = vpop.permute.xlu0 %7169
  %s7172 = sor.u32 256, 8
  %7173 = vbcast.lane.b32.xlu0 %v7167, %s7172
  %v7174 = vpop.permute.xlu0 %7173
  %v7175 = vlaneseq
  %v7176 = vshrl.u32 %v7175, 7
  %v7177 = vsub.s32 2, %v7176
  %v7178 = vrot.slane %v2850, %v7177
  %7180 = vbcast.lane.b32.xlu0 %v7178, 256
  %v7181 = vpop.permute.xlu0 %7180
  %s7183 = sor.u32 256, 8
  %7184 = vbcast.lane.b32.xlu0 %v7178, %s7183
  %v7185 = vpop.permute.xlu0 %7184
  %v7186 = vlaneseq
  %v7187 = vshrl.u32 %v7186, 7
  %v7188 = vsub.s32 3, %v7187
  %v7189 = vrot.slane %v2850, %v7188
  %7191 = vbcast.lane.b32.xlu0 %v7189, 256
  %v7192 = vpop.permute.xlu0 %7191
  %s7194 = sor.u32 256, 8
  %7195 = vbcast.lane.b32.xlu0 %v7189, %s7194
  %v7196 = vpop.permute.xlu0 %7195
  %v7197 = vlaneseq
  %v7198 = vshrl.u32 %v7197, 7
  %v7199 = vsub.s32 4, %v7198
  %v7200 = vrot.slane %v2850, %v7199
  %7202 = vbcast.lane.b32.xlu0 %v7200, 256
  %v7203 = vpop.permute.xlu0 %7202
  %s7205 = sor.u32 256, 8
  %7206 = vbcast.lane.b32.xlu0 %v7200, %s7205
  %v7207 = vpop.permute.xlu0 %7206
  %v7208 = vlaneseq
  %v7209 = vshrl.u32 %v7208, 7
  %v7210 = vsub.s32 5, %v7209
  %v7211 = vrot.slane %v2850, %v7210
  %7213 = vbcast.lane.b32.xlu0 %v7211, 256
  %v7214 = vpop.permute.xlu0 %7213
  %s7216 = sor.u32 256, 8
  %7217 = vbcast.lane.b32.xlu0 %v7211, %s7216
  %v7218 = vpop.permute.xlu0 %7217
  %v7219 = vlaneseq
  %v7220 = vshrl.u32 %v7219, 7
  %v7221 = vsub.s32 6, %v7220
  %v7222 = vrot.slane %v2850, %v7221
  %7224 = vbcast.lane.b32.xlu0 %v7222, 256
  %v7225 = vpop.permute.xlu0 %7224
  %s7227 = sor.u32 256, 8
  %7228 = vbcast.lane.b32.xlu0 %v7222, %s7227
  %v7229 = vpop.permute.xlu0 %7228
  %v7230 = vlaneseq
  %v7231 = vshrl.u32 %v7230, 7
  %v7232 = vsub.s32 7, %v7231
  %v7233 = vrot.slane %v2850, %v7232
  %7235 = vbcast.lane.b32.xlu0 %v7233, 256
  %v7236 = vpop.permute.xlu0 %7235
  %s7238 = sor.u32 256, 8
  %7239 = vbcast.lane.b32.xlu0 %v7233, %s7238
  %v7240 = vpop.permute.xlu0 %7239
  %v7241 = vlaneseq
  %v7242 = vshrl.u32 %v7241, 7
  %v7243 = vsub.s32 0, %v7242
  %v7244 = vrot.slane %v2851, %v7243
  %7246 = vbcast.lane.b32.xlu0 %v7244, 256
  %v7247 = vpop.permute.xlu0 %7246
  %s7249 = sor.u32 256, 8
  %7250 = vbcast.lane.b32.xlu0 %v7244, %s7249
  %v7251 = vpop.permute.xlu0 %7250
  %v7252 = vlaneseq
  %v7253 = vshrl.u32 %v7252, 7
  %v7254 = vsub.s32 1, %v7253
  %v7255 = vrot.slane %v2851, %v7254
  %7257 = vbcast.lane.b32.xlu0 %v7255, 256
  %v7258 = vpop.permute.xlu0 %7257
  %s7260 = sor.u32 256, 8
  %7261 = vbcast.lane.b32.xlu0 %v7255, %s7260
  %v7262 = vpop.permute.xlu0 %7261
  %v7263 = vlaneseq
  %v7264 = vshrl.u32 %v7263, 7
  %v7265 = vsub.s32 2, %v7264
  %v7266 = vrot.slane %v2851, %v7265
  %7268 = vbcast.lane.b32.xlu0 %v7266, 256
  %v7269 = vpop.permute.xlu0 %7268
  %s7271 = sor.u32 256, 8
  %7272 = vbcast.lane.b32.xlu0 %v7266, %s7271
  %v7273 = vpop.permute.xlu0 %7272
  %v7274 = vlaneseq
  %v7275 = vshrl.u32 %v7274, 7
  %v7276 = vsub.s32 3, %v7275
  %v7277 = vrot.slane %v2851, %v7276
  %7279 = vbcast.lane.b32.xlu0 %v7277, 256
  %v7280 = vpop.permute.xlu0 %7279
  %s7282 = sor.u32 256, 8
  %7283 = vbcast.lane.b32.xlu0 %v7277, %s7282
  %v7284 = vpop.permute.xlu0 %7283
  %v7285 = vlaneseq
  %v7286 = vshrl.u32 %v7285, 7
  %v7287 = vsub.s32 4, %v7286
  %v7288 = vrot.slane %v2851, %v7287
  %7290 = vbcast.lane.b32.xlu0 %v7288, 256
  %v7291 = vpop.permute.xlu0 %7290
  %s7293 = sor.u32 256, 8
  %7294 = vbcast.lane.b32.xlu0 %v7288, %s7293
  %v7295 = vpop.permute.xlu0 %7294
  %v7296 = vlaneseq
  %v7297 = vshrl.u32 %v7296, 7
  %v7298 = vsub.s32 5, %v7297
  %v7299 = vrot.slane %v2851, %v7298
  %7301 = vbcast.lane.b32.xlu0 %v7299, 256
  %v7302 = vpop.permute.xlu0 %7301
  %s7304 = sor.u32 256, 8
  %7305 = vbcast.lane.b32.xlu0 %v7299, %s7304
  %v7306 = vpop.permute.xlu0 %7305
  %v7307 = vlaneseq
  %v7308 = vshrl.u32 %v7307, 7
  %v7309 = vsub.s32 6, %v7308
  %v7310 = vrot.slane %v2851, %v7309
  %7312 = vbcast.lane.b32.xlu0 %v7310, 256
  %v7313 = vpop.permute.xlu0 %7312
  %s7315 = sor.u32 256, 8
  %7316 = vbcast.lane.b32.xlu0 %v7310, %s7315
  %v7317 = vpop.permute.xlu0 %7316
  %v7318 = vlaneseq
  %v7319 = vshrl.u32 %v7318, 7
  %v7320 = vsub.s32 7, %v7319
  %v7321 = vrot.slane %v2851, %v7320
  %7323 = vbcast.lane.b32.xlu0 %v7321, 256
  %v7324 = vpop.permute.xlu0 %7323
  %s7326 = sor.u32 256, 8
  %7327 = vbcast.lane.b32.xlu0 %v7321, %s7326
  %v7328 = vpop.permute.xlu0 %7327
  %v7329 = vlaneseq
  %v7330 = vshrl.u32 %v7329, 7
  %v7331 = vsub.s32 0, %v7330
  %v7332 = vrot.slane %v2852, %v7331
  %7334 = vbcast.lane.b32.xlu0 %v7332, 256
  %v7335 = vpop.permute.xlu0 %7334
  %s7337 = sor.u32 256, 8
  %7338 = vbcast.lane.b32.xlu0 %v7332, %s7337
  %v7339 = vpop.permute.xlu0 %7338
  %v7340 = vlaneseq
  %v7341 = vshrl.u32 %v7340, 7
  %v7342 = vsub.s32 1, %v7341
  %v7343 = vrot.slane %v2852, %v7342
  %7345 = vbcast.lane.b32.xlu0 %v7343, 256
  %v7346 = vpop.permute.xlu0 %7345
  %s7348 = sor.u32 256, 8
  %7349 = vbcast.lane.b32.xlu0 %v7343, %s7348
  %v7350 = vpop.permute.xlu0 %7349
  %v7351 = vlaneseq
  %v7352 = vshrl.u32 %v7351, 7
  %v7353 = vsub.s32 2, %v7352
  %v7354 = vrot.slane %v2852, %v7353
  %7356 = vbcast.lane.b32.xlu0 %v7354, 256
  %v7357 = vpop.permute.xlu0 %7356
  %s7359 = sor.u32 256, 8
  %7360 = vbcast.lane.b32.xlu0 %v7354, %s7359
  %v7361 = vpop.permute.xlu0 %7360
  %v7362 = vlaneseq
  %v7363 = vshrl.u32 %v7362, 7
  %v7364 = vsub.s32 3, %v7363
  %v7365 = vrot.slane %v2852, %v7364
  %7367 = vbcast.lane.b32.xlu0 %v7365, 256
  %v7368 = vpop.permute.xlu0 %7367
  %s7370 = sor.u32 256, 8
  %7371 = vbcast.lane.b32.xlu0 %v7365, %s7370
  %v7372 = vpop.permute.xlu0 %7371
  %v7373 = vlaneseq
  %v7374 = vshrl.u32 %v7373, 7
  %v7375 = vsub.s32 4, %v7374
  %v7376 = vrot.slane %v2852, %v7375
  %7378 = vbcast.lane.b32.xlu0 %v7376, 256
  %v7379 = vpop.permute.xlu0 %7378
  %s7381 = sor.u32 256, 8
  %7382 = vbcast.lane.b32.xlu0 %v7376, %s7381
  %v7383 = vpop.permute.xlu0 %7382
  %v7384 = vlaneseq
  %v7385 = vshrl.u32 %v7384, 7
  %v7386 = vsub.s32 5, %v7385
  %v7387 = vrot.slane %v2852, %v7386
  %7389 = vbcast.lane.b32.xlu0 %v7387, 256
  %v7390 = vpop.permute.xlu0 %7389
  %s7392 = sor.u32 256, 8
  %7393 = vbcast.lane.b32.xlu0 %v7387, %s7392
  %v7394 = vpop.permute.xlu0 %7393
  %v7395 = vlaneseq
  %v7396 = vshrl.u32 %v7395, 7
  %v7397 = vsub.s32 6, %v7396
  %v7398 = vrot.slane %v2852, %v7397
  %7400 = vbcast.lane.b32.xlu0 %v7398, 256
  %v7401 = vpop.permute.xlu0 %7400
  %s7403 = sor.u32 256, 8
  %7404 = vbcast.lane.b32.xlu0 %v7398, %s7403
  %v7405 = vpop.permute.xlu0 %7404
  %v7406 = vlaneseq
  %v7407 = vshrl.u32 %v7406, 7
  %v7408 = vsub.s32 7, %v7407
  %v7409 = vrot.slane %v2852, %v7408
  %7411 = vbcast.lane.b32.xlu0 %v7409, 256
  %v7412 = vpop.permute.xlu0 %7411
  %s7414 = sor.u32 256, 8
  %7415 = vbcast.lane.b32.xlu0 %v7409, %s7414
  %v7416 = vpop.permute.xlu0 %7415
  %v7545 = vsel %vm6585, %v6719, 0.0
  %v7546 = vsel %vm6586, %v6723, 0.0
  %v7547 = vsel %vm6587, %v6730, 0.0
  %v7548 = vsel %vm6588, %v6734, 0.0
  %v7549 = vsel %vm6589, %v6741, 0.0
  %v7550 = vsel %vm6590, %v6745, 0.0
  %v7551 = vsel %vm6591, %v6752, 0.0
  %v7552 = vsel %vm6592, %v6756, 0.0
  %v7553 = vsel %vm6593, %v6763, 0.0
  %v7554 = vsel %vm6594, %v6767, 0.0
  %v7555 = vsel %vm6595, %v6774, 0.0
  %v7556 = vsel %vm6596, %v6778, 0.0
  %v7557 = vsel %vm6597, %v6785, 0.0
  %v7558 = vsel %vm6598, %v6789, 0.0
  %v7559 = vsel %vm6599, %v6796, 0.0
  %v7560 = vsel %vm6600, %v6800, 0.0
  %v7561 = vsel %vm6601, %v6807, 0.0
  %v7562 = vsel %vm6602, %v6811, 0.0
  %v7563 = vsel %vm6603, %v6818, 0.0
  %v7564 = vsel %vm6604, %v6822, 0.0
  %v7565 = vsel %vm6605, %v6829, 0.0
  %v7566 = vsel %vm6606, %v6833, 0.0
  %v7567 = vsel %vm6607, %v6840, 0.0
  %v7568 = vsel %vm6608, %v6844, 0.0
  %v7569 = vsel %vm6609, %v6851, 0.0
  %v7570 = vsel %vm6610, %v6855, 0.0
  %v7571 = vsel %vm6611, %v6862, 0.0
  %v7572 = vsel %vm6612, %v6866, 0.0
  %v7573 = vsel %vm6613, %v6873, 0.0
  %v7574 = vsel %vm6614, %v6877, 0.0
  %v7575 = vsel %vm6615, %v6884, 0.0
  %v7576 = vsel %vm6616, %v6888, 0.0
  %v7577 = vsel %vm6617, %v6895, 0.0
  %v7578 = vsel %vm6618, %v6899, 0.0
  %v7579 = vsel %vm6619, %v6906, 0.0
  %v7580 = vsel %vm6620, %v6910, 0.0
  %v7581 = vsel %vm6621, %v6917, 0.0
  %v7582 = vsel %vm6622, %v6921, 0.0
  %v7583 = vsel %vm6623, %v6928, 0.0
  %v7584 = vsel %vm6624, %v6932, 0.0
  %v7585 = vsel %vm6625, %v6939, 0.0
  %v7586 = vsel %vm6626, %v6943, 0.0
  %v7587 = vsel %vm6627, %v6950, 0.0
  %v7588 = vsel %vm6628, %v6954, 0.0
  %v7589 = vsel %vm6629, %v6961, 0.0
  %v7590 = vsel %vm6630, %v6965, 0.0
  %v7591 = vsel %vm6631, %v6972, 0.0
  %v7592 = vsel %vm6632, %v6976, 0.0
  %v7593 = vsel %vm6633, %v6983, 0.0
  %v7594 = vsel %vm6634, %v6987, 0.0
  %v7595 = vsel %vm6635, %v6994, 0.0
  %v7596 = vsel %vm6636, %v6998, 0.0
  %v7597 = vsel %vm6637, %v7005, 0.0
  %v7598 = vsel %vm6638, %v7009, 0.0
  %v7599 = vsel %vm6639, %v7016, 0.0
  %v7600 = vsel %vm6640, %v7020, 0.0
  %v7601 = vsel %vm6641, %v7027, 0.0
  %v7602 = vsel %vm6642, %v7031, 0.0
  %v7603 = vsel %vm6643, %v7038, 0.0
  %v7604 = vsel %vm6644, %v7042, 0.0
  %v7605 = vsel %vm6645, %v7049, 0.0
  %v7606 = vsel %vm6646, %v7053, 0.0
  %v7607 = vsel %vm6647, %v7060, 0.0
  %v7608 = vsel %vm6648, %v7064, 0.0
  %v7609 = vsel %vm6649, %v7071, 0.0
  %v7610 = vsel %vm6650, %v7075, 0.0
  %v7611 = vsel %vm6651, %v7082, 0.0
  %v7612 = vsel %vm6652, %v7086, 0.0
  %v7613 = vsel %vm6653, %v7093, 0.0
  %v7614 = vsel %vm6654, %v7097, 0.0
  %v7615 = vsel %vm6655, %v7104, 0.0
  %v7616 = vsel %vm6656, %v7108, 0.0
  %v7617 = vsel %vm6657, %v7115, 0.0
  %v7618 = vsel %vm6658, %v7119, 0.0
  %v7619 = vsel %vm6659, %v7126, 0.0
  %v7620 = vsel %vm6660, %v7130, 0.0
  %v7621 = vsel %vm6661, %v7137, 0.0
  %v7622 = vsel %vm6662, %v7141, 0.0
  %v7623 = vsel %vm6663, %v7148, 0.0
  %v7624 = vsel %vm6664, %v7152, 0.0
  %v7625 = vsel %vm6665, %v7159, 0.0
  %v7626 = vsel %vm6666, %v7163, 0.0
  %v7627 = vsel %vm6667, %v7170, 0.0
  %v7628 = vsel %vm6668, %v7174, 0.0
  %v7629 = vsel %vm6669, %v7181, 0.0
  %v7630 = vsel %vm6670, %v7185, 0.0
  %v7631 = vsel %vm6671, %v7192, 0.0
  %v7632 = vsel %vm6672, %v7196, 0.0
  %v7633 = vsel %vm6673, %v7203, 0.0
  %v7634 = vsel %vm6674, %v7207, 0.0
  %v7635 = vsel %vm6675, %v7214, 0.0
  %v7636 = vsel %vm6676, %v7218, 0.0
  %v7637 = vsel %vm6677, %v7225, 0.0
  %v7638 = vsel %vm6678, %v7229, 0.0
  %v7639 = vsel %vm6679, %v7236, 0.0
  %v7640 = vsel %vm6680, %v7240, 0.0
  %v7641 = vsel %vm6681, %v7247, 0.0
  %v7642 = vsel %vm6682, %v7251, 0.0
  %v7643 = vsel %vm6683, %v7258, 0.0
  %v7644 = vsel %vm6684, %v7262, 0.0
  %v7645 = vsel %vm6685, %v7269, 0.0
  %v7646 = vsel %vm6686, %v7273, 0.0
  %v7647 = vsel %vm6687, %v7280, 0.0
  %v7648 = vsel %vm6688, %v7284, 0.0
  %v7649 = vsel %vm6689, %v7291, 0.0
  %v7650 = vsel %vm6690, %v7295, 0.0
  %v7651 = vsel %vm6691, %v7302, 0.0
  %v7652 = vsel %vm6692, %v7306, 0.0
  %v7653 = vsel %vm6693, %v7313, 0.0
  %v7654 = vsel %vm6694, %v7317, 0.0
  %v7655 = vsel %vm6695, %v7324, 0.0
  %v7656 = vsel %vm6696, %v7328, 0.0
  %v7657 = vsel %vm6697, %v7335, 0.0
  %v7658 = vsel %vm6698, %v7339, 0.0
  %v7659 = vsel %vm6699, %v7346, 0.0
  %v7660 = vsel %vm6700, %v7350, 0.0
  %v7661 = vsel %vm6701, %v7357, 0.0
  %v7662 = vsel %vm6702, %v7361, 0.0
  %v7663 = vsel %vm6703, %v7368, 0.0
  %v7664 = vsel %vm6704, %v7372, 0.0
  %v7665 = vsel %vm6705, %v7379, 0.0
  %v7666 = vsel %vm6706, %v7383, 0.0
  %v7667 = vsel %vm6707, %v7390, 0.0
  %v7668 = vsel %vm6708, %v7394, 0.0
  %v7669 = vsel %vm6709, %v7401, 0.0
  %v7670 = vsel %vm6710, %v7405, 0.0
  %v7671 = vsel %vm6711, %v7412, 0.0
  %v7672 = vsel %vm6712, %v7416, 0.0
  %7801 = vset.pattern.permute.xlu0 0
  %7802 = vperm.xlu0 %7801, %v7545
  %v7803 = vpop.permute.xlu0 %7802
  %7804 = vset.pattern.permute.xlu0 0
  %7805 = vperm.xlu0 %7804, %v7546
  %v7806 = vpop.permute.xlu0 %7805
  %7807 = vset.pattern.permute.xlu0 0
  %7808 = vperm.xlu0 %7807, %v7547
  %v7809 = vpop.permute.xlu0 %7808
  %7810 = vset.pattern.permute.xlu0 0
  %7811 = vperm.xlu0 %7810, %v7548
  %v7812 = vpop.permute.xlu0 %7811
  %7813 = vset.pattern.permute.xlu0 0
  %7814 = vperm.xlu0 %7813, %v7549
  %v7815 = vpop.permute.xlu0 %7814
  %7816 = vset.pattern.permute.xlu0 0
  %7817 = vperm.xlu0 %7816, %v7550
  %v7818 = vpop.permute.xlu0 %7817
  %7819 = vset.pattern.permute.xlu0 0
  %7820 = vperm.xlu0 %7819, %v7551
  %v7821 = vpop.permute.xlu0 %7820
  %7822 = vset.pattern.permute.xlu0 0
  %7823 = vperm.xlu0 %7822, %v7552
  %v7824 = vpop.permute.xlu0 %7823
  %7825 = vset.pattern.permute.xlu0 0
  %7826 = vperm.xlu0 %7825, %v7553
  %v7827 = vpop.permute.xlu0 %7826
  %7828 = vset.pattern.permute.xlu0 0
  %7829 = vperm.xlu0 %7828, %v7554
  %v7830 = vpop.permute.xlu0 %7829
  %7831 = vset.pattern.permute.xlu0 0
  %7832 = vperm.xlu0 %7831, %v7555
  %v7833 = vpop.permute.xlu0 %7832
  %7834 = vset.pattern.permute.xlu0 0
  %7835 = vperm.xlu0 %7834, %v7556
  %v7836 = vpop.permute.xlu0 %7835
  %7837 = vset.pattern.permute.xlu0 0
  %7838 = vperm.xlu0 %7837, %v7557
  %v7839 = vpop.permute.xlu0 %7838
  %7840 = vset.pattern.permute.xlu0 0
  %7841 = vperm.xlu0 %7840, %v7558
  %v7842 = vpop.permute.xlu0 %7841
  %7843 = vset.pattern.permute.xlu0 0
  %7844 = vperm.xlu0 %7843, %v7559
  %v7845 = vpop.permute.xlu0 %7844
  %7846 = vset.pattern.permute.xlu0 0
  %7847 = vperm.xlu0 %7846, %v7560
  %v7848 = vpop.permute.xlu0 %7847
  %7849 = vset.pattern.permute.xlu0 0
  %7850 = vperm.xlu0 %7849, %v7561
  %v7851 = vpop.permute.xlu0 %7850
  %7852 = vset.pattern.permute.xlu0 0
  %7853 = vperm.xlu0 %7852, %v7562
  %v7854 = vpop.permute.xlu0 %7853
  %7855 = vset.pattern.permute.xlu0 0
  %7856 = vperm.xlu0 %7855, %v7563
  %v7857 = vpop.permute.xlu0 %7856
  %7858 = vset.pattern.permute.xlu0 0
  %7859 = vperm.xlu0 %7858, %v7564
  %v7860 = vpop.permute.xlu0 %7859
  %7861 = vset.pattern.permute.xlu0 0
  %7862 = vperm.xlu0 %7861, %v7565
  %v7863 = vpop.permute.xlu0 %7862
  %7864 = vset.pattern.permute.xlu0 0
  %7865 = vperm.xlu0 %7864, %v7566
  %v7866 = vpop.permute.xlu0 %7865
  %7867 = vset.pattern.permute.xlu0 0
  %7868 = vperm.xlu0 %7867, %v7567
  %v7869 = vpop.permute.xlu0 %7868
  %7870 = vset.pattern.permute.xlu0 0
  %7871 = vperm.xlu0 %7870, %v7568
  %v7872 = vpop.permute.xlu0 %7871
  %7873 = vset.pattern.permute.xlu0 0
  %7874 = vperm.xlu0 %7873, %v7569
  %v7875 = vpop.permute.xlu0 %7874
  %7876 = vset.pattern.permute.xlu0 0
  %7877 = vperm.xlu0 %7876, %v7570
  %v7878 = vpop.permute.xlu0 %7877
  %7879 = vset.pattern.permute.xlu0 0
  %7880 = vperm.xlu0 %7879, %v7571
  %v7881 = vpop.permute.xlu0 %7880
  %7882 = vset.pattern.permute.xlu0 0
  %7883 = vperm.xlu0 %7882, %v7572
  %v7884 = vpop.permute.xlu0 %7883
  %7885 = vset.pattern.permute.xlu0 0
  %7886 = vperm.xlu0 %7885, %v7573
  %v7887 = vpop.permute.xlu0 %7886
  %7888 = vset.pattern.permute.xlu0 0
  %7889 = vperm.xlu0 %7888, %v7574
  %v7890 = vpop.permute.xlu0 %7889
  %7891 = vset.pattern.permute.xlu0 0
  %7892 = vperm.xlu0 %7891, %v7575
  %v7893 = vpop.permute.xlu0 %7892
  %7894 = vset.pattern.permute.xlu0 0
  %7895 = vperm.xlu0 %7894, %v7576
  %v7896 = vpop.permute.xlu0 %7895
  %7897 = vset.pattern.permute.xlu0 0
  %7898 = vperm.xlu0 %7897, %v7577
  %v7899 = vpop.permute.xlu0 %7898
  %7900 = vset.pattern.permute.xlu0 0
  %7901 = vperm.xlu0 %7900, %v7578
  %v7902 = vpop.permute.xlu0 %7901
  %7903 = vset.pattern.permute.xlu0 0
  %7904 = vperm.xlu0 %7903, %v7579
  %v7905 = vpop.permute.xlu0 %7904
  %7906 = vset.pattern.permute.xlu0 0
  %7907 = vperm.xlu0 %7906, %v7580
  %v7908 = vpop.permute.xlu0 %7907
  %7909 = vset.pattern.permute.xlu0 0
  %7910 = vperm.xlu0 %7909, %v7581
  %v7911 = vpop.permute.xlu0 %7910
  %7912 = vset.pattern.permute.xlu0 0
  %7913 = vperm.xlu0 %7912, %v7582
  %v7914 = vpop.permute.xlu0 %7913
  %7915 = vset.pattern.permute.xlu0 0
  %7916 = vperm.xlu0 %7915, %v7583
  %v7917 = vpop.permute.xlu0 %7916
  %7918 = vset.pattern.permute.xlu0 0
  %7919 = vperm.xlu0 %7918, %v7584
  %v7920 = vpop.permute.xlu0 %7919
  %7921 = vset.pattern.permute.xlu0 0
  %7922 = vperm.xlu0 %7921, %v7585
  %v7923 = vpop.permute.xlu0 %7922
  %7924 = vset.pattern.permute.xlu0 0
  %7925 = vperm.xlu0 %7924, %v7586
  %v7926 = vpop.permute.xlu0 %7925
  %7927 = vset.pattern.permute.xlu0 0
  %7928 = vperm.xlu0 %7927, %v7587
  %v7929 = vpop.permute.xlu0 %7928
  %7930 = vset.pattern.permute.xlu0 0
  %7931 = vperm.xlu0 %7930, %v7588
  %v7932 = vpop.permute.xlu0 %7931
  %7933 = vset.pattern.permute.xlu0 0
  %7934 = vperm.xlu0 %7933, %v7589
  %v7935 = vpop.permute.xlu0 %7934
  %7936 = vset.pattern.permute.xlu0 0
  %7937 = vperm.xlu0 %7936, %v7590
  %v7938 = vpop.permute.xlu0 %7937
  %7939 = vset.pattern.permute.xlu0 0
  %7940 = vperm.xlu0 %7939, %v7591
  %v7941 = vpop.permute.xlu0 %7940
  %7942 = vset.pattern.permute.xlu0 0
  %7943 = vperm.xlu0 %7942, %v7592
  %v7944 = vpop.permute.xlu0 %7943
  %7945 = vset.pattern.permute.xlu0 0
  %7946 = vperm.xlu0 %7945, %v7593
  %v7947 = vpop.permute.xlu0 %7946
  %7948 = vset.pattern.permute.xlu0 0
  %7949 = vperm.xlu0 %7948, %v7594
  %v7950 = vpop.permute.xlu0 %7949
  %7951 = vset.pattern.permute.xlu0 0
  %7952 = vperm.xlu0 %7951, %v7595
  %v7953 = vpop.permute.xlu0 %7952
  %7954 = vset.pattern.permute.xlu0 0
  %7955 = vperm.xlu0 %7954, %v7596
  %v7956 = vpop.permute.xlu0 %7955
  %7957 = vset.pattern.permute.xlu0 0
  %7958 = vperm.xlu0 %7957, %v7597
  %v7959 = vpop.permute.xlu0 %7958
  %7960 = vset.pattern.permute.xlu0 0
  %7961 = vperm.xlu0 %7960, %v7598
  %v7962 = vpop.permute.xlu0 %7961
  %7963 = vset.pattern.permute.xlu0 0
  %7964 = vperm.xlu0 %7963, %v7599
  %v7965 = vpop.permute.xlu0 %7964
  %7966 = vset.pattern.permute.xlu0 0
  %7967 = vperm.xlu0 %7966, %v7600
  %v7968 = vpop.permute.xlu0 %7967
  %7969 = vset.pattern.permute.xlu0 0
  %7970 = vperm.xlu0 %7969, %v7601
  %v7971 = vpop.permute.xlu0 %7970
  %7972 = vset.pattern.permute.xlu0 0
  %7973 = vperm.xlu0 %7972, %v7602
  %v7974 = vpop.permute.xlu0 %7973
  %7975 = vset.pattern.permute.xlu0 0
  %7976 = vperm.xlu0 %7975, %v7603
  %v7977 = vpop.permute.xlu0 %7976
  %7978 = vset.pattern.permute.xlu0 0
  %7979 = vperm.xlu0 %7978, %v7604
  %v7980 = vpop.permute.xlu0 %7979
  %7981 = vset.pattern.permute.xlu0 0
  %7982 = vperm.xlu0 %7981, %v7605
  %v7983 = vpop.permute.xlu0 %7982
  %7984 = vset.pattern.permute.xlu0 0
  %7985 = vperm.xlu0 %7984, %v7606
  %v7986 = vpop.permute.xlu0 %7985
  %7987 = vset.pattern.permute.xlu0 0
  %7988 = vperm.xlu0 %7987, %v7607
  %v7989 = vpop.permute.xlu0 %7988
  %7990 = vset.pattern.permute.xlu0 0
  %7991 = vperm.xlu0 %7990, %v7608
  %v7992 = vpop.permute.xlu0 %7991
  %7993 = vset.pattern.permute.xlu0 0
  %7994 = vperm.xlu0 %7993, %v7609
  %v7995 = vpop.permute.xlu0 %7994
  %7996 = vset.pattern.permute.xlu0 0
  %7997 = vperm.xlu0 %7996, %v7610
  %v7998 = vpop.permute.xlu0 %7997
  %7999 = vset.pattern.permute.xlu0 0
  %8000 = vperm.xlu0 %7999, %v7611
  %v8001 = vpop.permute.xlu0 %8000
  %8002 = vset.pattern.permute.xlu0 0
  %8003 = vperm.xlu0 %8002, %v7612
  %v8004 = vpop.permute.xlu0 %8003
  %8005 = vset.pattern.permute.xlu0 0
  %8006 = vperm.xlu0 %8005, %v7613
  %v8007 = vpop.permute.xlu0 %8006
  %8008 = vset.pattern.permute.xlu0 0
  %8009 = vperm.xlu0 %8008, %v7614
  %v8010 = vpop.permute.xlu0 %8009
  %8011 = vset.pattern.permute.xlu0 0
  %8012 = vperm.xlu0 %8011, %v7615
  %v8013 = vpop.permute.xlu0 %8012
  %8014 = vset.pattern.permute.xlu0 0
  %8015 = vperm.xlu0 %8014, %v7616
  %v8016 = vpop.permute.xlu0 %8015
  %8017 = vset.pattern.permute.xlu0 0
  %8018 = vperm.xlu0 %8017, %v7617
  %v8019 = vpop.permute.xlu0 %8018
  %8020 = vset.pattern.permute.xlu0 0
  %8021 = vperm.xlu0 %8020, %v7618
  %v8022 = vpop.permute.xlu0 %8021
  %8023 = vset.pattern.permute.xlu0 0
  %8024 = vperm.xlu0 %8023, %v7619
  %v8025 = vpop.permute.xlu0 %8024
  %8026 = vset.pattern.permute.xlu0 0
  %8027 = vperm.xlu0 %8026, %v7620
  %v8028 = vpop.permute.xlu0 %8027
  %8029 = vset.pattern.permute.xlu0 0
  %8030 = vperm.xlu0 %8029, %v7621
  %v8031 = vpop.permute.xlu0 %8030
  %8032 = vset.pattern.permute.xlu0 0
  %8033 = vperm.xlu0 %8032, %v7622
  %v8034 = vpop.permute.xlu0 %8033
  %8035 = vset.pattern.permute.xlu0 0
  %8036 = vperm.xlu0 %8035, %v7623
  %v8037 = vpop.permute.xlu0 %8036
  %8038 = vset.pattern.permute.xlu0 0
  %8039 = vperm.xlu0 %8038, %v7624
  %v8040 = vpop.permute.xlu0 %8039
  %8041 = vset.pattern.permute.xlu0 0
  %8042 = vperm.xlu0 %8041, %v7625
  %v8043 = vpop.permute.xlu0 %8042
  %8044 = vset.pattern.permute.xlu0 0
  %8045 = vperm.xlu0 %8044, %v7626
  %v8046 = vpop.permute.xlu0 %8045
  %8047 = vset.pattern.permute.xlu0 0
  %8048 = vperm.xlu0 %8047, %v7627
  %v8049 = vpop.permute.xlu0 %8048
  %8050 = vset.pattern.permute.xlu0 0
  %8051 = vperm.xlu0 %8050, %v7628
  %v8052 = vpop.permute.xlu0 %8051
  %8053 = vset.pattern.permute.xlu0 0
  %8054 = vperm.xlu0 %8053, %v7629
  %v8055 = vpop.permute.xlu0 %8054
  %8056 = vset.pattern.permute.xlu0 0
  %8057 = vperm.xlu0 %8056, %v7630
  %v8058 = vpop.permute.xlu0 %8057
  %8059 = vset.pattern.permute.xlu0 0
  %8060 = vperm.xlu0 %8059, %v7631
  %v8061 = vpop.permute.xlu0 %8060
  %8062 = vset.pattern.permute.xlu0 0
  %8063 = vperm.xlu0 %8062, %v7632
  %v8064 = vpop.permute.xlu0 %8063
  %8065 = vset.pattern.permute.xlu0 0
  %8066 = vperm.xlu0 %8065, %v7633
  %v8067 = vpop.permute.xlu0 %8066
  %8068 = vset.pattern.permute.xlu0 0
  %8069 = vperm.xlu0 %8068, %v7634
  %v8070 = vpop.permute.xlu0 %8069
  %8071 = vset.pattern.permute.xlu0 0
  %8072 = vperm.xlu0 %8071, %v7635
  %v8073 = vpop.permute.xlu0 %8072
  %8074 = vset.pattern.permute.xlu0 0
  %8075 = vperm.xlu0 %8074, %v7636
  %v8076 = vpop.permute.xlu0 %8075
  %8077 = vset.pattern.permute.xlu0 0
  %8078 = vperm.xlu0 %8077, %v7637
  %v8079 = vpop.permute.xlu0 %8078
  %8080 = vset.pattern.permute.xlu0 0
  %8081 = vperm.xlu0 %8080, %v7638
  %v8082 = vpop.permute.xlu0 %8081
  %8083 = vset.pattern.permute.xlu0 0
  %8084 = vperm.xlu0 %8083, %v7639
  %v8085 = vpop.permute.xlu0 %8084
  %8086 = vset.pattern.permute.xlu0 0
  %8087 = vperm.xlu0 %8086, %v7640
  %v8088 = vpop.permute.xlu0 %8087
  %8089 = vset.pattern.permute.xlu0 0
  %8090 = vperm.xlu0 %8089, %v7641
  %v8091 = vpop.permute.xlu0 %8090
  %8092 = vset.pattern.permute.xlu0 0
  %8093 = vperm.xlu0 %8092, %v7642
  %v8094 = vpop.permute.xlu0 %8093
  %8095 = vset.pattern.permute.xlu0 0
  %8096 = vperm.xlu0 %8095, %v7643
  %v8097 = vpop.permute.xlu0 %8096
  %8098 = vset.pattern.permute.xlu0 0
  %8099 = vperm.xlu0 %8098, %v7644
  %v8100 = vpop.permute.xlu0 %8099
  %8101 = vset.pattern.permute.xlu0 0
  %8102 = vperm.xlu0 %8101, %v7645
  %v8103 = vpop.permute.xlu0 %8102
  %8104 = vset.pattern.permute.xlu0 0
  %8105 = vperm.xlu0 %8104, %v7646
  %v8106 = vpop.permute.xlu0 %8105
  %8107 = vset.pattern.permute.xlu0 0
  %8108 = vperm.xlu0 %8107, %v7647
  %v8109 = vpop.permute.xlu0 %8108
  %8110 = vset.pattern.permute.xlu0 0
  %8111 = vperm.xlu0 %8110, %v7648
  %v8112 = vpop.permute.xlu0 %8111
  %8113 = vset.pattern.permute.xlu0 0
  %8114 = vperm.xlu0 %8113, %v7649
  %v8115 = vpop.permute.xlu0 %8114
  %8116 = vset.pattern.permute.xlu0 0
  %8117 = vperm.xlu0 %8116, %v7650
  %v8118 = vpop.permute.xlu0 %8117
  %8119 = vset.pattern.permute.xlu0 0
  %8120 = vperm.xlu0 %8119, %v7651
  %v8121 = vpop.permute.xlu0 %8120
  %8122 = vset.pattern.permute.xlu0 0
  %8123 = vperm.xlu0 %8122, %v7652
  %v8124 = vpop.permute.xlu0 %8123
  %8125 = vset.pattern.permute.xlu0 0
  %8126 = vperm.xlu0 %8125, %v7653
  %v8127 = vpop.permute.xlu0 %8126
  %8128 = vset.pattern.permute.xlu0 0
  %8129 = vperm.xlu0 %8128, %v7654
  %v8130 = vpop.permute.xlu0 %8129
  %8131 = vset.pattern.permute.xlu0 0
  %8132 = vperm.xlu0 %8131, %v7655
  %v8133 = vpop.permute.xlu0 %8132
  %8134 = vset.pattern.permute.xlu0 0
  %8135 = vperm.xlu0 %8134, %v7656
  %v8136 = vpop.permute.xlu0 %8135
  %8137 = vset.pattern.permute.xlu0 0
  %8138 = vperm.xlu0 %8137, %v7657
  %v8139 = vpop.permute.xlu0 %8138
  %8140 = vset.pattern.permute.xlu0 0
  %8141 = vperm.xlu0 %8140, %v7658
  %v8142 = vpop.permute.xlu0 %8141
  %8143 = vset.pattern.permute.xlu0 0
  %8144 = vperm.xlu0 %8143, %v7659
  %v8145 = vpop.permute.xlu0 %8144
  %8146 = vset.pattern.permute.xlu0 0
  %8147 = vperm.xlu0 %8146, %v7660
  %v8148 = vpop.permute.xlu0 %8147
  %8149 = vset.pattern.permute.xlu0 0
  %8150 = vperm.xlu0 %8149, %v7661
  %v8151 = vpop.permute.xlu0 %8150
  %8152 = vset.pattern.permute.xlu0 0
  %8153 = vperm.xlu0 %8152, %v7662
  %v8154 = vpop.permute.xlu0 %8153
  %8155 = vset.pattern.permute.xlu0 0
  %8156 = vperm.xlu0 %8155, %v7663
  %v8157 = vpop.permute.xlu0 %8156
  %8158 = vset.pattern.permute.xlu0 0
  %8159 = vperm.xlu0 %8158, %v7664
  %v8160 = vpop.permute.xlu0 %8159
  %8161 = vset.pattern.permute.xlu0 0
  %8162 = vperm.xlu0 %8161, %v7665
  %v8163 = vpop.permute.xlu0 %8162
  %8164 = vset.pattern.permute.xlu0 0
  %8165 = vperm.xlu0 %8164, %v7666
  %v8166 = vpop.permute.xlu0 %8165
  %8167 = vset.pattern.permute.xlu0 0
  %8168 = vperm.xlu0 %8167, %v7667
  %v8169 = vpop.permute.xlu0 %8168
  %8170 = vset.pattern.permute.xlu0 0
  %8171 = vperm.xlu0 %8170, %v7668
  %v8172 = vpop.permute.xlu0 %8171
  %8173 = vset.pattern.permute.xlu0 0
  %8174 = vperm.xlu0 %8173, %v7669
  %v8175 = vpop.permute.xlu0 %8174
  %8176 = vset.pattern.permute.xlu0 0
  %8177 = vperm.xlu0 %8176, %v7670
  %v8178 = vpop.permute.xlu0 %8177
  %8179 = vset.pattern.permute.xlu0 0
  %8180 = vperm.xlu0 %8179, %v7671
  %v8181 = vpop.permute.xlu0 %8180
  %8182 = vset.pattern.permute.xlu0 0
  %8183 = vperm.xlu0 %8182, %v7672
  %v8184 = vpop.permute.xlu0 %8183
  %v8185 = vlaneseq
  %v8186 = vshrl.u32 %v8185, 7
  %v8187 = vsub.s32 %v3958, %v8186
  %v8188 = vrot.slane %v7803, %v8187
  %v8189 = vadd.s32 %v3958, 4294967288
  %v8190 = vlaneseq
  %v8191 = vshrl.u32 %v8190, 7
  %v8192 = vsub.s32 %v8189, %v8191
  %v8193 = vrot.slane %v7806, %v8192
  %vm8194 = vcmask 130112
  %v8195 = vsel %vm8194, %v8193, %v8188
  %v8196 = vlaneseq
  %v8197 = vshrl.u32 %v8196, 7
  %v8198 = vsub.s32 %v3958, %v8197
  %v8199 = vrot.slane %v7809, %v8198
  %v8200 = vlaneseq
  %v8201 = vshrl.u32 %v8200, 7
  %v8202 = vsub.s32 %v8189, %v8201
  %v8203 = vrot.slane %v7812, %v8202
  %v8204 = vsel %vm8194, %v8203, %v8199
  %v8205 = vlaneseq
  %v8206 = vshrl.u32 %v8205, 7
  %v8207 = vsub.s32 %v3958, %v8206
  %v8208 = vrot.slane %v7815, %v8207
  %v8209 = vlaneseq
  %v8210 = vshrl.u32 %v8209, 7
  %v8211 = vsub.s32 %v8189, %v8210
  %v8212 = vrot.slane %v7818, %v8211
  %v8213 = vsel %vm8194, %v8212, %v8208
  %v8214 = vlaneseq
  %v8215 = vshrl.u32 %v8214, 7
  %v8216 = vsub.s32 %v3958, %v8215
  %v8217 = vrot.slane %v7821, %v8216
  %v8218 = vlaneseq
  %v8219 = vshrl.u32 %v8218, 7
  %v8220 = vsub.s32 %v8189, %v8219
  %v8221 = vrot.slane %v7824, %v8220
  %v8222 = vsel %vm8194, %v8221, %v8217
  %v8223 = vlaneseq
  %v8224 = vshrl.u32 %v8223, 7
  %v8225 = vsub.s32 %v3958, %v8224
  %v8226 = vrot.slane %v7827, %v8225
  %v8227 = vlaneseq
  %v8228 = vshrl.u32 %v8227, 7
  %v8229 = vsub.s32 %v8189, %v8228
  %v8230 = vrot.slane %v7830, %v8229
  %v8231 = vsel %vm8194, %v8230, %v8226
  %v8232 = vlaneseq
  %v8233 = vshrl.u32 %v8232, 7
  %v8234 = vsub.s32 %v3958, %v8233
  %v8235 = vrot.slane %v7833, %v8234
  %v8236 = vlaneseq
  %v8237 = vshrl.u32 %v8236, 7
  %v8238 = vsub.s32 %v8189, %v8237
  %v8239 = vrot.slane %v7836, %v8238
  %v8240 = vsel %vm8194, %v8239, %v8235
  %v8241 = vlaneseq
  %v8242 = vshrl.u32 %v8241, 7
  %v8243 = vsub.s32 %v3958, %v8242
  %v8244 = vrot.slane %v7839, %v8243
  %v8245 = vlaneseq
  %v8246 = vshrl.u32 %v8245, 7
  %v8247 = vsub.s32 %v8189, %v8246
  %v8248 = vrot.slane %v7842, %v8247
  %v8249 = vsel %vm8194, %v8248, %v8244
  %v8250 = vlaneseq
  %v8251 = vshrl.u32 %v8250, 7
  %v8252 = vsub.s32 %v3958, %v8251
  %v8253 = vrot.slane %v7845, %v8252
  %v8254 = vlaneseq
  %v8255 = vshrl.u32 %v8254, 7
  %v8256 = vsub.s32 %v8189, %v8255
  %v8257 = vrot.slane %v7848, %v8256
  %v8258 = vsel %vm8194, %v8257, %v8253
  %v8259 = vlaneseq
  %v8260 = vshrl.u32 %v8259, 7
  %v8261 = vsub.s32 %v3958, %v8260
  %v8262 = vrot.slane %v7851, %v8261
  %v8263 = vlaneseq
  %v8264 = vshrl.u32 %v8263, 7
  %v8265 = vsub.s32 %v8189, %v8264
  %v8266 = vrot.slane %v7854, %v8265
  %v8267 = vsel %vm8194, %v8266, %v8262
  %v8268 = vlaneseq
  %v8269 = vshrl.u32 %v8268, 7
  %v8270 = vsub.s32 %v3958, %v8269
  %v8271 = vrot.slane %v7857, %v8270
  %v8272 = vlaneseq
  %v8273 = vshrl.u32 %v8272, 7
  %v8274 = vsub.s32 %v8189, %v8273
  %v8275 = vrot.slane %v7860, %v8274
  %v8276 = vsel %vm8194, %v8275, %v8271
  %v8277 = vlaneseq
  %v8278 = vshrl.u32 %v8277, 7
  %v8279 = vsub.s32 %v3958, %v8278
  %v8280 = vrot.slane %v7863, %v8279
  %v8281 = vlaneseq
  %v8282 = vshrl.u32 %v8281, 7
  %v8283 = vsub.s32 %v8189, %v8282
  %v8284 = vrot.slane %v7866, %v8283
  %v8285 = vsel %vm8194, %v8284, %v8280
  %v8286 = vlaneseq
  %v8287 = vshrl.u32 %v8286, 7
  %v8288 = vsub.s32 %v3958, %v8287
  %v8289 = vrot.slane %v7869, %v8288
  %v8290 = vlaneseq
  %v8291 = vshrl.u32 %v8290, 7
  %v8292 = vsub.s32 %v8189, %v8291
  %v8293 = vrot.slane %v7872, %v8292
  %v8294 = vsel %vm8194, %v8293, %v8289
  %v8295 = vlaneseq
  %v8296 = vshrl.u32 %v8295, 7
  %v8297 = vsub.s32 %v3958, %v8296
  %v8298 = vrot.slane %v7875, %v8297
  %v8299 = vlaneseq
  %v8300 = vshrl.u32 %v8299, 7
  %v8301 = vsub.s32 %v8189, %v8300
  %v8302 = vrot.slane %v7878, %v8301
  %v8303 = vsel %vm8194, %v8302, %v8298
  %v8304 = vlaneseq
  %v8305 = vshrl.u32 %v8304, 7
  %v8306 = vsub.s32 %v3958, %v8305
  %v8307 = vrot.slane %v7881, %v8306
  %v8308 = vlaneseq
  %v8309 = vshrl.u32 %v8308, 7
  %v8310 = vsub.s32 %v8189, %v8309
  %v8311 = vrot.slane %v7884, %v8310
  %v8312 = vsel %vm8194, %v8311, %v8307
  %v8313 = vlaneseq
  %v8314 = vshrl.u32 %v8313, 7
  %v8315 = vsub.s32 %v3958, %v8314
  %v8316 = vrot.slane %v7887, %v8315
  %v8317 = vlaneseq
  %v8318 = vshrl.u32 %v8317, 7
  %v8319 = vsub.s32 %v8189, %v8318
  %v8320 = vrot.slane %v7890, %v8319
  %v8321 = vsel %vm8194, %v8320, %v8316
  %v8322 = vlaneseq
  %v8323 = vshrl.u32 %v8322, 7
  %v8324 = vsub.s32 %v3958, %v8323
  %v8325 = vrot.slane %v7893, %v8324
  %v8326 = vlaneseq
  %v8327 = vshrl.u32 %v8326, 7
  %v8328 = vsub.s32 %v8189, %v8327
  %v8329 = vrot.slane %v7896, %v8328
  %v8330 = vsel %vm8194, %v8329, %v8325
  %v8331 = vlaneseq
  %v8332 = vshrl.u32 %v8331, 7
  %v8333 = vsub.s32 %v3958, %v8332
  %v8334 = vrot.slane %v7899, %v8333
  %v8335 = vlaneseq
  %v8336 = vshrl.u32 %v8335, 7
  %v8337 = vsub.s32 %v8189, %v8336
  %v8338 = vrot.slane %v7902, %v8337
  %v8339 = vsel %vm8194, %v8338, %v8334
  %v8340 = vlaneseq
  %v8341 = vshrl.u32 %v8340, 7
  %v8342 = vsub.s32 %v3958, %v8341
  %v8343 = vrot.slane %v7905, %v8342
  %v8344 = vlaneseq
  %v8345 = vshrl.u32 %v8344, 7
  %v8346 = vsub.s32 %v8189, %v8345
  %v8347 = vrot.slane %v7908, %v8346
  %v8348 = vsel %vm8194, %v8347, %v8343
  %v8349 = vlaneseq
  %v8350 = vshrl.u32 %v8349, 7
  %v8351 = vsub.s32 %v3958, %v8350
  %v8352 = vrot.slane %v7911, %v8351
  %v8353 = vlaneseq
  %v8354 = vshrl.u32 %v8353, 7
  %v8355 = vsub.s32 %v8189, %v8354
  %v8356 = vrot.slane %v7914, %v8355
  %v8357 = vsel %vm8194, %v8356, %v8352
  %v8358 = vlaneseq
  %v8359 = vshrl.u32 %v8358, 7
  %v8360 = vsub.s32 %v3958, %v8359
  %v8361 = vrot.slane %v7917, %v8360
  %v8362 = vlaneseq
  %v8363 = vshrl.u32 %v8362, 7
  %v8364 = vsub.s32 %v8189, %v8363
  %v8365 = vrot.slane %v7920, %v8364
  %v8366 = vsel %vm8194, %v8365, %v8361
  %v8367 = vlaneseq
  %v8368 = vshrl.u32 %v8367, 7
  %v8369 = vsub.s32 %v3958, %v8368
  %v8370 = vrot.slane %v7923, %v8369
  %v8371 = vlaneseq
  %v8372 = vshrl.u32 %v8371, 7
  %v8373 = vsub.s32 %v8189, %v8372
  %v8374 = vrot.slane %v7926, %v8373
  %v8375 = vsel %vm8194, %v8374, %v8370
  %v8376 = vlaneseq
  %v8377 = vshrl.u32 %v8376, 7
  %v8378 = vsub.s32 %v3958, %v8377
  %v8379 = vrot.slane %v7929, %v8378
  %v8380 = vlaneseq
  %v8381 = vshrl.u32 %v8380, 7
  %v8382 = vsub.s32 %v8189, %v8381
  %v8383 = vrot.slane %v7932, %v8382
  %v8384 = vsel %vm8194, %v8383, %v8379
  %v8385 = vlaneseq
  %v8386 = vshrl.u32 %v8385, 7
  %v8387 = vsub.s32 %v3958, %v8386
  %v8388 = vrot.slane %v7935, %v8387
  %v8389 = vlaneseq
  %v8390 = vshrl.u32 %v8389, 7
  %v8391 = vsub.s32 %v8189, %v8390
  %v8392 = vrot.slane %v7938, %v8391
  %v8393 = vsel %vm8194, %v8392, %v8388
  %v8394 = vlaneseq
  %v8395 = vshrl.u32 %v8394, 7
  %v8396 = vsub.s32 %v3958, %v8395
  %v8397 = vrot.slane %v7941, %v8396
  %v8398 = vlaneseq
  %v8399 = vshrl.u32 %v8398, 7
  %v8400 = vsub.s32 %v8189, %v8399
  %v8401 = vrot.slane %v7944, %v8400
  %v8402 = vsel %vm8194, %v8401, %v8397
  %v8403 = vlaneseq
  %v8404 = vshrl.u32 %v8403, 7
  %v8405 = vsub.s32 %v3958, %v8404
  %v8406 = vrot.slane %v7947, %v8405
  %v8407 = vlaneseq
  %v8408 = vshrl.u32 %v8407, 7
  %v8409 = vsub.s32 %v8189, %v8408
  %v8410 = vrot.slane %v7950, %v8409
  %v8411 = vsel %vm8194, %v8410, %v8406
  %v8412 = vlaneseq
  %v8413 = vshrl.u32 %v8412, 7
  %v8414 = vsub.s32 %v3958, %v8413
  %v8415 = vrot.slane %v7953, %v8414
  %v8416 = vlaneseq
  %v8417 = vshrl.u32 %v8416, 7
  %v8418 = vsub.s32 %v8189, %v8417
  %v8419 = vrot.slane %v7956, %v8418
  %v8420 = vsel %vm8194, %v8419, %v8415
  %v8421 = vlaneseq
  %v8422 = vshrl.u32 %v8421, 7
  %v8423 = vsub.s32 %v3958, %v8422
  %v8424 = vrot.slane %v7959, %v8423
  %v8425 = vlaneseq
  %v8426 = vshrl.u32 %v8425, 7
  %v8427 = vsub.s32 %v8189, %v8426
  %v8428 = vrot.slane %v7962, %v8427
  %v8429 = vsel %vm8194, %v8428, %v8424
  %v8430 = vlaneseq
  %v8431 = vshrl.u32 %v8430, 7
  %v8432 = vsub.s32 %v3958, %v8431
  %v8433 = vrot.slane %v7965, %v8432
  %v8434 = vlaneseq
  %v8435 = vshrl.u32 %v8434, 7
  %v8436 = vsub.s32 %v8189, %v8435
  %v8437 = vrot.slane %v7968, %v8436
  %v8438 = vsel %vm8194, %v8437, %v8433
  %v8439 = vlaneseq
  %v8440 = vshrl.u32 %v8439, 7
  %v8441 = vsub.s32 %v3958, %v8440
  %v8442 = vrot.slane %v7971, %v8441
  %v8443 = vlaneseq
  %v8444 = vshrl.u32 %v8443, 7
  %v8445 = vsub.s32 %v8189, %v8444
  %v8446 = vrot.slane %v7974, %v8445
  %v8447 = vsel %vm8194, %v8446, %v8442
  %v8448 = vlaneseq
  %v8449 = vshrl.u32 %v8448, 7
  %v8450 = vsub.s32 %v3958, %v8449
  %v8451 = vrot.slane %v7977, %v8450
  %v8452 = vlaneseq
  %v8453 = vshrl.u32 %v8452, 7
  %v8454 = vsub.s32 %v8189, %v8453
  %v8455 = vrot.slane %v7980, %v8454
  %v8456 = vsel %vm8194, %v8455, %v8451
  %v8457 = vlaneseq
  %v8458 = vshrl.u32 %v8457, 7
  %v8459 = vsub.s32 %v3958, %v8458
  %v8460 = vrot.slane %v7983, %v8459
  %v8461 = vlaneseq
  %v8462 = vshrl.u32 %v8461, 7
  %v8463 = vsub.s32 %v8189, %v8462
  %v8464 = vrot.slane %v7986, %v8463
  %v8465 = vsel %vm8194, %v8464, %v8460
  %v8466 = vlaneseq
  %v8467 = vshrl.u32 %v8466, 7
  %v8468 = vsub.s32 %v3958, %v8467
  %v8469 = vrot.slane %v7989, %v8468
  %v8470 = vlaneseq
  %v8471 = vshrl.u32 %v8470, 7
  %v8472 = vsub.s32 %v8189, %v8471
  %v8473 = vrot.slane %v7992, %v8472
  %v8474 = vsel %vm8194, %v8473, %v8469
  %v8475 = vlaneseq
  %v8476 = vshrl.u32 %v8475, 7
  %v8477 = vsub.s32 %v3958, %v8476
  %v8478 = vrot.slane %v7995, %v8477
  %v8479 = vlaneseq
  %v8480 = vshrl.u32 %v8479, 7
  %v8481 = vsub.s32 %v8189, %v8480
  %v8482 = vrot.slane %v7998, %v8481
  %v8483 = vsel %vm8194, %v8482, %v8478
  %v8484 = vlaneseq
  %v8485 = vshrl.u32 %v8484, 7
  %v8486 = vsub.s32 %v3958, %v8485
  %v8487 = vrot.slane %v8001, %v8486
  %v8488 = vlaneseq
  %v8489 = vshrl.u32 %v8488, 7
  %v8490 = vsub.s32 %v8189, %v8489
  %v8491 = vrot.slane %v8004, %v8490
  %v8492 = vsel %vm8194, %v8491, %v8487
  %v8493 = vlaneseq
  %v8494 = vshrl.u32 %v8493, 7
  %v8495 = vsub.s32 %v3958, %v8494
  %v8496 = vrot.slane %v8007, %v8495
  %v8497 = vlaneseq
  %v8498 = vshrl.u32 %v8497, 7
  %v8499 = vsub.s32 %v8189, %v8498
  %v8500 = vrot.slane %v8010, %v8499
  %v8501 = vsel %vm8194, %v8500, %v8496
  %v8502 = vlaneseq
  %v8503 = vshrl.u32 %v8502, 7
  %v8504 = vsub.s32 %v3958, %v8503
  %v8505 = vrot.slane %v8013, %v8504
  %v8506 = vlaneseq
  %v8507 = vshrl.u32 %v8506, 7
  %v8508 = vsub.s32 %v8189, %v8507
  %v8509 = vrot.slane %v8016, %v8508
  %v8510 = vsel %vm8194, %v8509, %v8505
  %v8511 = vlaneseq
  %v8512 = vshrl.u32 %v8511, 7
  %v8513 = vsub.s32 %v3958, %v8512
  %v8514 = vrot.slane %v8019, %v8513
  %v8515 = vlaneseq
  %v8516 = vshrl.u32 %v8515, 7
  %v8517 = vsub.s32 %v8189, %v8516
  %v8518 = vrot.slane %v8022, %v8517
  %v8519 = vsel %vm8194, %v8518, %v8514
  %v8520 = vlaneseq
  %v8521 = vshrl.u32 %v8520, 7
  %v8522 = vsub.s32 %v3958, %v8521
  %v8523 = vrot.slane %v8025, %v8522
  %v8524 = vlaneseq
  %v8525 = vshrl.u32 %v8524, 7
  %v8526 = vsub.s32 %v8189, %v8525
  %v8527 = vrot.slane %v8028, %v8526
  %v8528 = vsel %vm8194, %v8527, %v8523
  %v8529 = vlaneseq
  %v8530 = vshrl.u32 %v8529, 7
  %v8531 = vsub.s32 %v3958, %v8530
  %v8532 = vrot.slane %v8031, %v8531
  %v8533 = vlaneseq
  %v8534 = vshrl.u32 %v8533, 7
  %v8535 = vsub.s32 %v8189, %v8534
  %v8536 = vrot.slane %v8034, %v8535
  %v8537 = vsel %vm8194, %v8536, %v8532
  %v8538 = vlaneseq
  %v8539 = vshrl.u32 %v8538, 7
  %v8540 = vsub.s32 %v3958, %v8539
  %v8541 = vrot.slane %v8037, %v8540
  %v8542 = vlaneseq
  %v8543 = vshrl.u32 %v8542, 7
  %v8544 = vsub.s32 %v8189, %v8543
  %v8545 = vrot.slane %v8040, %v8544
  %v8546 = vsel %vm8194, %v8545, %v8541
  %v8547 = vlaneseq
  %v8548 = vshrl.u32 %v8547, 7
  %v8549 = vsub.s32 %v3958, %v8548
  %v8550 = vrot.slane %v8043, %v8549
  %v8551 = vlaneseq
  %v8552 = vshrl.u32 %v8551, 7
  %v8553 = vsub.s32 %v8189, %v8552
  %v8554 = vrot.slane %v8046, %v8553
  %v8555 = vsel %vm8194, %v8554, %v8550
  %v8556 = vlaneseq
  %v8557 = vshrl.u32 %v8556, 7
  %v8558 = vsub.s32 %v3958, %v8557
  %v8559 = vrot.slane %v8049, %v8558
  %v8560 = vlaneseq
  %v8561 = vshrl.u32 %v8560, 7
  %v8562 = vsub.s32 %v8189, %v8561
  %v8563 = vrot.slane %v8052, %v8562
  %v8564 = vsel %vm8194, %v8563, %v8559
  %v8565 = vlaneseq
  %v8566 = vshrl.u32 %v8565, 7
  %v8567 = vsub.s32 %v3958, %v8566
  %v8568 = vrot.slane %v8055, %v8567
  %v8569 = vlaneseq
  %v8570 = vshrl.u32 %v8569, 7
  %v8571 = vsub.s32 %v8189, %v8570
  %v8572 = vrot.slane %v8058, %v8571
  %v8573 = vsel %vm8194, %v8572, %v8568
  %v8574 = vlaneseq
  %v8575 = vshrl.u32 %v8574, 7
  %v8576 = vsub.s32 %v3958, %v8575
  %v8577 = vrot.slane %v8061, %v8576
  %v8578 = vlaneseq
  %v8579 = vshrl.u32 %v8578, 7
  %v8580 = vsub.s32 %v8189, %v8579
  %v8581 = vrot.slane %v8064, %v8580
  %v8582 = vsel %vm8194, %v8581, %v8577
  %v8583 = vlaneseq
  %v8584 = vshrl.u32 %v8583, 7
  %v8585 = vsub.s32 %v3958, %v8584
  %v8586 = vrot.slane %v8067, %v8585
  %v8587 = vlaneseq
  %v8588 = vshrl.u32 %v8587, 7
  %v8589 = vsub.s32 %v8189, %v8588
  %v8590 = vrot.slane %v8070, %v8589
  %v8591 = vsel %vm8194, %v8590, %v8586
  %v8592 = vlaneseq
  %v8593 = vshrl.u32 %v8592, 7
  %v8594 = vsub.s32 %v3958, %v8593
  %v8595 = vrot.slane %v8073, %v8594
  %v8596 = vlaneseq
  %v8597 = vshrl.u32 %v8596, 7
  %v8598 = vsub.s32 %v8189, %v8597
  %v8599 = vrot.slane %v8076, %v8598
  %v8600 = vsel %vm8194, %v8599, %v8595
  %v8601 = vlaneseq
  %v8602 = vshrl.u32 %v8601, 7
  %v8603 = vsub.s32 %v3958, %v8602
  %v8604 = vrot.slane %v8079, %v8603
  %v8605 = vlaneseq
  %v8606 = vshrl.u32 %v8605, 7
  %v8607 = vsub.s32 %v8189, %v8606
  %v8608 = vrot.slane %v8082, %v8607
  %v8609 = vsel %vm8194, %v8608, %v8604
  %v8610 = vlaneseq
  %v8611 = vshrl.u32 %v8610, 7
  %v8612 = vsub.s32 %v3958, %v8611
  %v8613 = vrot.slane %v8085, %v8612
  %v8614 = vlaneseq
  %v8615 = vshrl.u32 %v8614, 7
  %v8616 = vsub.s32 %v8189, %v8615
  %v8617 = vrot.slane %v8088, %v8616
  %v8618 = vsel %vm8194, %v8617, %v8613
  %v8619 = vlaneseq
  %v8620 = vshrl.u32 %v8619, 7
  %v8621 = vsub.s32 %v3958, %v8620
  %v8622 = vrot.slane %v8091, %v8621
  %v8623 = vlaneseq
  %v8624 = vshrl.u32 %v8623, 7
  %v8625 = vsub.s32 %v8189, %v8624
  %v8626 = vrot.slane %v8094, %v8625
  %v8627 = vsel %vm8194, %v8626, %v8622
  %v8628 = vlaneseq
  %v8629 = vshrl.u32 %v8628, 7
  %v8630 = vsub.s32 %v3958, %v8629
  %v8631 = vrot.slane %v8097, %v8630
  %v8632 = vlaneseq
  %v8633 = vshrl.u32 %v8632, 7
  %v8634 = vsub.s32 %v8189, %v8633
  %v8635 = vrot.slane %v8100, %v8634
  %v8636 = vsel %vm8194, %v8635, %v8631
  %v8637 = vlaneseq
  %v8638 = vshrl.u32 %v8637, 7
  %v8639 = vsub.s32 %v3958, %v8638
  %v8640 = vrot.slane %v8103, %v8639
  %v8641 = vlaneseq
  %v8642 = vshrl.u32 %v8641, 7
  %v8643 = vsub.s32 %v8189, %v8642
  %v8644 = vrot.slane %v8106, %v8643
  %v8645 = vsel %vm8194, %v8644, %v8640
  %v8646 = vlaneseq
  %v8647 = vshrl.u32 %v8646, 7
  %v8648 = vsub.s32 %v3958, %v8647
  %v8649 = vrot.slane %v8109, %v8648
  %v8650 = vlaneseq
  %v8651 = vshrl.u32 %v8650, 7
  %v8652 = vsub.s32 %v8189, %v8651
  %v8653 = vrot.slane %v8112, %v8652
  %v8654 = vsel %vm8194, %v8653, %v8649
  %v8655 = vlaneseq
  %v8656 = vshrl.u32 %v8655, 7
  %v8657 = vsub.s32 %v3958, %v8656
  %v8658 = vrot.slane %v8115, %v8657
  %v8659 = vlaneseq
  %v8660 = vshrl.u32 %v8659, 7
  %v8661 = vsub.s32 %v8189, %v8660
  %v8662 = vrot.slane %v8118, %v8661
  %v8663 = vsel %vm8194, %v8662, %v8658
  %v8664 = vlaneseq
  %v8665 = vshrl.u32 %v8664, 7
  %v8666 = vsub.s32 %v3958, %v8665
  %v8667 = vrot.slane %v8121, %v8666
  %v8668 = vlaneseq
  %v8669 = vshrl.u32 %v8668, 7
  %v8670 = vsub.s32 %v8189, %v8669
  %v8671 = vrot.slane %v8124, %v8670
  %v8672 = vsel %vm8194, %v8671, %v8667
  %v8673 = vlaneseq
  %v8674 = vshrl.u32 %v8673, 7
  %v8675 = vsub.s32 %v3958, %v8674
  %v8676 = vrot.slane %v8127, %v8675
  %v8677 = vlaneseq
  %v8678 = vshrl.u32 %v8677, 7
  %v8679 = vsub.s32 %v8189, %v8678
  %v8680 = vrot.slane %v8130, %v8679
  %v8681 = vsel %vm8194, %v8680, %v8676
  %v8682 = vlaneseq
  %v8683 = vshrl.u32 %v8682, 7
  %v8684 = vsub.s32 %v3958, %v8683
  %v8685 = vrot.slane %v8133, %v8684
  %v8686 = vlaneseq
  %v8687 = vshrl.u32 %v8686, 7
  %v8688 = vsub.s32 %v8189, %v8687
  %v8689 = vrot.slane %v8136, %v8688
  %v8690 = vsel %vm8194, %v8689, %v8685
  %v8691 = vlaneseq
  %v8692 = vshrl.u32 %v8691, 7
  %v8693 = vsub.s32 %v3958, %v8692
  %v8694 = vrot.slane %v8139, %v8693
  %v8695 = vlaneseq
  %v8696 = vshrl.u32 %v8695, 7
  %v8697 = vsub.s32 %v8189, %v8696
  %v8698 = vrot.slane %v8142, %v8697
  %v8699 = vsel %vm8194, %v8698, %v8694
  %v8700 = vlaneseq
  %v8701 = vshrl.u32 %v8700, 7
  %v8702 = vsub.s32 %v3958, %v8701
  %v8703 = vrot.slane %v8145, %v8702
  %v8704 = vlaneseq
  %v8705 = vshrl.u32 %v8704, 7
  %v8706 = vsub.s32 %v8189, %v8705
  %v8707 = vrot.slane %v8148, %v8706
  %v8708 = vsel %vm8194, %v8707, %v8703
  %v8709 = vlaneseq
  %v8710 = vshrl.u32 %v8709, 7
  %v8711 = vsub.s32 %v3958, %v8710
  %v8712 = vrot.slane %v8151, %v8711
  %v8713 = vlaneseq
  %v8714 = vshrl.u32 %v8713, 7
  %v8715 = vsub.s32 %v8189, %v8714
  %v8716 = vrot.slane %v8154, %v8715
  %v8717 = vsel %vm8194, %v8716, %v8712
  %v8718 = vlaneseq
  %v8719 = vshrl.u32 %v8718, 7
  %v8720 = vsub.s32 %v3958, %v8719
  %v8721 = vrot.slane %v8157, %v8720
  %v8722 = vlaneseq
  %v8723 = vshrl.u32 %v8722, 7
  %v8724 = vsub.s32 %v8189, %v8723
  %v8725 = vrot.slane %v8160, %v8724
  %v8726 = vsel %vm8194, %v8725, %v8721
  %v8727 = vlaneseq
  %v8728 = vshrl.u32 %v8727, 7
  %v8729 = vsub.s32 %v3958, %v8728
  %v8730 = vrot.slane %v8163, %v8729
  %v8731 = vlaneseq
  %v8732 = vshrl.u32 %v8731, 7
  %v8733 = vsub.s32 %v8189, %v8732
  %v8734 = vrot.slane %v8166, %v8733
  %v8735 = vsel %vm8194, %v8734, %v8730
  %v8736 = vlaneseq
  %v8737 = vshrl.u32 %v8736, 7
  %v8738 = vsub.s32 %v3958, %v8737
  %v8739 = vrot.slane %v8169, %v8738
  %v8740 = vlaneseq
  %v8741 = vshrl.u32 %v8740, 7
  %v8742 = vsub.s32 %v8189, %v8741
  %v8743 = vrot.slane %v8172, %v8742
  %v8744 = vsel %vm8194, %v8743, %v8739
  %v8745 = vlaneseq
  %v8746 = vshrl.u32 %v8745, 7
  %v8747 = vsub.s32 %v3958, %v8746
  %v8748 = vrot.slane %v8175, %v8747
  %v8749 = vlaneseq
  %v8750 = vshrl.u32 %v8749, 7
  %v8751 = vsub.s32 %v8189, %v8750
  %v8752 = vrot.slane %v8178, %v8751
  %v8753 = vsel %vm8194, %v8752, %v8748
  %v8754 = vlaneseq
  %v8755 = vshrl.u32 %v8754, 7
  %v8756 = vsub.s32 %v3958, %v8755
  %v8757 = vrot.slane %v8181, %v8756
  %v8758 = vlaneseq
  %v8759 = vshrl.u32 %v8758, 7
  %v8760 = vsub.s32 %v8189, %v8759
  %v8761 = vrot.slane %v8184, %v8760
  %v8762 = vsel %vm8194, %v8761, %v8757
  %v8763 = vsel %vm2307, %v8204, %v8195
  %v8764 = vsel %vm2310, %v8213, %v8763
  %v8765 = vsel %vm2313, %v8222, %v8764
  %v8766 = vsel %vm2316, %v8231, %v8765
  %v8767 = vsel %vm2319, %v8240, %v8766
  %v8768 = vsel %vm2322, %v8249, %v8767
  %v8769 = vsel %vm2325, %v8258, %v8768
  %v8770 = vsel %vm2307, %v8276, %v8267
  %v8771 = vsel %vm2310, %v8285, %v8770
  %v8772 = vsel %vm2313, %v8294, %v8771
  %v8773 = vsel %vm2316, %v8303, %v8772
  %v8774 = vsel %vm2319, %v8312, %v8773
  %v8775 = vsel %vm2322, %v8321, %v8774
  %v8776 = vsel %vm2325, %v8330, %v8775
  %v8777 = vsel %vm2307, %v8348, %v8339
  %v8778 = vsel %vm2310, %v8357, %v8777
  %v8779 = vsel %vm2313, %v8366, %v8778
  %v8780 = vsel %vm2316, %v8375, %v8779
  %v8781 = vsel %vm2319, %v8384, %v8780
  %v8782 = vsel %vm2322, %v8393, %v8781
  %v8783 = vsel %vm2325, %v8402, %v8782
  %v8784 = vsel %vm2307, %v8420, %v8411
  %v8785 = vsel %vm2310, %v8429, %v8784
  %v8786 = vsel %vm2313, %v8438, %v8785
  %v8787 = vsel %vm2316, %v8447, %v8786
  %v8788 = vsel %vm2319, %v8456, %v8787
  %v8789 = vsel %vm2322, %v8465, %v8788
  %v8790 = vsel %vm2325, %v8474, %v8789
  %v8791 = vsel %vm2307, %v8492, %v8483
  %v8792 = vsel %vm2310, %v8501, %v8791
  %v8793 = vsel %vm2313, %v8510, %v8792
  %v8794 = vsel %vm2316, %v8519, %v8793
  %v8795 = vsel %vm2319, %v8528, %v8794
  %v8796 = vsel %vm2322, %v8537, %v8795
  %v8797 = vsel %vm2325, %v8546, %v8796
  %v8798 = vsel %vm2307, %v8564, %v8555
  %v8799 = vsel %vm2310, %v8573, %v8798
  %v8800 = vsel %vm2313, %v8582, %v8799
  %v8801 = vsel %vm2316, %v8591, %v8800
  %v8802 = vsel %vm2319, %v8600, %v8801
  %v8803 = vsel %vm2322, %v8609, %v8802
  %v8804 = vsel %vm2325, %v8618, %v8803
  %v8805 = vsel %vm2307, %v8636, %v8627
  %v8806 = vsel %vm2310, %v8645, %v8805
  %v8807 = vsel %vm2313, %v8654, %v8806
  %v8808 = vsel %vm2316, %v8663, %v8807
  %v8809 = vsel %vm2319, %v8672, %v8808
  %v8810 = vsel %vm2322, %v8681, %v8809
  %v8811 = vsel %vm2325, %v8690, %v8810
  %v8812 = vsel %vm2307, %v8708, %v8699
  %v8813 = vsel %vm2310, %v8717, %v8812
  %v8814 = vsel %vm2313, %v8726, %v8813
  %v8815 = vsel %vm2316, %v8735, %v8814
  %v8816 = vsel %vm2319, %v8744, %v8815
  %v8817 = vsel %vm2322, %v8753, %v8816
  %v8818 = vsel %vm2325, %v8762, %v8817
  %v8827 = vsel %vm1417, %v8769, 0.0
  %8828 = vadd.xlane.f32.xlu0 %v8827
  %v8829 = vpop.xlane.xlu0 %8828
  %v8830 = vsel %vm1417, %v8776, 0.0
  %8831 = vadd.xlane.f32.xlu0 %v8830
  %v8832 = vpop.xlane.xlu0 %8831
  %v8833 = vsel %vm1417, %v8783, 0.0
  %8834 = vadd.xlane.f32.xlu0 %v8833
  %v8835 = vpop.xlane.xlu0 %8834
  %v8836 = vsel %vm1417, %v8790, 0.0
  %8837 = vadd.xlane.f32.xlu0 %v8836
  %v8838 = vpop.xlane.xlu0 %8837
  %v8839 = vsel %vm1417, %v8797, 0.0
  %8840 = vadd.xlane.f32.xlu0 %v8839
  %v8841 = vpop.xlane.xlu0 %8840
  %v8842 = vsel %vm1417, %v8804, 0.0
  %8843 = vadd.xlane.f32.xlu0 %v8842
  %v8844 = vpop.xlane.xlu0 %8843
  %v8845 = vsel %vm1417, %v8811, 0.0
  %8846 = vadd.xlane.f32.xlu0 %v8845
  %v8847 = vpop.xlane.xlu0 %8846
  %v8848 = vsel %vm1417, %v8818, 0.0
  %8849 = vadd.xlane.f32.xlu0 %v8848
  %v8850 = vpop.xlane.xlu0 %8849
  %vm8851 = vcmp.eq.s32.totalorder %v4933, 4
  %vm8852 = vcmp.eq.s32.totalorder %v4946, 4
  %vm8853 = vcmp.eq.s32.totalorder %v4959, 4
  %vm8854 = vcmp.eq.s32.totalorder %v4972, 4
  %vm8855 = vcmp.eq.s32.totalorder %v4985, 4
  %vm8856 = vcmp.eq.s32.totalorder %v4998, 4
  %vm8857 = vcmp.eq.s32.totalorder %v5011, 4
  %vm8858 = vcmp.eq.s32.totalorder %v5024, 4
  %vm8859 = vcmp.eq.s32.totalorder %v5037, 4
  %vm8860 = vcmp.eq.s32.totalorder %v5050, 4
  %vm8861 = vcmp.eq.s32.totalorder %v5063, 4
  %vm8862 = vcmp.eq.s32.totalorder %v5076, 4
  %vm8863 = vcmp.eq.s32.totalorder %v5089, 4
  %vm8864 = vcmp.eq.s32.totalorder %v5102, 4
  %vm8865 = vcmp.eq.s32.totalorder %v5115, 4
  %vm8866 = vcmp.eq.s32.totalorder %v5128, 4
  %vm8867 = vcmp.eq.s32.totalorder %v5141, 4
  %vm8868 = vcmp.eq.s32.totalorder %v5154, 4
  %vm8869 = vcmp.eq.s32.totalorder %v5167, 4
  %vm8870 = vcmp.eq.s32.totalorder %v5180, 4
  %vm8871 = vcmp.eq.s32.totalorder %v5193, 4
  %vm8872 = vcmp.eq.s32.totalorder %v5206, 4
  %vm8873 = vcmp.eq.s32.totalorder %v5219, 4
  %vm8874 = vcmp.eq.s32.totalorder %v5232, 4
  %vm8875 = vcmp.eq.s32.totalorder %v5245, 4
  %vm8876 = vcmp.eq.s32.totalorder %v5258, 4
  %vm8877 = vcmp.eq.s32.totalorder %v5271, 4
  %vm8878 = vcmp.eq.s32.totalorder %v5284, 4
  %vm8879 = vcmp.eq.s32.totalorder %v5297, 4
  %vm8880 = vcmp.eq.s32.totalorder %v5310, 4
  %vm8881 = vcmp.eq.s32.totalorder %v5323, 4
  %vm8882 = vcmp.eq.s32.totalorder %v5336, 4
  %vm8883 = vcmp.eq.s32.totalorder %v5349, 4
  %vm8884 = vcmp.eq.s32.totalorder %v5362, 4
  %vm8885 = vcmp.eq.s32.totalorder %v5375, 4
  %vm8886 = vcmp.eq.s32.totalorder %v5388, 4
  %vm8887 = vcmp.eq.s32.totalorder %v5401, 4
  %vm8888 = vcmp.eq.s32.totalorder %v5414, 4
  %vm8889 = vcmp.eq.s32.totalorder %v5427, 4
  %vm8890 = vcmp.eq.s32.totalorder %v5440, 4
  %vm8891 = vcmp.eq.s32.totalorder %v5453, 4
  %vm8892 = vcmp.eq.s32.totalorder %v5466, 4
  %vm8893 = vcmp.eq.s32.totalorder %v5479, 4
  %vm8894 = vcmp.eq.s32.totalorder %v5492, 4
  %vm8895 = vcmp.eq.s32.totalorder %v5505, 4
  %vm8896 = vcmp.eq.s32.totalorder %v5518, 4
  %vm8897 = vcmp.eq.s32.totalorder %v5531, 4
  %vm8898 = vcmp.eq.s32.totalorder %v5544, 4
  %vm8899 = vcmp.eq.s32.totalorder %v5557, 4
  %vm8900 = vcmp.eq.s32.totalorder %v5570, 4
  %vm8901 = vcmp.eq.s32.totalorder %v5583, 4
  %vm8902 = vcmp.eq.s32.totalorder %v5596, 4
  %vm8903 = vcmp.eq.s32.totalorder %v5609, 4
  %vm8904 = vcmp.eq.s32.totalorder %v5622, 4
  %vm8905 = vcmp.eq.s32.totalorder %v5635, 4
  %vm8906 = vcmp.eq.s32.totalorder %v5648, 4
  %vm8907 = vcmp.eq.s32.totalorder %v5661, 4
  %vm8908 = vcmp.eq.s32.totalorder %v5674, 4
  %vm8909 = vcmp.eq.s32.totalorder %v5687, 4
  %vm8910 = vcmp.eq.s32.totalorder %v5700, 4
  %vm8911 = vcmp.eq.s32.totalorder %v5713, 4
  %vm8912 = vcmp.eq.s32.totalorder %v5726, 4
  %vm8913 = vcmp.eq.s32.totalorder %v5739, 4
  %vm8914 = vcmp.eq.s32.totalorder %v5752, 4
  %vm8915 = vcmp.eq.s32.totalorder %v5765, 4
  %vm8916 = vcmp.eq.s32.totalorder %v5778, 4
  %vm8917 = vcmp.eq.s32.totalorder %v5791, 4
  %vm8918 = vcmp.eq.s32.totalorder %v5804, 4
  %vm8919 = vcmp.eq.s32.totalorder %v5817, 4
  %vm8920 = vcmp.eq.s32.totalorder %v5830, 4
  %vm8921 = vcmp.eq.s32.totalorder %v5843, 4
  %vm8922 = vcmp.eq.s32.totalorder %v5856, 4
  %vm8923 = vcmp.eq.s32.totalorder %v5869, 4
  %vm8924 = vcmp.eq.s32.totalorder %v5882, 4
  %vm8925 = vcmp.eq.s32.totalorder %v5895, 4
  %vm8926 = vcmp.eq.s32.totalorder %v5908, 4
  %vm8927 = vcmp.eq.s32.totalorder %v5921, 4
  %vm8928 = vcmp.eq.s32.totalorder %v5934, 4
  %vm8929 = vcmp.eq.s32.totalorder %v5947, 4
  %vm8930 = vcmp.eq.s32.totalorder %v5960, 4
  %vm8931 = vcmp.eq.s32.totalorder %v5973, 4
  %vm8932 = vcmp.eq.s32.totalorder %v5986, 4
  %vm8933 = vcmp.eq.s32.totalorder %v5999, 4
  %vm8934 = vcmp.eq.s32.totalorder %v6012, 4
  %vm8935 = vcmp.eq.s32.totalorder %v6025, 4
  %vm8936 = vcmp.eq.s32.totalorder %v6038, 4
  %vm8937 = vcmp.eq.s32.totalorder %v6051, 4
  %vm8938 = vcmp.eq.s32.totalorder %v6064, 4
  %vm8939 = vcmp.eq.s32.totalorder %v6077, 4
  %vm8940 = vcmp.eq.s32.totalorder %v6090, 4
  %vm8941 = vcmp.eq.s32.totalorder %v6103, 4
  %vm8942 = vcmp.eq.s32.totalorder %v6116, 4
  %vm8943 = vcmp.eq.s32.totalorder %v6129, 4
  %vm8944 = vcmp.eq.s32.totalorder %v6142, 4
  %vm8945 = vcmp.eq.s32.totalorder %v6155, 4
  %vm8946 = vcmp.eq.s32.totalorder %v6168, 4
  %vm8947 = vcmp.eq.s32.totalorder %v6181, 4
  %vm8948 = vcmp.eq.s32.totalorder %v6194, 4
  %vm8949 = vcmp.eq.s32.totalorder %v6207, 4
  %vm8950 = vcmp.eq.s32.totalorder %v6220, 4
  %vm8951 = vcmp.eq.s32.totalorder %v6233, 4
  %vm8952 = vcmp.eq.s32.totalorder %v6246, 4
  %vm8953 = vcmp.eq.s32.totalorder %v6259, 4
  %vm8954 = vcmp.eq.s32.totalorder %v6272, 4
  %vm8955 = vcmp.eq.s32.totalorder %v6285, 4
  %vm8956 = vcmp.eq.s32.totalorder %v6298, 4
  %vm8957 = vcmp.eq.s32.totalorder %v6311, 4
  %vm8958 = vcmp.eq.s32.totalorder %v6324, 4
  %vm8959 = vcmp.eq.s32.totalorder %v6337, 4
  %vm8960 = vcmp.eq.s32.totalorder %v6350, 4
  %vm8961 = vcmp.eq.s32.totalorder %v6363, 4
  %vm8962 = vcmp.eq.s32.totalorder %v6376, 4
  %vm8963 = vcmp.eq.s32.totalorder %v6389, 4
  %vm8964 = vcmp.eq.s32.totalorder %v6402, 4
  %vm8965 = vcmp.eq.s32.totalorder %v6415, 4
  %vm8966 = vcmp.eq.s32.totalorder %v6428, 4
  %vm8967 = vcmp.eq.s32.totalorder %v6441, 4
  %vm8968 = vcmp.eq.s32.totalorder %v6454, 4
  %vm8969 = vcmp.eq.s32.totalorder %v6467, 4
  %vm8970 = vcmp.eq.s32.totalorder %v6480, 4
  %vm8971 = vcmp.eq.s32.totalorder %v6493, 4
  %vm8972 = vcmp.eq.s32.totalorder %v6506, 4
  %vm8973 = vcmp.eq.s32.totalorder %v6519, 4
  %vm8974 = vcmp.eq.s32.totalorder %v6532, 4
  %vm8975 = vcmp.eq.s32.totalorder %v6545, 4
  %vm8976 = vcmp.eq.s32.totalorder %v6558, 4
  %vm8977 = vcmp.eq.s32.totalorder %v6571, 4
  %vm8978 = vcmp.eq.s32.totalorder %v6584, 4
  %v8979 = vsel %vm8851, %v6719, 0.0
  %v8980 = vsel %vm8852, %v6723, 0.0
  %v8981 = vsel %vm8853, %v6730, 0.0
  %v8982 = vsel %vm8854, %v6734, 0.0
  %v8983 = vsel %vm8855, %v6741, 0.0
  %v8984 = vsel %vm8856, %v6745, 0.0
  %v8985 = vsel %vm8857, %v6752, 0.0
  %v8986 = vsel %vm8858, %v6756, 0.0
  %v8987 = vsel %vm8859, %v6763, 0.0
  %v8988 = vsel %vm8860, %v6767, 0.0
  %v8989 = vsel %vm8861, %v6774, 0.0
  %v8990 = vsel %vm8862, %v6778, 0.0
  %v8991 = vsel %vm8863, %v6785, 0.0
  %v8992 = vsel %vm8864, %v6789, 0.0
  %v8993 = vsel %vm8865, %v6796, 0.0
  %v8994 = vsel %vm8866, %v6800, 0.0
  %v8995 = vsel %vm8867, %v6807, 0.0
  %v8996 = vsel %vm8868, %v6811, 0.0
  %v8997 = vsel %vm8869, %v6818, 0.0
  %v8998 = vsel %vm8870, %v6822, 0.0
  %v8999 = vsel %vm8871, %v6829, 0.0
  %v9000 = vsel %vm8872, %v6833, 0.0
  %v9001 = vsel %vm8873, %v6840, 0.0
  %v9002 = vsel %vm8874, %v6844, 0.0
  %v9003 = vsel %vm8875, %v6851, 0.0
  %v9004 = vsel %vm8876, %v6855, 0.0
  %v9005 = vsel %vm8877, %v6862, 0.0
  %v9006 = vsel %vm8878, %v6866, 0.0
  %v9007 = vsel %vm8879, %v6873, 0.0
  %v9008 = vsel %vm8880, %v6877, 0.0
  %v9009 = vsel %vm8881, %v6884, 0.0
  %v9010 = vsel %vm8882, %v6888, 0.0
  %v9011 = vsel %vm8883, %v6895, 0.0
  %v9012 = vsel %vm8884, %v6899, 0.0
  %v9013 = vsel %vm8885, %v6906, 0.0
  %v9014 = vsel %vm8886, %v6910, 0.0
  %v9015 = vsel %vm8887, %v6917, 0.0
  %v9016 = vsel %vm8888, %v6921, 0.0
  %v9017 = vsel %vm8889, %v6928, 0.0
  %v9018 = vsel %vm8890, %v6932, 0.0
  %v9019 = vsel %vm8891, %v6939, 0.0
  %v9020 = vsel %vm8892, %v6943, 0.0
  %v9021 = vsel %vm8893, %v6950, 0.0
  %v9022 = vsel %vm8894, %v6954, 0.0
  %v9023 = vsel %vm8895, %v6961, 0.0
  %v9024 = vsel %vm8896, %v6965, 0.0
  %v9025 = vsel %vm8897, %v6972, 0.0
  %v9026 = vsel %vm8898, %v6976, 0.0
  %v9027 = vsel %vm8899, %v6983, 0.0
  %v9028 = vsel %vm8900, %v6987, 0.0
  %v9029 = vsel %vm8901, %v6994, 0.0
  %v9030 = vsel %vm8902, %v6998, 0.0
  %v9031 = vsel %vm8903, %v7005, 0.0
  %v9032 = vsel %vm8904, %v7009, 0.0
  %v9033 = vsel %vm8905, %v7016, 0.0
  %v9034 = vsel %vm8906, %v7020, 0.0
  %v9035 = vsel %vm8907, %v7027, 0.0
  %v9036 = vsel %vm8908, %v7031, 0.0
  %v9037 = vsel %vm8909, %v7038, 0.0
  %v9038 = vsel %vm8910, %v7042, 0.0
  %v9039 = vsel %vm8911, %v7049, 0.0
  %v9040 = vsel %vm8912, %v7053, 0.0
  %v9041 = vsel %vm8913, %v7060, 0.0
  %v9042 = vsel %vm8914, %v7064, 0.0
  %v9043 = vsel %vm8915, %v7071, 0.0
  %v9044 = vsel %vm8916, %v7075, 0.0
  %v9045 = vsel %vm8917, %v7082, 0.0
  %v9046 = vsel %vm8918, %v7086, 0.0
  %v9047 = vsel %vm8919, %v7093, 0.0
  %v9048 = vsel %vm8920, %v7097, 0.0
  %v9049 = vsel %vm8921, %v7104, 0.0
  %v9050 = vsel %vm8922, %v7108, 0.0
  %v9051 = vsel %vm8923, %v7115, 0.0
  %v9052 = vsel %vm8924, %v7119, 0.0
  %v9053 = vsel %vm8925, %v7126, 0.0
  %v9054 = vsel %vm8926, %v7130, 0.0
  %v9055 = vsel %vm8927, %v7137, 0.0
  %v9056 = vsel %vm8928, %v7141, 0.0
  %v9057 = vsel %vm8929, %v7148, 0.0
  %v9058 = vsel %vm8930, %v7152, 0.0
  %v9059 = vsel %vm8931, %v7159, 0.0
  %v9060 = vsel %vm8932, %v7163, 0.0
  %v9061 = vsel %vm8933, %v7170, 0.0
  %v9062 = vsel %vm8934, %v7174, 0.0
  %v9063 = vsel %vm8935, %v7181, 0.0
  %v9064 = vsel %vm8936, %v7185, 0.0
  %v9065 = vsel %vm8937, %v7192, 0.0
  %v9066 = vsel %vm8938, %v7196, 0.0
  %v9067 = vsel %vm8939, %v7203, 0.0
  %v9068 = vsel %vm8940, %v7207, 0.0
  %v9069 = vsel %vm8941, %v7214, 0.0
  %v9070 = vsel %vm8942, %v7218, 0.0
  %v9071 = vsel %vm8943, %v7225, 0.0
  %v9072 = vsel %vm8944, %v7229, 0.0
  %v9073 = vsel %vm8945, %v7236, 0.0
  %v9074 = vsel %vm8946, %v7240, 0.0
  %v9075 = vsel %vm8947, %v7247, 0.0
  %v9076 = vsel %vm8948, %v7251, 0.0
  %v9077 = vsel %vm8949, %v7258, 0.0
  %v9078 = vsel %vm8950, %v7262, 0.0
  %v9079 = vsel %vm8951, %v7269, 0.0
  %v9080 = vsel %vm8952, %v7273, 0.0
  %v9081 = vsel %vm8953, %v7280, 0.0
  %v9082 = vsel %vm8954, %v7284, 0.0
  %v9083 = vsel %vm8955, %v7291, 0.0
  %v9084 = vsel %vm8956, %v7295, 0.0
  %v9085 = vsel %vm8957, %v7302, 0.0
  %v9086 = vsel %vm8958, %v7306, 0.0
  %v9087 = vsel %vm8959, %v7313, 0.0
  %v9088 = vsel %vm8960, %v7317, 0.0
  %v9089 = vsel %vm8961, %v7324, 0.0
  %v9090 = vsel %vm8962, %v7328, 0.0
  %v9091 = vsel %vm8963, %v7335, 0.0
  %v9092 = vsel %vm8964, %v7339, 0.0
  %v9093 = vsel %vm8965, %v7346, 0.0
  %v9094 = vsel %vm8966, %v7350, 0.0
  %v9095 = vsel %vm8967, %v7357, 0.0
  %v9096 = vsel %vm8968, %v7361, 0.0
  %v9097 = vsel %vm8969, %v7368, 0.0
  %v9098 = vsel %vm8970, %v7372, 0.0
  %v9099 = vsel %vm8971, %v7379, 0.0
  %v9100 = vsel %vm8972, %v7383, 0.0
  %v9101 = vsel %vm8973, %v7390, 0.0
  %v9102 = vsel %vm8974, %v7394, 0.0
  %v9103 = vsel %vm8975, %v7401, 0.0
  %v9104 = vsel %vm8976, %v7405, 0.0
  %v9105 = vsel %vm8977, %v7412, 0.0
  %v9106 = vsel %vm8978, %v7416, 0.0
  %9235 = vset.pattern.permute.xlu0 0
  %9236 = vperm.xlu0 %9235, %v8979
  %v9237 = vpop.permute.xlu0 %9236
  %9238 = vset.pattern.permute.xlu0 0
  %9239 = vperm.xlu0 %9238, %v8980
  %v9240 = vpop.permute.xlu0 %9239
  %9241 = vset.pattern.permute.xlu0 0
  %9242 = vperm.xlu0 %9241, %v8981
  %v9243 = vpop.permute.xlu0 %9242
  %9244 = vset.pattern.permute.xlu0 0
  %9245 = vperm.xlu0 %9244, %v8982
  %v9246 = vpop.permute.xlu0 %9245
  %9247 = vset.pattern.permute.xlu0 0
  %9248 = vperm.xlu0 %9247, %v8983
  %v9249 = vpop.permute.xlu0 %9248
  %9250 = vset.pattern.permute.xlu0 0
  %9251 = vperm.xlu0 %9250, %v8984
  %v9252 = vpop.permute.xlu0 %9251
  %9253 = vset.pattern.permute.xlu0 0
  %9254 = vperm.xlu0 %9253, %v8985
  %v9255 = vpop.permute.xlu0 %9254
  %9256 = vset.pattern.permute.xlu0 0
  %9257 = vperm.xlu0 %9256, %v8986
  %v9258 = vpop.permute.xlu0 %9257
  %9259 = vset.pattern.permute.xlu0 0
  %9260 = vperm.xlu0 %9259, %v8987
  %v9261 = vpop.permute.xlu0 %9260
  %9262 = vset.pattern.permute.xlu0 0
  %9263 = vperm.xlu0 %9262, %v8988
  %v9264 = vpop.permute.xlu0 %9263
  %9265 = vset.pattern.permute.xlu0 0
  %9266 = vperm.xlu0 %9265, %v8989
  %v9267 = vpop.permute.xlu0 %9266
  %9268 = vset.pattern.permute.xlu0 0
  %9269 = vperm.xlu0 %9268, %v8990
  %v9270 = vpop.permute.xlu0 %9269
  %9271 = vset.pattern.permute.xlu0 0
  %9272 = vperm.xlu0 %9271, %v8991
  %v9273 = vpop.permute.xlu0 %9272
  %9274 = vset.pattern.permute.xlu0 0
  %9275 = vperm.xlu0 %9274, %v8992
  %v9276 = vpop.permute.xlu0 %9275
  %9277 = vset.pattern.permute.xlu0 0
  %9278 = vperm.xlu0 %9277, %v8993
  %v9279 = vpop.permute.xlu0 %9278
  %9280 = vset.pattern.permute.xlu0 0
  %9281 = vperm.xlu0 %9280, %v8994
  %v9282 = vpop.permute.xlu0 %9281
  %9283 = vset.pattern.permute.xlu0 0
  %9284 = vperm.xlu0 %9283, %v8995
  %v9285 = vpop.permute.xlu0 %9284
  %9286 = vset.pattern.permute.xlu0 0
  %9287 = vperm.xlu0 %9286, %v8996
  %v9288 = vpop.permute.xlu0 %9287
  %9289 = vset.pattern.permute.xlu0 0
  %9290 = vperm.xlu0 %9289, %v8997
  %v9291 = vpop.permute.xlu0 %9290
  %9292 = vset.pattern.permute.xlu0 0
  %9293 = vperm.xlu0 %9292, %v8998
  %v9294 = vpop.permute.xlu0 %9293
  %9295 = vset.pattern.permute.xlu0 0
  %9296 = vperm.xlu0 %9295, %v8999
  %v9297 = vpop.permute.xlu0 %9296
  %9298 = vset.pattern.permute.xlu0 0
  %9299 = vperm.xlu0 %9298, %v9000
  %v9300 = vpop.permute.xlu0 %9299
  %9301 = vset.pattern.permute.xlu0 0
  %9302 = vperm.xlu0 %9301, %v9001
  %v9303 = vpop.permute.xlu0 %9302
  %9304 = vset.pattern.permute.xlu0 0
  %9305 = vperm.xlu0 %9304, %v9002
  %v9306 = vpop.permute.xlu0 %9305
  %9307 = vset.pattern.permute.xlu0 0
  %9308 = vperm.xlu0 %9307, %v9003
  %v9309 = vpop.permute.xlu0 %9308
  %9310 = vset.pattern.permute.xlu0 0
  %9311 = vperm.xlu0 %9310, %v9004
  %v9312 = vpop.permute.xlu0 %9311
  %9313 = vset.pattern.permute.xlu0 0
  %9314 = vperm.xlu0 %9313, %v9005
  %v9315 = vpop.permute.xlu0 %9314
  %9316 = vset.pattern.permute.xlu0 0
  %9317 = vperm.xlu0 %9316, %v9006
  %v9318 = vpop.permute.xlu0 %9317
  %9319 = vset.pattern.permute.xlu0 0
  %9320 = vperm.xlu0 %9319, %v9007
  %v9321 = vpop.permute.xlu0 %9320
  %9322 = vset.pattern.permute.xlu0 0
  %9323 = vperm.xlu0 %9322, %v9008
  %v9324 = vpop.permute.xlu0 %9323
  %9325 = vset.pattern.permute.xlu0 0
  %9326 = vperm.xlu0 %9325, %v9009
  %v9327 = vpop.permute.xlu0 %9326
  %9328 = vset.pattern.permute.xlu0 0
  %9329 = vperm.xlu0 %9328, %v9010
  %v9330 = vpop.permute.xlu0 %9329
  %9331 = vset.pattern.permute.xlu0 0
  %9332 = vperm.xlu0 %9331, %v9011
  %v9333 = vpop.permute.xlu0 %9332
  %9334 = vset.pattern.permute.xlu0 0
  %9335 = vperm.xlu0 %9334, %v9012
  %v9336 = vpop.permute.xlu0 %9335
  %9337 = vset.pattern.permute.xlu0 0
  %9338 = vperm.xlu0 %9337, %v9013
  %v9339 = vpop.permute.xlu0 %9338
  %9340 = vset.pattern.permute.xlu0 0
  %9341 = vperm.xlu0 %9340, %v9014
  %v9342 = vpop.permute.xlu0 %9341
  %9343 = vset.pattern.permute.xlu0 0
  %9344 = vperm.xlu0 %9343, %v9015
  %v9345 = vpop.permute.xlu0 %9344
  %9346 = vset.pattern.permute.xlu0 0
  %9347 = vperm.xlu0 %9346, %v9016
  %v9348 = vpop.permute.xlu0 %9347
  %9349 = vset.pattern.permute.xlu0 0
  %9350 = vperm.xlu0 %9349, %v9017
  %v9351 = vpop.permute.xlu0 %9350
  %9352 = vset.pattern.permute.xlu0 0
  %9353 = vperm.xlu0 %9352, %v9018
  %v9354 = vpop.permute.xlu0 %9353
  %9355 = vset.pattern.permute.xlu0 0
  %9356 = vperm.xlu0 %9355, %v9019
  %v9357 = vpop.permute.xlu0 %9356
  %9358 = vset.pattern.permute.xlu0 0
  %9359 = vperm.xlu0 %9358, %v9020
  %v9360 = vpop.permute.xlu0 %9359
  %9361 = vset.pattern.permute.xlu0 0
  %9362 = vperm.xlu0 %9361, %v9021
  %v9363 = vpop.permute.xlu0 %9362
  %9364 = vset.pattern.permute.xlu0 0
  %9365 = vperm.xlu0 %9364, %v9022
  %v9366 = vpop.permute.xlu0 %9365
  %9367 = vset.pattern.permute.xlu0 0
  %9368 = vperm.xlu0 %9367, %v9023
  %v9369 = vpop.permute.xlu0 %9368
  %9370 = vset.pattern.permute.xlu0 0
  %9371 = vperm.xlu0 %9370, %v9024
  %v9372 = vpop.permute.xlu0 %9371
  %9373 = vset.pattern.permute.xlu0 0
  %9374 = vperm.xlu0 %9373, %v9025
  %v9375 = vpop.permute.xlu0 %9374
  %9376 = vset.pattern.permute.xlu0 0
  %9377 = vperm.xlu0 %9376, %v9026
  %v9378 = vpop.permute.xlu0 %9377
  %9379 = vset.pattern.permute.xlu0 0
  %9380 = vperm.xlu0 %9379, %v9027
  %v9381 = vpop.permute.xlu0 %9380
  %9382 = vset.pattern.permute.xlu0 0
  %9383 = vperm.xlu0 %9382, %v9028
  %v9384 = vpop.permute.xlu0 %9383
  %9385 = vset.pattern.permute.xlu0 0
  %9386 = vperm.xlu0 %9385, %v9029
  %v9387 = vpop.permute.xlu0 %9386
  %9388 = vset.pattern.permute.xlu0 0
  %9389 = vperm.xlu0 %9388, %v9030
  %v9390 = vpop.permute.xlu0 %9389
  %9391 = vset.pattern.permute.xlu0 0
  %9392 = vperm.xlu0 %9391, %v9031
  %v9393 = vpop.permute.xlu0 %9392
  %9394 = vset.pattern.permute.xlu0 0
  %9395 = vperm.xlu0 %9394, %v9032
  %v9396 = vpop.permute.xlu0 %9395
  %9397 = vset.pattern.permute.xlu0 0
  %9398 = vperm.xlu0 %9397, %v9033
  %v9399 = vpop.permute.xlu0 %9398
  %9400 = vset.pattern.permute.xlu0 0
  %9401 = vperm.xlu0 %9400, %v9034
  %v9402 = vpop.permute.xlu0 %9401
  %9403 = vset.pattern.permute.xlu0 0
  %9404 = vperm.xlu0 %9403, %v9035
  %v9405 = vpop.permute.xlu0 %9404
  %9406 = vset.pattern.permute.xlu0 0
  %9407 = vperm.xlu0 %9406, %v9036
  %v9408 = vpop.permute.xlu0 %9407
  %9409 = vset.pattern.permute.xlu0 0
  %9410 = vperm.xlu0 %9409, %v9037
  %v9411 = vpop.permute.xlu0 %9410
  %9412 = vset.pattern.permute.xlu0 0
  %9413 = vperm.xlu0 %9412, %v9038
  %v9414 = vpop.permute.xlu0 %9413
  %9415 = vset.pattern.permute.xlu0 0
  %9416 = vperm.xlu0 %9415, %v9039
  %v9417 = vpop.permute.xlu0 %9416
  %9418 = vset.pattern.permute.xlu0 0
  %9419 = vperm.xlu0 %9418, %v9040
  %v9420 = vpop.permute.xlu0 %9419
  %9421 = vset.pattern.permute.xlu0 0
  %9422 = vperm.xlu0 %9421, %v9041
  %v9423 = vpop.permute.xlu0 %9422
  %9424 = vset.pattern.permute.xlu0 0
  %9425 = vperm.xlu0 %9424, %v9042
  %v9426 = vpop.permute.xlu0 %9425
  %9427 = vset.pattern.permute.xlu0 0
  %9428 = vperm.xlu0 %9427, %v9043
  %v9429 = vpop.permute.xlu0 %9428
  %9430 = vset.pattern.permute.xlu0 0
  %9431 = vperm.xlu0 %9430, %v9044
  %v9432 = vpop.permute.xlu0 %9431
  %9433 = vset.pattern.permute.xlu0 0
  %9434 = vperm.xlu0 %9433, %v9045
  %v9435 = vpop.permute.xlu0 %9434
  %9436 = vset.pattern.permute.xlu0 0
  %9437 = vperm.xlu0 %9436, %v9046
  %v9438 = vpop.permute.xlu0 %9437
  %9439 = vset.pattern.permute.xlu0 0
  %9440 = vperm.xlu0 %9439, %v9047
  %v9441 = vpop.permute.xlu0 %9440
  %9442 = vset.pattern.permute.xlu0 0
  %9443 = vperm.xlu0 %9442, %v9048
  %v9444 = vpop.permute.xlu0 %9443
  %9445 = vset.pattern.permute.xlu0 0
  %9446 = vperm.xlu0 %9445, %v9049
  %v9447 = vpop.permute.xlu0 %9446
  %9448 = vset.pattern.permute.xlu0 0
  %9449 = vperm.xlu0 %9448, %v9050
  %v9450 = vpop.permute.xlu0 %9449
  %9451 = vset.pattern.permute.xlu0 0
  %9452 = vperm.xlu0 %9451, %v9051
  %v9453 = vpop.permute.xlu0 %9452
  %9454 = vset.pattern.permute.xlu0 0
  %9455 = vperm.xlu0 %9454, %v9052
  %v9456 = vpop.permute.xlu0 %9455
  %9457 = vset.pattern.permute.xlu0 0
  %9458 = vperm.xlu0 %9457, %v9053
  %v9459 = vpop.permute.xlu0 %9458
  %9460 = vset.pattern.permute.xlu0 0
  %9461 = vperm.xlu0 %9460, %v9054
  %v9462 = vpop.permute.xlu0 %9461
  %9463 = vset.pattern.permute.xlu0 0
  %9464 = vperm.xlu0 %9463, %v9055
  %v9465 = vpop.permute.xlu0 %9464
  %9466 = vset.pattern.permute.xlu0 0
  %9467 = vperm.xlu0 %9466, %v9056
  %v9468 = vpop.permute.xlu0 %9467
  %9469 = vset.pattern.permute.xlu0 0
  %9470 = vperm.xlu0 %9469, %v9057
  %v9471 = vpop.permute.xlu0 %9470
  %9472 = vset.pattern.permute.xlu0 0
  %9473 = vperm.xlu0 %9472, %v9058
  %v9474 = vpop.permute.xlu0 %9473
  %9475 = vset.pattern.permute.xlu0 0
  %9476 = vperm.xlu0 %9475, %v9059
  %v9477 = vpop.permute.xlu0 %9476
  %9478 = vset.pattern.permute.xlu0 0
  %9479 = vperm.xlu0 %9478, %v9060
  %v9480 = vpop.permute.xlu0 %9479
  %9481 = vset.pattern.permute.xlu0 0
  %9482 = vperm.xlu0 %9481, %v9061
  %v9483 = vpop.permute.xlu0 %9482
  %9484 = vset.pattern.permute.xlu0 0
  %9485 = vperm.xlu0 %9484, %v9062
  %v9486 = vpop.permute.xlu0 %9485
  %9487 = vset.pattern.permute.xlu0 0
  %9488 = vperm.xlu0 %9487, %v9063
  %v9489 = vpop.permute.xlu0 %9488
  %9490 = vset.pattern.permute.xlu0 0
  %9491 = vperm.xlu0 %9490, %v9064
  %v9492 = vpop.permute.xlu0 %9491
  %9493 = vset.pattern.permute.xlu0 0
  %9494 = vperm.xlu0 %9493, %v9065
  %v9495 = vpop.permute.xlu0 %9494
  %9496 = vset.pattern.permute.xlu0 0
  %9497 = vperm.xlu0 %9496, %v9066
  %v9498 = vpop.permute.xlu0 %9497
  %9499 = vset.pattern.permute.xlu0 0
  %9500 = vperm.xlu0 %9499, %v9067
  %v9501 = vpop.permute.xlu0 %9500
  %9502 = vset.pattern.permute.xlu0 0
  %9503 = vperm.xlu0 %9502, %v9068
  %v9504 = vpop.permute.xlu0 %9503
  %9505 = vset.pattern.permute.xlu0 0
  %9506 = vperm.xlu0 %9505, %v9069
  %v9507 = vpop.permute.xlu0 %9506
  %9508 = vset.pattern.permute.xlu0 0
  %9509 = vperm.xlu0 %9508, %v9070
  %v9510 = vpop.permute.xlu0 %9509
  %9511 = vset.pattern.permute.xlu0 0
  %9512 = vperm.xlu0 %9511, %v9071
  %v9513 = vpop.permute.xlu0 %9512
  %9514 = vset.pattern.permute.xlu0 0
  %9515 = vperm.xlu0 %9514, %v9072
  %v9516 = vpop.permute.xlu0 %9515
  %9517 = vset.pattern.permute.xlu0 0
  %9518 = vperm.xlu0 %9517, %v9073
  %v9519 = vpop.permute.xlu0 %9518
  %9520 = vset.pattern.permute.xlu0 0
  %9521 = vperm.xlu0 %9520, %v9074
  %v9522 = vpop.permute.xlu0 %9521
  %9523 = vset.pattern.permute.xlu0 0
  %9524 = vperm.xlu0 %9523, %v9075
  %v9525 = vpop.permute.xlu0 %9524
  %9526 = vset.pattern.permute.xlu0 0
  %9527 = vperm.xlu0 %9526, %v9076
  %v9528 = vpop.permute.xlu0 %9527
  %9529 = vset.pattern.permute.xlu0 0
  %9530 = vperm.xlu0 %9529, %v9077
  %v9531 = vpop.permute.xlu0 %9530
  %9532 = vset.pattern.permute.xlu0 0
  %9533 = vperm.xlu0 %9532, %v9078
  %v9534 = vpop.permute.xlu0 %9533
  %9535 = vset.pattern.permute.xlu0 0
  %9536 = vperm.xlu0 %9535, %v9079
  %v9537 = vpop.permute.xlu0 %9536
  %9538 = vset.pattern.permute.xlu0 0
  %9539 = vperm.xlu0 %9538, %v9080
  %v9540 = vpop.permute.xlu0 %9539
  %9541 = vset.pattern.permute.xlu0 0
  %9542 = vperm.xlu0 %9541, %v9081
  %v9543 = vpop.permute.xlu0 %9542
  %9544 = vset.pattern.permute.xlu0 0
  %9545 = vperm.xlu0 %9544, %v9082
  %v9546 = vpop.permute.xlu0 %9545
  %9547 = vset.pattern.permute.xlu0 0
  %9548 = vperm.xlu0 %9547, %v9083
  %v9549 = vpop.permute.xlu0 %9548
  %9550 = vset.pattern.permute.xlu0 0
  %9551 = vperm.xlu0 %9550, %v9084
  %v9552 = vpop.permute.xlu0 %9551
  %9553 = vset.pattern.permute.xlu0 0
  %9554 = vperm.xlu0 %9553, %v9085
  %v9555 = vpop.permute.xlu0 %9554
  %9556 = vset.pattern.permute.xlu0 0
  %9557 = vperm.xlu0 %9556, %v9086
  %v9558 = vpop.permute.xlu0 %9557
  %9559 = vset.pattern.permute.xlu0 0
  %9560 = vperm.xlu0 %9559, %v9087
  %v9561 = vpop.permute.xlu0 %9560
  %9562 = vset.pattern.permute.xlu0 0
  %9563 = vperm.xlu0 %9562, %v9088
  %v9564 = vpop.permute.xlu0 %9563
  %9565 = vset.pattern.permute.xlu0 0
  %9566 = vperm.xlu0 %9565, %v9089
  %v9567 = vpop.permute.xlu0 %9566
  %9568 = vset.pattern.permute.xlu0 0
  %9569 = vperm.xlu0 %9568, %v9090
  %v9570 = vpop.permute.xlu0 %9569
  %9571 = vset.pattern.permute.xlu0 0
  %9572 = vperm.xlu0 %9571, %v9091
  %v9573 = vpop.permute.xlu0 %9572
  %9574 = vset.pattern.permute.xlu0 0
  %9575 = vperm.xlu0 %9574, %v9092
  %v9576 = vpop.permute.xlu0 %9575
  %9577 = vset.pattern.permute.xlu0 0
  %9578 = vperm.xlu0 %9577, %v9093
  %v9579 = vpop.permute.xlu0 %9578
  %9580 = vset.pattern.permute.xlu0 0
  %9581 = vperm.xlu0 %9580, %v9094
  %v9582 = vpop.permute.xlu0 %9581
  %9583 = vset.pattern.permute.xlu0 0
  %9584 = vperm.xlu0 %9583, %v9095
  %v9585 = vpop.permute.xlu0 %9584
  %9586 = vset.pattern.permute.xlu0 0
  %9587 = vperm.xlu0 %9586, %v9096
  %v9588 = vpop.permute.xlu0 %9587
  %9589 = vset.pattern.permute.xlu0 0
  %9590 = vperm.xlu0 %9589, %v9097
  %v9591 = vpop.permute.xlu0 %9590
  %9592 = vset.pattern.permute.xlu0 0
  %9593 = vperm.xlu0 %9592, %v9098
  %v9594 = vpop.permute.xlu0 %9593
  %9595 = vset.pattern.permute.xlu0 0
  %9596 = vperm.xlu0 %9595, %v9099
  %v9597 = vpop.permute.xlu0 %9596
  %9598 = vset.pattern.permute.xlu0 0
  %9599 = vperm.xlu0 %9598, %v9100
  %v9600 = vpop.permute.xlu0 %9599
  %9601 = vset.pattern.permute.xlu0 0
  %9602 = vperm.xlu0 %9601, %v9101
  %v9603 = vpop.permute.xlu0 %9602
  %9604 = vset.pattern.permute.xlu0 0
  %9605 = vperm.xlu0 %9604, %v9102
  %v9606 = vpop.permute.xlu0 %9605
  %9607 = vset.pattern.permute.xlu0 0
  %9608 = vperm.xlu0 %9607, %v9103
  %v9609 = vpop.permute.xlu0 %9608
  %9610 = vset.pattern.permute.xlu0 0
  %9611 = vperm.xlu0 %9610, %v9104
  %v9612 = vpop.permute.xlu0 %9611
  %9613 = vset.pattern.permute.xlu0 0
  %9614 = vperm.xlu0 %9613, %v9105
  %v9615 = vpop.permute.xlu0 %9614
  %9616 = vset.pattern.permute.xlu0 0
  %9617 = vperm.xlu0 %9616, %v9106
  %v9618 = vpop.permute.xlu0 %9617
  %v9619 = vlaneseq
  %v9620 = vshrl.u32 %v9619, 7
  %v9621 = vsub.s32 %v3958, %v9620
  %v9622 = vrot.slane %v9237, %v9621
  %v9623 = vlaneseq
  %v9624 = vshrl.u32 %v9623, 7
  %v9625 = vsub.s32 %v8189, %v9624
  %v9626 = vrot.slane %v9240, %v9625
  %v9627 = vsel %vm8194, %v9626, %v9622
  %v9628 = vlaneseq
  %v9629 = vshrl.u32 %v9628, 7
  %v9630 = vsub.s32 %v3958, %v9629
  %v9631 = vrot.slane %v9243, %v9630
  %v9632 = vlaneseq
  %v9633 = vshrl.u32 %v9632, 7
  %v9634 = vsub.s32 %v8189, %v9633
  %v9635 = vrot.slane %v9246, %v9634
  %v9636 = vsel %vm8194, %v9635, %v9631
  %v9637 = vlaneseq
  %v9638 = vshrl.u32 %v9637, 7
  %v9639 = vsub.s32 %v3958, %v9638
  %v9640 = vrot.slane %v9249, %v9639
  %v9641 = vlaneseq
  %v9642 = vshrl.u32 %v9641, 7
  %v9643 = vsub.s32 %v8189, %v9642
  %v9644 = vrot.slane %v9252, %v9643
  %v9645 = vsel %vm8194, %v9644, %v9640
  %v9646 = vlaneseq
  %v9647 = vshrl.u32 %v9646, 7
  %v9648 = vsub.s32 %v3958, %v9647
  %v9649 = vrot.slane %v9255, %v9648
  %v9650 = vlaneseq
  %v9651 = vshrl.u32 %v9650, 7
  %v9652 = vsub.s32 %v8189, %v9651
  %v9653 = vrot.slane %v9258, %v9652
  %v9654 = vsel %vm8194, %v9653, %v9649
  %v9655 = vlaneseq
  %v9656 = vshrl.u32 %v9655, 7
  %v9657 = vsub.s32 %v3958, %v9656
  %v9658 = vrot.slane %v9261, %v9657
  %v9659 = vlaneseq
  %v9660 = vshrl.u32 %v9659, 7
  %v9661 = vsub.s32 %v8189, %v9660
  %v9662 = vrot.slane %v9264, %v9661
  %v9663 = vsel %vm8194, %v9662, %v9658
  %v9664 = vlaneseq
  %v9665 = vshrl.u32 %v9664, 7
  %v9666 = vsub.s32 %v3958, %v9665
  %v9667 = vrot.slane %v9267, %v9666
  %v9668 = vlaneseq
  %v9669 = vshrl.u32 %v9668, 7
  %v9670 = vsub.s32 %v8189, %v9669
  %v9671 = vrot.slane %v9270, %v9670
  %v9672 = vsel %vm8194, %v9671, %v9667
  %v9673 = vlaneseq
  %v9674 = vshrl.u32 %v9673, 7
  %v9675 = vsub.s32 %v3958, %v9674
  %v9676 = vrot.slane %v9273, %v9675
  %v9677 = vlaneseq
  %v9678 = vshrl.u32 %v9677, 7
  %v9679 = vsub.s32 %v8189, %v9678
  %v9680 = vrot.slane %v9276, %v9679
  %v9681 = vsel %vm8194, %v9680, %v9676
  %v9682 = vlaneseq
  %v9683 = vshrl.u32 %v9682, 7
  %v9684 = vsub.s32 %v3958, %v9683
  %v9685 = vrot.slane %v9279, %v9684
  %v9686 = vlaneseq
  %v9687 = vshrl.u32 %v9686, 7
  %v9688 = vsub.s32 %v8189, %v9687
  %v9689 = vrot.slane %v9282, %v9688
  %v9690 = vsel %vm8194, %v9689, %v9685
  %v9691 = vlaneseq
  %v9692 = vshrl.u32 %v9691, 7
  %v9693 = vsub.s32 %v3958, %v9692
  %v9694 = vrot.slane %v9285, %v9693
  %v9695 = vlaneseq
  %v9696 = vshrl.u32 %v9695, 7
  %v9697 = vsub.s32 %v8189, %v9696
  %v9698 = vrot.slane %v9288, %v9697
  %v9699 = vsel %vm8194, %v9698, %v9694
  %v9700 = vlaneseq
  %v9701 = vshrl.u32 %v9700, 7
  %v9702 = vsub.s32 %v3958, %v9701
  %v9703 = vrot.slane %v9291, %v9702
  %v9704 = vlaneseq
  %v9705 = vshrl.u32 %v9704, 7
  %v9706 = vsub.s32 %v8189, %v9705
  %v9707 = vrot.slane %v9294, %v9706
  %v9708 = vsel %vm8194, %v9707, %v9703
  %v9709 = vlaneseq
  %v9710 = vshrl.u32 %v9709, 7
  %v9711 = vsub.s32 %v3958, %v9710
  %v9712 = vrot.slane %v9297, %v9711
  %v9713 = vlaneseq
  %v9714 = vshrl.u32 %v9713, 7
  %v9715 = vsub.s32 %v8189, %v9714
  %v9716 = vrot.slane %v9300, %v9715
  %v9717 = vsel %vm8194, %v9716, %v9712
  %v9718 = vlaneseq
  %v9719 = vshrl.u32 %v9718, 7
  %v9720 = vsub.s32 %v3958, %v9719
  %v9721 = vrot.slane %v9303, %v9720
  %v9722 = vlaneseq
  %v9723 = vshrl.u32 %v9722, 7
  %v9724 = vsub.s32 %v8189, %v9723
  %v9725 = vrot.slane %v9306, %v9724
  %v9726 = vsel %vm8194, %v9725, %v9721
  %v9727 = vlaneseq
  %v9728 = vshrl.u32 %v9727, 7
  %v9729 = vsub.s32 %v3958, %v9728
  %v9730 = vrot.slane %v9309, %v9729
  %v9731 = vlaneseq
  %v9732 = vshrl.u32 %v9731, 7
  %v9733 = vsub.s32 %v8189, %v9732
  %v9734 = vrot.slane %v9312, %v9733
  %v9735 = vsel %vm8194, %v9734, %v9730
  %v9736 = vlaneseq
  %v9737 = vshrl.u32 %v9736, 7
  %v9738 = vsub.s32 %v3958, %v9737
  %v9739 = vrot.slane %v9315, %v9738
  %v9740 = vlaneseq
  %v9741 = vshrl.u32 %v9740, 7
  %v9742 = vsub.s32 %v8189, %v9741
  %v9743 = vrot.slane %v9318, %v9742
  %v9744 = vsel %vm8194, %v9743, %v9739
  %v9745 = vlaneseq
  %v9746 = vshrl.u32 %v9745, 7
  %v9747 = vsub.s32 %v3958, %v9746
  %v9748 = vrot.slane %v9321, %v9747
  %v9749 = vlaneseq
  %v9750 = vshrl.u32 %v9749, 7
  %v9751 = vsub.s32 %v8189, %v9750
  %v9752 = vrot.slane %v9324, %v9751
  %v9753 = vsel %vm8194, %v9752, %v9748
  %v9754 = vlaneseq
  %v9755 = vshrl.u32 %v9754, 7
  %v9756 = vsub.s32 %v3958, %v9755
  %v9757 = vrot.slane %v9327, %v9756
  %v9758 = vlaneseq
  %v9759 = vshrl.u32 %v9758, 7
  %v9760 = vsub.s32 %v8189, %v9759
  %v9761 = vrot.slane %v9330, %v9760
  %v9762 = vsel %vm8194, %v9761, %v9757
  %v9763 = vlaneseq
  %v9764 = vshrl.u32 %v9763, 7
  %v9765 = vsub.s32 %v3958, %v9764
  %v9766 = vrot.slane %v9333, %v9765
  %v9767 = vlaneseq
  %v9768 = vshrl.u32 %v9767, 7
  %v9769 = vsub.s32 %v8189, %v9768
  %v9770 = vrot.slane %v9336, %v9769
  %v9771 = vsel %vm8194, %v9770, %v9766
  %v9772 = vlaneseq
  %v9773 = vshrl.u32 %v9772, 7
  %v9774 = vsub.s32 %v3958, %v9773
  %v9775 = vrot.slane %v9339, %v9774
  %v9776 = vlaneseq
  %v9777 = vshrl.u32 %v9776, 7
  %v9778 = vsub.s32 %v8189, %v9777
  %v9779 = vrot.slane %v9342, %v9778
  %v9780 = vsel %vm8194, %v9779, %v9775
  %v9781 = vlaneseq
  %v9782 = vshrl.u32 %v9781, 7
  %v9783 = vsub.s32 %v3958, %v9782
  %v9784 = vrot.slane %v9345, %v9783
  %v9785 = vlaneseq
  %v9786 = vshrl.u32 %v9785, 7
  %v9787 = vsub.s32 %v8189, %v9786
  %v9788 = vrot.slane %v9348, %v9787
  %v9789 = vsel %vm8194, %v9788, %v9784
  %v9790 = vlaneseq
  %v9791 = vshrl.u32 %v9790, 7
  %v9792 = vsub.s32 %v3958, %v9791
  %v9793 = vrot.slane %v9351, %v9792
  %v9794 = vlaneseq
  %v9795 = vshrl.u32 %v9794, 7
  %v9796 = vsub.s32 %v8189, %v9795
  %v9797 = vrot.slane %v9354, %v9796
  %v9798 = vsel %vm8194, %v9797, %v9793
  %v9799 = vlaneseq
  %v9800 = vshrl.u32 %v9799, 7
  %v9801 = vsub.s32 %v3958, %v9800
  %v9802 = vrot.slane %v9357, %v9801
  %v9803 = vlaneseq
  %v9804 = vshrl.u32 %v9803, 7
  %v9805 = vsub.s32 %v8189, %v9804
  %v9806 = vrot.slane %v9360, %v9805
  %v9807 = vsel %vm8194, %v9806, %v9802
  %v9808 = vlaneseq
  %v9809 = vshrl.u32 %v9808, 7
  %v9810 = vsub.s32 %v3958, %v9809
  %v9811 = vrot.slane %v9363, %v9810
  %v9812 = vlaneseq
  %v9813 = vshrl.u32 %v9812, 7
  %v9814 = vsub.s32 %v8189, %v9813
  %v9815 = vrot.slane %v9366, %v9814
  %v9816 = vsel %vm8194, %v9815, %v9811
  %v9817 = vlaneseq
  %v9818 = vshrl.u32 %v9817, 7
  %v9819 = vsub.s32 %v3958, %v9818
  %v9820 = vrot.slane %v9369, %v9819
  %v9821 = vlaneseq
  %v9822 = vshrl.u32 %v9821, 7
  %v9823 = vsub.s32 %v8189, %v9822
  %v9824 = vrot.slane %v9372, %v9823
  %v9825 = vsel %vm8194, %v9824, %v9820
  %v9826 = vlaneseq
  %v9827 = vshrl.u32 %v9826, 7
  %v9828 = vsub.s32 %v3958, %v9827
  %v9829 = vrot.slane %v9375, %v9828
  %v9830 = vlaneseq
  %v9831 = vshrl.u32 %v9830, 7
  %v9832 = vsub.s32 %v8189, %v9831
  %v9833 = vrot.slane %v9378, %v9832
  %v9834 = vsel %vm8194, %v9833, %v9829
  %v9835 = vlaneseq
  %v9836 = vshrl.u32 %v9835, 7
  %v9837 = vsub.s32 %v3958, %v9836
  %v9838 = vrot.slane %v9381, %v9837
  %v9839 = vlaneseq
  %v9840 = vshrl.u32 %v9839, 7
  %v9841 = vsub.s32 %v8189, %v9840
  %v9842 = vrot.slane %v9384, %v9841
  %v9843 = vsel %vm8194, %v9842, %v9838
  %v9844 = vlaneseq
  %v9845 = vshrl.u32 %v9844, 7
  %v9846 = vsub.s32 %v3958, %v9845
  %v9847 = vrot.slane %v9387, %v9846
  %v9848 = vlaneseq
  %v9849 = vshrl.u32 %v9848, 7
  %v9850 = vsub.s32 %v8189, %v9849
  %v9851 = vrot.slane %v9390, %v9850
  %v9852 = vsel %vm8194, %v9851, %v9847
  %v9853 = vlaneseq
  %v9854 = vshrl.u32 %v9853, 7
  %v9855 = vsub.s32 %v3958, %v9854
  %v9856 = vrot.slane %v9393, %v9855
  %v9857 = vlaneseq
  %v9858 = vshrl.u32 %v9857, 7
  %v9859 = vsub.s32 %v8189, %v9858
  %v9860 = vrot.slane %v9396, %v9859
  %v9861 = vsel %vm8194, %v9860, %v9856
  %v9862 = vlaneseq
  %v9863 = vshrl.u32 %v9862, 7
  %v9864 = vsub.s32 %v3958, %v9863
  %v9865 = vrot.slane %v9399, %v9864
  %v9866 = vlaneseq
  %v9867 = vshrl.u32 %v9866, 7
  %v9868 = vsub.s32 %v8189, %v9867
  %v9869 = vrot.slane %v9402, %v9868
  %v9870 = vsel %vm8194, %v9869, %v9865
  %v9871 = vlaneseq
  %v9872 = vshrl.u32 %v9871, 7
  %v9873 = vsub.s32 %v3958, %v9872
  %v9874 = vrot.slane %v9405, %v9873
  %v9875 = vlaneseq
  %v9876 = vshrl.u32 %v9875, 7
  %v9877 = vsub.s32 %v8189, %v9876
  %v9878 = vrot.slane %v9408, %v9877
  %v9879 = vsel %vm8194, %v9878, %v9874
  %v9880 = vlaneseq
  %v9881 = vshrl.u32 %v9880, 7
  %v9882 = vsub.s32 %v3958, %v9881
  %v9883 = vrot.slane %v9411, %v9882
  %v9884 = vlaneseq
  %v9885 = vshrl.u32 %v9884, 7
  %v9886 = vsub.s32 %v8189, %v9885
  %v9887 = vrot.slane %v9414, %v9886
  %v9888 = vsel %vm8194, %v9887, %v9883
  %v9889 = vlaneseq
  %v9890 = vshrl.u32 %v9889, 7
  %v9891 = vsub.s32 %v3958, %v9890
  %v9892 = vrot.slane %v9417, %v9891
  %v9893 = vlaneseq
  %v9894 = vshrl.u32 %v9893, 7
  %v9895 = vsub.s32 %v8189, %v9894
  %v9896 = vrot.slane %v9420, %v9895
  %v9897 = vsel %vm8194, %v9896, %v9892
  %v9898 = vlaneseq
  %v9899 = vshrl.u32 %v9898, 7
  %v9900 = vsub.s32 %v3958, %v9899
  %v9901 = vrot.slane %v9423, %v9900
  %v9902 = vlaneseq
  %v9903 = vshrl.u32 %v9902, 7
  %v9904 = vsub.s32 %v8189, %v9903
  %v9905 = vrot.slane %v9426, %v9904
  %v9906 = vsel %vm8194, %v9905, %v9901
  %v9907 = vlaneseq
  %v9908 = vshrl.u32 %v9907, 7
  %v9909 = vsub.s32 %v3958, %v9908
  %v9910 = vrot.slane %v9429, %v9909
  %v9911 = vlaneseq
  %v9912 = vshrl.u32 %v9911, 7
  %v9913 = vsub.s32 %v8189, %v9912
  %v9914 = vrot.slane %v9432, %v9913
  %v9915 = vsel %vm8194, %v9914, %v9910
  %v9916 = vlaneseq
  %v9917 = vshrl.u32 %v9916, 7
  %v9918 = vsub.s32 %v3958, %v9917
  %v9919 = vrot.slane %v9435, %v9918
  %v9920 = vlaneseq
  %v9921 = vshrl.u32 %v9920, 7
  %v9922 = vsub.s32 %v8189, %v9921
  %v9923 = vrot.slane %v9438, %v9922
  %v9924 = vsel %vm8194, %v9923, %v9919
  %v9925 = vlaneseq
  %v9926 = vshrl.u32 %v9925, 7
  %v9927 = vsub.s32 %v3958, %v9926
  %v9928 = vrot.slane %v9441, %v9927
  %v9929 = vlaneseq
  %v9930 = vshrl.u32 %v9929, 7
  %v9931 = vsub.s32 %v8189, %v9930
  %v9932 = vrot.slane %v9444, %v9931
  %v9933 = vsel %vm8194, %v9932, %v9928
  %v9934 = vlaneseq
  %v9935 = vshrl.u32 %v9934, 7
  %v9936 = vsub.s32 %v3958, %v9935
  %v9937 = vrot.slane %v9447, %v9936
  %v9938 = vlaneseq
  %v9939 = vshrl.u32 %v9938, 7
  %v9940 = vsub.s32 %v8189, %v9939
  %v9941 = vrot.slane %v9450, %v9940
  %v9942 = vsel %vm8194, %v9941, %v9937
  %v9943 = vlaneseq
  %v9944 = vshrl.u32 %v9943, 7
  %v9945 = vsub.s32 %v3958, %v9944
  %v9946 = vrot.slane %v9453, %v9945
  %v9947 = vlaneseq
  %v9948 = vshrl.u32 %v9947, 7
  %v9949 = vsub.s32 %v8189, %v9948
  %v9950 = vrot.slane %v9456, %v9949
  %v9951 = vsel %vm8194, %v9950, %v9946
  %v9952 = vlaneseq
  %v9953 = vshrl.u32 %v9952, 7
  %v9954 = vsub.s32 %v3958, %v9953
  %v9955 = vrot.slane %v9459, %v9954
  %v9956 = vlaneseq
  %v9957 = vshrl.u32 %v9956, 7
  %v9958 = vsub.s32 %v8189, %v9957
  %v9959 = vrot.slane %v9462, %v9958
  %v9960 = vsel %vm8194, %v9959, %v9955
  %v9961 = vlaneseq
  %v9962 = vshrl.u32 %v9961, 7
  %v9963 = vsub.s32 %v3958, %v9962
  %v9964 = vrot.slane %v9465, %v9963
  %v9965 = vlaneseq
  %v9966 = vshrl.u32 %v9965, 7
  %v9967 = vsub.s32 %v8189, %v9966
  %v9968 = vrot.slane %v9468, %v9967
  %v9969 = vsel %vm8194, %v9968, %v9964
  %v9970 = vlaneseq
  %v9971 = vshrl.u32 %v9970, 7
  %v9972 = vsub.s32 %v3958, %v9971
  %v9973 = vrot.slane %v9471, %v9972
  %v9974 = vlaneseq
  %v9975 = vshrl.u32 %v9974, 7
  %v9976 = vsub.s32 %v8189, %v9975
  %v9977 = vrot.slane %v9474, %v9976
  %v9978 = vsel %vm8194, %v9977, %v9973
  %v9979 = vlaneseq
  %v9980 = vshrl.u32 %v9979, 7
  %v9981 = vsub.s32 %v3958, %v9980
  %v9982 = vrot.slane %v9477, %v9981
  %v9983 = vlaneseq
  %v9984 = vshrl.u32 %v9983, 7
  %v9985 = vsub.s32 %v8189, %v9984
  %v9986 = vrot.slane %v9480, %v9985
  %v9987 = vsel %vm8194, %v9986, %v9982
  %v9988 = vlaneseq
  %v9989 = vshrl.u32 %v9988, 7
  %v9990 = vsub.s32 %v3958, %v9989
  %v9991 = vrot.slane %v9483, %v9990
  %v9992 = vlaneseq
  %v9993 = vshrl.u32 %v9992, 7
  %v9994 = vsub.s32 %v8189, %v9993
  %v9995 = vrot.slane %v9486, %v9994
  %v9996 = vsel %vm8194, %v9995, %v9991
  %v9997 = vlaneseq
  %v9998 = vshrl.u32 %v9997, 7
  %v9999 = vsub.s32 %v3958, %v9998
  %v10000 = vrot.slane %v9489, %v9999
  %v10001 = vlaneseq
  %v10002 = vshrl.u32 %v10001, 7
  %v10003 = vsub.s32 %v8189, %v10002
  %v10004 = vrot.slane %v9492, %v10003
  %v10005 = vsel %vm8194, %v10004, %v10000
  %v10006 = vlaneseq
  %v10007 = vshrl.u32 %v10006, 7
  %v10008 = vsub.s32 %v3958, %v10007
  %v10009 = vrot.slane %v9495, %v10008
  %v10010 = vlaneseq
  %v10011 = vshrl.u32 %v10010, 7
  %v10012 = vsub.s32 %v8189, %v10011
  %v10013 = vrot.slane %v9498, %v10012
  %v10014 = vsel %vm8194, %v10013, %v10009
  %v10015 = vlaneseq
  %v10016 = vshrl.u32 %v10015, 7
  %v10017 = vsub.s32 %v3958, %v10016
  %v10018 = vrot.slane %v9501, %v10017
  %v10019 = vlaneseq
  %v10020 = vshrl.u32 %v10019, 7
  %v10021 = vsub.s32 %v8189, %v10020
  %v10022 = vrot.slane %v9504, %v10021
  %v10023 = vsel %vm8194, %v10022, %v10018
  %v10024 = vlaneseq
  %v10025 = vshrl.u32 %v10024, 7
  %v10026 = vsub.s32 %v3958, %v10025
  %v10027 = vrot.slane %v9507, %v10026
  %v10028 = vlaneseq
  %v10029 = vshrl.u32 %v10028, 7
  %v10030 = vsub.s32 %v8189, %v10029
  %v10031 = vrot.slane %v9510, %v10030
  %v10032 = vsel %vm8194, %v10031, %v10027
  %v10033 = vlaneseq
  %v10034 = vshrl.u32 %v10033, 7
  %v10035 = vsub.s32 %v3958, %v10034
  %v10036 = vrot.slane %v9513, %v10035
  %v10037 = vlaneseq
  %v10038 = vshrl.u32 %v10037, 7
  %v10039 = vsub.s32 %v8189, %v10038
  %v10040 = vrot.slane %v9516, %v10039
  %v10041 = vsel %vm8194, %v10040, %v10036
  %v10042 = vlaneseq
  %v10043 = vshrl.u32 %v10042, 7
  %v10044 = vsub.s32 %v3958, %v10043
  %v10045 = vrot.slane %v9519, %v10044
  %v10046 = vlaneseq
  %v10047 = vshrl.u32 %v10046, 7
  %v10048 = vsub.s32 %v8189, %v10047
  %v10049 = vrot.slane %v9522, %v10048
  %v10050 = vsel %vm8194, %v10049, %v10045
  %v10051 = vlaneseq
  %v10052 = vshrl.u32 %v10051, 7
  %v10053 = vsub.s32 %v3958, %v10052
  %v10054 = vrot.slane %v9525, %v10053
  %v10055 = vlaneseq
  %v10056 = vshrl.u32 %v10055, 7
  %v10057 = vsub.s32 %v8189, %v10056
  %v10058 = vrot.slane %v9528, %v10057
  %v10059 = vsel %vm8194, %v10058, %v10054
  %v10060 = vlaneseq
  %v10061 = vshrl.u32 %v10060, 7
  %v10062 = vsub.s32 %v3958, %v10061
  %v10063 = vrot.slane %v9531, %v10062
  %v10064 = vlaneseq
  %v10065 = vshrl.u32 %v10064, 7
  %v10066 = vsub.s32 %v8189, %v10065
  %v10067 = vrot.slane %v9534, %v10066
  %v10068 = vsel %vm8194, %v10067, %v10063
  %v10069 = vlaneseq
  %v10070 = vshrl.u32 %v10069, 7
  %v10071 = vsub.s32 %v3958, %v10070
  %v10072 = vrot.slane %v9537, %v10071
  %v10073 = vlaneseq
  %v10074 = vshrl.u32 %v10073, 7
  %v10075 = vsub.s32 %v8189, %v10074
  %v10076 = vrot.slane %v9540, %v10075
  %v10077 = vsel %vm8194, %v10076, %v10072
  %v10078 = vlaneseq
  %v10079 = vshrl.u32 %v10078, 7
  %v10080 = vsub.s32 %v3958, %v10079
  %v10081 = vrot.slane %v9543, %v10080
  %v10082 = vlaneseq
  %v10083 = vshrl.u32 %v10082, 7
  %v10084 = vsub.s32 %v8189, %v10083
  %v10085 = vrot.slane %v9546, %v10084
  %v10086 = vsel %vm8194, %v10085, %v10081
  %v10087 = vlaneseq
  %v10088 = vshrl.u32 %v10087, 7
  %v10089 = vsub.s32 %v3958, %v10088
  %v10090 = vrot.slane %v9549, %v10089
  %v10091 = vlaneseq
  %v10092 = vshrl.u32 %v10091, 7
  %v10093 = vsub.s32 %v8189, %v10092
  %v10094 = vrot.slane %v9552, %v10093
  %v10095 = vsel %vm8194, %v10094, %v10090
  %v10096 = vlaneseq
  %v10097 = vshrl.u32 %v10096, 7
  %v10098 = vsub.s32 %v3958, %v10097
  %v10099 = vrot.slane %v9555, %v10098
  %v10100 = vlaneseq
  %v10101 = vshrl.u32 %v10100, 7
  %v10102 = vsub.s32 %v8189, %v10101
  %v10103 = vrot.slane %v9558, %v10102
  %v10104 = vsel %vm8194, %v10103, %v10099
  %v10105 = vlaneseq
  %v10106 = vshrl.u32 %v10105, 7
  %v10107 = vsub.s32 %v3958, %v10106
  %v10108 = vrot.slane %v9561, %v10107
  %v10109 = vlaneseq
  %v10110 = vshrl.u32 %v10109, 7
  %v10111 = vsub.s32 %v8189, %v10110
  %v10112 = vrot.slane %v9564, %v10111
  %v10113 = vsel %vm8194, %v10112, %v10108
  %v10114 = vlaneseq
  %v10115 = vshrl.u32 %v10114, 7
  %v10116 = vsub.s32 %v3958, %v10115
  %v10117 = vrot.slane %v9567, %v10116
  %v10118 = vlaneseq
  %v10119 = vshrl.u32 %v10118, 7
  %v10120 = vsub.s32 %v8189, %v10119
  %v10121 = vrot.slane %v9570, %v10120
  %v10122 = vsel %vm8194, %v10121, %v10117
  %v10123 = vlaneseq
  %v10124 = vshrl.u32 %v10123, 7
  %v10125 = vsub.s32 %v3958, %v10124
  %v10126 = vrot.slane %v9573, %v10125
  %v10127 = vlaneseq
  %v10128 = vshrl.u32 %v10127, 7
  %v10129 = vsub.s32 %v8189, %v10128
  %v10130 = vrot.slane %v9576, %v10129
  %v10131 = vsel %vm8194, %v10130, %v10126
  %v10132 = vlaneseq
  %v10133 = vshrl.u32 %v10132, 7
  %v10134 = vsub.s32 %v3958, %v10133
  %v10135 = vrot.slane %v9579, %v10134
  %v10136 = vlaneseq
  %v10137 = vshrl.u32 %v10136, 7
  %v10138 = vsub.s32 %v8189, %v10137
  %v10139 = vrot.slane %v9582, %v10138
  %v10140 = vsel %vm8194, %v10139, %v10135
  %v10141 = vlaneseq
  %v10142 = vshrl.u32 %v10141, 7
  %v10143 = vsub.s32 %v3958, %v10142
  %v10144 = vrot.slane %v9585, %v10143
  %v10145 = vlaneseq
  %v10146 = vshrl.u32 %v10145, 7
  %v10147 = vsub.s32 %v8189, %v10146
  %v10148 = vrot.slane %v9588, %v10147
  %v10149 = vsel %vm8194, %v10148, %v10144
  %v10150 = vlaneseq
  %v10151 = vshrl.u32 %v10150, 7
  %v10152 = vsub.s32 %v3958, %v10151
  %v10153 = vrot.slane %v9591, %v10152
  %v10154 = vlaneseq
  %v10155 = vshrl.u32 %v10154, 7
  %v10156 = vsub.s32 %v8189, %v10155
  %v10157 = vrot.slane %v9594, %v10156
  %v10158 = vsel %vm8194, %v10157, %v10153
  %v10159 = vlaneseq
  %v10160 = vshrl.u32 %v10159, 7
  %v10161 = vsub.s32 %v3958, %v10160
  %v10162 = vrot.slane %v9597, %v10161
  %v10163 = vlaneseq
  %v10164 = vshrl.u32 %v10163, 7
  %v10165 = vsub.s32 %v8189, %v10164
  %v10166 = vrot.slane %v9600, %v10165
  %v10167 = vsel %vm8194, %v10166, %v10162
  %v10168 = vlaneseq
  %v10169 = vshrl.u32 %v10168, 7
  %v10170 = vsub.s32 %v3958, %v10169
  %v10171 = vrot.slane %v9603, %v10170
  %v10172 = vlaneseq
  %v10173 = vshrl.u32 %v10172, 7
  %v10174 = vsub.s32 %v8189, %v10173
  %v10175 = vrot.slane %v9606, %v10174
  %v10176 = vsel %vm8194, %v10175, %v10171
  %v10177 = vlaneseq
  %v10178 = vshrl.u32 %v10177, 7
  %v10179 = vsub.s32 %v3958, %v10178
  %v10180 = vrot.slane %v9609, %v10179
  %v10181 = vlaneseq
  %v10182 = vshrl.u32 %v10181, 7
  %v10183 = vsub.s32 %v8189, %v10182
  %v10184 = vrot.slane %v9612, %v10183
  %v10185 = vsel %vm8194, %v10184, %v10180
  %v10186 = vlaneseq
  %v10187 = vshrl.u32 %v10186, 7
  %v10188 = vsub.s32 %v3958, %v10187
  %v10189 = vrot.slane %v9615, %v10188
  %v10190 = vlaneseq
  %v10191 = vshrl.u32 %v10190, 7
  %v10192 = vsub.s32 %v8189, %v10191
  %v10193 = vrot.slane %v9618, %v10192
  %v10194 = vsel %vm8194, %v10193, %v10189
  %v10195 = vsel %vm2307, %v9636, %v9627
  %v10196 = vsel %vm2310, %v9645, %v10195
  %v10197 = vsel %vm2313, %v9654, %v10196
  %v10198 = vsel %vm2316, %v9663, %v10197
  %v10199 = vsel %vm2319, %v9672, %v10198
  %v10200 = vsel %vm2322, %v9681, %v10199
  %v10201 = vsel %vm2325, %v9690, %v10200
  %v10202 = vsel %vm2307, %v9708, %v9699
  %v10203 = vsel %vm2310, %v9717, %v10202
  %v10204 = vsel %vm2313, %v9726, %v10203
  %v10205 = vsel %vm2316, %v9735, %v10204
  %v10206 = vsel %vm2319, %v9744, %v10205
  %v10207 = vsel %vm2322, %v9753, %v10206
  %v10208 = vsel %vm2325, %v9762, %v10207
  %v10209 = vsel %vm2307, %v9780, %v9771
  %v10210 = vsel %vm2310, %v9789, %v10209
  %v10211 = vsel %vm2313, %v9798, %v10210
  %v10212 = vsel %vm2316, %v9807, %v10211
  %v10213 = vsel %vm2319, %v9816, %v10212
  %v10214 = vsel %vm2322, %v9825, %v10213
  %v10215 = vsel %vm2325, %v9834, %v10214
  %v10216 = vsel %vm2307, %v9852, %v9843
  %v10217 = vsel %vm2310, %v9861, %v10216
  %v10218 = vsel %vm2313, %v9870, %v10217
  %v10219 = vsel %vm2316, %v9879, %v10218
  %v10220 = vsel %vm2319, %v9888, %v10219
  %v10221 = vsel %vm2322, %v9897, %v10220
  %v10222 = vsel %vm2325, %v9906, %v10221
  %v10223 = vsel %vm2307, %v9924, %v9915
  %v10224 = vsel %vm2310, %v9933, %v10223
  %v10225 = vsel %vm2313, %v9942, %v10224
  %v10226 = vsel %vm2316, %v9951, %v10225
  %v10227 = vsel %vm2319, %v9960, %v10226
  %v10228 = vsel %vm2322, %v9969, %v10227
  %v10229 = vsel %vm2325, %v9978, %v10228
  %v10230 = vsel %vm2307, %v9996, %v9987
  %v10231 = vsel %vm2310, %v10005, %v10230
  %v10232 = vsel %vm2313, %v10014, %v10231
  %v10233 = vsel %vm2316, %v10023, %v10232
  %v10234 = vsel %vm2319, %v10032, %v10233
  %v10235 = vsel %vm2322, %v10041, %v10234
  %v10236 = vsel %vm2325, %v10050, %v10235
  %v10237 = vsel %vm2307, %v10068, %v10059
  %v10238 = vsel %vm2310, %v10077, %v10237
  %v10239 = vsel %vm2313, %v10086, %v10238
  %v10240 = vsel %vm2316, %v10095, %v10239
  %v10241 = vsel %vm2319, %v10104, %v10240
  %v10242 = vsel %vm2322, %v10113, %v10241
  %v10243 = vsel %vm2325, %v10122, %v10242
  %v10244 = vsel %vm2307, %v10140, %v10131
  %v10245 = vsel %vm2310, %v10149, %v10244
  %v10246 = vsel %vm2313, %v10158, %v10245
  %v10247 = vsel %vm2316, %v10167, %v10246
  %v10248 = vsel %vm2319, %v10176, %v10247
  %v10249 = vsel %vm2322, %v10185, %v10248
  %v10250 = vsel %vm2325, %v10194, %v10249
  %v10259 = vsel %vm1417, %v10201, 0.0
  %10260 = vadd.xlane.f32.xlu0 %v10259
  %v10261 = vpop.xlane.xlu0 %10260
  %v10262 = vsel %vm1417, %v10208, 0.0
  %10263 = vadd.xlane.f32.xlu0 %v10262
  %v10264 = vpop.xlane.xlu0 %10263
  %v10265 = vsel %vm1417, %v10215, 0.0
  %10266 = vadd.xlane.f32.xlu0 %v10265
  %v10267 = vpop.xlane.xlu0 %10266
  %v10268 = vsel %vm1417, %v10222, 0.0
  %10269 = vadd.xlane.f32.xlu0 %v10268
  %v10270 = vpop.xlane.xlu0 %10269
  %v10271 = vsel %vm1417, %v10229, 0.0
  %10272 = vadd.xlane.f32.xlu0 %v10271
  %v10273 = vpop.xlane.xlu0 %10272
  %v10274 = vsel %vm1417, %v10236, 0.0
  %10275 = vadd.xlane.f32.xlu0 %v10274
  %v10276 = vpop.xlane.xlu0 %10275
  %v10277 = vsel %vm1417, %v10243, 0.0
  %10278 = vadd.xlane.f32.xlu0 %v10277
  %v10279 = vpop.xlane.xlu0 %10278
  %v10280 = vsel %vm1417, %v10250, 0.0
  %10281 = vadd.xlane.f32.xlu0 %v10280
  %v10282 = vpop.xlane.xlu0 %10281
  %v10283 = vmul.f32 %v8829, 0.25
  %v10284 = vmul.f32 %v8832, 0.25
  %v10285 = vmul.f32 %v8835, 0.25
  %v10286 = vmul.f32 %v8838, 0.25
  %v10287 = vmul.f32 %v8841, 0.25
  %v10288 = vmul.f32 %v8844, 0.25
  %v10289 = vmul.f32 %v8847, 0.25
  %v10290 = vmul.f32 %v8850, 0.25
  %v10291 = vmul.f32 %v10261, 0.75
  %v10292 = vmul.f32 %v10264, 0.75
  %v10293 = vmul.f32 %v10267, 0.75
  %v10294 = vmul.f32 %v10270, 0.75
  %v10295 = vmul.f32 %v10273, 0.75
  %v10296 = vmul.f32 %v10276, 0.75
  %v10297 = vmul.f32 %v10279, 0.75
  %v10298 = vmul.f32 %v10282, 0.75
  %v10299 = vadd.f32 %v10283, %v10291
  %v10300 = vadd.f32 %v10284, %v10292
  %v10301 = vadd.f32 %v10285, %v10293
  %v10302 = vadd.f32 %v10286, %v10294
  %v10303 = vadd.f32 %v10287, %v10295
  %v10304 = vadd.f32 %v10288, %v10296
  %v10305 = vadd.f32 %v10289, %v10297
  %v10306 = vadd.f32 %v10290, %v10298
  %v10307 = vadd.f32 %v2825, %v10299
  %v10308 = vadd.f32 %v2826, %v10301
  %v10309 = vadd.f32 %v2827, %v10303
  %v10310 = vadd.f32 %v2828, %v10305
  %v10315 = vrot.slane %v10299, 1
  %v10316 = vrot.slane %v10301, 1
  %v10317 = vrot.slane %v10303, 1
  %v10318 = vrot.slane %v10305, 1
  %v10323 = vadd.f32 %v2825, %v10315
  %v10324 = vadd.f32 %v2826, %v10316
  %v10325 = vadd.f32 %v2827, %v10317
  %v10326 = vadd.f32 %v2828, %v10318
  %v10327 = vrot.slane %v10299, 2
  %v10328 = vrot.slane %v10301, 2
  %v10329 = vrot.slane %v10303, 2
  %v10330 = vrot.slane %v10305, 2
  %v10335 = vadd.f32 %v2825, %v10327
  %v10336 = vadd.f32 %v2826, %v10328
  %v10337 = vadd.f32 %v2827, %v10329
  %v10338 = vadd.f32 %v2828, %v10330
  %v10339 = vrot.slane %v10299, 3
  %v10340 = vrot.slane %v10301, 3
  %v10341 = vrot.slane %v10303, 3
  %v10342 = vrot.slane %v10305, 3
  %v10347 = vadd.f32 %v2825, %v10339
  %v10348 = vadd.f32 %v2826, %v10340
  %v10349 = vadd.f32 %v2827, %v10341
  %v10350 = vadd.f32 %v2828, %v10342
  %v10351 = vrot.slane %v10299, 4
  %v10352 = vrot.slane %v10301, 4
  %v10353 = vrot.slane %v10303, 4
  %v10354 = vrot.slane %v10305, 4
  %v10359 = vadd.f32 %v2825, %v10351
  %v10360 = vadd.f32 %v2826, %v10352
  %v10361 = vadd.f32 %v2827, %v10353
  %v10362 = vadd.f32 %v2828, %v10354
  %v10363 = vrot.slane %v10299, 5
  %v10364 = vrot.slane %v10301, 5
  %v10365 = vrot.slane %v10303, 5
  %v10366 = vrot.slane %v10305, 5
  %v10371 = vadd.f32 %v2825, %v10363
  %v10372 = vadd.f32 %v2826, %v10364
  %v10373 = vadd.f32 %v2827, %v10365
  %v10374 = vadd.f32 %v2828, %v10366
  %v10375 = vrot.slane %v10299, 6
  %v10376 = vrot.slane %v10301, 6
  %v10377 = vrot.slane %v10303, 6
  %v10378 = vrot.slane %v10305, 6
  %v10383 = vadd.f32 %v2825, %v10375
  %v10384 = vadd.f32 %v2826, %v10376
  %v10385 = vadd.f32 %v2827, %v10377
  %v10386 = vadd.f32 %v2828, %v10378
  %v10387 = vrot.slane %v10299, 7
  %v10388 = vrot.slane %v10301, 7
  %v10389 = vrot.slane %v10303, 7
  %v10390 = vrot.slane %v10305, 7
  %v10395 = vadd.f32 %v2825, %v10387
  %v10396 = vadd.f32 %v2826, %v10388
  %v10397 = vadd.f32 %v2827, %v10389
  %v10398 = vadd.f32 %v2828, %v10390
  %v10399 = vadd.f32 %v2825, %v10300
  %v10400 = vadd.f32 %v2826, %v10302
  %v10401 = vadd.f32 %v2827, %v10304
  %v10402 = vadd.f32 %v2828, %v10306
  %v10407 = vrot.slane %v10300, 1
  %v10408 = vrot.slane %v10302, 1
  %v10409 = vrot.slane %v10304, 1
  %v10410 = vrot.slane %v10306, 1
  %v10415 = vadd.f32 %v2825, %v10407
  %v10416 = vadd.f32 %v2826, %v10408
  %v10417 = vadd.f32 %v2827, %v10409
  %v10418 = vadd.f32 %v2828, %v10410
  %v10419 = vrot.slane %v10300, 2
  %v10420 = vrot.slane %v10302, 2
  %v10421 = vrot.slane %v10304, 2
  %v10422 = vrot.slane %v10306, 2
  %v10427 = vadd.f32 %v2825, %v10419
  %v10428 = vadd.f32 %v2826, %v10420
  %v10429 = vadd.f32 %v2827, %v10421
  %v10430 = vadd.f32 %v2828, %v10422
  %v10431 = vrot.slane %v10300, 3
  %v10432 = vrot.slane %v10302, 3
  %v10433 = vrot.slane %v10304, 3
  %v10434 = vrot.slane %v10306, 3
  %v10439 = vadd.f32 %v2825, %v10431
  %v10440 = vadd.f32 %v2826, %v10432
  %v10441 = vadd.f32 %v2827, %v10433
  %v10442 = vadd.f32 %v2828, %v10434
  %v10443 = vrot.slane %v10300, 4
  %v10444 = vrot.slane %v10302, 4
  %v10445 = vrot.slane %v10304, 4
  %v10446 = vrot.slane %v10306, 4
  %v10451 = vadd.f32 %v2825, %v10443
  %v10452 = vadd.f32 %v2826, %v10444
  %v10453 = vadd.f32 %v2827, %v10445
  %v10454 = vadd.f32 %v2828, %v10446
  %v10455 = vrot.slane %v10300, 5
  %v10456 = vrot.slane %v10302, 5
  %v10457 = vrot.slane %v10304, 5
  %v10458 = vrot.slane %v10306, 5
  %v10463 = vadd.f32 %v2825, %v10455
  %v10464 = vadd.f32 %v2826, %v10456
  %v10465 = vadd.f32 %v2827, %v10457
  %v10466 = vadd.f32 %v2828, %v10458
  %v10467 = vrot.slane %v10300, 6
  %v10468 = vrot.slane %v10302, 6
  %v10469 = vrot.slane %v10304, 6
  %v10470 = vrot.slane %v10306, 6
  %v10475 = vadd.f32 %v2825, %v10467
  %v10476 = vadd.f32 %v2826, %v10468
  %v10477 = vadd.f32 %v2827, %v10469
  %v10478 = vadd.f32 %v2828, %v10470
  %v10479 = vrot.slane %v10300, 7
  %v10480 = vrot.slane %v10302, 7
  %v10481 = vrot.slane %v10304, 7
  %v10482 = vrot.slane %v10306, 7
  %v10487 = vadd.f32 %v2825, %v10479
  %v10488 = vadd.f32 %v2826, %v10480
  %v10489 = vadd.f32 %v2827, %v10481
  %v10490 = vadd.f32 %v2828, %v10482
  %v10495 = vrot.slane %v10308, 7
  %v10496 = vsel %vm2307, %v10495, %v10307
  %v10497 = vrot.slane %v10309, 6
  %v10498 = vsel %vm2310, %v10497, %v10496
  %v10499 = vrot.slane %v10310, 5
  %v10500 = vsel %vm2313, %v10499, %v10498
  %v10506 = vrot.slane %v10324, 7
  %v10507 = vsel %vm2307, %v10506, %v10323
  %v10508 = vrot.slane %v10325, 6
  %v10509 = vsel %vm2310, %v10508, %v10507
  %v10510 = vrot.slane %v10326, 5
  %v10511 = vsel %vm2313, %v10510, %v10509
  %10512 = vrot.lane.b32.xlu0 %v10511, 16
  %v10513 = vpop.permute.xlu0 %10512
  %v10519 = vrot.slane %v10336, 7
  %v10520 = vsel %vm2307, %v10519, %v10335
  %v10521 = vrot.slane %v10337, 6
  %v10522 = vsel %vm2310, %v10521, %v10520
  %v10523 = vrot.slane %v10338, 5
  %v10524 = vsel %vm2313, %v10523, %v10522
  %10525 = vrot.lane.b32.xlu0 %v10524, 32
  %v10526 = vpop.permute.xlu0 %10525
  %v10532 = vrot.slane %v10348, 7
  %v10533 = vsel %vm2307, %v10532, %v10347
  %v10534 = vrot.slane %v10349, 6
  %v10535 = vsel %vm2310, %v10534, %v10533
  %v10536 = vrot.slane %v10350, 5
  %v10537 = vsel %vm2313, %v10536, %v10535
  %10538 = vrot.lane.b32.xlu0 %v10537, 48
  %v10539 = vpop.permute.xlu0 %10538
  %v10545 = vrot.slane %v10360, 7
  %v10546 = vsel %vm2307, %v10545, %v10359
  %v10547 = vrot.slane %v10361, 6
  %v10548 = vsel %vm2310, %v10547, %v10546
  %v10549 = vrot.slane %v10362, 5
  %v10550 = vsel %vm2313, %v10549, %v10548
  %10551 = vrot.lane.b32.xlu0 %v10550, 64
  %v10552 = vpop.permute.xlu0 %10551
  %v10558 = vrot.slane %v10372, 7
  %v10559 = vsel %vm2307, %v10558, %v10371
  %v10560 = vrot.slane %v10373, 6
  %v10561 = vsel %vm2310, %v10560, %v10559
  %v10562 = vrot.slane %v10374, 5
  %v10563 = vsel %vm2313, %v10562, %v10561
  %10564 = vrot.lane.b32.xlu0 %v10563, 80
  %v10565 = vpop.permute.xlu0 %10564
  %v10571 = vrot.slane %v10384, 7
  %v10572 = vsel %vm2307, %v10571, %v10383
  %v10573 = vrot.slane %v10385, 6
  %v10574 = vsel %vm2310, %v10573, %v10572
  %v10575 = vrot.slane %v10386, 5
  %v10576 = vsel %vm2313, %v10575, %v10574
  %10577 = vrot.lane.b32.xlu0 %v10576, 96
  %v10578 = vpop.permute.xlu0 %10577
  %v10584 = vrot.slane %v10396, 7
  %v10585 = vsel %vm2307, %v10584, %v10395
  %v10586 = vrot.slane %v10397, 6
  %v10587 = vsel %vm2310, %v10586, %v10585
  %v10588 = vrot.slane %v10398, 5
  %v10589 = vsel %vm2313, %v10588, %v10587
  %10590 = vrot.lane.b32.xlu0 %v10589, 112
  %v10591 = vpop.permute.xlu0 %10590
  %v10597 = vrot.slane %v10400, 7
  %v10598 = vsel %vm2307, %v10597, %v10399
  %v10599 = vrot.slane %v10401, 6
  %v10600 = vsel %vm2310, %v10599, %v10598
  %v10601 = vrot.slane %v10402, 5
  %v10602 = vsel %vm2313, %v10601, %v10600
  %v10608 = vrot.slane %v10416, 7
  %v10609 = vsel %vm2307, %v10608, %v10415
  %v10610 = vrot.slane %v10417, 6
  %v10611 = vsel %vm2310, %v10610, %v10609
  %v10612 = vrot.slane %v10418, 5
  %v10613 = vsel %vm2313, %v10612, %v10611
  %10614 = vrot.lane.b32.xlu0 %v10613, 16
  %v10615 = vpop.permute.xlu0 %10614
  %v10621 = vrot.slane %v10428, 7
  %v10622 = vsel %vm2307, %v10621, %v10427
  %v10623 = vrot.slane %v10429, 6
  %v10624 = vsel %vm2310, %v10623, %v10622
  %v10625 = vrot.slane %v10430, 5
  %v10626 = vsel %vm2313, %v10625, %v10624
  %10627 = vrot.lane.b32.xlu0 %v10626, 32
  %v10628 = vpop.permute.xlu0 %10627
  %v10634 = vrot.slane %v10440, 7
  %v10635 = vsel %vm2307, %v10634, %v10439
  %v10636 = vrot.slane %v10441, 6
  %v10637 = vsel %vm2310, %v10636, %v10635
  %v10638 = vrot.slane %v10442, 5
  %v10639 = vsel %vm2313, %v10638, %v10637
  %10640 = vrot.lane.b32.xlu0 %v10639, 48
  %v10641 = vpop.permute.xlu0 %10640
  %v10647 = vrot.slane %v10452, 7
  %v10648 = vsel %vm2307, %v10647, %v10451
  %v10649 = vrot.slane %v10453, 6
  %v10650 = vsel %vm2310, %v10649, %v10648
  %v10651 = vrot.slane %v10454, 5
  %v10652 = vsel %vm2313, %v10651, %v10650
  %10653 = vrot.lane.b32.xlu0 %v10652, 64
  %v10654 = vpop.permute.xlu0 %10653
  %v10660 = vrot.slane %v10464, 7
  %v10661 = vsel %vm2307, %v10660, %v10463
  %v10662 = vrot.slane %v10465, 6
  %v10663 = vsel %vm2310, %v10662, %v10661
  %v10664 = vrot.slane %v10466, 5
  %v10665 = vsel %vm2313, %v10664, %v10663
  %10666 = vrot.lane.b32.xlu0 %v10665, 80
  %v10667 = vpop.permute.xlu0 %10666
  %v10673 = vrot.slane %v10476, 7
  %v10674 = vsel %vm2307, %v10673, %v10475
  %v10675 = vrot.slane %v10477, 6
  %v10676 = vsel %vm2310, %v10675, %v10674
  %v10677 = vrot.slane %v10478, 5
  %v10678 = vsel %vm2313, %v10677, %v10676
  %10679 = vrot.lane.b32.xlu0 %v10678, 96
  %v10680 = vpop.permute.xlu0 %10679
  %v10686 = vrot.slane %v10488, 7
  %v10687 = vsel %vm2307, %v10686, %v10487
  %v10688 = vrot.slane %v10489, 6
  %v10689 = vsel %vm2310, %v10688, %v10687
  %v10690 = vrot.slane %v10490, 5
  %v10691 = vsel %vm2313, %v10690, %v10689
  %10692 = vrot.lane.b32.xlu0 %v10691, 112
  %v10693 = vpop.permute.xlu0 %10692
  %v10695 = vsel %vm1417, %v10500, %v10513
  %vm10696 = vcmask 261120
  %v10697 = vsel %vm10696, %v10695, %v10526
  %vm10698 = vcmask 392192
  %v10699 = vsel %vm10698, %v10697, %v10539
  %vm10700 = vcmask 523264
  %v10701 = vsel %vm10700, %v10699, %v10552
  %vm10702 = vcmask 654336
  %v10703 = vsel %vm10702, %v10701, %v10565
  %vm10704 = vcmask 785408
  %v10705 = vsel %vm10704, %v10703, %v10578
  %vm10706 = vcmask 916480
  %v10707 = vsel %vm10706, %v10705, %v10591
  %v10708 = vsel %vm1417, %v10602, %v10615
  %v10709 = vsel %vm10696, %v10708, %v10628
  %v10710 = vsel %vm10698, %v10709, %v10641
  %v10711 = vsel %vm10700, %v10710, %v10654
  %v10712 = vsel %vm10702, %v10711, %v10667
  %v10713 = vsel %vm10704, %v10712, %v10680
  %v10714 = vsel %vm10706, %v10713, %v10693
  %v10717 = vrot.slane %v10707, 4
  %v10718 = vrot.slane %v10714, 4
  %vm10721 = vcmask 1043456
  %v10722 = vsel %vm10721, %v10707, %v10717
  %v10723 = vsel %vm10721, %v10714, %v10718
  %v10724 = vld [vmem:[%s1] sm:$0xff]
  %v10725 = vld [vmem:[%s1 + $0x8] sm:$0xff]
  %v10726 = vsub.f32 %v10724, %v10722
  %v10727 = vsub.f32 %v10725, %v10723
  %v10728 = vld [vmem:[%s2] sm:$0xff]
  %v10729 = vld [vmem:[%s2 + $0x8] sm:$0xff]
  %vm10730 = vcmask 72704
  %v10732 = vsel %vm10730, %v10728, 0
  %v10735 = vsel %vm10730, %v10729, 0
  %vm10737 = vcmask 1040384
  %v10739 = vsel %vm10737, 1.0, 0
  %10741 = vmatprep.subr.mxu0 %v10727
  %10742 = vmatpush1.msra.mxu0 %v10726
  %10743 = vmatprep.subr.mxu0 %v10739
  %10744 = vmatpush1.msra.mxu0 %v10739
  %10745 = vmatprep.subr.mxu0 0.0
  %10746 = vmatpush1.msra.mxu0 0.0
  %10747 = vmatprep.subr.mxu0 0.0
  %10748 = vmatpush1.msra.mxu0 0.0
  %10749 = vmatprep.subr.mxu0 0.0
  %10750 = vmatpush1.msra.mxu0 0.0
  %10751 = vmatprep.subr.mxu0 0.0
  %10752 = vmatpush1.msra.mxu0 0.0
  %10753 = vmatprep.subr.mxu0 0.0
  %10754 = vmatpush1.msra.mxu0 0.0
  %10755 = vmatprep.subr.mxu0 0.0
  %10756 = vmatpush1.msra.mxu0 0.0
  %10757 = vmatprep.subr.mxu0 0.0
  %10758 = vmatpush1.msra.mxu0 0.0
  %10759 = vmatprep.subr.mxu0 0.0
  %10760 = vmatpush1.msra.mxu0 0.0
  %10761 = vmatprep.subr.mxu0 0.0
  %10762 = vmatpush1.msra.mxu0 0.0
  %10763 = vmatprep.subr.mxu0 0.0
  %10764 = vmatpush1.msra.mxu0 0.0
  %10765 = vmatprep.subr.mxu0 0.0
  %10766 = vmatpush1.msra.mxu0 0.0
  %10767 = vmatprep.subr.mxu0 0.0
  %10768 = vmatpush1.msra.mxu0 0.0
  %10769 = vmatprep.subr.mxu0 0.0
  %10770 = vmatpush1.msra.mxu0 0.0
  %10771 = vmatprep.subr.mxu0 0.0
  %10772 = vmatpush1.msra.mxu0 0.0
  %10773 = vmatprep.subr.mxu0 0.0
  %10774 = vmatpush1.msra.mxu0 0.0
  %10775 = vmatprep.subr.mxu0 0.0
  %10776 = vmatpush1.msra.mxu0 0.0
  %10777 = vmatprep.subr.mxu0 0.0
  %10778 = vmatpush1.msra.mxu0 0.0
  %10779 = vmatprep.subr.mxu0 0.0
  %10780 = vmatpush1.msra.mxu0 0.0
  %10781 = vmatprep.subr.mxu0 0.0
  %10782 = vmatpush1.msra.mxu0 0.0
  %10783 = vmatprep.subr.mxu0 0.0
  %10784 = vmatpush1.msra.mxu0 0.0
  %10785 = vmatprep.subr.mxu0 0.0
  %10786 = vmatpush1.msra.mxu0 0.0
  %10787 = vmatprep.subr.mxu0 0.0
  %10788 = vmatpush1.msra.mxu0 0.0
  %10789 = vmatprep.subr.mxu0 0.0
  %10790 = vmatpush1.msra.mxu0 0.0
  %10791 = vmatprep.subr.mxu0 0.0
  %10792 = vmatpush1.msra.mxu0 0.0
  %10793 = vmatprep.subr.mxu0 0.0
  %10794 = vmatpush1.msra.mxu0 0.0
  %10795 = vmatprep.subr.mxu0 0.0
  %10796 = vmatpush1.msra.mxu0 0.0
  %10797 = vmatprep.subr.mxu0 0.0
  %10798 = vmatpush1.msra.mxu0 0.0
  %10799 = vmatprep.subr.mxu0 0.0
  %10800 = vmatpush1.msra.mxu0 0.0
  %10801 = vmatprep.subr.mxu0 0.0
  %10802 = vmatpush1.msra.mxu0 0.0
  %10803 = vmatprep.subr.mxu0 0.0
  %10804 = vmatpush1.msra.mxu0 0.0
  %10805 = vmatprep.mubr.f32.mxu0 0.0
  %10806 = vmatmul.mubr.f32.gmra.mrb[0].mxu0 %v10732
  %v10807 = vpop.f32.mrb[0].mxu0
  %v10808 = vadd.f32 0.0, %v10807
  %v10809 = vpop.f32.mrb[0].mxu0
  %v10810 = vadd.f32 0.0, %v10809
  %10811 = vmatprep.mubr.f32.mxu0 0.0
  %10812 = vmatmul.mubr.f32.gmra.mrb[0].mxu0 %v10735
  %v10813 = vpop.f32.mrb[0].mxu0
  %v10814 = vadd.f32 0.0, %v10813
  %v10815 = vpop.f32.mrb[0].mxu0
  %v10816 = vadd.f32 0.0, %v10815
  %10817 = vdwg.mxu0
  %10818 = vst [vmem:[%s3] sm:$0xff] %v10808
  %10819 = vst [vmem:[%s3 + $0x8] sm:$0xff] %v10810
  %10820 = vst [vmem:[%s3 + $0x10] sm:$0xff] %v10814
  %10821 = vst [vmem:[%s3 + $0x18] sm:$0xff] %v10816
  // Predicated region
  $region14: #{mednorm_model_forward.1} parent=0 // pred_check
    _
  $region15: #{mednorm_model_forward.1} parent=0 // pred_check_branch
    %10823 = sbr.rel (0) target = $region17
  $region16: #{mednorm_model_forward.1} parent=0 // pred_region
    _
  $region17: #{mednorm_model_forward.1} parent=0 // pred_fallthru
    _
  // Predicated region
  $region18: #{mednorm_model_forward.1} parent=0 // pred_check
    _
  $region19: #{mednorm_model_forward.1} parent=0 // pred_check_branch
    %10825 = sbr.rel (0) target = $region21
  $region20: #{mednorm_model_forward.1} parent=0 // pred_region
    _
  $region21: #{mednorm_model_forward.1} parent=0 // pred_fallthru
    _

</llo_original>
